<compile_context>
chip_gen: v7x
topology: tpu7x:2x2x1
jax: 0.10.0
libtpu: 0.0.40
codegen_flags: <defaults>
</compile_context>

<pallas_src>
import math
from functools import partial

import jax
import jax.numpy as jnp
from jax import lax
from jax.experimental import pallas as pl
from jax.experimental.pallas import tpu as pltpu

# ----------------------------- module config --------------------------------
IN_CH = 8            # small, consistent with DownProjector(in_channels=...)
OUT_CH = 8           # must be divisible by GroupNorm num_groups = 4
GROUPS = 4
TARGET = (16, 8)     # (Ho, Wo) target_shape of F.interpolate
EPS = 1e-5           # PyTorch GroupNorm default eps
HIGHEST = lax.Precision.HIGHEST


def bilinear_matrix(out_size, in_size):
    """1-D interpolation matrix matching F.interpolate(mode='bilinear',
    align_corners=False) along one axis (PyTorch half-pixel convention)."""
    A = [[0.0] * in_size for _ in range(out_size)]
    scale = in_size / out_size
    for o in range(out_size):
        src = max((o + 0.5) * scale - 0.5, 0.0)
        i0 = min(int(math.floor(src)), in_size - 1)
        i1 = min(i0 + 1, in_size - 1)
        l1 = src - i0
        A[o][i0] += 1.0 - l1
        A[o][i1] += l1
    return jnp.asarray(A, jnp.float32)


# ------------------------------- kernel -------------------------------------
def _down_projector_kernel(x_ref, k1_ref, k2_ref, rg_ref, eg_ref, rows_ref,
                           o_ref, *, inv_n):
    rows = rows_ref[...]                        # (8, L) packed per-lane vectors
    b1r, g1r, be1r = rows[0:1], rows[1:2], rows[2:3]
    b2r, g2r, be2r = rows[3:4], rows[4:5], rows[5:6]
    rg = rg_ref[...]                            # (L, G) group indicator (reduce)
    eg = eg_ref[...]                            # (G, L) group indicator (bcast)

    def gn_silu(h, grow, brow):
        # per-(image, group) moments: batched indicator matmuls (M = bt)
        mean = jnp.dot(h, rg, preferred_element_type=jnp.float32) * inv_n
        msq = jnp.dot(h * h, rg, preferred_element_type=jnp.float32) * inv_n
        var = msq - mean * mean                 # biased variance (PyTorch GN)
        istd = lax.rsqrt(var + EPS)             # (bt, G)
        # broadcast per-group values back to the (bt, L) lane layout
        istd_l = jnp.dot(istd, eg, preferred_element_type=jnp.float32)
        mean_l = jnp.dot(mean, eg, preferred_element_type=jnp.float32)
        sc = istd_l * grow
        y = (h - mean_l) * sc + brow
        # exact SiLU: sigmoid(y) = 0.5 * (1 + tanh(y/2)) -- single EUP push
        return y * (0.5 * (1.0 + jnp.tanh(0.5 * y)))

    # fused bilinear-resize + zero-pad + conv1: one (bt, kin) @ (kin, L) matmul
    h1 = jnp.dot(x_ref[...], k1_ref[...], preferred_element_type=jnp.float32) + b1r
    a1 = gn_silu(h1, g1r, be1r)

    # conv2 with its zero padding baked into K2 (zero rows for OOB neighbors)
    h2 = jnp.dot(a1, k2_ref[...], preferred_element_type=jnp.float32) + b2r
    o_ref[...] = gn_silu(h2, g2r, be2r)         # (bt, L) lane-dense NCHW rows


# ------------------------------- wrapper -------------------------------------
def _pick_block_batch(batch):
    """Images per grid step: target a large M (up to 256 rows) for MXU fill,
    but keep >= 2 grid steps when possible so both v7x TensorCores get work."""
    bt = 256
    while bt > 8 and pl.cdiv(batch, bt) < 2:
        bt //= 2
    return bt


def down_projector(x_nchw, params, *, block_batch=None):
    W1, b1, g1, be1, W2, b2, g2, be2 = params
    B, cin, Hi, Wi = x_nchw.shape
    Ho, Wo = TARGET
    cout = W1.shape[0]
    kin = cin * Hi * Wi            # flattened input lanes
    L = cout * Ho * Wo             # flattened output lanes

    # ---- weight-derived constants (computed once per parameter set) ---------
    # K1: exact linear map  flatten_NCHW(x) -> flatten_NCHW(conv1(resize(x))),
    # bias excluded, built by pushing the identity basis through the reference
    # ops (guarantees identical padding / resize semantics).
    Ah = bilinear_matrix(Ho, Hi)
    Aw = bilinear_matrix(Wo, Wi)
    basis1 = jnp.eye(kin, dtype=jnp.float32).reshape(kin, cin, Hi, Wi)
    resized = jnp.einsum('oh,nchw,pw->ncop', Ah, basis1, Aw, precision=HIGHEST)
    K1 = lax.conv_general_dilated(
        resized, W1, (1, 1), ((1, 1), (1, 1)),
        dimension_numbers=('NCHW', 'OIHW', 'NCHW'),
        precision=HIGHEST).reshape(kin, L)

    # K2: exact linear map flatten(a) -> flatten(conv2(a)); zero padding is
    # encoded by zero rows, so no re-pad or lane shuffles in-kernel.
    basis2 = jnp.eye(L, dtype=jnp.float32).reshape(L, cout, Ho, Wo)
    K2 = lax.conv_general_dilated(
        basis2, W2, (1, 1), ((1, 1), (1, 1)),
        dimension_numbers=('NCHW', 'OIHW', 'NCHW'),
        precision=HIGHEST).reshape(L, L)

    # group-indicator matrices: lane l -> channel l//(Ho*Wo) -> group
    chan = jnp.arange(L) // (Ho * Wo)
    grp = chan // (cout // GROUPS)
    Rg = (grp[:, None] == jnp.arange(GROUPS)[None, :]).astype(jnp.float32)  # (L,G)
    Eg = Rg.T                                                               # (G,L)

    # conv biases and GN affine params broadcast to per-lane rows, packed (8,L)
    def per_lane(v):
        return v[chan]
    zero = jnp.zeros((L,), jnp.float32)
    rows = jnp.stack([per_lane(b1), per_lane(g1), per_lane(be1),
                      per_lane(b2), per_lane(g2), per_lane(be2),
                      zero, zero], axis=0)

    inv_n = 1.0 / float((cout // GROUPS) * Ho * Wo)   # elems per GN group

    # ---- batched, lane-dense data layout ------------------------------------
    bt = block_batch or _pick_block_batch(B)
    Bp = pl.cdiv(B, bt) * bt
    x_flat = x_nchw.reshape(B, kin)                   # NCHW flatten: metadata only
    if Bp != B:                                       # pad batch with zero images
        x_flat = jnp.concatenate(
            [x_flat, jnp.zeros((Bp - B, kin), x_flat.dtype)], axis=0)

    kern = partial(_down_projector_kernel, inv_n=inv_n)

    def const(a):
        nd = a.ndim
        return pl.BlockSpec(a.shape, lambda b: (0,) * nd)

    out = pl.pallas_call(
        kern,
        out_shape=jax.ShapeDtypeStruct((Bp, L), jnp.float32),
        grid_spec=pltpu.PrefetchScalarGridSpec(
            num_scalar_prefetch=0,
            grid=(Bp // bt,),
            in_specs=[
                pl.BlockSpec((bt, kin), lambda b: (b, 0)),
                const(K1), const(K2), const(Rg), const(Eg), const(rows),
            ],
            out_specs=pl.BlockSpec((bt, L), lambda b: (b, 0)),
        ),
        compiler_params=pltpu.CompilerParams(
            dimension_semantics=("parallel",),
            vmem_limit_bytes=32 * 1024 * 1024,
        ),
    )(x_flat, K1, K2, Rg, Eg, rows)

    return out[:B].reshape(B, cout, Ho, Wo)           # metadata reshape only


# -------------------------- pure-JAX reference -------------------------------
def reference(x_nchw, params):
    W1, b1, g1, be1, W2, b2, g2, be2 = params
    Ho, Wo = TARGET
    _, _, Hi, Wi = x_nchw.shape
    Ah = bilinear_matrix(Ho, Hi)
    Aw = bilinear_matrix(Wo, Wi)
    r = jnp.einsum('oh,bchw,pw->bcop', Ah, x_nchw, Aw, precision=HIGHEST)

    def conv(z, W, b):
        y = lax.conv_general_dilated(z, W, (1, 1), ((1, 1), (1, 1)),
                                     dimension_numbers=('NCHW', 'OIHW', 'NCHW'),
                                     precision=HIGHEST)
        return y + b[None, :, None, None]

    def gn(z, gamma, beta):
        Bz, C, H, W = z.shape
        zg = z.reshape(Bz, GROUPS, C // GROUPS, H, W)
        m = zg.mean(axis=(2, 3, 4), keepdims=True)
        v = ((zg - m) ** 2).mean(axis=(2, 3, 4), keepdims=True)
        zn = ((zg - m) * lax.rsqrt(v + EPS)).reshape(Bz, C, H, W)
        return zn * gamma[None, :, None, None] + beta[None, :, None, None]

    h = jax.nn.silu(gn(conv(r, W1, b1), g1, be1))
    h = jax.nn.silu(gn(conv(h, W2, b2), g2, be2))
    return h


if __name__ == "__main__":
    key = jax.random.PRNGKey(0)
    kx, k1, k2, k3, k4, k5, k6, k7, k8 = jax.random.split(key, 9)
    B, Hi, Wi = 16, 12, 10
    x = jax.random.normal(kx, (B, IN_CH, Hi, Wi), jnp.float32)

    W1 = 0.1 * jax.random.normal(k1, (OUT_CH, IN_CH, 3, 3), jnp.float32)
    b1 = 0.05 * jax.random.normal(k2, (OUT_CH,), jnp.float32)
    g1 = 1.0 + 0.1 * jax.random.normal(k3, (OUT_CH,), jnp.float32)
    be1 = 0.1 * jax.random.normal(k4, (OUT_CH,), jnp.float32)
    W2 = 0.1 * jax.random.normal(k5, (OUT_CH, OUT_CH, 3, 3), jnp.float32)
    b2 = 0.05 * jax.random.normal(k6, (OUT_CH,), jnp.float32)
    g2 = 1.0 + 0.1 * jax.random.normal(k7, (OUT_CH,), jnp.float32)
    be2 = 0.1 * jax.random.normal(k8, (OUT_CH,), jnp.float32)
    params = (W1, b1, g1, be1, W2, b2, g2, be2)

    out = jax.block_until_ready(down_projector(x, params))
    assert out.shape == (B, OUT_CH, TARGET[0], TARGET[1]), out.shape

    ref = jax.block_until_ready(reference(x, params))
    err = float(jnp.max(jnp.abs(out - ref)))
    if not err < 2e-3:
        raise AssertionError(f"kernel/reference mismatch, max abs err = {err}")
    print("KERNEL_OK")
</pallas_src>

<mosaic_0001>
module attributes {stable_mosaic.version = 11 : i64} {
  func.func @_down_projector_kernel(%arg0: i32, %arg1: memref<8x960xf32, #tpu.memory_space<vmem>>, %arg2: memref<960x1024xf32, #tpu.memory_space<vmem>>, %arg3: memref<1024x1024xf32, #tpu.memory_space<vmem>>, %arg4: memref<1024x4xf32, #tpu.memory_space<vmem>>, %arg5: memref<4x1024xf32, #tpu.memory_space<vmem>>, %arg6: memref<8x1024xf32, #tpu.memory_space<vmem>>, %arg7: memref<8x1024xf32, #tpu.memory_space<vmem>>) attributes {dimension_semantics = [#tpu.dimension_semantics<parallel>], iteration_bounds = array<i64: 2>, scalar_prefetch = 0 : i64, scratch_operands = 0 : i64, tpu.core_type = #tpu.core_type<tc>, window_params = [{transform_indices = @transform_0, window_bounds = array<i64: 8, 960>}, {pipeline_mode = #tpu.pipeline_mode<synchronous>, transform_indices = @transform_1, window_bounds = array<i64: 960, 1024>}, {pipeline_mode = #tpu.pipeline_mode<synchronous>, transform_indices = @transform_2, window_bounds = array<i64: 1024, 1024>}, {pipeline_mode = #tpu.pipeline_mode<synchronous>, transform_indices = @transform_3, window_bounds = array<i64: 1024, 4>}, {pipeline_mode = #tpu.pipeline_mode<synchronous>, transform_indices = @transform_4, window_bounds = array<i64: 4, 1024>}, {pipeline_mode = #tpu.pipeline_mode<synchronous>, transform_indices = @transform_5, window_bounds = array<i64: 8, 1024>}, {transform_indices = @transform_6, window_bounds = array<i64: 8, 1024>}]} {
    %c0 = arith.constant 0 : index
    %c0_0 = arith.constant 0 : index
    %0 = vector.load %arg6[%c0, %c0_0] : memref<8x1024xf32, #tpu.memory_space<vmem>>, vector<8x1024xf32>
    %1 = vector.extract_strided_slice %0 {offsets = [0, 0], sizes = [1, 1024], strides = [1, 1]} : vector<8x1024xf32> to vector<1x1024xf32>
    %2 = vector.extract_strided_slice %0 {offsets = [1, 0], sizes = [1, 1024], strides = [1, 1]} : vector<8x1024xf32> to vector<1x1024xf32>
    %3 = vector.extract_strided_slice %0 {offsets = [2, 0], sizes = [1, 1024], strides = [1, 1]} : vector<8x1024xf32> to vector<1x1024xf32>
    %4 = vector.extract_strided_slice %0 {offsets = [3, 0], sizes = [1, 1024], strides = [1, 1]} : vector<8x1024xf32> to vector<1x1024xf32>
    %5 = vector.extract_strided_slice %0 {offsets = [4, 0], sizes = [1, 1024], strides = [1, 1]} : vector<8x1024xf32> to vector<1x1024xf32>
    %6 = vector.extract_strided_slice %0 {offsets = [5, 0], sizes = [1, 1024], strides = [1, 1]} : vector<8x1024xf32> to vector<1x1024xf32>
    %c0_1 = arith.constant 0 : index
    %c0_2 = arith.constant 0 : index
    %7 = vector.load %arg4[%c0_1, %c0_2] : memref<1024x4xf32, #tpu.memory_space<vmem>>, vector<1024x4xf32>
    %c0_3 = arith.constant 0 : index
    %c0_4 = arith.constant 0 : index
    %8 = vector.load %arg5[%c0_3, %c0_4] : memref<4x1024xf32, #tpu.memory_space<vmem>>, vector<4x1024xf32>
    %c0_5 = arith.constant 0 : index
    %c0_6 = arith.constant 0 : index
    %9 = vector.load %arg1[%c0_5, %c0_6] : memref<8x960xf32, #tpu.memory_space<vmem>>, vector<8x960xf32>
    %c0_7 = arith.constant 0 : index
    %c0_8 = arith.constant 0 : index
    %10 = vector.load %arg2[%c0_7, %c0_8] : memref<960x1024xf32, #tpu.memory_space<vmem>>, vector<960x1024xf32>
    %cst = arith.constant dense<0.000000e+00> : vector<8x1024xf32>
    %11 = tpu.matmul %9, %10, %cst {dimension_numbers = #tpu.dot_dimension_numbers<[1], [0], [0], [1], [0, 0, 1, 1], [], []>} : vector<8x960xf32>, vector<960x1024xf32>, vector<8x1024xf32> -> vector<8x1024xf32>
    %12 = vector.broadcast %1 : vector<1x1024xf32> to vector<8x1024xf32>
    %13 = arith.addf %11, %12 : vector<8x1024xf32>
    %cst_9 = arith.constant dense<0.000000e+00> : vector<8x4xf32>
    %14 = tpu.matmul %13, %7, %cst_9 {dimension_numbers = #tpu.dot_dimension_numbers<[1], [0], [0], [1], [0, 0, 1, 1], [], []>} : vector<8x1024xf32>, vector<1024x4xf32>, vector<8x4xf32> -> vector<8x4xf32>
    %cst_10 = arith.constant 3.906250e-03 : f32
    %15 = vector.broadcast %cst_10 : f32 to vector<8x4xf32>
    %16 = arith.mulf %14, %15 : vector<8x4xf32>
    %17 = arith.mulf %13, %13 : vector<8x1024xf32>
    %cst_11 = arith.constant dense<0.000000e+00> : vector<8x4xf32>
    %18 = tpu.matmul %17, %7, %cst_11 {dimension_numbers = #tpu.dot_dimension_numbers<[1], [0], [0], [1], [0, 0, 1, 1], [], []>} : vector<8x1024xf32>, vector<1024x4xf32>, vector<8x4xf32> -> vector<8x4xf32>
    %cst_12 = arith.constant 3.906250e-03 : f32
    %19 = vector.broadcast %cst_12 : f32 to vector<8x4xf32>
    %20 = arith.mulf %18, %19 : vector<8x4xf32>
    %21 = arith.mulf %16, %16 : vector<8x4xf32>
    %22 = arith.subf %20, %21 : vector<8x4xf32>
    %cst_13 = arith.constant 9.99999974E-6 : f32
    %23 = vector.broadcast %cst_13 : f32 to vector<8x4xf32>
    %24 = arith.addf %22, %23 : vector<8x4xf32>
    %25 = math.rsqrt %24 : vector<8x4xf32>
    %cst_14 = arith.constant dense<0.000000e+00> : vector<8x1024xf32>
    %26 = tpu.matmul %25, %8, %cst_14 {dimension_numbers = #tpu.dot_dimension_numbers<[1], [0], [0], [1], [0, 0, 1, 1], [], []>} : vector<8x4xf32>, vector<4x1024xf32>, vector<8x1024xf32> -> vector<8x1024xf32>
    %cst_15 = arith.constant dense<0.000000e+00> : vector<8x1024xf32>
    %27 = tpu.matmul %16, %8, %cst_15 {dimension_numbers = #tpu.dot_dimension_numbers<[1], [0], [0], [1], [0, 0, 1, 1], [], []>} : vector<8x4xf32>, vector<4x1024xf32>, vector<8x1024xf32> -> vector<8x1024xf32>
    %28 = vector.broadcast %2 : vector<1x1024xf32> to vector<8x1024xf32>
    %29 = arith.mulf %26, %28 : vector<8x1024xf32>
    %30 = arith.subf %13, %27 : vector<8x1024xf32>
    %31 = arith.mulf %30, %29 : vector<8x1024xf32>
    %32 = vector.broadcast %3 : vector<1x1024xf32> to vector<8x1024xf32>
    %33 = arith.addf %31, %32 : vector<8x1024xf32>
    %cst_16 = arith.constant 5.000000e-01 : f32
    %34 = vector.broadcast %cst_16 : f32 to vector<8x1024xf32>
    %35 = arith.mulf %34, %33 : vector<8x1024xf32>
    %36 = math.tanh %35 : vector<8x1024xf32>
    %cst_17 = arith.constant 1.000000e+00 : f32
    %37 = vector.broadcast %cst_17 : f32 to vector<8x1024xf32>
    %38 = arith.addf %37, %36 : vector<8x1024xf32>
    %cst_18 = arith.constant 5.000000e-01 : f32
    %39 = vector.broadcast %cst_18 : f32 to vector<8x1024xf32>
    %40 = arith.mulf %39, %38 : vector<8x1024xf32>
    %41 = arith.mulf %33, %40 : vector<8x1024xf32>
    %c0_19 = arith.constant 0 : index
    %c0_20 = arith.constant 0 : index
    %42 = vector.load %arg3[%c0_19, %c0_20] : memref<1024x1024xf32, #tpu.memory_space<vmem>>, vector<1024x1024xf32>
    %cst_21 = arith.constant dense<0.000000e+00> : vector<8x1024xf32>
    %43 = tpu.matmul %41, %42, %cst_21 {dimension_numbers = #tpu.dot_dimension_numbers<[1], [0], [0], [1], [0, 0, 1, 1], [], []>} : vector<8x1024xf32>, vector<1024x1024xf32>, vector<8x1024xf32> -> vector<8x1024xf32>
    %44 = vector.broadcast %4 : vector<1x1024xf32> to vector<8x1024xf32>
    %45 = arith.addf %43, %44 : vector<8x1024xf32>
    %cst_22 = arith.constant dense<0.000000e+00> : vector<8x4xf32>
    %46 = tpu.matmul %45, %7, %cst_22 {dimension_numbers = #tpu.dot_dimension_numbers<[1], [0], [0], [1], [0, 0, 1, 1], [], []>} : vector<8x1024xf32>, vector<1024x4xf32>, vector<8x4xf32> -> vector<8x4xf32>
    %cst_23 = arith.constant 3.906250e-03 : f32
    %47 = vector.broadcast %cst_23 : f32 to vector<8x4xf32>
    %48 = arith.mulf %46, %47 : vector<8x4xf32>
    %49 = arith.mulf %45, %45 : vector<8x1024xf32>
    %cst_24 = arith.constant dense<0.000000e+00> : vector<8x4xf32>
    %50 = tpu.matmul %49, %7, %cst_24 {dimension_numbers = #tpu.dot_dimension_numbers<[1], [0], [0], [1], [0, 0, 1, 1], [], []>} : vector<8x1024xf32>, vector<1024x4xf32>, vector<8x4xf32> -> vector<8x4xf32>
    %cst_25 = arith.constant 3.906250e-03 : f32
    %51 = vector.broadcast %cst_25 : f32 to vector<8x4xf32>
    %52 = arith.mulf %50, %51 : vector<8x4xf32>
    %53 = arith.mulf %48, %48 : vector<8x4xf32>
    %54 = arith.subf %52, %53 : vector<8x4xf32>
    %cst_26 = arith.constant 9.99999974E-6 : f32
    %55 = vector.broadcast %cst_26 : f32 to vector<8x4xf32>
    %56 = arith.addf %54, %55 : vector<8x4xf32>
    %57 = math.rsqrt %56 : vector<8x4xf32>
    %cst_27 = arith.constant dense<0.000000e+00> : vector<8x1024xf32>
    %58 = tpu.matmul %57, %8, %cst_27 {dimension_numbers = #tpu.dot_dimension_numbers<[1], [0], [0], [1], [0, 0, 1, 1], [], []>} : vector<8x4xf32>, vector<4x1024xf32>, vector<8x1024xf32> -> vector<8x1024xf32>
    %cst_28 = arith.constant dense<0.000000e+00> : vector<8x1024xf32>
    %59 = tpu.matmul %48, %8, %cst_28 {dimension_numbers = #tpu.dot_dimension_numbers<[1], [0], [0], [1], [0, 0, 1, 1], [], []>} : vector<8x4xf32>, vector<4x1024xf32>, vector<8x1024xf32> -> vector<8x1024xf32>
    %60 = vector.broadcast %5 : vector<1x1024xf32> to vector<8x1024xf32>
    %61 = arith.mulf %58, %60 : vector<8x1024xf32>
    %62 = arith.subf %45, %59 : vector<8x1024xf32>
    %63 = arith.mulf %62, %61 : vector<8x1024xf32>
    %64 = vector.broadcast %6 : vector<1x1024xf32> to vector<8x1024xf32>
    %65 = arith.addf %63, %64 : vector<8x1024xf32>
    %cst_29 = arith.constant 5.000000e-01 : f32
    %66 = vector.broadcast %cst_29 : f32 to vector<8x1024xf32>
    %67 = arith.mulf %66, %65 : vector<8x1024xf32>
    %68 = math.tanh %67 : vector<8x1024xf32>
    %cst_30 = arith.constant 1.000000e+00 : f32
    %69 = vector.broadcast %cst_30 : f32 to vector<8x1024xf32>
    %70 = arith.addf %69, %68 : vector<8x1024xf32>
    %cst_31 = arith.constant 5.000000e-01 : f32
    %71 = vector.broadcast %cst_31 : f32 to vector<8x1024xf32>
    %72 = arith.mulf %71, %70 : vector<8x1024xf32>
    %73 = arith.mulf %65, %72 : vector<8x1024xf32>
    %c0_32 = arith.constant 0 : index
    %c0_33 = arith.constant 0 : index
    %74 = vector.load %arg7[%c0_32, %c0_33] : memref<8x1024xf32, #tpu.memory_space<vmem>>, vector<8x1024xf32>
    tpu.vector_store %arg7[%c0_32, %c0_33], %73 {strides = array<i32>} : memref<8x1024xf32, #tpu.memory_space<vmem>>, vector<8x1024xf32>,
    return
  }
  func.func @transform_0(%arg0: i32) -> (i32, i32) {
    %c0_i32 = arith.constant 0 : i32
    %c0_i32_0 = arith.constant 0 : i32
    return %arg0, %c0_i32 : i32, i32
  }
  func.func @transform_1(%arg0: i32) -> (i32, i32) {
    %c0_i32 = arith.constant 0 : i32
    %c0_i32_0 = arith.constant 0 : i32
    %c0_i32_1 = arith.constant 0 : i32
    return %c0_i32, %c0_i32_0 : i32, i32
  }
  func.func @transform_2(%arg0: i32) -> (i32, i32) {
    %c0_i32 = arith.constant 0 : i32
    %c0_i32_0 = arith.constant 0 : i32
    %c0_i32_1 = arith.constant 0 : i32
    return %c0_i32, %c0_i32_0 : i32, i32
  }
  func.func @transform_3(%arg0: i32) -> (i32, i32) {
    %c0_i32 = arith.constant 0 : i32
    %c0_i32_0 = arith.constant 0 : i32
    %c0_i32_1 = arith.constant 0 : i32
    return %c0_i32, %c0_i32_0 : i32, i32
  }
  func.func @transform_4(%arg0: i32) -> (i32, i32) {
    %c0_i32 = arith.constant 0 : i32
    %c0_i32_0 = arith.constant 0 : i32
    %c0_i32_1 = arith.constant 0 : i32
    return %c0_i32, %c0_i32_0 : i32, i32
  }
  func.func @transform_5(%arg0: i32) -> (i32, i32) {
    %c0_i32 = arith.constant 0 : i32
    %c0_i32_0 = arith.constant 0 : i32
    %c0_i32_1 = arith.constant 0 : i32
    return %c0_i32, %c0_i32_0 : i32, i32
  }
  func.func @transform_6(%arg0: i32) -> (i32, i32) {
    %c0_i32 = arith.constant 0 : i32
    %c0_i32_0 = arith.constant 0 : i32
    return %arg0, %c0_i32 : i32, i32
  }
}

</mosaic_0001>

<llo_original>
// kernel: tpu_custom_call.1
$region0: #{tpu_custom_call.1}
  #allocation0 [shape = 'u32[]', space=smem, size = 0x4, offset = 0x4, fixed_abs, tag = 'smem constant byte address 0x4 - core index']
  #allocation1 [shape = 'u32[144,128]{1,0:T(1,128)}', space=vmem, size = 0x12000, scoped, tag = 'internal scratch']
  %s0 = inlined_call_operand.hbm [shape: f32[16,960], index: 0, kind: input, shape index: {}]
  %s1 = inlined_call_operand.hbm [shape: f32[960,1024], index: 1, kind: input, shape index: {}]
  %s2 = inlined_call_operand.hbm [shape: f32[1024,1024], index: 2, kind: input, shape index: {}]
  %s3 = inlined_call_operand.vmem [shape: f32[1024,4], index: 3, kind: input, shape index: {}]
  %s4 = inlined_call_operand.hbm [shape: f32[4,1024], index: 4, kind: input, shape index: {}]
  %s5 = inlined_call_operand.hbm [shape: f32[8,1024], index: 5, kind: input, shape index: {}]
  %s6 = inlined_call_operand.hbm [shape: f32[16,1024], index: 6, kind: output, shape index: {}]
  %s7 = sld [smem:[#allocation0]]
  $region77: #{tpu_custom_call.1} parent=0
    _
  %s9 = ssub.s32 1, %s7
  %s10 = scalar_select 0, %s9, %s7
  $region1: #{tpu_custom_call.1} parent=0
    #allocation2 [shape = 'u8[65536]{0}', space=vmem, size = 0x10000, scoped, tag = 'input window, operand 0']
    #allocation3 [shape = 's32[2]{0}', space=sflag, size = 0x8, scoped, tag = 'scoped memory for tpu_custom_call.1']
    #allocation4 [shape = 's32[2]{0}', space=sflag, size = 0x8, scoped, tag = 'scoped memory for tpu_custom_call.1']
    #allocation5 [shape = 'u8[3932160]{0}', space=vmem, size = 0x3c0000, scoped, tag = 'input window, operand 1, single buffered']
    #allocation6 [shape = 's32[1]{0}', space=sflag, size = 0x4, scoped, tag = 'scoped memory for tpu_custom_call.1']
    #allocation7 [shape = 'u8[4194304]{0}', space=vmem, size = 0x400000, scoped, tag = 'input window, operand 2, single buffered']
    #allocation8 [shape = 'u8[16384]{0}', space=vmem, size = 0x4000, scoped, tag = 'input window, operand 4, single buffered']
    #allocation9 [shape = 's32[1]{0}', space=sflag, size = 0x4, scoped, tag = 'scoped memory for tpu_custom_call.1']
    #allocation10 [shape = 'u8[32768]{0}', space=vmem, size = 0x8000, scoped, tag = 'input window, operand 5, single buffered']
    #allocation11 [shape = 'u8[65536]{0}', space=vmem, size = 0x10000, scoped, tag = 'output window, operand 0']
    %11 = vsyncpa [#allocation3], 0
    %s12 = scalar_lea.sflag [#allocation3], 1
    %13 = vsyncpa %s12, 0
    %14 = vsyncpa [#allocation6], 0
    %15 = vsyncpa [#allocation9], 0
    %16 = vsyncpa [#allocation4], 0
    %s17 = scalar_lea.sflag [#allocation4], 1
    %18 = vsyncpa %s17, 0
    loop: start=0, step=1, limit=4
    $region2: #{tpu_custom_call.1} parent=1 // loop_pre_header
      _
    $region3: #{tpu_custom_call.1} parent=1 // loop_header
      %s20 = sphi 0, %s24
      %p21 = scmp.ge.s32.totalorder %s20, 4
      %s30 = sphi 0, %s32
      %s33 = sphi 0, %s30
      %s34 = sphi 0, %s33
      %s50 = sphi 0, %s34
      %s54 = sphi 0, %s54
      %s56 = sphi 0, %s54
      %s57 = sphi 0, %s56
      %s71 = sphi 0, %s57
      %s75 = sphi 0, %s75
      %s77 = sphi 0, %s75
      %s78 = sphi 0, %s77
      %s92 = sphi 0, %s78
      %s96 = sphi 0, %s96
      %s98 = sphi 0, %s96
      %s99 = sphi 0, %s98
      %s113 = sphi 0, %s99
      %s117 = sphi 0, %s117
      %s119 = sphi 0, %s117
      %s120 = sphi 0, %s119
      %s134 = sphi 0, %s120
      %s138 = sphi 0, %s138
      %s140 = sphi 0, %s138
      %s141 = sphi 0, %s140
      %s155 = sphi 0, %s141
      %s161 = sphi 0, %s163
      %s164 = sphi 0, %s161
      %s165 = sphi 0, %s164
      %s181 = sphi 0, %s165
    $region4: #{tpu_custom_call.1} parent=1 // loop_header_branch
      %23 = sbr.rel (%p21) target = $region8
    $region5: #{tpu_custom_call.1} parent=1 // loop_body
      %s25 = ssub.s32 %s20, 1
      %s26 = ssub.s32 %s20, 2
      %s27 = sadd.s32 %s20, 1
      %s28 = ssub.s32 %s20, %s27
      %p29 = scmp.eq.s32.totalorder %s28, 0
      %s31 = sadd.s32 %s30, 1
      %s32 = scalar_select %p29, %s30, %s31
      %p35 = pneg %p29
      %p36 = scmp.eq.s32.totalorder %s20, 1
      %p37 = por %p35, %p36
      %p38 = scmp.ne.s32.totalorder %s30, %s33
      %p39 = scmp.eq.s32.totalorder %s20, 0
      %p40 = por %p38, %p39
      %p41 = scmp.ne.s32.totalorder %s30, %s33
      %p42 = scmp.eq.s32.totalorder %s25, 1
      %p43 = por %p41, %p42
      %p44 = scmp.ne.s32.totalorder %s33, %s34
      %p45 = scmp.eq.s32.totalorder %s25, 0
      %p46 = por %p44, %p45
      %p47 = scmp.ne.s32.totalorder %s33, %s34
      %p48 = scmp.eq.s32.totalorder %s26, 1
      %p49 = por %p47, %p48
      %p51 = scmp.ne.s32.totalorder %s34, %s50
      %p52 = scmp.eq.s32.totalorder %s26, 0
      %p53 = por %p51, %p52
      %s55 = sadd.s32 %s54, 1
      %p58 = scmp.eq.s32.totalorder %s20, 1
      %p59 = scmp.ne.s32.totalorder %s54, %s56
      %p60 = scmp.eq.s32.totalorder %s20, 0
      %p61 = por %p59, %p60
      %p62 = scmp.ne.s32.totalorder %s54, %s56
      %p63 = scmp.eq.s32.totalorder %s25, 1
      %p64 = por %p62, %p63
      %p65 = scmp.ne.s32.totalorder %s56, %s57
      %p66 = scmp.eq.s32.totalorder %s25, 0
      %p67 = por %p65, %p66
      %p68 = scmp.ne.s32.totalorder %s56, %s57
      %p69 = scmp.eq.s32.totalorder %s26, 1
      %p70 = por %p68, %p69
      %p72 = scmp.ne.s32.totalorder %s57, %s71
      %p73 = scmp.eq.s32.totalorder %s26, 0
      %p74 = por %p72, %p73
      %s76 = sadd.s32 %s75, 1
      %p79 = scmp.eq.s32.totalorder %s20, 1
      %p80 = scmp.ne.s32.totalorder %s75, %s77
      %p81 = scmp.eq.s32.totalorder %s20, 0
      %p82 = por %p80, %p81
      %p83 = scmp.ne.s32.totalorder %s75, %s77
      %p84 = scmp.eq.s32.totalorder %s25, 1
      %p85 = por %p83, %p84
      %p86 = scmp.ne.s32.totalorder %s77, %s78
      %p87 = scmp.eq.s32.totalorder %s25, 0
      %p88 = por %p86, %p87
      %p89 = scmp.ne.s32.totalorder %s77, %s78
      %p90 = scmp.eq.s32.totalorder %s26, 1
      %p91 = por %p89, %p90
      %p93 = scmp.ne.s32.totalorder %s78, %s92
      %p94 = scmp.eq.s32.totalorder %s26, 0
      %p95 = por %p93, %p94
      %s97 = sadd.s32 %s96, 1
      %p100 = scmp.eq.s32.totalorder %s20, 1
      %p101 = scmp.ne.s32.totalorder %s96, %s98
      %p102 = scmp.eq.s32.totalorder %s20, 0
      %p103 = por %p101, %p102
      %p104 = scmp.ne.s32.totalorder %s96, %s98
      %p105 = scmp.eq.s32.totalorder %s25, 1
      %p106 = por %p104, %p105
      %p107 = scmp.ne.s32.totalorder %s98, %s99
      %p108 = scmp.eq.s32.totalorder %s25, 0
      %p109 = por %p107, %p108
      %p110 = scmp.ne.s32.totalorder %s98, %s99
      %p111 = scmp.eq.s32.totalorder %s26, 1
      %p112 = por %p110, %p111
      %p114 = scmp.ne.s32.totalorder %s99, %s113
      %p115 = scmp.eq.s32.totalorder %s26, 0
      %p116 = por %p114, %p115
      %s118 = sadd.s32 %s117, 1
      %p121 = scmp.eq.s32.totalorder %s20, 1
      %p122 = scmp.ne.s32.totalorder %s117, %s119
      %p123 = scmp.eq.s32.totalorder %s20, 0
      %p124 = por %p122, %p123
      %p125 = scmp.ne.s32.totalorder %s117, %s119
      %p126 = scmp.eq.s32.totalorder %s25, 1
      %p127 = por %p125, %p126
      %p128 = scmp.ne.s32.totalorder %s119, %s120
      %p129 = scmp.eq.s32.totalorder %s25, 0
      %p130 = por %p128, %p129
      %p131 = scmp.ne.s32.totalorder %s119, %s120
      %p132 = scmp.eq.s32.totalorder %s26, 1
      %p133 = por %p131, %p132
      %p135 = scmp.ne.s32.totalorder %s120, %s134
      %p136 = scmp.eq.s32.totalorder %s26, 0
      %p137 = por %p135, %p136
      %s139 = sadd.s32 %s138, 1
      %p142 = scmp.eq.s32.totalorder %s20, 1
      %p143 = scmp.ne.s32.totalorder %s138, %s140
      %p144 = scmp.eq.s32.totalorder %s20, 0
      %p145 = por %p143, %p144
      %p146 = scmp.ne.s32.totalorder %s138, %s140
      %p147 = scmp.eq.s32.totalorder %s25, 1
      %p148 = por %p146, %p147
      %p149 = scmp.ne.s32.totalorder %s140, %s141
      %p150 = scmp.eq.s32.totalorder %s25, 0
      %p151 = por %p149, %p150
      %p152 = scmp.ne.s32.totalorder %s140, %s141
      %p153 = scmp.eq.s32.totalorder %s26, 1
      %p154 = por %p152, %p153
      %p156 = scmp.ne.s32.totalorder %s141, %s155
      %p157 = scmp.eq.s32.totalorder %s26, 0
      %p158 = por %p156, %p157
      %s159 = ssub.s32 %s20, %s27
      %p160 = scmp.eq.s32.totalorder %s159, 0
      %s162 = sadd.s32 %s161, 1
      %s163 = scalar_select %p160, %s161, %s162
      %p166 = pneg %p160
      %p167 = scmp.eq.s32.totalorder %s20, 1
      %p168 = por %p166, %p167
      %p169 = scmp.ne.s32.totalorder %s161, %s164
      %p170 = scmp.eq.s32.totalorder %s20, 0
      %p171 = por %p169, %p170
      %p172 = scmp.ne.s32.totalorder %s161, %s164
      %p173 = scmp.eq.s32.totalorder %s25, 1
      %p174 = por %p172, %p173
      %p175 = scmp.ne.s32.totalorder %s164, %s165
      %p176 = scmp.eq.s32.totalorder %s25, 0
      %p177 = por %p175, %p176
      %p178 = scmp.ne.s32.totalorder %s164, %s165
      %p179 = scmp.eq.s32.totalorder %s26, 1
      %p180 = por %p178, %p179
      %p182 = scmp.ne.s32.totalorder %s165, %s181
      %p183 = scmp.eq.s32.totalorder %s26, 0
      %p184 = por %p182, %p183
      %p185 = scmp.le.s32.totalorder 1, %s20
      %p186 = scmp.lt.s32.totalorder %s20, 3
      %p187 = pnand %p185, %p186
      %p188 = pneg %p187
      // Predicated region
      $region9: #{tpu_custom_call.1} parent=5 // pred_check
        _
      $region10: #{tpu_custom_call.1} parent=5 // pred_check_branch
        %190 = sbr.rel (%p187) target = $region12
      $region11: #{tpu_custom_call.1} parent=5 // pred_region
        %s191 = ssub.s32 %s20, 1
        // Predicated region
        $region13: #{tpu_custom_call.1} parent=11 // pred_check
          %p192 = pneg %p67
        $region14: #{tpu_custom_call.1} parent=11 // pred_check_branch
          %194 = sbr.rel (%p192) target = $region16
        $region15: #{tpu_custom_call.1} parent=11 // pred_region
          %s196 = ssub.s32 122880, 122880
          %197 = vsyncadd [#allocation6], %s196
          %s198 = sshll.u32 [#allocation5], 4
          %s199 = int_to_ptr.vmem [resolvable:$true] %s198
          %204 = dma.hbm_to_vmem [thread:$0]  %s1, 122880, %s199, [#allocation6], 1024, 1024, 64
        $region16: #{tpu_custom_call.1} parent=11 // pred_fallthru
          _
        // Predicated region
        $region17: #{tpu_custom_call.1} parent=11 // pred_check
          %p205 = pneg %p88
        $region18: #{tpu_custom_call.1} parent=11 // pred_check_branch
          %207 = sbr.rel (%p205) target = $region20
        $region19: #{tpu_custom_call.1} parent=11 // pred_region
          %s209 = ssub.s32 131072, 131072
          %210 = vsyncadd [#allocation6], %s209
          %s211 = sshll.u32 [#allocation7], 4
          %s212 = int_to_ptr.vmem [resolvable:$true] %s211
          %217 = dma.hbm_to_vmem [thread:$0]  %s2, 131072, %s212, [#allocation6], 1024, 1024, 64
        $region20: #{tpu_custom_call.1} parent=11 // pred_fallthru
          _
        // Predicated region
        $region21: #{tpu_custom_call.1} parent=11 // pred_check
          %p218 = pneg %p109
        $region22: #{tpu_custom_call.1} parent=11 // pred_check_branch
          %220 = sbr.rel (%p218) target = $region24
        $region23: #{tpu_custom_call.1} parent=11 // pred_region
          _
        $region24: #{tpu_custom_call.1} parent=11 // pred_fallthru
          _
        // Predicated region
        $region25: #{tpu_custom_call.1} parent=11 // pred_check
          %p221 = pneg %p130
        $region26: #{tpu_custom_call.1} parent=11 // pred_check_branch
          %223 = sbr.rel (%p221) target = $region28
        $region27: #{tpu_custom_call.1} parent=11 // pred_region
          %s225 = ssub.s32 512, 512
          %226 = vsyncadd [#allocation9], %s225
          %s228 = sshll.u32 [#allocation8], 4
          %s229 = int_to_ptr.vmem [resolvable:$true] %s228
          %231 = dma.hbm_to_vmem [thread:$0]  %s4, 512, %s229, [#allocation9]
        $region28: #{tpu_custom_call.1} parent=11 // pred_fallthru
          _
        // Predicated region
        $region29: #{tpu_custom_call.1} parent=11 // pred_check
          %p232 = pneg %p151
        $region30: #{tpu_custom_call.1} parent=11 // pred_check_branch
          %234 = sbr.rel (%p232) target = $region32
        $region31: #{tpu_custom_call.1} parent=11 // pred_region
          %s236 = ssub.s32 1024, 1024
          %237 = vsyncadd [#allocation9], %s236
          %s239 = sshll.u32 [#allocation10], 4
          %s240 = int_to_ptr.vmem [resolvable:$true] %s239
          %242 = dma.hbm_to_vmem [thread:$0]  %s5, 1024, %s240, [#allocation9]
        $region32: #{tpu_custom_call.1} parent=11 // pred_fallthru
          _
      $region12: #{tpu_custom_call.1} parent=5 // pred_fallthru
        _
      %p243 = scmp.lt.s32.totalorder %s20, 2
      // Predicated region
      $region33: #{tpu_custom_call.1} parent=5 // pred_check
        %p244 = pneg %p243
      $region34: #{tpu_custom_call.1} parent=5 // pred_check_branch
        %246 = sbr.rel (%p244) target = $region36
      $region35: #{tpu_custom_call.1} parent=5 // pred_region
        // Predicated region
        $region37: #{tpu_custom_call.1} parent=35 // pred_check
          %p247 = pneg %p40
        $region38: #{tpu_custom_call.1} parent=35 // pred_check_branch
          %249 = sbr.rel (%p247) target = $region40
        $region39: #{tpu_custom_call.1} parent=35 // pred_region
          %s250 = sand.u32 %s30, 1
          %s251 = scalar_lea.sflag [#allocation3], %s250
          %s252 = sand.u32 %s30, 1
          %s253 = smul.addr %s252, 64
          %s254 = scalar_lea.vmem [#allocation2], %s253
          %s256 = ssub.s32 1024, 1024
          %257 = vsyncadd %s251, %s256
          %s258 = smul.addr %s20, 8
          %s259 = smul.addr %s258, 128
          %s260 = scalar_lea.hbm %s0, %s259
          %s262 = sshll.u32 %s254, 4
          %s263 = int_to_ptr.vmem [resolvable:$true] %s262
          %265 = dma.hbm_to_vmem [thread:$0]  %s260, 1024, %s263, %s251
        $region40: #{tpu_custom_call.1} parent=35 // pred_fallthru
          _
      $region36: #{tpu_custom_call.1} parent=5 // pred_fallthru
        _
      %p266 = scmp.le.s32.totalorder 1, %s20
      %p267 = scmp.lt.s32.totalorder %s20, 3
      %p268 = pnand %p266, %p267
      %p269 = pneg %p268
      // Predicated region
      $region41: #{tpu_custom_call.1} parent=5 // pred_check
        _
      $region42: #{tpu_custom_call.1} parent=5 // pred_check_branch
        %271 = sbr.rel (%p268) target = $region44
      $region43: #{tpu_custom_call.1} parent=5 // pred_region
        %s272 = ssub.s32 %s20, 1
        %s273 = sand.u32 %s33, 1
        %s274 = scalar_lea.sflag [#allocation3], %s273
        %s275 = sand.u32 %s33, 1
        %s276 = smul.addr %s275, 64
        %s277 = scalar_lea.vmem [#allocation2], %s276
        // Predicated region
        $region45: #{tpu_custom_call.1} parent=43 // pred_check
          %p278 = pneg %p46
        $region46: #{tpu_custom_call.1} parent=43 // pred_check_branch
          %280 = sbr.rel (%p278) target = $region48
        $region47: #{tpu_custom_call.1} parent=43 // pred_region
          %281 = dma.done %s274, 1024
        $region48: #{tpu_custom_call.1} parent=43 // pred_fallthru
          _
        // Predicated region
        $region49: #{tpu_custom_call.1} parent=43 // pred_check
          %p282 = pneg %p67
        $region50: #{tpu_custom_call.1} parent=43 // pred_check_branch
          %284 = sbr.rel (%p282) target = $region52
        $region51: #{tpu_custom_call.1} parent=43 // pred_region
          %285 = dma.done [#allocation6], 122880
        $region52: #{tpu_custom_call.1} parent=43 // pred_fallthru
          _
        // Predicated region
        $region53: #{tpu_custom_call.1} parent=43 // pred_check
          %p286 = pneg %p88
        $region54: #{tpu_custom_call.1} parent=43 // pred_check_branch
          %288 = sbr.rel (%p286) target = $region56
        $region55: #{tpu_custom_call.1} parent=43 // pred_region
          %289 = dma.done [#allocation6], 131072
        $region56: #{tpu_custom_call.1} parent=43 // pred_fallthru
          _
        // Predicated region
        $region57: #{tpu_custom_call.1} parent=43 // pred_check
          %p290 = pneg %p130
        $region58: #{tpu_custom_call.1} parent=43 // pred_check_branch
          %292 = sbr.rel (%p290) target = $region60
        $region59: #{tpu_custom_call.1} parent=43 // pred_region
          %293 = dma.done [#allocation9], 512
        $region60: #{tpu_custom_call.1} parent=43 // pred_fallthru
          _
        // Predicated region
        $region61: #{tpu_custom_call.1} parent=43 // pred_check
          %p294 = pneg %p151
        $region62: #{tpu_custom_call.1} parent=43 // pred_check_branch
          %296 = sbr.rel (%p294) target = $region64
        $region63: #{tpu_custom_call.1} parent=43 // pred_region
          %297 = dma.done [#allocation9], 1024
        $region64: #{tpu_custom_call.1} parent=43 // pred_fallthru
          _
        %s298 = sand.u32 %s33, 1
        %s299 = scalar_lea.sflag [#allocation3], %s298
        %s300 = sand.u32 %s33, 1
        %s301 = smul.addr %s300, 64
        %s302 = scalar_lea.vmem [#allocation2], %s301
        %p303 = pneg %p46
        %p304 = pneg %p43
        %p305 = pneg %p67
        %p306 = pneg %p64
        %p307 = pneg %p88
        %p308 = pneg %p85
        %p309 = pneg %p109
        %p310 = pneg %p106
        %p311 = pneg %p130
        %p312 = pneg %p127
        %p313 = pneg %p151
        %p314 = pneg %p148
        %p315 = pneg %p177
        %p316 = pneg %p174
        %s317 = sand.u32 %s164, 1
        %s318 = scalar_lea.sflag [#allocation4], %s317
        %s319 = sand.u32 %s164, 1
        %s320 = smul.addr %s319, 64
        %s321 = scalar_lea.vmem [#allocation11], %s320
        %v322 = vld [vmem:[#allocation10] sm:$0xff]
        %v323 = vld [vmem:[#allocation10 + $0x8] sm:$0xff]
        %v324 = vld [vmem:[#allocation10 + $0x10] sm:$0xff]
        %v325 = vld [vmem:[#allocation10 + $0x18] sm:$0xff]
        %v326 = vld [vmem:[#allocation10 + $0x20] sm:$0xff]
        %v327 = vld [vmem:[#allocation10 + $0x28] sm:$0xff]
        %v328 = vld [vmem:[#allocation10 + $0x30] sm:$0xff]
        %v329 = vld [vmem:[#allocation10 + $0x38] sm:$0xff]
        %v330 = vld [vmem:[%s3] sm:$0xff]
        %v331 = vld [vmem:[%s3 + $0x8] sm:$0xff]
        %v332 = vld [vmem:[%s3 + $0x10] sm:$0xff]
        %v333 = vld [vmem:[%s3 + $0x18] sm:$0xff]
        %v334 = vld [vmem:[%s3 + $0x20] sm:$0xff]
        %v335 = vld [vmem:[%s3 + $0x28] sm:$0xff]
        %v336 = vld [vmem:[%s3 + $0x30] sm:$0xff]
        %v337 = vld [vmem:[%s3 + $0x38] sm:$0xff]
        %v338 = vld [vmem:[%s3 + $0x40] sm:$0xff]
        %v339 = vld [vmem:[%s3 + $0x48] sm:$0xff]
        %v340 = vld [vmem:[%s3 + $0x50] sm:$0xff]
        %v341 = vld [vmem:[%s3 + $0x58] sm:$0xff]
        %v342 = vld [vmem:[%s3 + $0x60] sm:$0xff]
        %v343 = vld [vmem:[%s3 + $0x68] sm:$0xff]
        %v344 = vld [vmem:[%s3 + $0x70] sm:$0xff]
        %v345 = vld [vmem:[%s3 + $0x78] sm:$0xff]
        %v346 = vld [vmem:[%s3 + $0x80] sm:$0xff]
        %v347 = vld [vmem:[%s3 + $0x88] sm:$0xff]
        %v348 = vld [vmem:[%s3 + $0x90] sm:$0xff]
        %v349 = vld [vmem:[%s3 + $0x98] sm:$0xff]
        %v350 = vld [vmem:[%s3 + $0xa0] sm:$0xff]
        %v351 = vld [vmem:[%s3 + $0xa8] sm:$0xff]
        %v352 = vld [vmem:[%s3 + $0xb0] sm:$0xff]
        %v353 = vld [vmem:[%s3 + $0xb8] sm:$0xff]
        %v354 = vld [vmem:[%s3 + $0xc0] sm:$0xff]
        %v355 = vld [vmem:[%s3 + $0xc8] sm:$0xff]
        %v356 = vld [vmem:[%s3 + $0xd0] sm:$0xff]
        %v357 = vld [vmem:[%s3 + $0xd8] sm:$0xff]
        %v358 = vld [vmem:[%s3 + $0xe0] sm:$0xff]
        %v359 = vld [vmem:[%s3 + $0xe8] sm:$0xff]
        %v360 = vld [vmem:[%s3 + $0xf0] sm:$0xff]
        %v361 = vld [vmem:[%s3 + $0xf8] sm:$0xff]
        %v362 = vld [vmem:[%s3 + $0x100] sm:$0xff]
        %v363 = vld [vmem:[%s3 + $0x108] sm:$0xff]
        %v364 = vld [vmem:[%s3 + $0x110] sm:$0xff]
        %v365 = vld [vmem:[%s3 + $0x118] sm:$0xff]
        %v366 = vld [vmem:[%s3 + $0x120] sm:$0xff]
        %v367 = vld [vmem:[%s3 + $0x128] sm:$0xff]
        %v368 = vld [vmem:[%s3 + $0x130] sm:$0xff]
        %v369 = vld [vmem:[%s3 + $0x138] sm:$0xff]
        %v370 = vld [vmem:[%s3 + $0x140] sm:$0xff]
        %v371 = vld [vmem:[%s3 + $0x148] sm:$0xff]
        %v372 = vld [vmem:[%s3 + $0x150] sm:$0xff]
        %v373 = vld [vmem:[%s3 + $0x158] sm:$0xff]
        %v374 = vld [vmem:[%s3 + $0x160] sm:$0xff]
        %v375 = vld [vmem:[%s3 + $0x168] sm:$0xff]
        %v376 = vld [vmem:[%s3 + $0x170] sm:$0xff]
        %v377 = vld [vmem:[%s3 + $0x178] sm:$0xff]
        %v378 = vld [vmem:[%s3 + $0x180] sm:$0xff]
        %v379 = vld [vmem:[%s3 + $0x188] sm:$0xff]
        %v380 = vld [vmem:[%s3 + $0x190] sm:$0xff]
        %v381 = vld [vmem:[%s3 + $0x198] sm:$0xff]
        %v382 = vld [vmem:[%s3 + $0x1a0] sm:$0xff]
        %v383 = vld [vmem:[%s3 + $0x1a8] sm:$0xff]
        %v384 = vld [vmem:[%s3 + $0x1b0] sm:$0xff]
        %v385 = vld [vmem:[%s3 + $0x1b8] sm:$0xff]
        %v386 = vld [vmem:[%s3 + $0x1c0] sm:$0xff]
        %v387 = vld [vmem:[%s3 + $0x1c8] sm:$0xff]
        %v388 = vld [vmem:[%s3 + $0x1d0] sm:$0xff]
        %v389 = vld [vmem:[%s3 + $0x1d8] sm:$0xff]
        %v390 = vld [vmem:[%s3 + $0x1e0] sm:$0xff]
        %v391 = vld [vmem:[%s3 + $0x1e8] sm:$0xff]
        %v392 = vld [vmem:[%s3 + $0x1f0] sm:$0xff]
        %v393 = vld [vmem:[%s3 + $0x1f8] sm:$0xff]
        %v394 = vld [vmem:[%s3 + $0x200] sm:$0xff]
        %v395 = vld [vmem:[%s3 + $0x208] sm:$0xff]
        %v396 = vld [vmem:[%s3 + $0x210] sm:$0xff]
        %v397 = vld [vmem:[%s3 + $0x218] sm:$0xff]
        %v398 = vld [vmem:[%s3 + $0x220] sm:$0xff]
        %v399 = vld [vmem:[%s3 + $0x228] sm:$0xff]
        %v400 = vld [vmem:[%s3 + $0x230] sm:$0xff]
        %v401 = vld [vmem:[%s3 + $0x238] sm:$0xff]
        %v402 = vld [vmem:[%s3 + $0x240] sm:$0xff]
        %v403 = vld [vmem:[%s3 + $0x248] sm:$0xff]
        %v404 = vld [vmem:[%s3 + $0x250] sm:$0xff]
        %v405 = vld [vmem:[%s3 + $0x258] sm:$0xff]
        %v406 = vld [vmem:[%s3 + $0x260] sm:$0xff]
        %v407 = vld [vmem:[%s3 + $0x268] sm:$0xff]
        %v408 = vld [vmem:[%s3 + $0x270] sm:$0xff]
        %v409 = vld [vmem:[%s3 + $0x278] sm:$0xff]
        %v410 = vld [vmem:[%s3 + $0x280] sm:$0xff]
        %v411 = vld [vmem:[%s3 + $0x288] sm:$0xff]
        %v412 = vld [vmem:[%s3 + $0x290] sm:$0xff]
        %v413 = vld [vmem:[%s3 + $0x298] sm:$0xff]
        %v414 = vld [vmem:[%s3 + $0x2a0] sm:$0xff]
        %v415 = vld [vmem:[%s3 + $0x2a8] sm:$0xff]
        %v416 = vld [vmem:[%s3 + $0x2b0] sm:$0xff]
        %v417 = vld [vmem:[%s3 + $0x2b8] sm:$0xff]
        %v418 = vld [vmem:[%s3 + $0x2c0] sm:$0xff]
        %v419 = vld [vmem:[%s3 + $0x2c8] sm:$0xff]
        %v420 = vld [vmem:[%s3 + $0x2d0] sm:$0xff]
        %v421 = vld [vmem:[%s3 + $0x2d8] sm:$0xff]
        %v422 = vld [vmem:[%s3 + $0x2e0] sm:$0xff]
        %v423 = vld [vmem:[%s3 + $0x2e8] sm:$0xff]
        %v424 = vld [vmem:[%s3 + $0x2f0] sm:$0xff]
        %v425 = vld [vmem:[%s3 + $0x2f8] sm:$0xff]
        %v426 = vld [vmem:[%s3 + $0x300] sm:$0xff]
        %v427 = vld [vmem:[%s3 + $0x308] sm:$0xff]
        %v428 = vld [vmem:[%s3 + $0x310] sm:$0xff]
        %v429 = vld [vmem:[%s3 + $0x318] sm:$0xff]
        %v430 = vld [vmem:[%s3 + $0x320] sm:$0xff]
        %v431 = vld [vmem:[%s3 + $0x328] sm:$0xff]
        %v432 = vld [vmem:[%s3 + $0x330] sm:$0xff]
        %v433 = vld [vmem:[%s3 + $0x338] sm:$0xff]
        %v434 = vld [vmem:[%s3 + $0x340] sm:$0xff]
        %v435 = vld [vmem:[%s3 + $0x348] sm:$0xff]
        %v436 = vld [vmem:[%s3 + $0x350] sm:$0xff]
        %v437 = vld [vmem:[%s3 + $0x358] sm:$0xff]
        %v438 = vld [vmem:[%s3 + $0x360] sm:$0xff]
        %v439 = vld [vmem:[%s3 + $0x368] sm:$0xff]
        %v440 = vld [vmem:[%s3 + $0x370] sm:$0xff]
        %v441 = vld [vmem:[%s3 + $0x378] sm:$0xff]
        %v442 = vld [vmem:[%s3 + $0x380] sm:$0xff]
        %v443 = vld [vmem:[%s3 + $0x388] sm:$0xff]
        %v444 = vld [vmem:[%s3 + $0x390] sm:$0xff]
        %v445 = vld [vmem:[%s3 + $0x398] sm:$0xff]
        %v446 = vld [vmem:[%s3 + $0x3a0] sm:$0xff]
        %v447 = vld [vmem:[%s3 + $0x3a8] sm:$0xff]
        %v448 = vld [vmem:[%s3 + $0x3b0] sm:$0xff]
        %v449 = vld [vmem:[%s3 + $0x3b8] sm:$0xff]
        %v450 = vld [vmem:[%s3 + $0x3c0] sm:$0xff]
        %v451 = vld [vmem:[%s3 + $0x3c8] sm:$0xff]
        %v452 = vld [vmem:[%s3 + $0x3d0] sm:$0xff]
        %v453 = vld [vmem:[%s3 + $0x3d8] sm:$0xff]
        %v454 = vld [vmem:[%s3 + $0x3e0] sm:$0xff]
        %v455 = vld [vmem:[%s3 + $0x3e8] sm:$0xff]
        %v456 = vld [vmem:[%s3 + $0x3f0] sm:$0xff]
        %v457 = vld [vmem:[%s3 + $0x3f8] sm:$0xff]
        %v458 = vld [vmem:[#allocation8] sm:$0xff]
        %v459 = vld [vmem:[#allocation8 + $0x8] sm:$0xff]
        %v460 = vld [vmem:[#allocation8 + $0x10] sm:$0xff]
        %v461 = vld [vmem:[#allocation8 + $0x18] sm:$0xff]
        %v462 = vld [vmem:[%s277] sm:$0xff]
        %v463 = vld [vmem:[%s277 + $0x8] sm:$0xff]
        %v464 = vld [vmem:[%s277 + $0x10] sm:$0xff]
        %v465 = vld [vmem:[%s277 + $0x18] sm:$0xff]
        %v466 = vld [vmem:[%s277 + $0x20] sm:$0xff]
        %v467 = vld [vmem:[%s277 + $0x28] sm:$0xff]
        %v468 = vld [vmem:[%s277 + $0x30] sm:$0xff]
        %v469 = vld [vmem:[%s277 + $0x38] sm:$0xff]
        %v470 = vld [vmem:[#allocation5] sm:$0xff]
        %v471 = vld [vmem:[#allocation5 + $0x8] sm:$0xff]
        %v472 = vld [vmem:[#allocation5 + $0x10] sm:$0xff]
        %v473 = vld [vmem:[#allocation5 + $0x18] sm:$0xff]
        %v474 = vld [vmem:[#allocation5 + $0x20] sm:$0xff]
        %v475 = vld [vmem:[#allocation5 + $0x28] sm:$0xff]
        %v476 = vld [vmem:[#allocation5 + $0x30] sm:$0xff]
        %v477 = vld [vmem:[#allocation5 + $0x38] sm:$0xff]
        %v478 = vld [vmem:[#allocation5 + $0x40] sm:$0xff]
        %v479 = vld [vmem:[#allocation5 + $0x48] sm:$0xff]
        %v480 = vld [vmem:[#allocation5 + $0x50] sm:$0xff]
        %v481 = vld [vmem:[#allocation5 + $0x58] sm:$0xff]
        %v482 = vld [vmem:[#allocation5 + $0x60] sm:$0xff]
        %v483 = vld [vmem:[#allocation5 + $0x68] sm:$0xff]
        %v484 = vld [vmem:[#allocation5 + $0x70] sm:$0xff]
        %v485 = vld [vmem:[#allocation5 + $0x78] sm:$0xff]
        %v486 = vld [vmem:[#allocation5 + $0x80] sm:$0xff]
        %v487 = vld [vmem:[#allocation5 + $0x88] sm:$0xff]
        %v488 = vld [vmem:[#allocation5 + $0x90] sm:$0xff]
        %v489 = vld [vmem:[#allocation5 + $0x98] sm:$0xff]
        %v490 = vld [vmem:[#allocation5 + $0xa0] sm:$0xff]
        %v491 = vld [vmem:[#allocation5 + $0xa8] sm:$0xff]
        %v492 = vld [vmem:[#allocation5 + $0xb0] sm:$0xff]
        %v493 = vld [vmem:[#allocation5 + $0xb8] sm:$0xff]
        %v494 = vld [vmem:[#allocation5 + $0xc0] sm:$0xff]
        %v495 = vld [vmem:[#allocation5 + $0xc8] sm:$0xff]
        %v496 = vld [vmem:[#allocation5 + $0xd0] sm:$0xff]
        %v497 = vld [vmem:[#allocation5 + $0xd8] sm:$0xff]
        %v498 = vld [vmem:[#allocation5 + $0xe0] sm:$0xff]
        %v499 = vld [vmem:[#allocation5 + $0xe8] sm:$0xff]
        %v500 = vld [vmem:[#allocation5 + $0xf0] sm:$0xff]
        %v501 = vld [vmem:[#allocation5 + $0xf8] sm:$0xff]
        %v502 = vld [vmem:[#allocation5 + $0x100] sm:$0xff]
        %v503 = vld [vmem:[#allocation5 + $0x108] sm:$0xff]
        %v504 = vld [vmem:[#allocation5 + $0x110] sm:$0xff]
        %v505 = vld [vmem:[#allocation5 + $0x118] sm:$0xff]
        %v506 = vld [vmem:[#allocation5 + $0x120] sm:$0xff]
        %v507 = vld [vmem:[#allocation5 + $0x128] sm:$0xff]
        %v508 = vld [vmem:[#allocation5 + $0x130] sm:$0xff]
        %v509 = vld [vmem:[#allocation5 + $0x138] sm:$0xff]
        %v510 = vld [vmem:[#allocation5 + $0x140] sm:$0xff]
        %v511 = vld [vmem:[#allocation5 + $0x148] sm:$0xff]
        %v512 = vld [vmem:[#allocation5 + $0x150] sm:$0xff]
        %v513 = vld [vmem:[#allocation5 + $0x158] sm:$0xff]
        %v514 = vld [vmem:[#allocation5 + $0x160] sm:$0xff]
        %v515 = vld [vmem:[#allocation5 + $0x168] sm:$0xff]
        %v516 = vld [vmem:[#allocation5 + $0x170] sm:$0xff]
        %v517 = vld [vmem:[#allocation5 + $0x178] sm:$0xff]
        %v518 = vld [vmem:[#allocation5 + $0x180] sm:$0xff]
        %v519 = vld [vmem:[#allocation5 + $0x188] sm:$0xff]
        %v520 = vld [vmem:[#allocation5 + $0x190] sm:$0xff]
        %v521 = vld [vmem:[#allocation5 + $0x198] sm:$0xff]
        %v522 = vld [vmem:[#allocation5 + $0x1a0] sm:$0xff]
        %v523 = vld [vmem:[#allocation5 + $0x1a8] sm:$0xff]
        %v524 = vld [vmem:[#allocation5 + $0x1b0] sm:$0xff]
        %v525 = vld [vmem:[#allocation5 + $0x1b8] sm:$0xff]
        %v526 = vld [vmem:[#allocation5 + $0x1c0] sm:$0xff]
        %v527 = vld [vmem:[#allocation5 + $0x1c8] sm:$0xff]
        %v528 = vld [vmem:[#allocation5 + $0x1d0] sm:$0xff]
        %v529 = vld [vmem:[#allocation5 + $0x1d8] sm:$0xff]
        %v530 = vld [vmem:[#allocation5 + $0x1e0] sm:$0xff]
        %v531 = vld [vmem:[#allocation5 + $0x1e8] sm:$0xff]
        %v532 = vld [vmem:[#allocation5 + $0x1f0] sm:$0xff]
        %v533 = vld [vmem:[#allocation5 + $0x1f8] sm:$0xff]
        %v534 = vld [vmem:[#allocation5 + $0x200] sm:$0xff]
        %v535 = vld [vmem:[#allocation5 + $0x208] sm:$0xff]
        %v536 = vld [vmem:[#allocation5 + $0x210] sm:$0xff]
        %v537 = vld [vmem:[#allocation5 + $0x218] sm:$0xff]
        %v538 = vld [vmem:[#allocation5 + $0x220] sm:$0xff]
        %v539 = vld [vmem:[#allocation5 + $0x228] sm:$0xff]
        %v540 = vld [vmem:[#allocation5 + $0x230] sm:$0xff]
        %v541 = vld [vmem:[#allocation5 + $0x238] sm:$0xff]
        %v542 = vld [vmem:[#allocation5 + $0x240] sm:$0xff]
        %v543 = vld [vmem:[#allocation5 + $0x248] sm:$0xff]
        %v544 = vld [vmem:[#allocation5 + $0x250] sm:$0xff]
        %v545 = vld [vmem:[#allocation5 + $0x258] sm:$0xff]
        %v546 = vld [vmem:[#allocation5 + $0x260] sm:$0xff]
        %v547 = vld [vmem:[#allocation5 + $0x268] sm:$0xff]
        %v548 = vld [vmem:[#allocation5 + $0x270] sm:$0xff]
        %v549 = vld [vmem:[#allocation5 + $0x278] sm:$0xff]
        %v550 = vld [vmem:[#allocation5 + $0x280] sm:$0xff]
        %v551 = vld [vmem:[#allocation5 + $0x288] sm:$0xff]
        %v552 = vld [vmem:[#allocation5 + $0x290] sm:$0xff]
        %v553 = vld [vmem:[#allocation5 + $0x298] sm:$0xff]
        %v554 = vld [vmem:[#allocation5 + $0x2a0] sm:$0xff]
        %v555 = vld [vmem:[#allocation5 + $0x2a8] sm:$0xff]
        %v556 = vld [vmem:[#allocation5 + $0x2b0] sm:$0xff]
        %v557 = vld [vmem:[#allocation5 + $0x2b8] sm:$0xff]
        %v558 = vld [vmem:[#allocation5 + $0x2c0] sm:$0xff]
        %v559 = vld [vmem:[#allocation5 + $0x2c8] sm:$0xff]
        %v560 = vld [vmem:[#allocation5 + $0x2d0] sm:$0xff]
        %v561 = vld [vmem:[#allocation5 + $0x2d8] sm:$0xff]
        %v562 = vld [vmem:[#allocation5 + $0x2e0] sm:$0xff]
        %v563 = vld [vmem:[#allocation5 + $0x2e8] sm:$0xff]
        %v564 = vld [vmem:[#allocation5 + $0x2f0] sm:$0xff]
        %v565 = vld [vmem:[#allocation5 + $0x2f8] sm:$0xff]
        %v566 = vld [vmem:[#allocation5 + $0x300] sm:$0xff]
        %v567 = vld [vmem:[#allocation5 + $0x308] sm:$0xff]
        %v568 = vld [vmem:[#allocation5 + $0x310] sm:$0xff]
        %v569 = vld [vmem:[#allocation5 + $0x318] sm:$0xff]
        %v570 = vld [vmem:[#allocation5 + $0x320] sm:$0xff]
        %v571 = vld [vmem:[#allocation5 + $0x328] sm:$0xff]
        %v572 = vld [vmem:[#allocation5 + $0x330] sm:$0xff]
        %v573 = vld [vmem:[#allocation5 + $0x338] sm:$0xff]
        %v574 = vld [vmem:[#allocation5 + $0x340] sm:$0xff]
        %v575 = vld [vmem:[#allocation5 + $0x348] sm:$0xff]
        %v576 = vld [vmem:[#allocation5 + $0x350] sm:$0xff]
        %v577 = vld [vmem:[#allocation5 + $0x358] sm:$0xff]
        %v578 = vld [vmem:[#allocation5 + $0x360] sm:$0xff]
        %v579 = vld [vmem:[#allocation5 + $0x368] sm:$0xff]
        %v580 = vld [vmem:[#allocation5 + $0x370] sm:$0xff]
        %v581 = vld [vmem:[#allocation5 + $0x378] sm:$0xff]
        %v582 = vld [vmem:[#allocation5 + $0x380] sm:$0xff]
        %v583 = vld [vmem:[#allocation5 + $0x388] sm:$0xff]
        %v584 = vld [vmem:[#allocation5 + $0x390] sm:$0xff]
        %v585 = vld [vmem:[#allocation5 + $0x398] sm:$0xff]
        %v586 = vld [vmem:[#allocation5 + $0x3a0] sm:$0xff]
        %v587 = vld [vmem:[#allocation5 + $0x3a8] sm:$0xff]
        %v588 = vld [vmem:[#allocation5 + $0x3b0] sm:$0xff]
        %v589 = vld [vmem:[#allocation5 + $0x3b8] sm:$0xff]
        %v590 = vld [vmem:[#allocation5 + $0x3c0] sm:$0xff]
        %v591 = vld [vmem:[#allocation5 + $0x3c8] sm:$0xff]
        %v592 = vld [vmem:[#allocation5 + $0x3d0] sm:$0xff]
        %v593 = vld [vmem:[#allocation5 + $0x3d8] sm:$0xff]
        %v594 = vld [vmem:[#allocation5 + $0x3e0] sm:$0xff]
        %v595 = vld [vmem:[#allocation5 + $0x3e8] sm:$0xff]
        %v596 = vld [vmem:[#allocation5 + $0x3f0] sm:$0xff]
        %v597 = vld [vmem:[#allocation5 + $0x3f8] sm:$0xff]
        %v598 = vld [vmem:[#allocation5 + $0x400] sm:$0xff]
        %v599 = vld [vmem:[#allocation5 + $0x408] sm:$0xff]
        %v600 = vld [vmem:[#allocation5 + $0x410] sm:$0xff]
        %v601 = vld [vmem:[#allocation5 + $0x418] sm:$0xff]
        %v602 = vld [vmem:[#allocation5 + $0x420] sm:$0xff]
        %v603 = vld [vmem:[#allocation5 + $0x428] sm:$0xff]
        %v604 = vld [vmem:[#allocation5 + $0x430] sm:$0xff]
        %v605 = vld [vmem:[#allocation5 + $0x438] sm:$0xff]
        %v606 = vld [vmem:[#allocation5 + $0x440] sm:$0xff]
        %v607 = vld [vmem:[#allocation5 + $0x448] sm:$0xff]
        %v608 = vld [vmem:[#allocation5 + $0x450] sm:$0xff]
        %v609 = vld [vmem:[#allocation5 + $0x458] sm:$0xff]
        %v610 = vld [vmem:[#allocation5 + $0x460] sm:$0xff]
        %v611 = vld [vmem:[#allocation5 + $0x468] sm:$0xff]
        %v612 = vld [vmem:[#allocation5 + $0x470] sm:$0xff]
        %v613 = vld [vmem:[#allocation5 + $0x478] sm:$0xff]
        %v614 = vld [vmem:[#allocation5 + $0x480] sm:$0xff]
        %v615 = vld [vmem:[#allocation5 + $0x488] sm:$0xff]
        %v616 = vld [vmem:[#allocation5 + $0x490] sm:$0xff]
        %v617 = vld [vmem:[#allocation5 + $0x498] sm:$0xff]
        %v618 = vld [vmem:[#allocation5 + $0x4a0] sm:$0xff]
        %v619 = vld [vmem:[#allocation5 + $0x4a8] sm:$0xff]
        %v620 = vld [vmem:[#allocation5 + $0x4b0] sm:$0xff]
        %v621 = vld [vmem:[#allocation5 + $0x4b8] sm:$0xff]
        %v622 = vld [vmem:[#allocation5 + $0x4c0] sm:$0xff]
        %v623 = vld [vmem:[#allocation5 + $0x4c8] sm:$0xff]
        %v624 = vld [vmem:[#allocation5 + $0x4d0] sm:$0xff]
        %v625 = vld [vmem:[#allocation5 + $0x4d8] sm:$0xff]
        %v626 = vld [vmem:[#allocation5 + $0x4e0] sm:$0xff]
        %v627 = vld [vmem:[#allocation5 + $0x4e8] sm:$0xff]
        %v628 = vld [vmem:[#allocation5 + $0x4f0] sm:$0xff]
        %v629 = vld [vmem:[#allocation5 + $0x4f8] sm:$0xff]
        %v630 = vld [vmem:[#allocation5 + $0x500] sm:$0xff]
        %v631 = vld [vmem:[#allocation5 + $0x508] sm:$0xff]
        %v632 = vld [vmem:[#allocation5 + $0x510] sm:$0xff]
        %v633 = vld [vmem:[#allocation5 + $0x518] sm:$0xff]
        %v634 = vld [vmem:[#allocation5 + $0x520] sm:$0xff]
        %v635 = vld [vmem:[#allocation5 + $0x528] sm:$0xff]
        %v636 = vld [vmem:[#allocation5 + $0x530] sm:$0xff]
        %v637 = vld [vmem:[#allocation5 + $0x538] sm:$0xff]
        %v638 = vld [vmem:[#allocation5 + $0x540] sm:$0xff]
        %v639 = vld [vmem:[#allocation5 + $0x548] sm:$0xff]
        %v640 = vld [vmem:[#allocation5 + $0x550] sm:$0xff]
        %v641 = vld [vmem:[#allocation5 + $0x558] sm:$0xff]
        %v642 = vld [vmem:[#allocation5 + $0x560] sm:$0xff]
        %v643 = vld [vmem:[#allocation5 + $0x568] sm:$0xff]
        %v644 = vld [vmem:[#allocation5 + $0x570] sm:$0xff]
        %v645 = vld [vmem:[#allocation5 + $0x578] sm:$0xff]
        %v646 = vld [vmem:[#allocation5 + $0x580] sm:$0xff]
        %v647 = vld [vmem:[#allocation5 + $0x588] sm:$0xff]
        %v648 = vld [vmem:[#allocation5 + $0x590] sm:$0xff]
        %v649 = vld [vmem:[#allocation5 + $0x598] sm:$0xff]
        %v650 = vld [vmem:[#allocation5 + $0x5a0] sm:$0xff]
        %v651 = vld [vmem:[#allocation5 + $0x5a8] sm:$0xff]
        %v652 = vld [vmem:[#allocation5 + $0x5b0] sm:$0xff]
        %v653 = vld [vmem:[#allocation5 + $0x5b8] sm:$0xff]
        %v654 = vld [vmem:[#allocation5 + $0x5c0] sm:$0xff]
        %v655 = vld [vmem:[#allocation5 + $0x5c8] sm:$0xff]
        %v656 = vld [vmem:[#allocation5 + $0x5d0] sm:$0xff]
        %v657 = vld [vmem:[#allocation5 + $0x5d8] sm:$0xff]
        %v658 = vld [vmem:[#allocation5 + $0x5e0] sm:$0xff]
        %v659 = vld [vmem:[#allocation5 + $0x5e8] sm:$0xff]
        %v660 = vld [vmem:[#allocation5 + $0x5f0] sm:$0xff]
        %v661 = vld [vmem:[#allocation5 + $0x5f8] sm:$0xff]
        %v662 = vld [vmem:[#allocation5 + $0x600] sm:$0xff]
        %v663 = vld [vmem:[#allocation5 + $0x608] sm:$0xff]
        %v664 = vld [vmem:[#allocation5 + $0x610] sm:$0xff]
        %v665 = vld [vmem:[#allocation5 + $0x618] sm:$0xff]
        %v666 = vld [vmem:[#allocation5 + $0x620] sm:$0xff]
        %v667 = vld [vmem:[#allocation5 + $0x628] sm:$0xff]
        %v668 = vld [vmem:[#allocation5 + $0x630] sm:$0xff]
        %v669 = vld [vmem:[#allocation5 + $0x638] sm:$0xff]
        %v670 = vld [vmem:[#allocation5 + $0x640] sm:$0xff]
        %v671 = vld [vmem:[#allocation5 + $0x648] sm:$0xff]
        %v672 = vld [vmem:[#allocation5 + $0x650] sm:$0xff]
        %v673 = vld [vmem:[#allocation5 + $0x658] sm:$0xff]
        %v674 = vld [vmem:[#allocation5 + $0x660] sm:$0xff]
        %v675 = vld [vmem:[#allocation5 + $0x668] sm:$0xff]
        %v676 = vld [vmem:[#allocation5 + $0x670] sm:$0xff]
        %v677 = vld [vmem:[#allocation5 + $0x678] sm:$0xff]
        %v678 = vld [vmem:[#allocation5 + $0x680] sm:$0xff]
        %v679 = vld [vmem:[#allocation5 + $0x688] sm:$0xff]
        %v680 = vld [vmem:[#allocation5 + $0x690] sm:$0xff]
        %v681 = vld [vmem:[#allocation5 + $0x698] sm:$0xff]
        %v682 = vld [vmem:[#allocation5 + $0x6a0] sm:$0xff]
        %v683 = vld [vmem:[#allocation5 + $0x6a8] sm:$0xff]
        %v684 = vld [vmem:[#allocation5 + $0x6b0] sm:$0xff]
        %v685 = vld [vmem:[#allocation5 + $0x6b8] sm:$0xff]
        %v686 = vld [vmem:[#allocation5 + $0x6c0] sm:$0xff]
        %v687 = vld [vmem:[#allocation5 + $0x6c8] sm:$0xff]
        %v688 = vld [vmem:[#allocation5 + $0x6d0] sm:$0xff]
        %v689 = vld [vmem:[#allocation5 + $0x6d8] sm:$0xff]
        %v690 = vld [vmem:[#allocation5 + $0x6e0] sm:$0xff]
        %v691 = vld [vmem:[#allocation5 + $0x6e8] sm:$0xff]
        %v692 = vld [vmem:[#allocation5 + $0x6f0] sm:$0xff]
        %v693 = vld [vmem:[#allocation5 + $0x6f8] sm:$0xff]
        %v694 = vld [vmem:[#allocation5 + $0x700] sm:$0xff]
        %v695 = vld [vmem:[#allocation5 + $0x708] sm:$0xff]
        %v696 = vld [vmem:[#allocation5 + $0x710] sm:$0xff]
        %v697 = vld [vmem:[#allocation5 + $0x718] sm:$0xff]
        %v698 = vld [vmem:[#allocation5 + $0x720] sm:$0xff]
        %v699 = vld [vmem:[#allocation5 + $0x728] sm:$0xff]
        %v700 = vld [vmem:[#allocation5 + $0x730] sm:$0xff]
        %v701 = vld [vmem:[#allocation5 + $0x738] sm:$0xff]
        %v702 = vld [vmem:[#allocation5 + $0x740] sm:$0xff]
        %v703 = vld [vmem:[#allocation5 + $0x748] sm:$0xff]
        %v704 = vld [vmem:[#allocation5 + $0x750] sm:$0xff]
        %v705 = vld [vmem:[#allocation5 + $0x758] sm:$0xff]
        %v706 = vld [vmem:[#allocation5 + $0x760] sm:$0xff]
        %v707 = vld [vmem:[#allocation5 + $0x768] sm:$0xff]
        %v708 = vld [vmem:[#allocation5 + $0x770] sm:$0xff]
        %v709 = vld [vmem:[#allocation5 + $0x778] sm:$0xff]
        %v710 = vld [vmem:[#allocation5 + $0x780] sm:$0xff]
        %v711 = vld [vmem:[#allocation5 + $0x788] sm:$0xff]
        %v712 = vld [vmem:[#allocation5 + $0x790] sm:$0xff]
        %v713 = vld [vmem:[#allocation5 + $0x798] sm:$0xff]
        %v714 = vld [vmem:[#allocation5 + $0x7a0] sm:$0xff]
        %v715 = vld [vmem:[#allocation5 + $0x7a8] sm:$0xff]
        %v716 = vld [vmem:[#allocation5 + $0x7b0] sm:$0xff]
        %v717 = vld [vmem:[#allocation5 + $0x7b8] sm:$0xff]
        %v718 = vld [vmem:[#allocation5 + $0x7c0] sm:$0xff]
        %v719 = vld [vmem:[#allocation5 + $0x7c8] sm:$0xff]
        %v720 = vld [vmem:[#allocation5 + $0x7d0] sm:$0xff]
        %v721 = vld [vmem:[#allocation5 + $0x7d8] sm:$0xff]
        %v722 = vld [vmem:[#allocation5 + $0x7e0] sm:$0xff]
        %v723 = vld [vmem:[#allocation5 + $0x7e8] sm:$0xff]
        %v724 = vld [vmem:[#allocation5 + $0x7f0] sm:$0xff]
        %v725 = vld [vmem:[#allocation5 + $0x7f8] sm:$0xff]
        %v726 = vld [vmem:[#allocation5 + $0x800] sm:$0xff]
        %v727 = vld [vmem:[#allocation5 + $0x808] sm:$0xff]
        %v728 = vld [vmem:[#allocation5 + $0x810] sm:$0xff]
        %v729 = vld [vmem:[#allocation5 + $0x818] sm:$0xff]
        %v730 = vld [vmem:[#allocation5 + $0x820] sm:$0xff]
        %v731 = vld [vmem:[#allocation5 + $0x828] sm:$0xff]
        %v732 = vld [vmem:[#allocation5 + $0x830] sm:$0xff]
        %v733 = vld [vmem:[#allocation5 + $0x838] sm:$0xff]
        %v734 = vld [vmem:[#allocation5 + $0x840] sm:$0xff]
        %v735 = vld [vmem:[#allocation5 + $0x848] sm:$0xff]
        %v736 = vld [vmem:[#allocation5 + $0x850] sm:$0xff]
        %v737 = vld [vmem:[#allocation5 + $0x858] sm:$0xff]
        %v738 = vld [vmem:[#allocation5 + $0x860] sm:$0xff]
        %v739 = vld [vmem:[#allocation5 + $0x868] sm:$0xff]
        %v740 = vld [vmem:[#allocation5 + $0x870] sm:$0xff]
        %v741 = vld [vmem:[#allocation5 + $0x878] sm:$0xff]
        %v742 = vld [vmem:[#allocation5 + $0x880] sm:$0xff]
        %v743 = vld [vmem:[#allocation5 + $0x888] sm:$0xff]
        %v744 = vld [vmem:[#allocation5 + $0x890] sm:$0xff]
        %v745 = vld [vmem:[#allocation5 + $0x898] sm:$0xff]
        %v746 = vld [vmem:[#allocation5 + $0x8a0] sm:$0xff]
        %v747 = vld [vmem:[#allocation5 + $0x8a8] sm:$0xff]
        %v748 = vld [vmem:[#allocation5 + $0x8b0] sm:$0xff]
        %v749 = vld [vmem:[#allocation5 + $0x8b8] sm:$0xff]
        %v750 = vld [vmem:[#allocation5 + $0x8c0] sm:$0xff]
        %v751 = vld [vmem:[#allocation5 + $0x8c8] sm:$0xff]
        %v752 = vld [vmem:[#allocation5 + $0x8d0] sm:$0xff]
        %v753 = vld [vmem:[#allocation5 + $0x8d8] sm:$0xff]
        %v754 = vld [vmem:[#allocation5 + $0x8e0] sm:$0xff]
        %v755 = vld [vmem:[#allocation5 + $0x8e8] sm:$0xff]
        %v756 = vld [vmem:[#allocation5 + $0x8f0] sm:$0xff]
        %v757 = vld [vmem:[#allocation5 + $0x8f8] sm:$0xff]
        %v758 = vld [vmem:[#allocation5 + $0x900] sm:$0xff]
        %v759 = vld [vmem:[#allocation5 + $0x908] sm:$0xff]
        %v760 = vld [vmem:[#allocation5 + $0x910] sm:$0xff]
        %v761 = vld [vmem:[#allocation5 + $0x918] sm:$0xff]
        %v762 = vld [vmem:[#allocation5 + $0x920] sm:$0xff]
        %v763 = vld [vmem:[#allocation5 + $0x928] sm:$0xff]
        %v764 = vld [vmem:[#allocation5 + $0x930] sm:$0xff]
        %v765 = vld [vmem:[#allocation5 + $0x938] sm:$0xff]
        %v766 = vld [vmem:[#allocation5 + $0x940] sm:$0xff]
        %v767 = vld [vmem:[#allocation5 + $0x948] sm:$0xff]
        %v768 = vld [vmem:[#allocation5 + $0x950] sm:$0xff]
        %v769 = vld [vmem:[#allocation5 + $0x958] sm:$0xff]
        %v770 = vld [vmem:[#allocation5 + $0x960] sm:$0xff]
        %v771 = vld [vmem:[#allocation5 + $0x968] sm:$0xff]
        %v772 = vld [vmem:[#allocation5 + $0x970] sm:$0xff]
        %v773 = vld [vmem:[#allocation5 + $0x978] sm:$0xff]
        %v774 = vld [vmem:[#allocation5 + $0x980] sm:$0xff]
        %v775 = vld [vmem:[#allocation5 + $0x988] sm:$0xff]
        %v776 = vld [vmem:[#allocation5 + $0x990] sm:$0xff]
        %v777 = vld [vmem:[#allocation5 + $0x998] sm:$0xff]
        %v778 = vld [vmem:[#allocation5 + $0x9a0] sm:$0xff]
        %v779 = vld [vmem:[#allocation5 + $0x9a8] sm:$0xff]
        %v780 = vld [vmem:[#allocation5 + $0x9b0] sm:$0xff]
        %v781 = vld [vmem:[#allocation5 + $0x9b8] sm:$0xff]
        %v782 = vld [vmem:[#allocation5 + $0x9c0] sm:$0xff]
        %v783 = vld [vmem:[#allocation5 + $0x9c8] sm:$0xff]
        %v784 = vld [vmem:[#allocation5 + $0x9d0] sm:$0xff]
        %v785 = vld [vmem:[#allocation5 + $0x9d8] sm:$0xff]
        %v786 = vld [vmem:[#allocation5 + $0x9e0] sm:$0xff]
        %v787 = vld [vmem:[#allocation5 + $0x9e8] sm:$0xff]
        %v788 = vld [vmem:[#allocation5 + $0x9f0] sm:$0xff]
        %v789 = vld [vmem:[#allocation5 + $0x9f8] sm:$0xff]
        %v790 = vld [vmem:[#allocation5 + $0xa00] sm:$0xff]
        %v791 = vld [vmem:[#allocation5 + $0xa08] sm:$0xff]
        %v792 = vld [vmem:[#allocation5 + $0xa10] sm:$0xff]
        %v793 = vld [vmem:[#allocation5 + $0xa18] sm:$0xff]
        %v794 = vld [vmem:[#allocation5 + $0xa20] sm:$0xff]
        %v795 = vld [vmem:[#allocation5 + $0xa28] sm:$0xff]
        %v796 = vld [vmem:[#allocation5 + $0xa30] sm:$0xff]
        %v797 = vld [vmem:[#allocation5 + $0xa38] sm:$0xff]
        %v798 = vld [vmem:[#allocation5 + $0xa40] sm:$0xff]
        %v799 = vld [vmem:[#allocation5 + $0xa48] sm:$0xff]
        %v800 = vld [vmem:[#allocation5 + $0xa50] sm:$0xff]
        %v801 = vld [vmem:[#allocation5 + $0xa58] sm:$0xff]
        %v802 = vld [vmem:[#allocation5 + $0xa60] sm:$0xff]
        %v803 = vld [vmem:[#allocation5 + $0xa68] sm:$0xff]
        %v804 = vld [vmem:[#allocation5 + $0xa70] sm:$0xff]
        %v805 = vld [vmem:[#allocation5 + $0xa78] sm:$0xff]
        %v806 = vld [vmem:[#allocation5 + $0xa80] sm:$0xff]
        %v807 = vld [vmem:[#allocation5 + $0xa88] sm:$0xff]
        %v808 = vld [vmem:[#allocation5 + $0xa90] sm:$0xff]
        %v809 = vld [vmem:[#allocation5 + $0xa98] sm:$0xff]
        %v810 = vld [vmem:[#allocation5 + $0xaa0] sm:$0xff]
        %v811 = vld [vmem:[#allocation5 + $0xaa8] sm:$0xff]
        %v812 = vld [vmem:[#allocation5 + $0xab0] sm:$0xff]
        %v813 = vld [vmem:[#allocation5 + $0xab8] sm:$0xff]
        %v814 = vld [vmem:[#allocation5 + $0xac0] sm:$0xff]
        %v815 = vld [vmem:[#allocation5 + $0xac8] sm:$0xff]
        %v816 = vld [vmem:[#allocation5 + $0xad0] sm:$0xff]
        %v817 = vld [vmem:[#allocation5 + $0xad8] sm:$0xff]
        %v818 = vld [vmem:[#allocation5 + $0xae0] sm:$0xff]
        %v819 = vld [vmem:[#allocation5 + $0xae8] sm:$0xff]
        %v820 = vld [vmem:[#allocation5 + $0xaf0] sm:$0xff]
        %v821 = vld [vmem:[#allocation5 + $0xaf8] sm:$0xff]
        %v822 = vld [vmem:[#allocation5 + $0xb00] sm:$0xff]
        %v823 = vld [vmem:[#allocation5 + $0xb08] sm:$0xff]
        %v824 = vld [vmem:[#allocation5 + $0xb10] sm:$0xff]
        %v825 = vld [vmem:[#allocation5 + $0xb18] sm:$0xff]
        %v826 = vld [vmem:[#allocation5 + $0xb20] sm:$0xff]
        %v827 = vld [vmem:[#allocation5 + $0xb28] sm:$0xff]
        %v828 = vld [vmem:[#allocation5 + $0xb30] sm:$0xff]
        %v829 = vld [vmem:[#allocation5 + $0xb38] sm:$0xff]
        %v830 = vld [vmem:[#allocation5 + $0xb40] sm:$0xff]
        %v831 = vld [vmem:[#allocation5 + $0xb48] sm:$0xff]
        %v832 = vld [vmem:[#allocation5 + $0xb50] sm:$0xff]
        %v833 = vld [vmem:[#allocation5 + $0xb58] sm:$0xff]
        %v834 = vld [vmem:[#allocation5 + $0xb60] sm:$0xff]
        %v835 = vld [vmem:[#allocation5 + $0xb68] sm:$0xff]
        %v836 = vld [vmem:[#allocation5 + $0xb70] sm:$0xff]
        %v837 = vld [vmem:[#allocation5 + $0xb78] sm:$0xff]
        %v838 = vld [vmem:[#allocation5 + $0xb80] sm:$0xff]
        %v839 = vld [vmem:[#allocation5 + $0xb88] sm:$0xff]
        %v840 = vld [vmem:[#allocation5 + $0xb90] sm:$0xff]
        %v841 = vld [vmem:[#allocation5 + $0xb98] sm:$0xff]
        %v842 = vld [vmem:[#allocation5 + $0xba0] sm:$0xff]
        %v843 = vld [vmem:[#allocation5 + $0xba8] sm:$0xff]
        %v844 = vld [vmem:[#allocation5 + $0xbb0] sm:$0xff]
        %v845 = vld [vmem:[#allocation5 + $0xbb8] sm:$0xff]
        %v846 = vld [vmem:[#allocation5 + $0xbc0] sm:$0xff]
        %v847 = vld [vmem:[#allocation5 + $0xbc8] sm:$0xff]
        %v848 = vld [vmem:[#allocation5 + $0xbd0] sm:$0xff]
        %v849 = vld [vmem:[#allocation5 + $0xbd8] sm:$0xff]
        %v850 = vld [vmem:[#allocation5 + $0xbe0] sm:$0xff]
        %v851 = vld [vmem:[#allocation5 + $0xbe8] sm:$0xff]
        %v852 = vld [vmem:[#allocation5 + $0xbf0] sm:$0xff]
        %v853 = vld [vmem:[#allocation5 + $0xbf8] sm:$0xff]
        %v854 = vld [vmem:[#allocation5 + $0xc00] sm:$0xff]
        %v855 = vld [vmem:[#allocation5 + $0xc08] sm:$0xff]
        %v856 = vld [vmem:[#allocation5 + $0xc10] sm:$0xff]
        %v857 = vld [vmem:[#allocation5 + $0xc18] sm:$0xff]
        %v858 = vld [vmem:[#allocation5 + $0xc20] sm:$0xff]
        %v859 = vld [vmem:[#allocation5 + $0xc28] sm:$0xff]
        %v860 = vld [vmem:[#allocation5 + $0xc30] sm:$0xff]
        %v861 = vld [vmem:[#allocation5 + $0xc38] sm:$0xff]
        %v862 = vld [vmem:[#allocation5 + $0xc40] sm:$0xff]
        %v863 = vld [vmem:[#allocation5 + $0xc48] sm:$0xff]
        %v864 = vld [vmem:[#allocation5 + $0xc50] sm:$0xff]
        %v865 = vld [vmem:[#allocation5 + $0xc58] sm:$0xff]
        %v866 = vld [vmem:[#allocation5 + $0xc60] sm:$0xff]
        %v867 = vld [vmem:[#allocation5 + $0xc68] sm:$0xff]
        %v868 = vld [vmem:[#allocation5 + $0xc70] sm:$0xff]
        %v869 = vld [vmem:[#allocation5 + $0xc78] sm:$0xff]
        %v870 = vld [vmem:[#allocation5 + $0xc80] sm:$0xff]
        %v871 = vld [vmem:[#allocation5 + $0xc88] sm:$0xff]
        %v872 = vld [vmem:[#allocation5 + $0xc90] sm:$0xff]
        %v873 = vld [vmem:[#allocation5 + $0xc98] sm:$0xff]
        %v874 = vld [vmem:[#allocation5 + $0xca0] sm:$0xff]
        %v875 = vld [vmem:[#allocation5 + $0xca8] sm:$0xff]
        %v876 = vld [vmem:[#allocation5 + $0xcb0] sm:$0xff]
        %v877 = vld [vmem:[#allocation5 + $0xcb8] sm:$0xff]
        %v878 = vld [vmem:[#allocation5 + $0xcc0] sm:$0xff]
        %v879 = vld [vmem:[#allocation5 + $0xcc8] sm:$0xff]
        %v880 = vld [vmem:[#allocation5 + $0xcd0] sm:$0xff]
        %v881 = vld [vmem:[#allocation5 + $0xcd8] sm:$0xff]
        %v882 = vld [vmem:[#allocation5 + $0xce0] sm:$0xff]
        %v883 = vld [vmem:[#allocation5 + $0xce8] sm:$0xff]
        %v884 = vld [vmem:[#allocation5 + $0xcf0] sm:$0xff]
        %v885 = vld [vmem:[#allocation5 + $0xcf8] sm:$0xff]
        %v886 = vld [vmem:[#allocation5 + $0xd00] sm:$0xff]
        %v887 = vld [vmem:[#allocation5 + $0xd08] sm:$0xff]
        %v888 = vld [vmem:[#allocation5 + $0xd10] sm:$0xff]
        %v889 = vld [vmem:[#allocation5 + $0xd18] sm:$0xff]
        %v890 = vld [vmem:[#allocation5 + $0xd20] sm:$0xff]
        %v891 = vld [vmem:[#allocation5 + $0xd28] sm:$0xff]
        %v892 = vld [vmem:[#allocation5 + $0xd30] sm:$0xff]
        %v893 = vld [vmem:[#allocation5 + $0xd38] sm:$0xff]
        %v894 = vld [vmem:[#allocation5 + $0xd40] sm:$0xff]
        %v895 = vld [vmem:[#allocation5 + $0xd48] sm:$0xff]
        %v896 = vld [vmem:[#allocation5 + $0xd50] sm:$0xff]
        %v897 = vld [vmem:[#allocation5 + $0xd58] sm:$0xff]
        %v898 = vld [vmem:[#allocation5 + $0xd60] sm:$0xff]
        %v899 = vld [vmem:[#allocation5 + $0xd68] sm:$0xff]
        %v900 = vld [vmem:[#allocation5 + $0xd70] sm:$0xff]
        %v901 = vld [vmem:[#allocation5 + $0xd78] sm:$0xff]
        %v902 = vld [vmem:[#allocation5 + $0xd80] sm:$0xff]
        %v903 = vld [vmem:[#allocation5 + $0xd88] sm:$0xff]
        %v904 = vld [vmem:[#allocation5 + $0xd90] sm:$0xff]
        %v905 = vld [vmem:[#allocation5 + $0xd98] sm:$0xff]
        %v906 = vld [vmem:[#allocation5 + $0xda0] sm:$0xff]
        %v907 = vld [vmem:[#allocation5 + $0xda8] sm:$0xff]
        %v908 = vld [vmem:[#allocation5 + $0xdb0] sm:$0xff]
        %v909 = vld [vmem:[#allocation5 + $0xdb8] sm:$0xff]
        %v910 = vld [vmem:[#allocation5 + $0xdc0] sm:$0xff]
        %v911 = vld [vmem:[#allocation5 + $0xdc8] sm:$0xff]
        %v912 = vld [vmem:[#allocation5 + $0xdd0] sm:$0xff]
        %v913 = vld [vmem:[#allocation5 + $0xdd8] sm:$0xff]
        %v914 = vld [vmem:[#allocation5 + $0xde0] sm:$0xff]
        %v915 = vld [vmem:[#allocation5 + $0xde8] sm:$0xff]
        %v916 = vld [vmem:[#allocation5 + $0xdf0] sm:$0xff]
        %v917 = vld [vmem:[#allocation5 + $0xdf8] sm:$0xff]
        %v918 = vld [vmem:[#allocation5 + $0xe00] sm:$0xff]
        %v919 = vld [vmem:[#allocation5 + $0xe08] sm:$0xff]
        %v920 = vld [vmem:[#allocation5 + $0xe10] sm:$0xff]
        %v921 = vld [vmem:[#allocation5 + $0xe18] sm:$0xff]
        %v922 = vld [vmem:[#allocation5 + $0xe20] sm:$0xff]
        %v923 = vld [vmem:[#allocation5 + $0xe28] sm:$0xff]
        %v924 = vld [vmem:[#allocation5 + $0xe30] sm:$0xff]
        %v925 = vld [vmem:[#allocation5 + $0xe38] sm:$0xff]
        %v926 = vld [vmem:[#allocation5 + $0xe40] sm:$0xff]
        %v927 = vld [vmem:[#allocation5 + $0xe48] sm:$0xff]
        %v928 = vld [vmem:[#allocation5 + $0xe50] sm:$0xff]
        %v929 = vld [vmem:[#allocation5 + $0xe58] sm:$0xff]
        %v930 = vld [vmem:[#allocation5 + $0xe60] sm:$0xff]
        %v931 = vld [vmem:[#allocation5 + $0xe68] sm:$0xff]
        %v932 = vld [vmem:[#allocation5 + $0xe70] sm:$0xff]
        %v933 = vld [vmem:[#allocation5 + $0xe78] sm:$0xff]
        %v934 = vld [vmem:[#allocation5 + $0xe80] sm:$0xff]
        %v935 = vld [vmem:[#allocation5 + $0xe88] sm:$0xff]
        %v936 = vld [vmem:[#allocation5 + $0xe90] sm:$0xff]
        %v937 = vld [vmem:[#allocation5 + $0xe98] sm:$0xff]
        %v938 = vld [vmem:[#allocation5 + $0xea0] sm:$0xff]
        %v939 = vld [vmem:[#allocation5 + $0xea8] sm:$0xff]
        %v940 = vld [vmem:[#allocation5 + $0xeb0] sm:$0xff]
        %v941 = vld [vmem:[#allocation5 + $0xeb8] sm:$0xff]
        %v942 = vld [vmem:[#allocation5 + $0xec0] sm:$0xff]
        %v943 = vld [vmem:[#allocation5 + $0xec8] sm:$0xff]
        %v944 = vld [vmem:[#allocation5 + $0xed0] sm:$0xff]
        %v945 = vld [vmem:[#allocation5 + $0xed8] sm:$0xff]
        %v946 = vld [vmem:[#allocation5 + $0xee0] sm:$0xff]
        %v947 = vld [vmem:[#allocation5 + $0xee8] sm:$0xff]
        %v948 = vld [vmem:[#allocation5 + $0xef0] sm:$0xff]
        %v949 = vld [vmem:[#allocation5 + $0xef8] sm:$0xff]
        %v950 = vld [vmem:[#allocation5 + $0xf00] sm:$0xff]
        %v951 = vld [vmem:[#allocation5 + $0xf08] sm:$0xff]
        %v952 = vld [vmem:[#allocation5 + $0xf10] sm:$0xff]
        %v953 = vld [vmem:[#allocation5 + $0xf18] sm:$0xff]
        %v954 = vld [vmem:[#allocation5 + $0xf20] sm:$0xff]
        %v955 = vld [vmem:[#allocation5 + $0xf28] sm:$0xff]
        %v956 = vld [vmem:[#allocation5 + $0xf30] sm:$0xff]
        %v957 = vld [vmem:[#allocation5 + $0xf38] sm:$0xff]
        %v958 = vld [vmem:[#allocation5 + $0xf40] sm:$0xff]
        %v959 = vld [vmem:[#allocation5 + $0xf48] sm:$0xff]
        %v960 = vld [vmem:[#allocation5 + $0xf50] sm:$0xff]
        %v961 = vld [vmem:[#allocation5 + $0xf58] sm:$0xff]
        %v962 = vld [vmem:[#allocation5 + $0xf60] sm:$0xff]
        %v963 = vld [vmem:[#allocation5 + $0xf68] sm:$0xff]
        %v964 = vld [vmem:[#allocation5 + $0xf70] sm:$0xff]
        %v965 = vld [vmem:[#allocation5 + $0xf78] sm:$0xff]
        %v966 = vld [vmem:[#allocation5 + $0xf80] sm:$0xff]
        %v967 = vld [vmem:[#allocation5 + $0xf88] sm:$0xff]
        %v968 = vld [vmem:[#allocation5 + $0xf90] sm:$0xff]
        %v969 = vld [vmem:[#allocation5 + $0xf98] sm:$0xff]
        %v970 = vld [vmem:[#allocation5 + $0xfa0] sm:$0xff]
        %v971 = vld [vmem:[#allocation5 + $0xfa8] sm:$0xff]
        %v972 = vld [vmem:[#allocation5 + $0xfb0] sm:$0xff]
        %v973 = vld [vmem:[#allocation5 + $0xfb8] sm:$0xff]
        %v974 = vld [vmem:[#allocation5 + $0xfc0] sm:$0xff]
        %v975 = vld [vmem:[#allocation5 + $0xfc8] sm:$0xff]
        %v976 = vld [vmem:[#allocation5 + $0xfd0] sm:$0xff]
        %v977 = vld [vmem:[#allocation5 + $0xfd8] sm:$0xff]
        %v978 = vld [vmem:[#allocation5 + $0xfe0] sm:$0xff]
        %v979 = vld [vmem:[#allocation5 + $0xfe8] sm:$0xff]
        %v980 = vld [vmem:[#allocation5 + $0xff0] sm:$0xff]
        %v981 = vld [vmem:[#allocation5 + $0xff8] sm:$0xff]
        %v982 = vld [vmem:[#allocation5 + $0x1000] sm:$0xff]
        %v983 = vld [vmem:[#allocation5 + $0x1008] sm:$0xff]
        %v984 = vld [vmem:[#allocation5 + $0x1010] sm:$0xff]
        %v985 = vld [vmem:[#allocation5 + $0x1018] sm:$0xff]
        %v986 = vld [vmem:[#allocation5 + $0x1020] sm:$0xff]
        %v987 = vld [vmem:[#allocation5 + $0x1028] sm:$0xff]
        %v988 = vld [vmem:[#allocation5 + $0x1030] sm:$0xff]
        %v989 = vld [vmem:[#allocation5 + $0x1038] sm:$0xff]
        %v990 = vld [vmem:[#allocation5 + $0x1040] sm:$0xff]
        %v991 = vld [vmem:[#allocation5 + $0x1048] sm:$0xff]
        %v992 = vld [vmem:[#allocation5 + $0x1050] sm:$0xff]
        %v993 = vld [vmem:[#allocation5 + $0x1058] sm:$0xff]
        %v994 = vld [vmem:[#allocation5 + $0x1060] sm:$0xff]
        %v995 = vld [vmem:[#allocation5 + $0x1068] sm:$0xff]
        %v996 = vld [vmem:[#allocation5 + $0x1070] sm:$0xff]
        %v997 = vld [vmem:[#allocation5 + $0x1078] sm:$0xff]
        %v998 = vld [vmem:[#allocation5 + $0x1080] sm:$0xff]
        %v999 = vld [vmem:[#allocation5 + $0x1088] sm:$0xff]
        %v1000 = vld [vmem:[#allocation5 + $0x1090] sm:$0xff]
        %v1001 = vld [vmem:[#allocation5 + $0x1098] sm:$0xff]
        %v1002 = vld [vmem:[#allocation5 + $0x10a0] sm:$0xff]
        %v1003 = vld [vmem:[#allocation5 + $0x10a8] sm:$0xff]
        %v1004 = vld [vmem:[#allocation5 + $0x10b0] sm:$0xff]
        %v1005 = vld [vmem:[#allocation5 + $0x10b8] sm:$0xff]
        %v1006 = vld [vmem:[#allocation5 + $0x10c0] sm:$0xff]
        %v1007 = vld [vmem:[#allocation5 + $0x10c8] sm:$0xff]
        %v1008 = vld [vmem:[#allocation5 + $0x10d0] sm:$0xff]
        %v1009 = vld [vmem:[#allocation5 + $0x10d8] sm:$0xff]
        %v1010 = vld [vmem:[#allocation5 + $0x10e0] sm:$0xff]
        %v1011 = vld [vmem:[#allocation5 + $0x10e8] sm:$0xff]
        %v1012 = vld [vmem:[#allocation5 + $0x10f0] sm:$0xff]
        %v1013 = vld [vmem:[#allocation5 + $0x10f8] sm:$0xff]
        %v1014 = vld [vmem:[#allocation5 + $0x1100] sm:$0xff]
        %v1015 = vld [vmem:[#allocation5 + $0x1108] sm:$0xff]
        %v1016 = vld [vmem:[#allocation5 + $0x1110] sm:$0xff]
        %v1017 = vld [vmem:[#allocation5 + $0x1118] sm:$0xff]
        %v1018 = vld [vmem:[#allocation5 + $0x1120] sm:$0xff]
        %v1019 = vld [vmem:[#allocation5 + $0x1128] sm:$0xff]
        %v1020 = vld [vmem:[#allocation5 + $0x1130] sm:$0xff]
        %v1021 = vld [vmem:[#allocation5 + $0x1138] sm:$0xff]
        %v1022 = vld [vmem:[#allocation5 + $0x1140] sm:$0xff]
        %v1023 = vld [vmem:[#allocation5 + $0x1148] sm:$0xff]
        %v1024 = vld [vmem:[#allocation5 + $0x1150] sm:$0xff]
        %v1025 = vld [vmem:[#allocation5 + $0x1158] sm:$0xff]
        %v1026 = vld [vmem:[#allocation5 + $0x1160] sm:$0xff]
        %v1027 = vld [vmem:[#allocation5 + $0x1168] sm:$0xff]
        %v1028 = vld [vmem:[#allocation5 + $0x1170] sm:$0xff]
        %v1029 = vld [vmem:[#allocation5 + $0x1178] sm:$0xff]
        %v1030 = vld [vmem:[#allocation5 + $0x1180] sm:$0xff]
        %v1031 = vld [vmem:[#allocation5 + $0x1188] sm:$0xff]
        %v1032 = vld [vmem:[#allocation5 + $0x1190] sm:$0xff]
        %v1033 = vld [vmem:[#allocation5 + $0x1198] sm:$0xff]
        %v1034 = vld [vmem:[#allocation5 + $0x11a0] sm:$0xff]
        %v1035 = vld [vmem:[#allocation5 + $0x11a8] sm:$0xff]
        %v1036 = vld [vmem:[#allocation5 + $0x11b0] sm:$0xff]
        %v1037 = vld [vmem:[#allocation5 + $0x11b8] sm:$0xff]
        %v1038 = vld [vmem:[#allocation5 + $0x11c0] sm:$0xff]
        %v1039 = vld [vmem:[#allocation5 + $0x11c8] sm:$0xff]
        %v1040 = vld [vmem:[#allocation5 + $0x11d0] sm:$0xff]
        %v1041 = vld [vmem:[#allocation5 + $0x11d8] sm:$0xff]
        %v1042 = vld [vmem:[#allocation5 + $0x11e0] sm:$0xff]
        %v1043 = vld [vmem:[#allocation5 + $0x11e8] sm:$0xff]
        %v1044 = vld [vmem:[#allocation5 + $0x11f0] sm:$0xff]
        %v1045 = vld [vmem:[#allocation5 + $0x11f8] sm:$0xff]
        %v1046 = vld [vmem:[#allocation5 + $0x1200] sm:$0xff]
        %v1047 = vld [vmem:[#allocation5 + $0x1208] sm:$0xff]
        %v1048 = vld [vmem:[#allocation5 + $0x1210] sm:$0xff]
        %v1049 = vld [vmem:[#allocation5 + $0x1218] sm:$0xff]
        %v1050 = vld [vmem:[#allocation5 + $0x1220] sm:$0xff]
        %v1051 = vld [vmem:[#allocation5 + $0x1228] sm:$0xff]
        %v1052 = vld [vmem:[#allocation5 + $0x1230] sm:$0xff]
        %v1053 = vld [vmem:[#allocation5 + $0x1238] sm:$0xff]
        %v1054 = vld [vmem:[#allocation5 + $0x1240] sm:$0xff]
        %v1055 = vld [vmem:[#allocation5 + $0x1248] sm:$0xff]
        %v1056 = vld [vmem:[#allocation5 + $0x1250] sm:$0xff]
        %v1057 = vld [vmem:[#allocation5 + $0x1258] sm:$0xff]
        %v1058 = vld [vmem:[#allocation5 + $0x1260] sm:$0xff]
        %v1059 = vld [vmem:[#allocation5 + $0x1268] sm:$0xff]
        %v1060 = vld [vmem:[#allocation5 + $0x1270] sm:$0xff]
        %v1061 = vld [vmem:[#allocation5 + $0x1278] sm:$0xff]
        %v1062 = vld [vmem:[#allocation5 + $0x1280] sm:$0xff]
        %v1063 = vld [vmem:[#allocation5 + $0x1288] sm:$0xff]
        %v1064 = vld [vmem:[#allocation5 + $0x1290] sm:$0xff]
        %v1065 = vld [vmem:[#allocation5 + $0x1298] sm:$0xff]
        %v1066 = vld [vmem:[#allocation5 + $0x12a0] sm:$0xff]
        %v1067 = vld [vmem:[#allocation5 + $0x12a8] sm:$0xff]
        %v1068 = vld [vmem:[#allocation5 + $0x12b0] sm:$0xff]
        %v1069 = vld [vmem:[#allocation5 + $0x12b8] sm:$0xff]
        %v1070 = vld [vmem:[#allocation5 + $0x12c0] sm:$0xff]
        %v1071 = vld [vmem:[#allocation5 + $0x12c8] sm:$0xff]
        %v1072 = vld [vmem:[#allocation5 + $0x12d0] sm:$0xff]
        %v1073 = vld [vmem:[#allocation5 + $0x12d8] sm:$0xff]
        %v1074 = vld [vmem:[#allocation5 + $0x12e0] sm:$0xff]
        %v1075 = vld [vmem:[#allocation5 + $0x12e8] sm:$0xff]
        %v1076 = vld [vmem:[#allocation5 + $0x12f0] sm:$0xff]
        %v1077 = vld [vmem:[#allocation5 + $0x12f8] sm:$0xff]
        %v1078 = vld [vmem:[#allocation5 + $0x1300] sm:$0xff]
        %v1079 = vld [vmem:[#allocation5 + $0x1308] sm:$0xff]
        %v1080 = vld [vmem:[#allocation5 + $0x1310] sm:$0xff]
        %v1081 = vld [vmem:[#allocation5 + $0x1318] sm:$0xff]
        %v1082 = vld [vmem:[#allocation5 + $0x1320] sm:$0xff]
        %v1083 = vld [vmem:[#allocation5 + $0x1328] sm:$0xff]
        %v1084 = vld [vmem:[#allocation5 + $0x1330] sm:$0xff]
        %v1085 = vld [vmem:[#allocation5 + $0x1338] sm:$0xff]
        %v1086 = vld [vmem:[#allocation5 + $0x1340] sm:$0xff]
        %v1087 = vld [vmem:[#allocation5 + $0x1348] sm:$0xff]
        %v1088 = vld [vmem:[#allocation5 + $0x1350] sm:$0xff]
        %v1089 = vld [vmem:[#allocation5 + $0x1358] sm:$0xff]
        %v1090 = vld [vmem:[#allocation5 + $0x1360] sm:$0xff]
        %v1091 = vld [vmem:[#allocation5 + $0x1368] sm:$0xff]
        %v1092 = vld [vmem:[#allocation5 + $0x1370] sm:$0xff]
        %v1093 = vld [vmem:[#allocation5 + $0x1378] sm:$0xff]
        %v1094 = vld [vmem:[#allocation5 + $0x1380] sm:$0xff]
        %v1095 = vld [vmem:[#allocation5 + $0x1388] sm:$0xff]
        %v1096 = vld [vmem:[#allocation5 + $0x1390] sm:$0xff]
        %v1097 = vld [vmem:[#allocation5 + $0x1398] sm:$0xff]
        %v1098 = vld [vmem:[#allocation5 + $0x13a0] sm:$0xff]
        %v1099 = vld [vmem:[#allocation5 + $0x13a8] sm:$0xff]
        %v1100 = vld [vmem:[#allocation5 + $0x13b0] sm:$0xff]
        %v1101 = vld [vmem:[#allocation5 + $0x13b8] sm:$0xff]
        %v1102 = vld [vmem:[#allocation5 + $0x13c0] sm:$0xff]
        %v1103 = vld [vmem:[#allocation5 + $0x13c8] sm:$0xff]
        %v1104 = vld [vmem:[#allocation5 + $0x13d0] sm:$0xff]
        %v1105 = vld [vmem:[#allocation5 + $0x13d8] sm:$0xff]
        %v1106 = vld [vmem:[#allocation5 + $0x13e0] sm:$0xff]
        %v1107 = vld [vmem:[#allocation5 + $0x13e8] sm:$0xff]
        %v1108 = vld [vmem:[#allocation5 + $0x13f0] sm:$0xff]
        %v1109 = vld [vmem:[#allocation5 + $0x13f8] sm:$0xff]
        %v1110 = vld [vmem:[#allocation5 + $0x1400] sm:$0xff]
        %v1111 = vld [vmem:[#allocation5 + $0x1408] sm:$0xff]
        %v1112 = vld [vmem:[#allocation5 + $0x1410] sm:$0xff]
        %v1113 = vld [vmem:[#allocation5 + $0x1418] sm:$0xff]
        %v1114 = vld [vmem:[#allocation5 + $0x1420] sm:$0xff]
        %v1115 = vld [vmem:[#allocation5 + $0x1428] sm:$0xff]
        %v1116 = vld [vmem:[#allocation5 + $0x1430] sm:$0xff]
        %v1117 = vld [vmem:[#allocation5 + $0x1438] sm:$0xff]
        %v1118 = vld [vmem:[#allocation5 + $0x1440] sm:$0xff]
        %v1119 = vld [vmem:[#allocation5 + $0x1448] sm:$0xff]
        %v1120 = vld [vmem:[#allocation5 + $0x1450] sm:$0xff]
        %v1121 = vld [vmem:[#allocation5 + $0x1458] sm:$0xff]
        %v1122 = vld [vmem:[#allocation5 + $0x1460] sm:$0xff]
        %v1123 = vld [vmem:[#allocation5 + $0x1468] sm:$0xff]
        %v1124 = vld [vmem:[#allocation5 + $0x1470] sm:$0xff]
        %v1125 = vld [vmem:[#allocation5 + $0x1478] sm:$0xff]
        %v1126 = vld [vmem:[#allocation5 + $0x1480] sm:$0xff]
        %v1127 = vld [vmem:[#allocation5 + $0x1488] sm:$0xff]
        %v1128 = vld [vmem:[#allocation5 + $0x1490] sm:$0xff]
        %v1129 = vld [vmem:[#allocation5 + $0x1498] sm:$0xff]
        %v1130 = vld [vmem:[#allocation5 + $0x14a0] sm:$0xff]
        %v1131 = vld [vmem:[#allocation5 + $0x14a8] sm:$0xff]
        %v1132 = vld [vmem:[#allocation5 + $0x14b0] sm:$0xff]
        %v1133 = vld [vmem:[#allocation5 + $0x14b8] sm:$0xff]
        %v1134 = vld [vmem:[#allocation5 + $0x14c0] sm:$0xff]
        %v1135 = vld [vmem:[#allocation5 + $0x14c8] sm:$0xff]
        %v1136 = vld [vmem:[#allocation5 + $0x14d0] sm:$0xff]
        %v1137 = vld [vmem:[#allocation5 + $0x14d8] sm:$0xff]
        %v1138 = vld [vmem:[#allocation5 + $0x14e0] sm:$0xff]
        %v1139 = vld [vmem:[#allocation5 + $0x14e8] sm:$0xff]
        %v1140 = vld [vmem:[#allocation5 + $0x14f0] sm:$0xff]
        %v1141 = vld [vmem:[#allocation5 + $0x14f8] sm:$0xff]
        %v1142 = vld [vmem:[#allocation5 + $0x1500] sm:$0xff]
        %v1143 = vld [vmem:[#allocation5 + $0x1508] sm:$0xff]
        %v1144 = vld [vmem:[#allocation5 + $0x1510] sm:$0xff]
        %v1145 = vld [vmem:[#allocation5 + $0x1518] sm:$0xff]
        %v1146 = vld [vmem:[#allocation5 + $0x1520] sm:$0xff]
        %v1147 = vld [vmem:[#allocation5 + $0x1528] sm:$0xff]
        %v1148 = vld [vmem:[#allocation5 + $0x1530] sm:$0xff]
        %v1149 = vld [vmem:[#allocation5 + $0x1538] sm:$0xff]
        %v1150 = vld [vmem:[#allocation5 + $0x1540] sm:$0xff]
        %v1151 = vld [vmem:[#allocation5 + $0x1548] sm:$0xff]
        %v1152 = vld [vmem:[#allocation5 + $0x1550] sm:$0xff]
        %v1153 = vld [vmem:[#allocation5 + $0x1558] sm:$0xff]
        %v1154 = vld [vmem:[#allocation5 + $0x1560] sm:$0xff]
        %v1155 = vld [vmem:[#allocation5 + $0x1568] sm:$0xff]
        %v1156 = vld [vmem:[#allocation5 + $0x1570] sm:$0xff]
        %v1157 = vld [vmem:[#allocation5 + $0x1578] sm:$0xff]
        %v1158 = vld [vmem:[#allocation5 + $0x1580] sm:$0xff]
        %v1159 = vld [vmem:[#allocation5 + $0x1588] sm:$0xff]
        %v1160 = vld [vmem:[#allocation5 + $0x1590] sm:$0xff]
        %v1161 = vld [vmem:[#allocation5 + $0x1598] sm:$0xff]
        %v1162 = vld [vmem:[#allocation5 + $0x15a0] sm:$0xff]
        %v1163 = vld [vmem:[#allocation5 + $0x15a8] sm:$0xff]
        %v1164 = vld [vmem:[#allocation5 + $0x15b0] sm:$0xff]
        %v1165 = vld [vmem:[#allocation5 + $0x15b8] sm:$0xff]
        %v1166 = vld [vmem:[#allocation5 + $0x15c0] sm:$0xff]
        %v1167 = vld [vmem:[#allocation5 + $0x15c8] sm:$0xff]
        %v1168 = vld [vmem:[#allocation5 + $0x15d0] sm:$0xff]
        %v1169 = vld [vmem:[#allocation5 + $0x15d8] sm:$0xff]
        %v1170 = vld [vmem:[#allocation5 + $0x15e0] sm:$0xff]
        %v1171 = vld [vmem:[#allocation5 + $0x15e8] sm:$0xff]
        %v1172 = vld [vmem:[#allocation5 + $0x15f0] sm:$0xff]
        %v1173 = vld [vmem:[#allocation5 + $0x15f8] sm:$0xff]
        %v1174 = vld [vmem:[#allocation5 + $0x1600] sm:$0xff]
        %v1175 = vld [vmem:[#allocation5 + $0x1608] sm:$0xff]
        %v1176 = vld [vmem:[#allocation5 + $0x1610] sm:$0xff]
        %v1177 = vld [vmem:[#allocation5 + $0x1618] sm:$0xff]
        %v1178 = vld [vmem:[#allocation5 + $0x1620] sm:$0xff]
        %v1179 = vld [vmem:[#allocation5 + $0x1628] sm:$0xff]
        %v1180 = vld [vmem:[#allocation5 + $0x1630] sm:$0xff]
        %v1181 = vld [vmem:[#allocation5 + $0x1638] sm:$0xff]
        %v1182 = vld [vmem:[#allocation5 + $0x1640] sm:$0xff]
        %v1183 = vld [vmem:[#allocation5 + $0x1648] sm:$0xff]
        %v1184 = vld [vmem:[#allocation5 + $0x1650] sm:$0xff]
        %v1185 = vld [vmem:[#allocation5 + $0x1658] sm:$0xff]
        %v1186 = vld [vmem:[#allocation5 + $0x1660] sm:$0xff]
        %v1187 = vld [vmem:[#allocation5 + $0x1668] sm:$0xff]
        %v1188 = vld [vmem:[#allocation5 + $0x1670] sm:$0xff]
        %v1189 = vld [vmem:[#allocation5 + $0x1678] sm:$0xff]
        %v1190 = vld [vmem:[#allocation5 + $0x1680] sm:$0xff]
        %v1191 = vld [vmem:[#allocation5 + $0x1688] sm:$0xff]
        %v1192 = vld [vmem:[#allocation5 + $0x1690] sm:$0xff]
        %v1193 = vld [vmem:[#allocation5 + $0x1698] sm:$0xff]
        %v1194 = vld [vmem:[#allocation5 + $0x16a0] sm:$0xff]
        %v1195 = vld [vmem:[#allocation5 + $0x16a8] sm:$0xff]
        %v1196 = vld [vmem:[#allocation5 + $0x16b0] sm:$0xff]
        %v1197 = vld [vmem:[#allocation5 + $0x16b8] sm:$0xff]
        %v1198 = vld [vmem:[#allocation5 + $0x16c0] sm:$0xff]
        %v1199 = vld [vmem:[#allocation5 + $0x16c8] sm:$0xff]
        %v1200 = vld [vmem:[#allocation5 + $0x16d0] sm:$0xff]
        %v1201 = vld [vmem:[#allocation5 + $0x16d8] sm:$0xff]
        %v1202 = vld [vmem:[#allocation5 + $0x16e0] sm:$0xff]
        %v1203 = vld [vmem:[#allocation5 + $0x16e8] sm:$0xff]
        %v1204 = vld [vmem:[#allocation5 + $0x16f0] sm:$0xff]
        %v1205 = vld [vmem:[#allocation5 + $0x16f8] sm:$0xff]
        %v1206 = vld [vmem:[#allocation5 + $0x1700] sm:$0xff]
        %v1207 = vld [vmem:[#allocation5 + $0x1708] sm:$0xff]
        %v1208 = vld [vmem:[#allocation5 + $0x1710] sm:$0xff]
        %v1209 = vld [vmem:[#allocation5 + $0x1718] sm:$0xff]
        %v1210 = vld [vmem:[#allocation5 + $0x1720] sm:$0xff]
        %v1211 = vld [vmem:[#allocation5 + $0x1728] sm:$0xff]
        %v1212 = vld [vmem:[#allocation5 + $0x1730] sm:$0xff]
        %v1213 = vld [vmem:[#allocation5 + $0x1738] sm:$0xff]
        %v1214 = vld [vmem:[#allocation5 + $0x1740] sm:$0xff]
        %v1215 = vld [vmem:[#allocation5 + $0x1748] sm:$0xff]
        %v1216 = vld [vmem:[#allocation5 + $0x1750] sm:$0xff]
        %v1217 = vld [vmem:[#allocation5 + $0x1758] sm:$0xff]
        %v1218 = vld [vmem:[#allocation5 + $0x1760] sm:$0xff]
        %v1219 = vld [vmem:[#allocation5 + $0x1768] sm:$0xff]
        %v1220 = vld [vmem:[#allocation5 + $0x1770] sm:$0xff]
        %v1221 = vld [vmem:[#allocation5 + $0x1778] sm:$0xff]
        %v1222 = vld [vmem:[#allocation5 + $0x1780] sm:$0xff]
        %v1223 = vld [vmem:[#allocation5 + $0x1788] sm:$0xff]
        %v1224 = vld [vmem:[#allocation5 + $0x1790] sm:$0xff]
        %v1225 = vld [vmem:[#allocation5 + $0x1798] sm:$0xff]
        %v1226 = vld [vmem:[#allocation5 + $0x17a0] sm:$0xff]
        %v1227 = vld [vmem:[#allocation5 + $0x17a8] sm:$0xff]
        %v1228 = vld [vmem:[#allocation5 + $0x17b0] sm:$0xff]
        %v1229 = vld [vmem:[#allocation5 + $0x17b8] sm:$0xff]
        %v1230 = vld [vmem:[#allocation5 + $0x17c0] sm:$0xff]
        %v1231 = vld [vmem:[#allocation5 + $0x17c8] sm:$0xff]
        %v1232 = vld [vmem:[#allocation5 + $0x17d0] sm:$0xff]
        %v1233 = vld [vmem:[#allocation5 + $0x17d8] sm:$0xff]
        %v1234 = vld [vmem:[#allocation5 + $0x17e0] sm:$0xff]
        %v1235 = vld [vmem:[#allocation5 + $0x17e8] sm:$0xff]
        %v1236 = vld [vmem:[#allocation5 + $0x17f0] sm:$0xff]
        %v1237 = vld [vmem:[#allocation5 + $0x17f8] sm:$0xff]
        %v1238 = vld [vmem:[#allocation5 + $0x1800] sm:$0xff]
        %v1239 = vld [vmem:[#allocation5 + $0x1808] sm:$0xff]
        %v1240 = vld [vmem:[#allocation5 + $0x1810] sm:$0xff]
        %v1241 = vld [vmem:[#allocation5 + $0x1818] sm:$0xff]
        %v1242 = vld [vmem:[#allocation5 + $0x1820] sm:$0xff]
        %v1243 = vld [vmem:[#allocation5 + $0x1828] sm:$0xff]
        %v1244 = vld [vmem:[#allocation5 + $0x1830] sm:$0xff]
        %v1245 = vld [vmem:[#allocation5 + $0x1838] sm:$0xff]
        %v1246 = vld [vmem:[#allocation5 + $0x1840] sm:$0xff]
        %v1247 = vld [vmem:[#allocation5 + $0x1848] sm:$0xff]
        %v1248 = vld [vmem:[#allocation5 + $0x1850] sm:$0xff]
        %v1249 = vld [vmem:[#allocation5 + $0x1858] sm:$0xff]
        %v1250 = vld [vmem:[#allocation5 + $0x1860] sm:$0xff]
        %v1251 = vld [vmem:[#allocation5 + $0x1868] sm:$0xff]
        %v1252 = vld [vmem:[#allocation5 + $0x1870] sm:$0xff]
        %v1253 = vld [vmem:[#allocation5 + $0x1878] sm:$0xff]
        %v1254 = vld [vmem:[#allocation5 + $0x1880] sm:$0xff]
        %v1255 = vld [vmem:[#allocation5 + $0x1888] sm:$0xff]
        %v1256 = vld [vmem:[#allocation5 + $0x1890] sm:$0xff]
        %v1257 = vld [vmem:[#allocation5 + $0x1898] sm:$0xff]
        %v1258 = vld [vmem:[#allocation5 + $0x18a0] sm:$0xff]
        %v1259 = vld [vmem:[#allocation5 + $0x18a8] sm:$0xff]
        %v1260 = vld [vmem:[#allocation5 + $0x18b0] sm:$0xff]
        %v1261 = vld [vmem:[#allocation5 + $0x18b8] sm:$0xff]
        %v1262 = vld [vmem:[#allocation5 + $0x18c0] sm:$0xff]
        %v1263 = vld [vmem:[#allocation5 + $0x18c8] sm:$0xff]
        %v1264 = vld [vmem:[#allocation5 + $0x18d0] sm:$0xff]
        %v1265 = vld [vmem:[#allocation5 + $0x18d8] sm:$0xff]
        %v1266 = vld [vmem:[#allocation5 + $0x18e0] sm:$0xff]
        %v1267 = vld [vmem:[#allocation5 + $0x18e8] sm:$0xff]
        %v1268 = vld [vmem:[#allocation5 + $0x18f0] sm:$0xff]
        %v1269 = vld [vmem:[#allocation5 + $0x18f8] sm:$0xff]
        %v1270 = vld [vmem:[#allocation5 + $0x1900] sm:$0xff]
        %v1271 = vld [vmem:[#allocation5 + $0x1908] sm:$0xff]
        %v1272 = vld [vmem:[#allocation5 + $0x1910] sm:$0xff]
        %v1273 = vld [vmem:[#allocation5 + $0x1918] sm:$0xff]
        %v1274 = vld [vmem:[#allocation5 + $0x1920] sm:$0xff]
        %v1275 = vld [vmem:[#allocation5 + $0x1928] sm:$0xff]
        %v1276 = vld [vmem:[#allocation5 + $0x1930] sm:$0xff]
        %v1277 = vld [vmem:[#allocation5 + $0x1938] sm:$0xff]
        %v1278 = vld [vmem:[#allocation5 + $0x1940] sm:$0xff]
        %v1279 = vld [vmem:[#allocation5 + $0x1948] sm:$0xff]
        %v1280 = vld [vmem:[#allocation5 + $0x1950] sm:$0xff]
        %v1281 = vld [vmem:[#allocation5 + $0x1958] sm:$0xff]
        %v1282 = vld [vmem:[#allocation5 + $0x1960] sm:$0xff]
        %v1283 = vld [vmem:[#allocation5 + $0x1968] sm:$0xff]
        %v1284 = vld [vmem:[#allocation5 + $0x1970] sm:$0xff]
        %v1285 = vld [vmem:[#allocation5 + $0x1978] sm:$0xff]
        %v1286 = vld [vmem:[#allocation5 + $0x1980] sm:$0xff]
        %v1287 = vld [vmem:[#allocation5 + $0x1988] sm:$0xff]
        %v1288 = vld [vmem:[#allocation5 + $0x1990] sm:$0xff]
        %v1289 = vld [vmem:[#allocation5 + $0x1998] sm:$0xff]
        %v1290 = vld [vmem:[#allocation5 + $0x19a0] sm:$0xff]
        %v1291 = vld [vmem:[#allocation5 + $0x19a8] sm:$0xff]
        %v1292 = vld [vmem:[#allocation5 + $0x19b0] sm:$0xff]
        %v1293 = vld [vmem:[#allocation5 + $0x19b8] sm:$0xff]
        %v1294 = vld [vmem:[#allocation5 + $0x19c0] sm:$0xff]
        %v1295 = vld [vmem:[#allocation5 + $0x19c8] sm:$0xff]
        %v1296 = vld [vmem:[#allocation5 + $0x19d0] sm:$0xff]
        %v1297 = vld [vmem:[#allocation5 + $0x19d8] sm:$0xff]
        %v1298 = vld [vmem:[#allocation5 + $0x19e0] sm:$0xff]
        %v1299 = vld [vmem:[#allocation5 + $0x19e8] sm:$0xff]
        %v1300 = vld [vmem:[#allocation5 + $0x19f0] sm:$0xff]
        %v1301 = vld [vmem:[#allocation5 + $0x19f8] sm:$0xff]
        %v1302 = vld [vmem:[#allocation5 + $0x1a00] sm:$0xff]
        %v1303 = vld [vmem:[#allocation5 + $0x1a08] sm:$0xff]
        %v1304 = vld [vmem:[#allocation5 + $0x1a10] sm:$0xff]
        %v1305 = vld [vmem:[#allocation5 + $0x1a18] sm:$0xff]
        %v1306 = vld [vmem:[#allocation5 + $0x1a20] sm:$0xff]
        %v1307 = vld [vmem:[#allocation5 + $0x1a28] sm:$0xff]
        %v1308 = vld [vmem:[#allocation5 + $0x1a30] sm:$0xff]
        %v1309 = vld [vmem:[#allocation5 + $0x1a38] sm:$0xff]
        %v1310 = vld [vmem:[#allocation5 + $0x1a40] sm:$0xff]
        %v1311 = vld [vmem:[#allocation5 + $0x1a48] sm:$0xff]
        %v1312 = vld [vmem:[#allocation5 + $0x1a50] sm:$0xff]
        %v1313 = vld [vmem:[#allocation5 + $0x1a58] sm:$0xff]
        %v1314 = vld [vmem:[#allocation5 + $0x1a60] sm:$0xff]
        %v1315 = vld [vmem:[#allocation5 + $0x1a68] sm:$0xff]
        %v1316 = vld [vmem:[#allocation5 + $0x1a70] sm:$0xff]
        %v1317 = vld [vmem:[#allocation5 + $0x1a78] sm:$0xff]
        %v1318 = vld [vmem:[#allocation5 + $0x1a80] sm:$0xff]
        %v1319 = vld [vmem:[#allocation5 + $0x1a88] sm:$0xff]
        %v1320 = vld [vmem:[#allocation5 + $0x1a90] sm:$0xff]
        %v1321 = vld [vmem:[#allocation5 + $0x1a98] sm:$0xff]
        %v1322 = vld [vmem:[#allocation5 + $0x1aa0] sm:$0xff]
        %v1323 = vld [vmem:[#allocation5 + $0x1aa8] sm:$0xff]
        %v1324 = vld [vmem:[#allocation5 + $0x1ab0] sm:$0xff]
        %v1325 = vld [vmem:[#allocation5 + $0x1ab8] sm:$0xff]
        %v1326 = vld [vmem:[#allocation5 + $0x1ac0] sm:$0xff]
        %v1327 = vld [vmem:[#allocation5 + $0x1ac8] sm:$0xff]
        %v1328 = vld [vmem:[#allocation5 + $0x1ad0] sm:$0xff]
        %v1329 = vld [vmem:[#allocation5 + $0x1ad8] sm:$0xff]
        %v1330 = vld [vmem:[#allocation5 + $0x1ae0] sm:$0xff]
        %v1331 = vld [vmem:[#allocation5 + $0x1ae8] sm:$0xff]
        %v1332 = vld [vmem:[#allocation5 + $0x1af0] sm:$0xff]
        %v1333 = vld [vmem:[#allocation5 + $0x1af8] sm:$0xff]
        %v1334 = vld [vmem:[#allocation5 + $0x1b00] sm:$0xff]
        %v1335 = vld [vmem:[#allocation5 + $0x1b08] sm:$0xff]
        %v1336 = vld [vmem:[#allocation5 + $0x1b10] sm:$0xff]
        %v1337 = vld [vmem:[#allocation5 + $0x1b18] sm:$0xff]
        %v1338 = vld [vmem:[#allocation5 + $0x1b20] sm:$0xff]
        %v1339 = vld [vmem:[#allocation5 + $0x1b28] sm:$0xff]
        %v1340 = vld [vmem:[#allocation5 + $0x1b30] sm:$0xff]
        %v1341 = vld [vmem:[#allocation5 + $0x1b38] sm:$0xff]
        %v1342 = vld [vmem:[#allocation5 + $0x1b40] sm:$0xff]
        %v1343 = vld [vmem:[#allocation5 + $0x1b48] sm:$0xff]
        %v1344 = vld [vmem:[#allocation5 + $0x1b50] sm:$0xff]
        %v1345 = vld [vmem:[#allocation5 + $0x1b58] sm:$0xff]
        %v1346 = vld [vmem:[#allocation5 + $0x1b60] sm:$0xff]
        %v1347 = vld [vmem:[#allocation5 + $0x1b68] sm:$0xff]
        %v1348 = vld [vmem:[#allocation5 + $0x1b70] sm:$0xff]
        %v1349 = vld [vmem:[#allocation5 + $0x1b78] sm:$0xff]
        %v1350 = vld [vmem:[#allocation5 + $0x1b80] sm:$0xff]
        %v1351 = vld [vmem:[#allocation5 + $0x1b88] sm:$0xff]
        %v1352 = vld [vmem:[#allocation5 + $0x1b90] sm:$0xff]
        %v1353 = vld [vmem:[#allocation5 + $0x1b98] sm:$0xff]
        %v1354 = vld [vmem:[#allocation5 + $0x1ba0] sm:$0xff]
        %v1355 = vld [vmem:[#allocation5 + $0x1ba8] sm:$0xff]
        %v1356 = vld [vmem:[#allocation5 + $0x1bb0] sm:$0xff]
        %v1357 = vld [vmem:[#allocation5 + $0x1bb8] sm:$0xff]
        %v1358 = vld [vmem:[#allocation5 + $0x1bc0] sm:$0xff]
        %v1359 = vld [vmem:[#allocation5 + $0x1bc8] sm:$0xff]
        %v1360 = vld [vmem:[#allocation5 + $0x1bd0] sm:$0xff]
        %v1361 = vld [vmem:[#allocation5 + $0x1bd8] sm:$0xff]
        %v1362 = vld [vmem:[#allocation5 + $0x1be0] sm:$0xff]
        %v1363 = vld [vmem:[#allocation5 + $0x1be8] sm:$0xff]
        %v1364 = vld [vmem:[#allocation5 + $0x1bf0] sm:$0xff]
        %v1365 = vld [vmem:[#allocation5 + $0x1bf8] sm:$0xff]
        %v1366 = vld [vmem:[#allocation5 + $0x1c00] sm:$0xff]
        %v1367 = vld [vmem:[#allocation5 + $0x1c08] sm:$0xff]
        %v1368 = vld [vmem:[#allocation5 + $0x1c10] sm:$0xff]
        %v1369 = vld [vmem:[#allocation5 + $0x1c18] sm:$0xff]
        %v1370 = vld [vmem:[#allocation5 + $0x1c20] sm:$0xff]
        %v1371 = vld [vmem:[#allocation5 + $0x1c28] sm:$0xff]
        %v1372 = vld [vmem:[#allocation5 + $0x1c30] sm:$0xff]
        %v1373 = vld [vmem:[#allocation5 + $0x1c38] sm:$0xff]
        %v1374 = vld [vmem:[#allocation5 + $0x1c40] sm:$0xff]
        %v1375 = vld [vmem:[#allocation5 + $0x1c48] sm:$0xff]
        %v1376 = vld [vmem:[#allocation5 + $0x1c50] sm:$0xff]
        %v1377 = vld [vmem:[#allocation5 + $0x1c58] sm:$0xff]
        %v1378 = vld [vmem:[#allocation5 + $0x1c60] sm:$0xff]
        %v1379 = vld [vmem:[#allocation5 + $0x1c68] sm:$0xff]
        %v1380 = vld [vmem:[#allocation5 + $0x1c70] sm:$0xff]
        %v1381 = vld [vmem:[#allocation5 + $0x1c78] sm:$0xff]
        %v1382 = vld [vmem:[#allocation5 + $0x1c80] sm:$0xff]
        %v1383 = vld [vmem:[#allocation5 + $0x1c88] sm:$0xff]
        %v1384 = vld [vmem:[#allocation5 + $0x1c90] sm:$0xff]
        %v1385 = vld [vmem:[#allocation5 + $0x1c98] sm:$0xff]
        %v1386 = vld [vmem:[#allocation5 + $0x1ca0] sm:$0xff]
        %v1387 = vld [vmem:[#allocation5 + $0x1ca8] sm:$0xff]
        %v1388 = vld [vmem:[#allocation5 + $0x1cb0] sm:$0xff]
        %v1389 = vld [vmem:[#allocation5 + $0x1cb8] sm:$0xff]
        %v1390 = vld [vmem:[#allocation5 + $0x1cc0] sm:$0xff]
        %v1391 = vld [vmem:[#allocation5 + $0x1cc8] sm:$0xff]
        %v1392 = vld [vmem:[#allocation5 + $0x1cd0] sm:$0xff]
        %v1393 = vld [vmem:[#allocation5 + $0x1cd8] sm:$0xff]
        %v1394 = vld [vmem:[#allocation5 + $0x1ce0] sm:$0xff]
        %v1395 = vld [vmem:[#allocation5 + $0x1ce8] sm:$0xff]
        %v1396 = vld [vmem:[#allocation5 + $0x1cf0] sm:$0xff]
        %v1397 = vld [vmem:[#allocation5 + $0x1cf8] sm:$0xff]
        %v1398 = vld [vmem:[#allocation5 + $0x1d00] sm:$0xff]
        %v1399 = vld [vmem:[#allocation5 + $0x1d08] sm:$0xff]
        %v1400 = vld [vmem:[#allocation5 + $0x1d10] sm:$0xff]
        %v1401 = vld [vmem:[#allocation5 + $0x1d18] sm:$0xff]
        %v1402 = vld [vmem:[#allocation5 + $0x1d20] sm:$0xff]
        %v1403 = vld [vmem:[#allocation5 + $0x1d28] sm:$0xff]
        %v1404 = vld [vmem:[#allocation5 + $0x1d30] sm:$0xff]
        %v1405 = vld [vmem:[#allocation5 + $0x1d38] sm:$0xff]
        %v1406 = vld [vmem:[#allocation5 + $0x1d40] sm:$0xff]
        %v1407 = vld [vmem:[#allocation5 + $0x1d48] sm:$0xff]
        %v1408 = vld [vmem:[#allocation5 + $0x1d50] sm:$0xff]
        %v1409 = vld [vmem:[#allocation5 + $0x1d58] sm:$0xff]
        %v1410 = vld [vmem:[#allocation5 + $0x1d60] sm:$0xff]
        %v1411 = vld [vmem:[#allocation5 + $0x1d68] sm:$0xff]
        %v1412 = vld [vmem:[#allocation5 + $0x1d70] sm:$0xff]
        %v1413 = vld [vmem:[#allocation5 + $0x1d78] sm:$0xff]
        %v1414 = vld [vmem:[#allocation5 + $0x1d80] sm:$0xff]
        %v1415 = vld [vmem:[#allocation5 + $0x1d88] sm:$0xff]
        %v1416 = vld [vmem:[#allocation5 + $0x1d90] sm:$0xff]
        %v1417 = vld [vmem:[#allocation5 + $0x1d98] sm:$0xff]
        %v1418 = vld [vmem:[#allocation5 + $0x1da0] sm:$0xff]
        %v1419 = vld [vmem:[#allocation5 + $0x1da8] sm:$0xff]
        %v1420 = vld [vmem:[#allocation5 + $0x1db0] sm:$0xff]
        %v1421 = vld [vmem:[#allocation5 + $0x1db8] sm:$0xff]
        %v1422 = vld [vmem:[#allocation5 + $0x1dc0] sm:$0xff]
        %v1423 = vld [vmem:[#allocation5 + $0x1dc8] sm:$0xff]
        %v1424 = vld [vmem:[#allocation5 + $0x1dd0] sm:$0xff]
        %v1425 = vld [vmem:[#allocation5 + $0x1dd8] sm:$0xff]
        %v1426 = vld [vmem:[#allocation5 + $0x1de0] sm:$0xff]
        %v1427 = vld [vmem:[#allocation5 + $0x1de8] sm:$0xff]
        %v1428 = vld [vmem:[#allocation5 + $0x1df0] sm:$0xff]
        %v1429 = vld [vmem:[#allocation5 + $0x1df8] sm:$0xff]
        %v1430 = vlaneseq
        %v1431 = vshrl.u32 %v1430, 7
        %v1432 = vsub.s32 0, %v1431
        %v1433 = vrot.slane %v322, %v1432
        %v1434 = vlaneseq
        %v1435 = vshrl.u32 %v1434, 7
        %v1436 = vsub.s32 0, %v1435
        %v1437 = vrot.slane %v323, %v1436
        %v1438 = vlaneseq
        %v1439 = vshrl.u32 %v1438, 7
        %v1440 = vsub.s32 0, %v1439
        %v1441 = vrot.slane %v324, %v1440
        %v1442 = vlaneseq
        %v1443 = vshrl.u32 %v1442, 7
        %v1444 = vsub.s32 0, %v1443
        %v1445 = vrot.slane %v325, %v1444
        %v1446 = vlaneseq
        %v1447 = vshrl.u32 %v1446, 7
        %v1448 = vsub.s32 0, %v1447
        %v1449 = vrot.slane %v326, %v1448
        %v1450 = vlaneseq
        %v1451 = vshrl.u32 %v1450, 7
        %v1452 = vsub.s32 0, %v1451
        %v1453 = vrot.slane %v327, %v1452
        %v1454 = vlaneseq
        %v1455 = vshrl.u32 %v1454, 7
        %v1456 = vsub.s32 0, %v1455
        %v1457 = vrot.slane %v328, %v1456
        %v1458 = vlaneseq
        %v1459 = vshrl.u32 %v1458, 7
        %v1460 = vsub.s32 0, %v1459
        %v1461 = vrot.slane %v329, %v1460
        %vm1462 = vcmask 523264
        %v1464 = vsel %vm1462, %v469, 0
        %1466 = vmatprep.subr.mxu0 %v471
        %1467 = vmatpush1.msra.mxu0 %v470
        %1468 = vmatprep.subr.mxu0 %v479
        %1469 = vmatpush1.msra.mxu0 %v478
        %1470 = vmatprep.subr.mxu0 %v487
        %1471 = vmatpush1.msra.mxu0 %v486
        %1472 = vmatprep.subr.mxu0 %v495
        %1473 = vmatpush1.msra.mxu0 %v494
        %1474 = vmatprep.subr.mxu0 %v503
        %1475 = vmatpush1.msra.mxu0 %v502
        %1476 = vmatprep.subr.mxu0 %v511
        %1477 = vmatpush1.msra.mxu0 %v510
        %1478 = vmatprep.subr.mxu0 %v519
        %1479 = vmatpush1.msra.mxu0 %v518
        %1480 = vmatprep.subr.mxu0 %v527
        %1481 = vmatpush1.msra.mxu0 %v526
        %1482 = vmatprep.subr.mxu0 %v535
        %1483 = vmatpush1.msra.mxu0 %v534
        %1484 = vmatprep.subr.mxu0 %v543
        %1485 = vmatpush1.msra.mxu0 %v542
        %1486 = vmatprep.subr.mxu0 %v551
        %1487 = vmatpush1.msra.mxu0 %v550
        %1488 = vmatprep.subr.mxu0 %v559
        %1489 = vmatpush1.msra.mxu0 %v558
        %1490 = vmatprep.subr.mxu0 %v567
        %1491 = vmatpush1.msra.mxu0 %v566
        %1492 = vmatprep.subr.mxu0 %v575
        %1493 = vmatpush1.msra.mxu0 %v574
        %1494 = vmatprep.subr.mxu0 %v583
        %1495 = vmatpush1.msra.mxu0 %v582
        %1496 = vmatprep.subr.mxu0 %v591
        %1497 = vmatpush1.msra.mxu0 %v590
        %1498 = vmatprep.subr.mxu0 %v599
        %1499 = vmatpush1.msra.mxu0 %v598
        %1500 = vmatprep.subr.mxu0 %v607
        %1501 = vmatpush1.msra.mxu0 %v606
        %1502 = vmatprep.subr.mxu0 %v615
        %1503 = vmatpush1.msra.mxu0 %v614
        %1504 = vmatprep.subr.mxu0 %v623
        %1505 = vmatpush1.msra.mxu0 %v622
        %1506 = vmatprep.subr.mxu0 %v631
        %1507 = vmatpush1.msra.mxu0 %v630
        %1508 = vmatprep.subr.mxu0 %v639
        %1509 = vmatpush1.msra.mxu0 %v638
        %1510 = vmatprep.subr.mxu0 %v647
        %1511 = vmatpush1.msra.mxu0 %v646
        %1512 = vmatprep.subr.mxu0 %v655
        %1513 = vmatpush1.msra.mxu0 %v654
        %1514 = vmatprep.subr.mxu0 %v663
        %1515 = vmatpush1.msra.mxu0 %v662
        %1516 = vmatprep.subr.mxu0 %v671
        %1517 = vmatpush1.msra.mxu0 %v670
        %1518 = vmatprep.subr.mxu0 %v679
        %1519 = vmatpush1.msra.mxu0 %v678
        %1520 = vmatprep.subr.mxu0 %v687
        %1521 = vmatpush1.msra.mxu0 %v686
        %1522 = vmatprep.subr.mxu0 %v695
        %1523 = vmatpush1.msra.mxu0 %v694
        %1524 = vmatprep.subr.mxu0 %v703
        %1525 = vmatpush1.msra.mxu0 %v702
        %1526 = vmatprep.subr.mxu0 %v711
        %1527 = vmatpush1.msra.mxu0 %v710
        %1528 = vmatprep.subr.mxu0 %v719
        %1529 = vmatpush1.msra.mxu0 %v718
        %1530 = vmatprep.mubr.f32.mxu0 %v463
        %1531 = vmatmul.mubr.f32.gmra.mrb[0].mxu0 %v462
        %v1532 = vpop.f32.mrb[0].mxu0
        %v1533 = vadd.f32 %v1433, %v1532
        %v1534 = vpop.f32.mrb[0].mxu0
        %v1535 = vadd.f32 %v1437, %v1534
        %1536 = vdwg.mxu0
        %1537 = vmatprep.subr.mxu0 %v727
        %1538 = vmatpush1.msra.mxu0 %v726
        %1539 = vmatprep.subr.mxu0 %v735
        %1540 = vmatpush1.msra.mxu0 %v734
        %1541 = vmatprep.subr.mxu0 %v743
        %1542 = vmatpush1.msra.mxu0 %v742
        %1543 = vmatprep.subr.mxu0 %v751
        %1544 = vmatpush1.msra.mxu0 %v750
        %1545 = vmatprep.subr.mxu0 %v759
        %1546 = vmatpush1.msra.mxu0 %v758
        %1547 = vmatprep.subr.mxu0 %v767
        %1548 = vmatpush1.msra.mxu0 %v766
        %1549 = vmatprep.subr.mxu0 %v775
        %1550 = vmatpush1.msra.mxu0 %v774
        %1551 = vmatprep.subr.mxu0 %v783
        %1552 = vmatpush1.msra.mxu0 %v782
        %1553 = vmatprep.subr.mxu0 %v791
        %1554 = vmatpush1.msra.mxu0 %v790
        %1555 = vmatprep.subr.mxu0 %v799
        %1556 = vmatpush1.msra.mxu0 %v798
        %1557 = vmatprep.subr.mxu0 %v807
        %1558 = vmatpush1.msra.mxu0 %v806
        %1559 = vmatprep.subr.mxu0 %v815
        %1560 = vmatpush1.msra.mxu0 %v814
        %1561 = vmatprep.subr.mxu0 %v823
        %1562 = vmatpush1.msra.mxu0 %v822
        %1563 = vmatprep.subr.mxu0 %v831
        %1564 = vmatpush1.msra.mxu0 %v830
        %1565 = vmatprep.subr.mxu0 %v839
        %1566 = vmatpush1.msra.mxu0 %v838
        %1567 = vmatprep.subr.mxu0 %v847
        %1568 = vmatpush1.msra.mxu0 %v846
        %1569 = vmatprep.subr.mxu0 %v855
        %1570 = vmatpush1.msra.mxu0 %v854
        %1571 = vmatprep.subr.mxu0 %v863
        %1572 = vmatpush1.msra.mxu0 %v862
        %1573 = vmatprep.subr.mxu0 %v871
        %1574 = vmatpush1.msra.mxu0 %v870
        %1575 = vmatprep.subr.mxu0 %v879
        %1576 = vmatpush1.msra.mxu0 %v878
        %1577 = vmatprep.subr.mxu0 %v887
        %1578 = vmatpush1.msra.mxu0 %v886
        %1579 = vmatprep.subr.mxu0 %v895
        %1580 = vmatpush1.msra.mxu0 %v894
        %1581 = vmatprep.subr.mxu0 %v903
        %1582 = vmatpush1.msra.mxu0 %v902
        %1583 = vmatprep.subr.mxu0 %v911
        %1584 = vmatpush1.msra.mxu0 %v910
        %1585 = vmatprep.subr.mxu0 %v919
        %1586 = vmatpush1.msra.mxu0 %v918
        %1587 = vmatprep.subr.mxu0 %v927
        %1588 = vmatpush1.msra.mxu0 %v926
        %1589 = vmatprep.subr.mxu0 %v935
        %1590 = vmatpush1.msra.mxu0 %v934
        %1591 = vmatprep.subr.mxu0 %v943
        %1592 = vmatpush1.msra.mxu0 %v942
        %1593 = vmatprep.subr.mxu0 %v951
        %1594 = vmatpush1.msra.mxu0 %v950
        %1595 = vmatprep.subr.mxu0 %v959
        %1596 = vmatpush1.msra.mxu0 %v958
        %1597 = vmatprep.subr.mxu0 %v967
        %1598 = vmatpush1.msra.mxu0 %v966
        %1599 = vmatprep.subr.mxu0 %v975
        %1600 = vmatpush1.msra.mxu0 %v974
        %1601 = vmatprep.mubr.f32.mxu0 %v465
        %1602 = vmatmul.mubr.f32.gmra.mrb[0].mxu0 %v464
        %v1603 = vpop.f32.mrb[0].mxu0
        %v1604 = vadd.f32 %v1533, %v1603
        %v1605 = vpop.f32.mrb[0].mxu0
        %v1606 = vadd.f32 %v1535, %v1605
        %1607 = vdwg.mxu0
        %1608 = vmatprep.subr.mxu0 %v983
        %1609 = vmatpush1.msra.mxu0 %v982
        %1610 = vmatprep.subr.mxu0 %v991
        %1611 = vmatpush1.msra.mxu0 %v990
        %1612 = vmatprep.subr.mxu0 %v999
        %1613 = vmatpush1.msra.mxu0 %v998
        %1614 = vmatprep.subr.mxu0 %v1007
        %1615 = vmatpush1.msra.mxu0 %v1006
        %1616 = vmatprep.subr.mxu0 %v1015
        %1617 = vmatpush1.msra.mxu0 %v1014
        %1618 = vmatprep.subr.mxu0 %v1023
        %1619 = vmatpush1.msra.mxu0 %v1022
        %1620 = vmatprep.subr.mxu0 %v1031
        %1621 = vmatpush1.msra.mxu0 %v1030
        %1622 = vmatprep.subr.mxu0 %v1039
        %1623 = vmatpush1.msra.mxu0 %v1038
        %1624 = vmatprep.subr.mxu0 %v1047
        %1625 = vmatpush1.msra.mxu0 %v1046
        %1626 = vmatprep.subr.mxu0 %v1055
        %1627 = vmatpush1.msra.mxu0 %v1054
        %1628 = vmatprep.subr.mxu0 %v1063
        %1629 = vmatpush1.msra.mxu0 %v1062
        %1630 = vmatprep.subr.mxu0 %v1071
        %1631 = vmatpush1.msra.mxu0 %v1070
        %1632 = vmatprep.subr.mxu0 %v1079
        %1633 = vmatpush1.msra.mxu0 %v1078
        %1634 = vmatprep.subr.mxu0 %v1087
        %1635 = vmatpush1.msra.mxu0 %v1086
        %1636 = vmatprep.subr.mxu0 %v1095
        %1637 = vmatpush1.msra.mxu0 %v1094
        %1638 = vmatprep.subr.mxu0 %v1103
        %1639 = vmatpush1.msra.mxu0 %v1102
        %1640 = vmatprep.subr.mxu0 %v1111
        %1641 = vmatpush1.msra.mxu0 %v1110
        %1642 = vmatprep.subr.mxu0 %v1119
        %1643 = vmatpush1.msra.mxu0 %v1118
        %1644 = vmatprep.subr.mxu0 %v1127
        %1645 = vmatpush1.msra.mxu0 %v1126
        %1646 = vmatprep.subr.mxu0 %v1135
        %1647 = vmatpush1.msra.mxu0 %v1134
        %1648 = vmatprep.subr.mxu0 %v1143
        %1649 = vmatpush1.msra.mxu0 %v1142
        %1650 = vmatprep.subr.mxu0 %v1151
        %1651 = vmatpush1.msra.mxu0 %v1150
        %1652 = vmatprep.subr.mxu0 %v1159
        %1653 = vmatpush1.msra.mxu0 %v1158
        %1654 = vmatprep.subr.mxu0 %v1167
        %1655 = vmatpush1.msra.mxu0 %v1166
        %1656 = vmatprep.subr.mxu0 %v1175
        %1657 = vmatpush1.msra.mxu0 %v1174
        %1658 = vmatprep.subr.mxu0 %v1183
        %1659 = vmatpush1.msra.mxu0 %v1182
        %1660 = vmatprep.subr.mxu0 %v1191
        %1661 = vmatpush1.msra.mxu0 %v1190
        %1662 = vmatprep.subr.mxu0 %v1199
        %1663 = vmatpush1.msra.mxu0 %v1198
        %1664 = vmatprep.subr.mxu0 %v1207
        %1665 = vmatpush1.msra.mxu0 %v1206
        %1666 = vmatprep.subr.mxu0 %v1215
        %1667 = vmatpush1.msra.mxu0 %v1214
        %1668 = vmatprep.subr.mxu0 %v1223
        %1669 = vmatpush1.msra.mxu0 %v1222
        %1670 = vmatprep.subr.mxu0 %v1231
        %1671 = vmatpush1.msra.mxu0 %v1230
        %1672 = vmatprep.mubr.f32.mxu0 %v467
        %1673 = vmatmul.mubr.f32.gmra.mrb[0].mxu0 %v466
        %v1674 = vpop.f32.mrb[0].mxu0
        %v1675 = vadd.f32 %v1604, %v1674
        %v1676 = vpop.f32.mrb[0].mxu0
        %v1677 = vadd.f32 %v1606, %v1676
        %1678 = vdwg.mxu0
        %1679 = vmatprep.subr.mxu0 %v1239
        %1680 = vmatpush1.msra.mxu0 %v1238
        %1681 = vmatprep.subr.mxu0 %v1247
        %1682 = vmatpush1.msra.mxu0 %v1246
        %1683 = vmatprep.subr.mxu0 %v1255
        %1684 = vmatpush1.msra.mxu0 %v1254
        %1685 = vmatprep.subr.mxu0 %v1263
        %1686 = vmatpush1.msra.mxu0 %v1262
        %1687 = vmatprep.subr.mxu0 %v1271
        %1688 = vmatpush1.msra.mxu0 %v1270
        %1689 = vmatprep.subr.mxu0 %v1279
        %1690 = vmatpush1.msra.mxu0 %v1278
        %1691 = vmatprep.subr.mxu0 %v1287
        %1692 = vmatpush1.msra.mxu0 %v1286
        %1693 = vmatprep.subr.mxu0 %v1295
        %1694 = vmatpush1.msra.mxu0 %v1294
        %1695 = vmatprep.subr.mxu0 %v1303
        %1696 = vmatpush1.msra.mxu0 %v1302
        %1697 = vmatprep.subr.mxu0 %v1311
        %1698 = vmatpush1.msra.mxu0 %v1310
        %1699 = vmatprep.subr.mxu0 %v1319
        %1700 = vmatpush1.msra.mxu0 %v1318
        %1701 = vmatprep.subr.mxu0 %v1327
        %1702 = vmatpush1.msra.mxu0 %v1326
        %1703 = vmatprep.subr.mxu0 %v1335
        %1704 = vmatpush1.msra.mxu0 %v1334
        %1705 = vmatprep.subr.mxu0 %v1343
        %1706 = vmatpush1.msra.mxu0 %v1342
        %1707 = vmatprep.subr.mxu0 %v1351
        %1708 = vmatpush1.msra.mxu0 %v1350
        %1709 = vmatprep.subr.mxu0 %v1359
        %1710 = vmatpush1.msra.mxu0 %v1358
        %1711 = vmatprep.subr.mxu0 %v1367
        %1712 = vmatpush1.msra.mxu0 %v1366
        %1713 = vmatprep.subr.mxu0 %v1375
        %1714 = vmatpush1.msra.mxu0 %v1374
        %1715 = vmatprep.subr.mxu0 %v1383
        %1716 = vmatpush1.msra.mxu0 %v1382
        %1717 = vmatprep.subr.mxu0 %v1391
        %1718 = vmatpush1.msra.mxu0 %v1390
        %1719 = vmatprep.subr.mxu0 %v1399
        %1720 = vmatpush1.msra.mxu0 %v1398
        %1721 = vmatprep.subr.mxu0 %v1407
        %1722 = vmatpush1.msra.mxu0 %v1406
        %1723 = vmatprep.subr.mxu0 %v1415
        %1724 = vmatpush1.msra.mxu0 %v1414
        %1725 = vmatprep.subr.mxu0 %v1423
        %1726 = vmatpush1.msra.mxu0 %v1422
        %1727 = vmatprep.subr.mxu0 0.0
        %1728 = vmatpush1.msra.mxu0 0.0
        %1729 = vmatprep.subr.mxu0 0.0
        %1730 = vmatpush1.msra.mxu0 0.0
        %1731 = vmatprep.subr.mxu0 0.0
        %1732 = vmatpush1.msra.mxu0 0.0
        %1733 = vmatprep.subr.mxu0 0.0
        %1734 = vmatpush1.msra.mxu0 0.0
        %1735 = vmatprep.subr.mxu0 0.0
        %1736 = vmatpush1.msra.mxu0 0.0
        %1737 = vmatprep.subr.mxu0 0.0
        %1738 = vmatpush1.msra.mxu0 0.0
        %1739 = vmatprep.subr.mxu0 0.0
        %1740 = vmatpush1.msra.mxu0 0.0
        %1741 = vmatprep.subr.mxu0 0.0
        %1742 = vmatpush1.msra.mxu0 0.0
        %1743 = vmatprep.mubr.f32.mxu0 %v1464
        %1744 = vmatmul.mubr.f32.gmra.mrb[0].mxu0 %v468
        %v1745 = vpop.f32.mrb[0].mxu0
        %v1746 = vadd.f32 %v1675, %v1745
        %v1747 = vpop.f32.mrb[0].mxu0
        %v1748 = vadd.f32 %v1677, %v1747
        %1749 = vdwg.mxu0
        %1750 = vmatprep.subr.mxu0 %v473
        %1751 = vmatpush1.msra.mxu0 %v472
        %1752 = vmatprep.subr.mxu0 %v481
        %1753 = vmatpush1.msra.mxu0 %v480
        %1754 = vmatprep.subr.mxu0 %v489
        %1755 = vmatpush1.msra.mxu0 %v488
        %1756 = vmatprep.subr.mxu0 %v497
        %1757 = vmatpush1.msra.mxu0 %v496
        %1758 = vmatprep.subr.mxu0 %v505
        %1759 = vmatpush1.msra.mxu0 %v504
        %1760 = vmatprep.subr.mxu0 %v513
        %1761 = vmatpush1.msra.mxu0 %v512
        %1762 = vmatprep.subr.mxu0 %v521
        %1763 = vmatpush1.msra.mxu0 %v520
        %1764 = vmatprep.subr.mxu0 %v529
        %1765 = vmatpush1.msra.mxu0 %v528
        %1766 = vmatprep.subr.mxu0 %v537
        %1767 = vmatpush1.msra.mxu0 %v536
        %1768 = vmatprep.subr.mxu0 %v545
        %1769 = vmatpush1.msra.mxu0 %v544
        %1770 = vmatprep.subr.mxu0 %v553
        %1771 = vmatpush1.msra.mxu0 %v552
        %1772 = vmatprep.subr.mxu0 %v561
        %1773 = vmatpush1.msra.mxu0 %v560
        %1774 = vmatprep.subr.mxu0 %v569
        %1775 = vmatpush1.msra.mxu0 %v568
        %1776 = vmatprep.subr.mxu0 %v577
        %1777 = vmatpush1.msra.mxu0 %v576
        %1778 = vmatprep.subr.mxu0 %v585
        %1779 = vmatpush1.msra.mxu0 %v584
        %1780 = vmatprep.subr.mxu0 %v593
        %1781 = vmatpush1.msra.mxu0 %v592
        %1782 = vmatprep.subr.mxu0 %v601
        %1783 = vmatpush1.msra.mxu0 %v600
        %1784 = vmatprep.subr.mxu0 %v609
        %1785 = vmatpush1.msra.mxu0 %v608
        %1786 = vmatprep.subr.mxu0 %v617
        %1787 = vmatpush1.msra.mxu0 %v616
        %1788 = vmatprep.subr.mxu0 %v625
        %1789 = vmatpush1.msra.mxu0 %v624
        %1790 = vmatprep.subr.mxu0 %v633
        %1791 = vmatpush1.msra.mxu0 %v632
        %1792 = vmatprep.subr.mxu0 %v641
        %1793 = vmatpush1.msra.mxu0 %v640
        %1794 = vmatprep.subr.mxu0 %v649
        %1795 = vmatpush1.msra.mxu0 %v648
        %1796 = vmatprep.subr.mxu0 %v657
        %1797 = vmatpush1.msra.mxu0 %v656
        %1798 = vmatprep.subr.mxu0 %v665
        %1799 = vmatpush1.msra.mxu0 %v664
        %1800 = vmatprep.subr.mxu0 %v673
        %1801 = vmatpush1.msra.mxu0 %v672
        %1802 = vmatprep.subr.mxu0 %v681
        %1803 = vmatpush1.msra.mxu0 %v680
        %1804 = vmatprep.subr.mxu0 %v689
        %1805 = vmatpush1.msra.mxu0 %v688
        %1806 = vmatprep.subr.mxu0 %v697
        %1807 = vmatpush1.msra.mxu0 %v696
        %1808 = vmatprep.subr.mxu0 %v705
        %1809 = vmatpush1.msra.mxu0 %v704
        %1810 = vmatprep.subr.mxu0 %v713
        %1811 = vmatpush1.msra.mxu0 %v712
        %1812 = vmatprep.subr.mxu0 %v721
        %1813 = vmatpush1.msra.mxu0 %v720
        %1814 = vmatprep.mubr.f32.mxu0 %v463
        %1815 = vmatmul.mubr.f32.gmra.mrb[0].mxu0 %v462
        %v1816 = vpop.f32.mrb[0].mxu0
        %v1817 = vadd.f32 %v1441, %v1816
        %v1818 = vpop.f32.mrb[0].mxu0
        %v1819 = vadd.f32 %v1445, %v1818
        %1820 = vdwg.mxu0
        %1821 = vmatprep.subr.mxu0 %v729
        %1822 = vmatpush1.msra.mxu0 %v728
        %1823 = vmatprep.subr.mxu0 %v737
        %1824 = vmatpush1.msra.mxu0 %v736
        %1825 = vmatprep.subr.mxu0 %v745
        %1826 = vmatpush1.msra.mxu0 %v744
        %1827 = vmatprep.subr.mxu0 %v753
        %1828 = vmatpush1.msra.mxu0 %v752
        %1829 = vmatprep.subr.mxu0 %v761
        %1830 = vmatpush1.msra.mxu0 %v760
        %1831 = vmatprep.subr.mxu0 %v769
        %1832 = vmatpush1.msra.mxu0 %v768
        %1833 = vmatprep.subr.mxu0 %v777
        %1834 = vmatpush1.msra.mxu0 %v776
        %1835 = vmatprep.subr.mxu0 %v785
        %1836 = vmatpush1.msra.mxu0 %v784
        %1837 = vmatprep.subr.mxu0 %v793
        %1838 = vmatpush1.msra.mxu0 %v792
        %1839 = vmatprep.subr.mxu0 %v801
        %1840 = vmatpush1.msra.mxu0 %v800
        %1841 = vmatprep.subr.mxu0 %v809
        %1842 = vmatpush1.msra.mxu0 %v808
        %1843 = vmatprep.subr.mxu0 %v817
        %1844 = vmatpush1.msra.mxu0 %v816
        %1845 = vmatprep.subr.mxu0 %v825
        %1846 = vmatpush1.msra.mxu0 %v824
        %1847 = vmatprep.subr.mxu0 %v833
        %1848 = vmatpush1.msra.mxu0 %v832
        %1849 = vmatprep.subr.mxu0 %v841
        %1850 = vmatpush1.msra.mxu0 %v840
        %1851 = vmatprep.subr.mxu0 %v849
        %1852 = vmatpush1.msra.mxu0 %v848
        %1853 = vmatprep.subr.mxu0 %v857
        %1854 = vmatpush1.msra.mxu0 %v856
        %1855 = vmatprep.subr.mxu0 %v865
        %1856 = vmatpush1.msra.mxu0 %v864
        %1857 = vmatprep.subr.mxu0 %v873
        %1858 = vmatpush1.msra.mxu0 %v872
        %1859 = vmatprep.subr.mxu0 %v881
        %1860 = vmatpush1.msra.mxu0 %v880
        %1861 = vmatprep.subr.mxu0 %v889
        %1862 = vmatpush1.msra.mxu0 %v888
        %1863 = vmatprep.subr.mxu0 %v897
        %1864 = vmatpush1.msra.mxu0 %v896
        %1865 = vmatprep.subr.mxu0 %v905
        %1866 = vmatpush1.msra.mxu0 %v904
        %1867 = vmatprep.subr.mxu0 %v913
        %1868 = vmatpush1.msra.mxu0 %v912
        %1869 = vmatprep.subr.mxu0 %v921
        %1870 = vmatpush1.msra.mxu0 %v920
        %1871 = vmatprep.subr.mxu0 %v929
        %1872 = vmatpush1.msra.mxu0 %v928
        %1873 = vmatprep.subr.mxu0 %v937
        %1874 = vmatpush1.msra.mxu0 %v936
        %1875 = vmatprep.subr.mxu0 %v945
        %1876 = vmatpush1.msra.mxu0 %v944
        %1877 = vmatprep.subr.mxu0 %v953
        %1878 = vmatpush1.msra.mxu0 %v952
        %1879 = vmatprep.subr.mxu0 %v961
        %1880 = vmatpush1.msra.mxu0 %v960
        %1881 = vmatprep.subr.mxu0 %v969
        %1882 = vmatpush1.msra.mxu0 %v968
        %1883 = vmatprep.subr.mxu0 %v977
        %1884 = vmatpush1.msra.mxu0 %v976
        %1885 = vmatprep.mubr.f32.mxu0 %v465
        %1886 = vmatmul.mubr.f32.gmra.mrb[0].mxu0 %v464
        %v1887 = vpop.f32.mrb[0].mxu0
        %v1888 = vadd.f32 %v1817, %v1887
        %v1889 = vpop.f32.mrb[0].mxu0
        %v1890 = vadd.f32 %v1819, %v1889
        %1891 = vdwg.mxu0
        %1892 = vmatprep.subr.mxu0 %v985
        %1893 = vmatpush1.msra.mxu0 %v984
        %1894 = vmatprep.subr.mxu0 %v993
        %1895 = vmatpush1.msra.mxu0 %v992
        %1896 = vmatprep.subr.mxu0 %v1001
        %1897 = vmatpush1.msra.mxu0 %v1000
        %1898 = vmatprep.subr.mxu0 %v1009
        %1899 = vmatpush1.msra.mxu0 %v1008
        %1900 = vmatprep.subr.mxu0 %v1017
        %1901 = vmatpush1.msra.mxu0 %v1016
        %1902 = vmatprep.subr.mxu0 %v1025
        %1903 = vmatpush1.msra.mxu0 %v1024
        %1904 = vmatprep.subr.mxu0 %v1033
        %1905 = vmatpush1.msra.mxu0 %v1032
        %1906 = vmatprep.subr.mxu0 %v1041
        %1907 = vmatpush1.msra.mxu0 %v1040
        %1908 = vmatprep.subr.mxu0 %v1049
        %1909 = vmatpush1.msra.mxu0 %v1048
        %1910 = vmatprep.subr.mxu0 %v1057
        %1911 = vmatpush1.msra.mxu0 %v1056
        %1912 = vmatprep.subr.mxu0 %v1065
        %1913 = vmatpush1.msra.mxu0 %v1064
        %1914 = vmatprep.subr.mxu0 %v1073
        %1915 = vmatpush1.msra.mxu0 %v1072
        %1916 = vmatprep.subr.mxu0 %v1081
        %1917 = vmatpush1.msra.mxu0 %v1080
        %1918 = vmatprep.subr.mxu0 %v1089
        %1919 = vmatpush1.msra.mxu0 %v1088
        %1920 = vmatprep.subr.mxu0 %v1097
        %1921 = vmatpush1.msra.mxu0 %v1096
        %1922 = vmatprep.subr.mxu0 %v1105
        %1923 = vmatpush1.msra.mxu0 %v1104
        %1924 = vmatprep.subr.mxu0 %v1113
        %1925 = vmatpush1.msra.mxu0 %v1112
        %1926 = vmatprep.subr.mxu0 %v1121
        %1927 = vmatpush1.msra.mxu0 %v1120
        %1928 = vmatprep.subr.mxu0 %v1129
        %1929 = vmatpush1.msra.mxu0 %v1128
        %1930 = vmatprep.subr.mxu0 %v1137
        %1931 = vmatpush1.msra.mxu0 %v1136
        %1932 = vmatprep.subr.mxu0 %v1145
        %1933 = vmatpush1.msra.mxu0 %v1144
        %1934 = vmatprep.subr.mxu0 %v1153
        %1935 = vmatpush1.msra.mxu0 %v1152
        %1936 = vmatprep.subr.mxu0 %v1161
        %1937 = vmatpush1.msra.mxu0 %v1160
        %1938 = vmatprep.subr.mxu0 %v1169
        %1939 = vmatpush1.msra.mxu0 %v1168
        %1940 = vmatprep.subr.mxu0 %v1177
        %1941 = vmatpush1.msra.mxu0 %v1176
        %1942 = vmatprep.subr.mxu0 %v1185
        %1943 = vmatpush1.msra.mxu0 %v1184
        %1944 = vmatprep.subr.mxu0 %v1193
        %1945 = vmatpush1.msra.mxu0 %v1192
        %1946 = vmatprep.subr.mxu0 %v1201
        %1947 = vmatpush1.msra.mxu0 %v1200
        %1948 = vmatprep.subr.mxu0 %v1209
        %1949 = vmatpush1.msra.mxu0 %v1208
        %1950 = vmatprep.subr.mxu0 %v1217
        %1951 = vmatpush1.msra.mxu0 %v1216
        %1952 = vmatprep.subr.mxu0 %v1225
        %1953 = vmatpush1.msra.mxu0 %v1224
        %1954 = vmatprep.subr.mxu0 %v1233
        %1955 = vmatpush1.msra.mxu0 %v1232
        %1956 = vmatprep.mubr.f32.mxu0 %v467
        %1957 = vmatmul.mubr.f32.gmra.mrb[0].mxu0 %v466
        %v1958 = vpop.f32.mrb[0].mxu0
        %v1959 = vadd.f32 %v1888, %v1958
        %v1960 = vpop.f32.mrb[0].mxu0
        %v1961 = vadd.f32 %v1890, %v1960
        %1962 = vdwg.mxu0
        %1963 = vmatprep.subr.mxu0 %v1241
        %1964 = vmatpush1.msra.mxu0 %v1240
        %1965 = vmatprep.subr.mxu0 %v1249
        %1966 = vmatpush1.msra.mxu0 %v1248
        %1967 = vmatprep.subr.mxu0 %v1257
        %1968 = vmatpush1.msra.mxu0 %v1256
        %1969 = vmatprep.subr.mxu0 %v1265
        %1970 = vmatpush1.msra.mxu0 %v1264
        %1971 = vmatprep.subr.mxu0 %v1273
        %1972 = vmatpush1.msra.mxu0 %v1272
        %1973 = vmatprep.subr.mxu0 %v1281
        %1974 = vmatpush1.msra.mxu0 %v1280
        %1975 = vmatprep.subr.mxu0 %v1289
        %1976 = vmatpush1.msra.mxu0 %v1288
        %1977 = vmatprep.subr.mxu0 %v1297
        %1978 = vmatpush1.msra.mxu0 %v1296
        %1979 = vmatprep.subr.mxu0 %v1305
        %1980 = vmatpush1.msra.mxu0 %v1304
        %1981 = vmatprep.subr.mxu0 %v1313
        %1982 = vmatpush1.msra.mxu0 %v1312
        %1983 = vmatprep.subr.mxu0 %v1321
        %1984 = vmatpush1.msra.mxu0 %v1320
        %1985 = vmatprep.subr.mxu0 %v1329
        %1986 = vmatpush1.msra.mxu0 %v1328
        %1987 = vmatprep.subr.mxu0 %v1337
        %1988 = vmatpush1.msra.mxu0 %v1336
        %1989 = vmatprep.subr.mxu0 %v1345
        %1990 = vmatpush1.msra.mxu0 %v1344
        %1991 = vmatprep.subr.mxu0 %v1353
        %1992 = vmatpush1.msra.mxu0 %v1352
        %1993 = vmatprep.subr.mxu0 %v1361
        %1994 = vmatpush1.msra.mxu0 %v1360
        %1995 = vmatprep.subr.mxu0 %v1369
        %1996 = vmatpush1.msra.mxu0 %v1368
        %1997 = vmatprep.subr.mxu0 %v1377
        %1998 = vmatpush1.msra.mxu0 %v1376
        %1999 = vmatprep.subr.mxu0 %v1385
        %2000 = vmatpush1.msra.mxu0 %v1384
        %2001 = vmatprep.subr.mxu0 %v1393
        %2002 = vmatpush1.msra.mxu0 %v1392
        %2003 = vmatprep.subr.mxu0 %v1401
        %2004 = vmatpush1.msra.mxu0 %v1400
        %2005 = vmatprep.subr.mxu0 %v1409
        %2006 = vmatpush1.msra.mxu0 %v1408
        %2007 = vmatprep.subr.mxu0 %v1417
        %2008 = vmatpush1.msra.mxu0 %v1416
        %2009 = vmatprep.subr.mxu0 %v1425
        %2010 = vmatpush1.msra.mxu0 %v1424
        %2011 = vmatprep.subr.mxu0 0.0
        %2012 = vmatpush1.msra.mxu0 0.0
        %2013 = vmatprep.subr.mxu0 0.0
        %2014 = vmatpush1.msra.mxu0 0.0
        %2015 = vmatprep.subr.mxu0 0.0
        %2016 = vmatpush1.msra.mxu0 0.0
        %2017 = vmatprep.subr.mxu0 0.0
        %2018 = vmatpush1.msra.mxu0 0.0
        %2019 = vmatprep.subr.mxu0 0.0
        %2020 = vmatpush1.msra.mxu0 0.0
        %2021 = vmatprep.subr.mxu0 0.0
        %2022 = vmatpush1.msra.mxu0 0.0
        %2023 = vmatprep.subr.mxu0 0.0
        %2024 = vmatpush1.msra.mxu0 0.0
        %2025 = vmatprep.subr.mxu0 0.0
        %2026 = vmatpush1.msra.mxu0 0.0
        %2027 = vmatprep.mubr.f32.mxu0 %v1464
        %2028 = vmatmul.mubr.f32.gmra.mrb[0].mxu0 %v468
        %v2029 = vpop.f32.mrb[0].mxu0
        %v2030 = vadd.f32 %v1959, %v2029
        %v2031 = vpop.f32.mrb[0].mxu0
        %v2032 = vadd.f32 %v1961, %v2031
        %2033 = vdwg.mxu0
        %2034 = vmatprep.subr.mxu0 %v475
        %2035 = vmatpush1.msra.mxu0 %v474
        %2036 = vmatprep.subr.mxu0 %v483
        %2037 = vmatpush1.msra.mxu0 %v482
        %2038 = vmatprep.subr.mxu0 %v491
        %2039 = vmatpush1.msra.mxu0 %v490
        %2040 = vmatprep.subr.mxu0 %v499
        %2041 = vmatpush1.msra.mxu0 %v498
        %2042 = vmatprep.subr.mxu0 %v507
        %2043 = vmatpush1.msra.mxu0 %v506
        %2044 = vmatprep.subr.mxu0 %v515
        %2045 = vmatpush1.msra.mxu0 %v514
        %2046 = vmatprep.subr.mxu0 %v523
        %2047 = vmatpush1.msra.mxu0 %v522
        %2048 = vmatprep.subr.mxu0 %v531
        %2049 = vmatpush1.msra.mxu0 %v530
        %2050 = vmatprep.subr.mxu0 %v539
        %2051 = vmatpush1.msra.mxu0 %v538
        %2052 = vmatprep.subr.mxu0 %v547
        %2053 = vmatpush1.msra.mxu0 %v546
        %2054 = vmatprep.subr.mxu0 %v555
        %2055 = vmatpush1.msra.mxu0 %v554
        %2056 = vmatprep.subr.mxu0 %v563
        %2057 = vmatpush1.msra.mxu0 %v562
        %2058 = vmatprep.subr.mxu0 %v571
        %2059 = vmatpush1.msra.mxu0 %v570
        %2060 = vmatprep.subr.mxu0 %v579
        %2061 = vmatpush1.msra.mxu0 %v578
        %2062 = vmatprep.subr.mxu0 %v587
        %2063 = vmatpush1.msra.mxu0 %v586
        %2064 = vmatprep.subr.mxu0 %v595
        %2065 = vmatpush1.msra.mxu0 %v594
        %2066 = vmatprep.subr.mxu0 %v603
        %2067 = vmatpush1.msra.mxu0 %v602
        %2068 = vmatprep.subr.mxu0 %v611
        %2069 = vmatpush1.msra.mxu0 %v610
        %2070 = vmatprep.subr.mxu0 %v619
        %2071 = vmatpush1.msra.mxu0 %v618
        %2072 = vmatprep.subr.mxu0 %v627
        %2073 = vmatpush1.msra.mxu0 %v626
        %2074 = vmatprep.subr.mxu0 %v635
        %2075 = vmatpush1.msra.mxu0 %v634
        %2076 = vmatprep.subr.mxu0 %v643
        %2077 = vmatpush1.msra.mxu0 %v642
        %2078 = vmatprep.subr.mxu0 %v651
        %2079 = vmatpush1.msra.mxu0 %v650
        %2080 = vmatprep.subr.mxu0 %v659
        %2081 = vmatpush1.msra.mxu0 %v658
        %2082 = vmatprep.subr.mxu0 %v667
        %2083 = vmatpush1.msra.mxu0 %v666
        %2084 = vmatprep.subr.mxu0 %v675
        %2085 = vmatpush1.msra.mxu0 %v674
        %2086 = vmatprep.subr.mxu0 %v683
        %2087 = vmatpush1.msra.mxu0 %v682
        %2088 = vmatprep.subr.mxu0 %v691
        %2089 = vmatpush1.msra.mxu0 %v690
        %2090 = vmatprep.subr.mxu0 %v699
        %2091 = vmatpush1.msra.mxu0 %v698
        %2092 = vmatprep.subr.mxu0 %v707
        %2093 = vmatpush1.msra.mxu0 %v706
        %2094 = vmatprep.subr.mxu0 %v715
        %2095 = vmatpush1.msra.mxu0 %v714
        %2096 = vmatprep.subr.mxu0 %v723
        %2097 = vmatpush1.msra.mxu0 %v722
        %2098 = vmatprep.mubr.f32.mxu0 %v463
        %2099 = vmatmul.mubr.f32.gmra.mrb[0].mxu0 %v462
        %v2100 = vpop.f32.mrb[0].mxu0
        %v2101 = vadd.f32 %v1449, %v2100
        %v2102 = vpop.f32.mrb[0].mxu0
        %v2103 = vadd.f32 %v1453, %v2102
        %2104 = vdwg.mxu0
        %2105 = vmatprep.subr.mxu0 %v731
        %2106 = vmatpush1.msra.mxu0 %v730
        %2107 = vmatprep.subr.mxu0 %v739
        %2108 = vmatpush1.msra.mxu0 %v738
        %2109 = vmatprep.subr.mxu0 %v747
        %2110 = vmatpush1.msra.mxu0 %v746
        %2111 = vmatprep.subr.mxu0 %v755
        %2112 = vmatpush1.msra.mxu0 %v754
        %2113 = vmatprep.subr.mxu0 %v763
        %2114 = vmatpush1.msra.mxu0 %v762
        %2115 = vmatprep.subr.mxu0 %v771
        %2116 = vmatpush1.msra.mxu0 %v770
        %2117 = vmatprep.subr.mxu0 %v779
        %2118 = vmatpush1.msra.mxu0 %v778
        %2119 = vmatprep.subr.mxu0 %v787
        %2120 = vmatpush1.msra.mxu0 %v786
        %2121 = vmatprep.subr.mxu0 %v795
        %2122 = vmatpush1.msra.mxu0 %v794
        %2123 = vmatprep.subr.mxu0 %v803
        %2124 = vmatpush1.msra.mxu0 %v802
        %2125 = vmatprep.subr.mxu0 %v811
        %2126 = vmatpush1.msra.mxu0 %v810
        %2127 = vmatprep.subr.mxu0 %v819
        %2128 = vmatpush1.msra.mxu0 %v818
        %2129 = vmatprep.subr.mxu0 %v827
        %2130 = vmatpush1.msra.mxu0 %v826
        %2131 = vmatprep.subr.mxu0 %v835
        %2132 = vmatpush1.msra.mxu0 %v834
        %2133 = vmatprep.subr.mxu0 %v843
        %2134 = vmatpush1.msra.mxu0 %v842
        %2135 = vmatprep.subr.mxu0 %v851
        %2136 = vmatpush1.msra.mxu0 %v850
        %2137 = vmatprep.subr.mxu0 %v859
        %2138 = vmatpush1.msra.mxu0 %v858
        %2139 = vmatprep.subr.mxu0 %v867
        %2140 = vmatpush1.msra.mxu0 %v866
        %2141 = vmatprep.subr.mxu0 %v875
        %2142 = vmatpush1.msra.mxu0 %v874
        %2143 = vmatprep.subr.mxu0 %v883
        %2144 = vmatpush1.msra.mxu0 %v882
        %2145 = vmatprep.subr.mxu0 %v891
        %2146 = vmatpush1.msra.mxu0 %v890
        %2147 = vmatprep.subr.mxu0 %v899
        %2148 = vmatpush1.msra.mxu0 %v898
        %2149 = vmatprep.subr.mxu0 %v907
        %2150 = vmatpush1.msra.mxu0 %v906
        %2151 = vmatprep.subr.mxu0 %v915
        %2152 = vmatpush1.msra.mxu0 %v914
        %2153 = vmatprep.subr.mxu0 %v923
        %2154 = vmatpush1.msra.mxu0 %v922
        %2155 = vmatprep.subr.mxu0 %v931
        %2156 = vmatpush1.msra.mxu0 %v930
        %2157 = vmatprep.subr.mxu0 %v939
        %2158 = vmatpush1.msra.mxu0 %v938
        %2159 = vmatprep.subr.mxu0 %v947
        %2160 = vmatpush1.msra.mxu0 %v946
        %2161 = vmatprep.subr.mxu0 %v955
        %2162 = vmatpush1.msra.mxu0 %v954
        %2163 = vmatprep.subr.mxu0 %v963
        %2164 = vmatpush1.msra.mxu0 %v962
        %2165 = vmatprep.subr.mxu0 %v971
        %2166 = vmatpush1.msra.mxu0 %v970
        %2167 = vmatprep.subr.mxu0 %v979
        %2168 = vmatpush1.msra.mxu0 %v978
        %2169 = vmatprep.mubr.f32.mxu0 %v465
        %2170 = vmatmul.mubr.f32.gmra.mrb[0].mxu0 %v464
        %v2171 = vpop.f32.mrb[0].mxu0
        %v2172 = vadd.f32 %v2101, %v2171
        %v2173 = vpop.f32.mrb[0].mxu0
        %v2174 = vadd.f32 %v2103, %v2173
        %2175 = vdwg.mxu0
        %2176 = vmatprep.subr.mxu0 %v987
        %2177 = vmatpush1.msra.mxu0 %v986
        %2178 = vmatprep.subr.mxu0 %v995
        %2179 = vmatpush1.msra.mxu0 %v994
        %2180 = vmatprep.subr.mxu0 %v1003
        %2181 = vmatpush1.msra.mxu0 %v1002
        %2182 = vmatprep.subr.mxu0 %v1011
        %2183 = vmatpush1.msra.mxu0 %v1010
        %2184 = vmatprep.subr.mxu0 %v1019
        %2185 = vmatpush1.msra.mxu0 %v1018
        %2186 = vmatprep.subr.mxu0 %v1027
        %2187 = vmatpush1.msra.mxu0 %v1026
        %2188 = vmatprep.subr.mxu0 %v1035
        %2189 = vmatpush1.msra.mxu0 %v1034
        %2190 = vmatprep.subr.mxu0 %v1043
        %2191 = vmatpush1.msra.mxu0 %v1042
        %2192 = vmatprep.subr.mxu0 %v1051
        %2193 = vmatpush1.msra.mxu0 %v1050
        %2194 = vmatprep.subr.mxu0 %v1059
        %2195 = vmatpush1.msra.mxu0 %v1058
        %2196 = vmatprep.subr.mxu0 %v1067
        %2197 = vmatpush1.msra.mxu0 %v1066
        %2198 = vmatprep.subr.mxu0 %v1075
        %2199 = vmatpush1.msra.mxu0 %v1074
        %2200 = vmatprep.subr.mxu0 %v1083
        %2201 = vmatpush1.msra.mxu0 %v1082
        %2202 = vmatprep.subr.mxu0 %v1091
        %2203 = vmatpush1.msra.mxu0 %v1090
        %2204 = vmatprep.subr.mxu0 %v1099
        %2205 = vmatpush1.msra.mxu0 %v1098
        %2206 = vmatprep.subr.mxu0 %v1107
        %2207 = vmatpush1.msra.mxu0 %v1106
        %2208 = vmatprep.subr.mxu0 %v1115
        %2209 = vmatpush1.msra.mxu0 %v1114
        %2210 = vmatprep.subr.mxu0 %v1123
        %2211 = vmatpush1.msra.mxu0 %v1122
        %2212 = vmatprep.subr.mxu0 %v1131
        %2213 = vmatpush1.msra.mxu0 %v1130
        %2214 = vmatprep.subr.mxu0 %v1139
        %2215 = vmatpush1.msra.mxu0 %v1138
        %2216 = vmatprep.subr.mxu0 %v1147
        %2217 = vmatpush1.msra.mxu0 %v1146
        %2218 = vmatprep.subr.mxu0 %v1155
        %2219 = vmatpush1.msra.mxu0 %v1154
        %2220 = vmatprep.subr.mxu0 %v1163
        %2221 = vmatpush1.msra.mxu0 %v1162
        %2222 = vmatprep.subr.mxu0 %v1171
        %2223 = vmatpush1.msra.mxu0 %v1170
        %2224 = vmatprep.subr.mxu0 %v1179
        %2225 = vmatpush1.msra.mxu0 %v1178
        %2226 = vmatprep.subr.mxu0 %v1187
        %2227 = vmatpush1.msra.mxu0 %v1186
        %2228 = vmatprep.subr.mxu0 %v1195
        %2229 = vmatpush1.msra.mxu0 %v1194
        %2230 = vmatprep.subr.mxu0 %v1203
        %2231 = vmatpush1.msra.mxu0 %v1202
        %2232 = vmatprep.subr.mxu0 %v1211
        %2233 = vmatpush1.msra.mxu0 %v1210
        %2234 = vmatprep.subr.mxu0 %v1219
        %2235 = vmatpush1.msra.mxu0 %v1218
        %2236 = vmatprep.subr.mxu0 %v1227
        %2237 = vmatpush1.msra.mxu0 %v1226
        %2238 = vmatprep.subr.mxu0 %v1235
        %2239 = vmatpush1.msra.mxu0 %v1234
        %2240 = vmatprep.mubr.f32.mxu0 %v467
        %2241 = vmatmul.mubr.f32.gmra.mrb[0].mxu0 %v466
        %v2242 = vpop.f32.mrb[0].mxu0
        %v2243 = vadd.f32 %v2172, %v2242
        %v2244 = vpop.f32.mrb[0].mxu0
        %v2245 = vadd.f32 %v2174, %v2244
        %2246 = vdwg.mxu0
        %2247 = vmatprep.subr.mxu0 %v1243
        %2248 = vmatpush1.msra.mxu0 %v1242
        %2249 = vmatprep.subr.mxu0 %v1251
        %2250 = vmatpush1.msra.mxu0 %v1250
        %2251 = vmatprep.subr.mxu0 %v1259
        %2252 = vmatpush1.msra.mxu0 %v1258
        %2253 = vmatprep.subr.mxu0 %v1267
        %2254 = vmatpush1.msra.mxu0 %v1266
        %2255 = vmatprep.subr.mxu0 %v1275
        %2256 = vmatpush1.msra.mxu0 %v1274
        %2257 = vmatprep.subr.mxu0 %v1283
        %2258 = vmatpush1.msra.mxu0 %v1282
        %2259 = vmatprep.subr.mxu0 %v1291
        %2260 = vmatpush1.msra.mxu0 %v1290
        %2261 = vmatprep.subr.mxu0 %v1299
        %2262 = vmatpush1.msra.mxu0 %v1298
        %2263 = vmatprep.subr.mxu0 %v1307
        %2264 = vmatpush1.msra.mxu0 %v1306
        %2265 = vmatprep.subr.mxu0 %v1315
        %2266 = vmatpush1.msra.mxu0 %v1314
        %2267 = vmatprep.subr.mxu0 %v1323
        %2268 = vmatpush1.msra.mxu0 %v1322
        %2269 = vmatprep.subr.mxu0 %v1331
        %2270 = vmatpush1.msra.mxu0 %v1330
        %2271 = vmatprep.subr.mxu0 %v1339
        %2272 = vmatpush1.msra.mxu0 %v1338
        %2273 = vmatprep.subr.mxu0 %v1347
        %2274 = vmatpush1.msra.mxu0 %v1346
        %2275 = vmatprep.subr.mxu0 %v1355
        %2276 = vmatpush1.msra.mxu0 %v1354
        %2277 = vmatprep.subr.mxu0 %v1363
        %2278 = vmatpush1.msra.mxu0 %v1362
        %2279 = vmatprep.subr.mxu0 %v1371
        %2280 = vmatpush1.msra.mxu0 %v1370
        %2281 = vmatprep.subr.mxu0 %v1379
        %2282 = vmatpush1.msra.mxu0 %v1378
        %2283 = vmatprep.subr.mxu0 %v1387
        %2284 = vmatpush1.msra.mxu0 %v1386
        %2285 = vmatprep.subr.mxu0 %v1395
        %2286 = vmatpush1.msra.mxu0 %v1394
        %2287 = vmatprep.subr.mxu0 %v1403
        %2288 = vmatpush1.msra.mxu0 %v1402
        %2289 = vmatprep.subr.mxu0 %v1411
        %2290 = vmatpush1.msra.mxu0 %v1410
        %2291 = vmatprep.subr.mxu0 %v1419
        %2292 = vmatpush1.msra.mxu0 %v1418
        %2293 = vmatprep.subr.mxu0 %v1427
        %2294 = vmatpush1.msra.mxu0 %v1426
        %2295 = vmatprep.subr.mxu0 0.0
        %2296 = vmatpush1.msra.mxu0 0.0
        %2297 = vmatprep.subr.mxu0 0.0
        %2298 = vmatpush1.msra.mxu0 0.0
        %2299 = vmatprep.subr.mxu0 0.0
        %2300 = vmatpush1.msra.mxu0 0.0
        %2301 = vmatprep.subr.mxu0 0.0
        %2302 = vmatpush1.msra.mxu0 0.0
        %2303 = vmatprep.subr.mxu0 0.0
        %2304 = vmatpush1.msra.mxu0 0.0
        %2305 = vmatprep.subr.mxu0 0.0
        %2306 = vmatpush1.msra.mxu0 0.0
        %2307 = vmatprep.subr.mxu0 0.0
        %2308 = vmatpush1.msra.mxu0 0.0
        %2309 = vmatprep.subr.mxu0 0.0
        %2310 = vmatpush1.msra.mxu0 0.0
        %2311 = vmatprep.mubr.f32.mxu0 %v1464
        %2312 = vmatmul.mubr.f32.gmra.mrb[0].mxu0 %v468
        %v2313 = vpop.f32.mrb[0].mxu0
        %v2314 = vadd.f32 %v2243, %v2313
        %v2315 = vpop.f32.mrb[0].mxu0
        %v2316 = vadd.f32 %v2245, %v2315
        %2317 = vdwg.mxu0
        %2318 = vmatprep.subr.mxu0 %v477
        %2319 = vmatpush1.msra.mxu0 %v476
        %2320 = vmatprep.subr.mxu0 %v485
        %2321 = vmatpush1.msra.mxu0 %v484
        %2322 = vmatprep.subr.mxu0 %v493
        %2323 = vmatpush1.msra.mxu0 %v492
        %2324 = vmatprep.subr.mxu0 %v501
        %2325 = vmatpush1.msra.mxu0 %v500
        %2326 = vmatprep.subr.mxu0 %v509
        %2327 = vmatpush1.msra.mxu0 %v508
        %2328 = vmatprep.subr.mxu0 %v517
        %2329 = vmatpush1.msra.mxu0 %v516
        %2330 = vmatprep.subr.mxu0 %v525
        %2331 = vmatpush1.msra.mxu0 %v524
        %2332 = vmatprep.subr.mxu0 %v533
        %2333 = vmatpush1.msra.mxu0 %v532
        %2334 = vmatprep.subr.mxu0 %v541
        %2335 = vmatpush1.msra.mxu0 %v540
        %2336 = vmatprep.subr.mxu0 %v549
        %2337 = vmatpush1.msra.mxu0 %v548
        %2338 = vmatprep.subr.mxu0 %v557
        %2339 = vmatpush1.msra.mxu0 %v556
        %2340 = vmatprep.subr.mxu0 %v565
        %2341 = vmatpush1.msra.mxu0 %v564
        %2342 = vmatprep.subr.mxu0 %v573
        %2343 = vmatpush1.msra.mxu0 %v572
        %2344 = vmatprep.subr.mxu0 %v581
        %2345 = vmatpush1.msra.mxu0 %v580
        %2346 = vmatprep.subr.mxu0 %v589
        %2347 = vmatpush1.msra.mxu0 %v588
        %2348 = vmatprep.subr.mxu0 %v597
        %2349 = vmatpush1.msra.mxu0 %v596
        %2350 = vmatprep.subr.mxu0 %v605
        %2351 = vmatpush1.msra.mxu0 %v604
        %2352 = vmatprep.subr.mxu0 %v613
        %2353 = vmatpush1.msra.mxu0 %v612
        %2354 = vmatprep.subr.mxu0 %v621
        %2355 = vmatpush1.msra.mxu0 %v620
        %2356 = vmatprep.subr.mxu0 %v629
        %2357 = vmatpush1.msra.mxu0 %v628
        %2358 = vmatprep.subr.mxu0 %v637
        %2359 = vmatpush1.msra.mxu0 %v636
        %2360 = vmatprep.subr.mxu0 %v645
        %2361 = vmatpush1.msra.mxu0 %v644
        %2362 = vmatprep.subr.mxu0 %v653
        %2363 = vmatpush1.msra.mxu0 %v652
        %2364 = vmatprep.subr.mxu0 %v661
        %2365 = vmatpush1.msra.mxu0 %v660
        %2366 = vmatprep.subr.mxu0 %v669
        %2367 = vmatpush1.msra.mxu0 %v668
        %2368 = vmatprep.subr.mxu0 %v677
        %2369 = vmatpush1.msra.mxu0 %v676
        %2370 = vmatprep.subr.mxu0 %v685
        %2371 = vmatpush1.msra.mxu0 %v684
        %2372 = vmatprep.subr.mxu0 %v693
        %2373 = vmatpush1.msra.mxu0 %v692
        %2374 = vmatprep.subr.mxu0 %v701
        %2375 = vmatpush1.msra.mxu0 %v700
        %2376 = vmatprep.subr.mxu0 %v709
        %2377 = vmatpush1.msra.mxu0 %v708
        %2378 = vmatprep.subr.mxu0 %v717
        %2379 = vmatpush1.msra.mxu0 %v716
        %2380 = vmatprep.subr.mxu0 %v725
        %2381 = vmatpush1.msra.mxu0 %v724
        %2382 = vmatprep.mubr.f32.mxu0 %v463
        %2383 = vmatmul.mubr.f32.gmra.mrb[0].mxu0 %v462
        %v2384 = vpop.f32.mrb[0].mxu0
        %v2385 = vadd.f32 %v1457, %v2384
        %v2386 = vpop.f32.mrb[0].mxu0
        %v2387 = vadd.f32 %v1461, %v2386
        %2388 = vdwg.mxu0
        %2389 = vmatprep.subr.mxu0 %v733
        %2390 = vmatpush1.msra.mxu0 %v732
        %2391 = vmatprep.subr.mxu0 %v741
        %2392 = vmatpush1.msra.mxu0 %v740
        %2393 = vmatprep.subr.mxu0 %v749
        %2394 = vmatpush1.msra.mxu0 %v748
        %2395 = vmatprep.subr.mxu0 %v757
        %2396 = vmatpush1.msra.mxu0 %v756
        %2397 = vmatprep.subr.mxu0 %v765
        %2398 = vmatpush1.msra.mxu0 %v764
        %2399 = vmatprep.subr.mxu0 %v773
        %2400 = vmatpush1.msra.mxu0 %v772
        %2401 = vmatprep.subr.mxu0 %v781
        %2402 = vmatpush1.msra.mxu0 %v780
        %2403 = vmatprep.subr.mxu0 %v789
        %2404 = vmatpush1.msra.mxu0 %v788
        %2405 = vmatprep.subr.mxu0 %v797
        %2406 = vmatpush1.msra.mxu0 %v796
        %2407 = vmatprep.subr.mxu0 %v805
        %2408 = vmatpush1.msra.mxu0 %v804
        %2409 = vmatprep.subr.mxu0 %v813
        %2410 = vmatpush1.msra.mxu0 %v812
        %2411 = vmatprep.subr.mxu0 %v821
        %2412 = vmatpush1.msra.mxu0 %v820
        %2413 = vmatprep.subr.mxu0 %v829
        %2414 = vmatpush1.msra.mxu0 %v828
        %2415 = vmatprep.subr.mxu0 %v837
        %2416 = vmatpush1.msra.mxu0 %v836
        %2417 = vmatprep.subr.mxu0 %v845
        %2418 = vmatpush1.msra.mxu0 %v844
        %2419 = vmatprep.subr.mxu0 %v853
        %2420 = vmatpush1.msra.mxu0 %v852
        %2421 = vmatprep.subr.mxu0 %v861
        %2422 = vmatpush1.msra.mxu0 %v860
        %2423 = vmatprep.subr.mxu0 %v869
        %2424 = vmatpush1.msra.mxu0 %v868
        %2425 = vmatprep.subr.mxu0 %v877
        %2426 = vmatpush1.msra.mxu0 %v876
        %2427 = vmatprep.subr.mxu0 %v885
        %2428 = vmatpush1.msra.mxu0 %v884
        %2429 = vmatprep.subr.mxu0 %v893
        %2430 = vmatpush1.msra.mxu0 %v892
        %2431 = vmatprep.subr.mxu0 %v901
        %2432 = vmatpush1.msra.mxu0 %v900
        %2433 = vmatprep.subr.mxu0 %v909
        %2434 = vmatpush1.msra.mxu0 %v908
        %2435 = vmatprep.subr.mxu0 %v917
        %2436 = vmatpush1.msra.mxu0 %v916
        %2437 = vmatprep.subr.mxu0 %v925
        %2438 = vmatpush1.msra.mxu0 %v924
        %2439 = vmatprep.subr.mxu0 %v933
        %2440 = vmatpush1.msra.mxu0 %v932
        %2441 = vmatprep.subr.mxu0 %v941
        %2442 = vmatpush1.msra.mxu0 %v940
        %2443 = vmatprep.subr.mxu0 %v949
        %2444 = vmatpush1.msra.mxu0 %v948
        %2445 = vmatprep.subr.mxu0 %v957
        %2446 = vmatpush1.msra.mxu0 %v956
        %2447 = vmatprep.subr.mxu0 %v965
        %2448 = vmatpush1.msra.mxu0 %v964
        %2449 = vmatprep.subr.mxu0 %v973
        %2450 = vmatpush1.msra.mxu0 %v972
        %2451 = vmatprep.subr.mxu0 %v981
        %2452 = vmatpush1.msra.mxu0 %v980
        %2453 = vmatprep.mubr.f32.mxu0 %v465
        %2454 = vmatmul.mubr.f32.gmra.mrb[0].mxu0 %v464
        %v2455 = vpop.f32.mrb[0].mxu0
        %v2456 = vadd.f32 %v2385, %v2455
        %v2457 = vpop.f32.mrb[0].mxu0
        %v2458 = vadd.f32 %v2387, %v2457
        %2459 = vdwg.mxu0
        %2460 = vmatprep.subr.mxu0 %v989
        %2461 = vmatpush1.msra.mxu0 %v988
        %2462 = vmatprep.subr.mxu0 %v997
        %2463 = vmatpush1.msra.mxu0 %v996
        %2464 = vmatprep.subr.mxu0 %v1005
        %2465 = vmatpush1.msra.mxu0 %v1004
        %2466 = vmatprep.subr.mxu0 %v1013
        %2467 = vmatpush1.msra.mxu0 %v1012
        %2468 = vmatprep.subr.mxu0 %v1021
        %2469 = vmatpush1.msra.mxu0 %v1020
        %2470 = vmatprep.subr.mxu0 %v1029
        %2471 = vmatpush1.msra.mxu0 %v1028
        %2472 = vmatprep.subr.mxu0 %v1037
        %2473 = vmatpush1.msra.mxu0 %v1036
        %2474 = vmatprep.subr.mxu0 %v1045
        %2475 = vmatpush1.msra.mxu0 %v1044
        %2476 = vmatprep.subr.mxu0 %v1053
        %2477 = vmatpush1.msra.mxu0 %v1052
        %2478 = vmatprep.subr.mxu0 %v1061
        %2479 = vmatpush1.msra.mxu0 %v1060
        %2480 = vmatprep.subr.mxu0 %v1069
        %2481 = vmatpush1.msra.mxu0 %v1068
        %2482 = vmatprep.subr.mxu0 %v1077
        %2483 = vmatpush1.msra.mxu0 %v1076
        %2484 = vmatprep.subr.mxu0 %v1085
        %2485 = vmatpush1.msra.mxu0 %v1084
        %2486 = vmatprep.subr.mxu0 %v1093
        %2487 = vmatpush1.msra.mxu0 %v1092
        %2488 = vmatprep.subr.mxu0 %v1101
        %2489 = vmatpush1.msra.mxu0 %v1100
        %2490 = vmatprep.subr.mxu0 %v1109
        %2491 = vmatpush1.msra.mxu0 %v1108
        %2492 = vmatprep.subr.mxu0 %v1117
        %2493 = vmatpush1.msra.mxu0 %v1116
        %2494 = vmatprep.subr.mxu0 %v1125
        %2495 = vmatpush1.msra.mxu0 %v1124
        %2496 = vmatprep.subr.mxu0 %v1133
        %2497 = vmatpush1.msra.mxu0 %v1132
        %2498 = vmatprep.subr.mxu0 %v1141
        %2499 = vmatpush1.msra.mxu0 %v1140
        %2500 = vmatprep.subr.mxu0 %v1149
        %2501 = vmatpush1.msra.mxu0 %v1148
        %2502 = vmatprep.subr.mxu0 %v1157
        %2503 = vmatpush1.msra.mxu0 %v1156
        %2504 = vmatprep.subr.mxu0 %v1165
        %2505 = vmatpush1.msra.mxu0 %v1164
        %2506 = vmatprep.subr.mxu0 %v1173
        %2507 = vmatpush1.msra.mxu0 %v1172
        %2508 = vmatprep.subr.mxu0 %v1181
        %2509 = vmatpush1.msra.mxu0 %v1180
        %2510 = vmatprep.subr.mxu0 %v1189
        %2511 = vmatpush1.msra.mxu0 %v1188
        %2512 = vmatprep.subr.mxu0 %v1197
        %2513 = vmatpush1.msra.mxu0 %v1196
        %2514 = vmatprep.subr.mxu0 %v1205
        %2515 = vmatpush1.msra.mxu0 %v1204
        %2516 = vmatprep.subr.mxu0 %v1213
        %2517 = vmatpush1.msra.mxu0 %v1212
        %2518 = vmatprep.subr.mxu0 %v1221
        %2519 = vmatpush1.msra.mxu0 %v1220
        %2520 = vmatprep.subr.mxu0 %v1229
        %2521 = vmatpush1.msra.mxu0 %v1228
        %2522 = vmatprep.subr.mxu0 %v1237
        %2523 = vmatpush1.msra.mxu0 %v1236
        %2524 = vmatprep.mubr.f32.mxu0 %v467
        %2525 = vmatmul.mubr.f32.gmra.mrb[0].mxu0 %v466
        %v2526 = vpop.f32.mrb[0].mxu0
        %v2527 = vadd.f32 %v2456, %v2526
        %v2528 = vpop.f32.mrb[0].mxu0
        %v2529 = vadd.f32 %v2458, %v2528
        %2530 = vdwg.mxu0
        %2531 = vmatprep.subr.mxu0 %v1245
        %2532 = vmatpush1.msra.mxu0 %v1244
        %2533 = vmatprep.subr.mxu0 %v1253
        %2534 = vmatpush1.msra.mxu0 %v1252
        %2535 = vmatprep.subr.mxu0 %v1261
        %2536 = vmatpush1.msra.mxu0 %v1260
        %2537 = vmatprep.subr.mxu0 %v1269
        %2538 = vmatpush1.msra.mxu0 %v1268
        %2539 = vmatprep.subr.mxu0 %v1277
        %2540 = vmatpush1.msra.mxu0 %v1276
        %2541 = vmatprep.subr.mxu0 %v1285
        %2542 = vmatpush1.msra.mxu0 %v1284
        %2543 = vmatprep.subr.mxu0 %v1293
        %2544 = vmatpush1.msra.mxu0 %v1292
        %2545 = vmatprep.subr.mxu0 %v1301
        %2546 = vmatpush1.msra.mxu0 %v1300
        %2547 = vmatprep.subr.mxu0 %v1309
        %2548 = vmatpush1.msra.mxu0 %v1308
        %2549 = vmatprep.subr.mxu0 %v1317
        %2550 = vmatpush1.msra.mxu0 %v1316
        %2551 = vmatprep.subr.mxu0 %v1325
        %2552 = vmatpush1.msra.mxu0 %v1324
        %2553 = vmatprep.subr.mxu0 %v1333
        %2554 = vmatpush1.msra.mxu0 %v1332
        %2555 = vmatprep.subr.mxu0 %v1341
        %2556 = vmatpush1.msra.mxu0 %v1340
        %2557 = vmatprep.subr.mxu0 %v1349
        %2558 = vmatpush1.msra.mxu0 %v1348
        %2559 = vmatprep.subr.mxu0 %v1357
        %2560 = vmatpush1.msra.mxu0 %v1356
        %2561 = vmatprep.subr.mxu0 %v1365
        %2562 = vmatpush1.msra.mxu0 %v1364
        %2563 = vmatprep.subr.mxu0 %v1373
        %2564 = vmatpush1.msra.mxu0 %v1372
        %2565 = vmatprep.subr.mxu0 %v1381
        %2566 = vmatpush1.msra.mxu0 %v1380
        %2567 = vmatprep.subr.mxu0 %v1389
        %2568 = vmatpush1.msra.mxu0 %v1388
        %2569 = vmatprep.subr.mxu0 %v1397
        %2570 = vmatpush1.msra.mxu0 %v1396
        %2571 = vmatprep.subr.mxu0 %v1405
        %2572 = vmatpush1.msra.mxu0 %v1404
        %2573 = vmatprep.subr.mxu0 %v1413
        %2574 = vmatpush1.msra.mxu0 %v1412
        %2575 = vmatprep.subr.mxu0 %v1421
        %2576 = vmatpush1.msra.mxu0 %v1420
        %2577 = vmatprep.subr.mxu0 %v1429
        %2578 = vmatpush1.msra.mxu0 %v1428
        %2579 = vmatprep.subr.mxu0 0.0
        %2580 = vmatpush1.msra.mxu0 0.0
        %2581 = vmatprep.subr.mxu0 0.0
        %2582 = vmatpush1.msra.mxu0 0.0
        %2583 = vmatprep.subr.mxu0 0.0
        %2584 = vmatpush1.msra.mxu0 0.0
        %2585 = vmatprep.subr.mxu0 0.0
        %2586 = vmatpush1.msra.mxu0 0.0
        %2587 = vmatprep.subr.mxu0 0.0
        %2588 = vmatpush1.msra.mxu0 0.0
        %2589 = vmatprep.subr.mxu0 0.0
        %2590 = vmatpush1.msra.mxu0 0.0
        %2591 = vmatprep.subr.mxu0 0.0
        %2592 = vmatpush1.msra.mxu0 0.0
        %2593 = vmatprep.subr.mxu0 0.0
        %2594 = vmatpush1.msra.mxu0 0.0
        %2595 = vmatprep.mubr.f32.mxu0 %v1464
        %2596 = vmatmul.mubr.f32.gmra.mrb[0].mxu0 %v468
        %v2597 = vpop.f32.mrb[0].mxu0
        %v2598 = vadd.f32 %v2527, %v2597
        %v2599 = vpop.f32.mrb[0].mxu0
        %v2600 = vadd.f32 %v2529, %v2599
        %2601 = vdwg.mxu0
        %2602 = vmatprep.subr.mxu0 0.0
        %2603 = vmatpush1.msra.mxu0 %v330
        %2604 = vmatprep.subr.mxu0 0.0
        %2605 = vmatpush1.msra.mxu0 %v331
        %2606 = vmatprep.subr.mxu0 0.0
        %2607 = vmatpush1.msra.mxu0 %v332
        %2608 = vmatprep.subr.mxu0 0.0
        %2609 = vmatpush1.msra.mxu0 %v333
        %2610 = vmatprep.subr.mxu0 0.0
        %2611 = vmatpush1.msra.mxu0 %v334
        %2612 = vmatprep.subr.mxu0 0.0
        %2613 = vmatpush1.msra.mxu0 %v335
        %2614 = vmatprep.subr.mxu0 0.0
        %2615 = vmatpush1.msra.mxu0 %v336
        %2616 = vmatprep.subr.mxu0 0.0
        %2617 = vmatpush1.msra.mxu0 %v337
        %2618 = vmatprep.subr.mxu0 0.0
        %2619 = vmatpush1.msra.mxu0 %v338
        %2620 = vmatprep.subr.mxu0 0.0
        %2621 = vmatpush1.msra.mxu0 %v339
        %2622 = vmatprep.subr.mxu0 0.0
        %2623 = vmatpush1.msra.mxu0 %v340
        %2624 = vmatprep.subr.mxu0 0.0
        %2625 = vmatpush1.msra.mxu0 %v341
        %2626 = vmatprep.subr.mxu0 0.0
        %2627 = vmatpush1.msra.mxu0 %v342
        %2628 = vmatprep.subr.mxu0 0.0
        %2629 = vmatpush1.msra.mxu0 %v343
        %2630 = vmatprep.subr.mxu0 0.0
        %2631 = vmatpush1.msra.mxu0 %v344
        %2632 = vmatprep.subr.mxu0 0.0
        %2633 = vmatpush1.msra.mxu0 %v345
        %2634 = vmatprep.subr.mxu0 0.0
        %2635 = vmatpush1.msra.mxu0 %v346
        %2636 = vmatprep.subr.mxu0 0.0
        %2637 = vmatpush1.msra.mxu0 %v347
        %2638 = vmatprep.subr.mxu0 0.0
        %2639 = vmatpush1.msra.mxu0 %v348
        %2640 = vmatprep.subr.mxu0 0.0
        %2641 = vmatpush1.msra.mxu0 %v349
        %2642 = vmatprep.subr.mxu0 0.0
        %2643 = vmatpush1.msra.mxu0 %v350
        %2644 = vmatprep.subr.mxu0 0.0
        %2645 = vmatpush1.msra.mxu0 %v351
        %2646 = vmatprep.subr.mxu0 0.0
        %2647 = vmatpush1.msra.mxu0 %v352
        %2648 = vmatprep.subr.mxu0 0.0
        %2649 = vmatpush1.msra.mxu0 %v353
        %2650 = vmatprep.subr.mxu0 0.0
        %2651 = vmatpush1.msra.mxu0 %v354
        %2652 = vmatprep.subr.mxu0 0.0
        %2653 = vmatpush1.msra.mxu0 %v355
        %2654 = vmatprep.subr.mxu0 0.0
        %2655 = vmatpush1.msra.mxu0 %v356
        %2656 = vmatprep.subr.mxu0 0.0
        %2657 = vmatpush1.msra.mxu0 %v357
        %2658 = vmatprep.subr.mxu0 0.0
        %2659 = vmatpush1.msra.mxu0 %v358
        %2660 = vmatprep.subr.mxu0 0.0
        %2661 = vmatpush1.msra.mxu0 %v359
        %2662 = vmatprep.subr.mxu0 0.0
        %2663 = vmatpush1.msra.mxu0 %v360
        %2664 = vmatprep.subr.mxu0 0.0
        %2665 = vmatpush1.msra.mxu0 %v361
        %2666 = vmatprep.mubr.f32.mxu0 %v1748
        %2667 = vmatmul.mubr.f32.gmra.mrb[0].mxu0 %v1746
        %v2668 = vpop.f32.mrb[0].mxu0
        %v2669 = vadd.f32 0.0, %v2668
        %v2670 = vpop.f32.mrb[0].mxu0
        %2671 = vdwg.mxu0
        %2672 = vmatprep.subr.mxu0 0.0
        %2673 = vmatpush1.msra.mxu0 %v362
        %2674 = vmatprep.subr.mxu0 0.0
        %2675 = vmatpush1.msra.mxu0 %v363
        %2676 = vmatprep.subr.mxu0 0.0
        %2677 = vmatpush1.msra.mxu0 %v364
        %2678 = vmatprep.subr.mxu0 0.0
        %2679 = vmatpush1.msra.mxu0 %v365
        %2680 = vmatprep.subr.mxu0 0.0
        %2681 = vmatpush1.msra.mxu0 %v366
        %2682 = vmatprep.subr.mxu0 0.0
        %2683 = vmatpush1.msra.mxu0 %v367
        %2684 = vmatprep.subr.mxu0 0.0
        %2685 = vmatpush1.msra.mxu0 %v368
        %2686 = vmatprep.subr.mxu0 0.0
        %2687 = vmatpush1.msra.mxu0 %v369
        %2688 = vmatprep.subr.mxu0 0.0
        %2689 = vmatpush1.msra.mxu0 %v370
        %2690 = vmatprep.subr.mxu0 0.0
        %2691 = vmatpush1.msra.mxu0 %v371
        %2692 = vmatprep.subr.mxu0 0.0
        %2693 = vmatpush1.msra.mxu0 %v372
        %2694 = vmatprep.subr.mxu0 0.0
        %2695 = vmatpush1.msra.mxu0 %v373
        %2696 = vmatprep.subr.mxu0 0.0
        %2697 = vmatpush1.msra.mxu0 %v374
        %2698 = vmatprep.subr.mxu0 0.0
        %2699 = vmatpush1.msra.mxu0 %v375
        %2700 = vmatprep.subr.mxu0 0.0
        %2701 = vmatpush1.msra.mxu0 %v376
        %2702 = vmatprep.subr.mxu0 0.0
        %2703 = vmatpush1.msra.mxu0 %v377
        %2704 = vmatprep.subr.mxu0 0.0
        %2705 = vmatpush1.msra.mxu0 %v378
        %2706 = vmatprep.subr.mxu0 0.0
        %2707 = vmatpush1.msra.mxu0 %v379
        %2708 = vmatprep.subr.mxu0 0.0
        %2709 = vmatpush1.msra.mxu0 %v380
        %2710 = vmatprep.subr.mxu0 0.0
        %2711 = vmatpush1.msra.mxu0 %v381
        %2712 = vmatprep.subr.mxu0 0.0
        %2713 = vmatpush1.msra.mxu0 %v382
        %2714 = vmatprep.subr.mxu0 0.0
        %2715 = vmatpush1.msra.mxu0 %v383
        %2716 = vmatprep.subr.mxu0 0.0
        %2717 = vmatpush1.msra.mxu0 %v384
        %2718 = vmatprep.subr.mxu0 0.0
        %2719 = vmatpush1.msra.mxu0 %v385
        %2720 = vmatprep.subr.mxu0 0.0
        %2721 = vmatpush1.msra.mxu0 %v386
        %2722 = vmatprep.subr.mxu0 0.0
        %2723 = vmatpush1.msra.mxu0 %v387
        %2724 = vmatprep.subr.mxu0 0.0
        %2725 = vmatpush1.msra.mxu0 %v388
        %2726 = vmatprep.subr.mxu0 0.0
        %2727 = vmatpush1.msra.mxu0 %v389
        %2728 = vmatprep.subr.mxu0 0.0
        %2729 = vmatpush1.msra.mxu0 %v390
        %2730 = vmatprep.subr.mxu0 0.0
        %2731 = vmatpush1.msra.mxu0 %v391
        %2732 = vmatprep.subr.mxu0 0.0
        %2733 = vmatpush1.msra.mxu0 %v392
        %2734 = vmatprep.subr.mxu0 0.0
        %2735 = vmatpush1.msra.mxu0 %v393
        %2736 = vmatprep.mubr.f32.mxu0 %v2032
        %2737 = vmatmul.mubr.f32.gmra.mrb[0].mxu0 %v2030
        %v2738 = vpop.f32.mrb[0].mxu0
        %v2739 = vadd.f32 %v2669, %v2738
        %v2740 = vpop.f32.mrb[0].mxu0
        %2741 = vdwg.mxu0
        %2742 = vmatprep.subr.mxu0 0.0
        %2743 = vmatpush1.msra.mxu0 %v394
        %2744 = vmatprep.subr.mxu0 0.0
        %2745 = vmatpush1.msra.mxu0 %v395
        %2746 = vmatprep.subr.mxu0 0.0
        %2747 = vmatpush1.msra.mxu0 %v396
        %2748 = vmatprep.subr.mxu0 0.0
        %2749 = vmatpush1.msra.mxu0 %v397
        %2750 = vmatprep.subr.mxu0 0.0
        %2751 = vmatpush1.msra.mxu0 %v398
        %2752 = vmatprep.subr.mxu0 0.0
        %2753 = vmatpush1.msra.mxu0 %v399
        %2754 = vmatprep.subr.mxu0 0.0
        %2755 = vmatpush1.msra.mxu0 %v400
        %2756 = vmatprep.subr.mxu0 0.0
        %2757 = vmatpush1.msra.mxu0 %v401
        %2758 = vmatprep.subr.mxu0 0.0
        %2759 = vmatpush1.msra.mxu0 %v402
        %2760 = vmatprep.subr.mxu0 0.0
        %2761 = vmatpush1.msra.mxu0 %v403
        %2762 = vmatprep.subr.mxu0 0.0
        %2763 = vmatpush1.msra.mxu0 %v404
        %2764 = vmatprep.subr.mxu0 0.0
        %2765 = vmatpush1.msra.mxu0 %v405
        %2766 = vmatprep.subr.mxu0 0.0
        %2767 = vmatpush1.msra.mxu0 %v406
        %2768 = vmatprep.subr.mxu0 0.0
        %2769 = vmatpush1.msra.mxu0 %v407
        %2770 = vmatprep.subr.mxu0 0.0
        %2771 = vmatpush1.msra.mxu0 %v408
        %2772 = vmatprep.subr.mxu0 0.0
        %2773 = vmatpush1.msra.mxu0 %v409
        %2774 = vmatprep.subr.mxu0 0.0
        %2775 = vmatpush1.msra.mxu0 %v410
        %2776 = vmatprep.subr.mxu0 0.0
        %2777 = vmatpush1.msra.mxu0 %v411
        %2778 = vmatprep.subr.mxu0 0.0
        %2779 = vmatpush1.msra.mxu0 %v412
        %2780 = vmatprep.subr.mxu0 0.0
        %2781 = vmatpush1.msra.mxu0 %v413
        %2782 = vmatprep.subr.mxu0 0.0
        %2783 = vmatpush1.msra.mxu0 %v414
        %2784 = vmatprep.subr.mxu0 0.0
        %2785 = vmatpush1.msra.mxu0 %v415
        %2786 = vmatprep.subr.mxu0 0.0
        %2787 = vmatpush1.msra.mxu0 %v416
        %2788 = vmatprep.subr.mxu0 0.0
        %2789 = vmatpush1.msra.mxu0 %v417
        %2790 = vmatprep.subr.mxu0 0.0
        %2791 = vmatpush1.msra.mxu0 %v418
        %2792 = vmatprep.subr.mxu0 0.0
        %2793 = vmatpush1.msra.mxu0 %v419
        %2794 = vmatprep.subr.mxu0 0.0
        %2795 = vmatpush1.msra.mxu0 %v420
        %2796 = vmatprep.subr.mxu0 0.0
        %2797 = vmatpush1.msra.mxu0 %v421
        %2798 = vmatprep.subr.mxu0 0.0
        %2799 = vmatpush1.msra.mxu0 %v422
        %2800 = vmatprep.subr.mxu0 0.0
        %2801 = vmatpush1.msra.mxu0 %v423
        %2802 = vmatprep.subr.mxu0 0.0
        %2803 = vmatpush1.msra.mxu0 %v424
        %2804 = vmatprep.subr.mxu0 0.0
        %2805 = vmatpush1.msra.mxu0 %v425
        %2806 = vmatprep.mubr.f32.mxu0 %v2316
        %2807 = vmatmul.mubr.f32.gmra.mrb[0].mxu0 %v2314
        %v2808 = vpop.f32.mrb[0].mxu0
        %v2809 = vadd.f32 %v2739, %v2808
        %v2810 = vpop.f32.mrb[0].mxu0
        %2811 = vdwg.mxu0
        %2812 = vmatprep.subr.mxu0 0.0
        %2813 = vmatpush1.msra.mxu0 %v426
        %2814 = vmatprep.subr.mxu0 0.0
        %2815 = vmatpush1.msra.mxu0 %v427
        %2816 = vmatprep.subr.mxu0 0.0
        %2817 = vmatpush1.msra.mxu0 %v428
        %2818 = vmatprep.subr.mxu0 0.0
        %2819 = vmatpush1.msra.mxu0 %v429
        %2820 = vmatprep.subr.mxu0 0.0
        %2821 = vmatpush1.msra.mxu0 %v430
        %2822 = vmatprep.subr.mxu0 0.0
        %2823 = vmatpush1.msra.mxu0 %v431
        %2824 = vmatprep.subr.mxu0 0.0
        %2825 = vmatpush1.msra.mxu0 %v432
        %2826 = vmatprep.subr.mxu0 0.0
        %2827 = vmatpush1.msra.mxu0 %v433
        %2828 = vmatprep.subr.mxu0 0.0
        %2829 = vmatpush1.msra.mxu0 %v434
        %2830 = vmatprep.subr.mxu0 0.0
        %2831 = vmatpush1.msra.mxu0 %v435
        %2832 = vmatprep.subr.mxu0 0.0
        %2833 = vmatpush1.msra.mxu0 %v436
        %2834 = vmatprep.subr.mxu0 0.0
        %2835 = vmatpush1.msra.mxu0 %v437
        %2836 = vmatprep.subr.mxu0 0.0
        %2837 = vmatpush1.msra.mxu0 %v438
        %2838 = vmatprep.subr.mxu0 0.0
        %2839 = vmatpush1.msra.mxu0 %v439
        %2840 = vmatprep.subr.mxu0 0.0
        %2841 = vmatpush1.msra.mxu0 %v440
        %2842 = vmatprep.subr.mxu0 0.0
        %2843 = vmatpush1.msra.mxu0 %v441
        %2844 = vmatprep.subr.mxu0 0.0
        %2845 = vmatpush1.msra.mxu0 %v442
        %2846 = vmatprep.subr.mxu0 0.0
        %2847 = vmatpush1.msra.mxu0 %v443
        %2848 = vmatprep.subr.mxu0 0.0
        %2849 = vmatpush1.msra.mxu0 %v444
        %2850 = vmatprep.subr.mxu0 0.0
        %2851 = vmatpush1.msra.mxu0 %v445
        %2852 = vmatprep.subr.mxu0 0.0
        %2853 = vmatpush1.msra.mxu0 %v446
        %2854 = vmatprep.subr.mxu0 0.0
        %2855 = vmatpush1.msra.mxu0 %v447
        %2856 = vmatprep.subr.mxu0 0.0
        %2857 = vmatpush1.msra.mxu0 %v448
        %2858 = vmatprep.subr.mxu0 0.0
        %2859 = vmatpush1.msra.mxu0 %v449
        %2860 = vmatprep.subr.mxu0 0.0
        %2861 = vmatpush1.msra.mxu0 %v450
        %2862 = vmatprep.subr.mxu0 0.0
        %2863 = vmatpush1.msra.mxu0 %v451
        %2864 = vmatprep.subr.mxu0 0.0
        %2865 = vmatpush1.msra.mxu0 %v452
        %2866 = vmatprep.subr.mxu0 0.0
        %2867 = vmatpush1.msra.mxu0 %v453
        %2868 = vmatprep.subr.mxu0 0.0
        %2869 = vmatpush1.msra.mxu0 %v454
        %2870 = vmatprep.subr.mxu0 0.0
        %2871 = vmatpush1.msra.mxu0 %v455
        %2872 = vmatprep.subr.mxu0 0.0
        %2873 = vmatpush1.msra.mxu0 %v456
        %2874 = vmatprep.subr.mxu0 0.0
        %2875 = vmatpush1.msra.mxu0 %v457
        %2876 = vmatprep.mubr.f32.mxu0 %v2600
        %2877 = vmatmul.mubr.f32.gmra.mrb[0].mxu0 %v2598
        %v2878 = vpop.f32.mrb[0].mxu0
        %v2879 = vadd.f32 %v2809, %v2878
        %v2880 = vpop.f32.mrb[0].mxu0
        %2881 = vdwg.mxu0
        %v2882 = vmul.f32 %v2879, 0.00390625
        %v2883 = vmul.f32 %v1746, %v1746
        %v2884 = vmul.f32 %v1748, %v1748
        %v2885 = vmul.f32 %v2030, %v2030
        %v2886 = vmul.f32 %v2032, %v2032
        %v2887 = vmul.f32 %v2314, %v2314
        %v2888 = vmul.f32 %v2316, %v2316
        %v2889 = vmul.f32 %v2598, %v2598
        %v2890 = vmul.f32 %v2600, %v2600
        %2891 = vmatprep.subr.mxu0 0.0
        %2892 = vmatpush1.msra.mxu0 %v330
        %2893 = vmatprep.subr.mxu0 0.0
        %2894 = vmatpush1.msra.mxu0 %v331
        %2895 = vmatprep.subr.mxu0 0.0
        %2896 = vmatpush1.msra.mxu0 %v332
        %2897 = vmatprep.subr.mxu0 0.0
        %2898 = vmatpush1.msra.mxu0 %v333
        %2899 = vmatprep.subr.mxu0 0.0
        %2900 = vmatpush1.msra.mxu0 %v334
        %2901 = vmatprep.subr.mxu0 0.0
        %2902 = vmatpush1.msra.mxu0 %v335
        %2903 = vmatprep.subr.mxu0 0.0
        %2904 = vmatpush1.msra.mxu0 %v336
        %2905 = vmatprep.subr.mxu0 0.0
        %2906 = vmatpush1.msra.mxu0 %v337
        %2907 = vmatprep.subr.mxu0 0.0
        %2908 = vmatpush1.msra.mxu0 %v338
        %2909 = vmatprep.subr.mxu0 0.0
        %2910 = vmatpush1.msra.mxu0 %v339
        %2911 = vmatprep.subr.mxu0 0.0
        %2912 = vmatpush1.msra.mxu0 %v340
        %2913 = vmatprep.subr.mxu0 0.0
        %2914 = vmatpush1.msra.mxu0 %v341
        %2915 = vmatprep.subr.mxu0 0.0
        %2916 = vmatpush1.msra.mxu0 %v342
        %2917 = vmatprep.subr.mxu0 0.0
        %2918 = vmatpush1.msra.mxu0 %v343
        %2919 = vmatprep.subr.mxu0 0.0
        %2920 = vmatpush1.msra.mxu0 %v344
        %2921 = vmatprep.subr.mxu0 0.0
        %2922 = vmatpush1.msra.mxu0 %v345
        %2923 = vmatprep.subr.mxu0 0.0
        %2924 = vmatpush1.msra.mxu0 %v346
        %2925 = vmatprep.subr.mxu0 0.0
        %2926 = vmatpush1.msra.mxu0 %v347
        %2927 = vmatprep.subr.mxu0 0.0
        %2928 = vmatpush1.msra.mxu0 %v348
        %2929 = vmatprep.subr.mxu0 0.0
        %2930 = vmatpush1.msra.mxu0 %v349
        %2931 = vmatprep.subr.mxu0 0.0
        %2932 = vmatpush1.msra.mxu0 %v350
        %2933 = vmatprep.subr.mxu0 0.0
        %2934 = vmatpush1.msra.mxu0 %v351
        %2935 = vmatprep.subr.mxu0 0.0
        %2936 = vmatpush1.msra.mxu0 %v352
        %2937 = vmatprep.subr.mxu0 0.0
        %2938 = vmatpush1.msra.mxu0 %v353
        %2939 = vmatprep.subr.mxu0 0.0
        %2940 = vmatpush1.msra.mxu0 %v354
        %2941 = vmatprep.subr.mxu0 0.0
        %2942 = vmatpush1.msra.mxu0 %v355
        %2943 = vmatprep.subr.mxu0 0.0
        %2944 = vmatpush1.msra.mxu0 %v356
        %2945 = vmatprep.subr.mxu0 0.0
        %2946 = vmatpush1.msra.mxu0 %v357
        %2947 = vmatprep.subr.mxu0 0.0
        %2948 = vmatpush1.msra.mxu0 %v358
        %2949 = vmatprep.subr.mxu0 0.0
        %2950 = vmatpush1.msra.mxu0 %v359
        %2951 = vmatprep.subr.mxu0 0.0
        %2952 = vmatpush1.msra.mxu0 %v360
        %2953 = vmatprep.subr.mxu0 0.0
        %2954 = vmatpush1.msra.mxu0 %v361
        %2955 = vmatprep.mubr.f32.mxu0 %v2884
        %2956 = vmatmul.mubr.f32.gmra.mrb[0].mxu0 %v2883
        %v2957 = vpop.f32.mrb[0].mxu0
        %v2958 = vadd.f32 0.0, %v2957
        %v2959 = vpop.f32.mrb[0].mxu0
        %2960 = vdwg.mxu0
        %2961 = vmatprep.subr.mxu0 0.0
        %2962 = vmatpush1.msra.mxu0 %v362
        %2963 = vmatprep.subr.mxu0 0.0
        %2964 = vmatpush1.msra.mxu0 %v363
        %2965 = vmatprep.subr.mxu0 0.0
        %2966 = vmatpush1.msra.mxu0 %v364
        %2967 = vmatprep.subr.mxu0 0.0
        %2968 = vmatpush1.msra.mxu0 %v365
        %2969 = vmatprep.subr.mxu0 0.0
        %2970 = vmatpush1.msra.mxu0 %v366
        %2971 = vmatprep.subr.mxu0 0.0
        %2972 = vmatpush1.msra.mxu0 %v367
        %2973 = vmatprep.subr.mxu0 0.0
        %2974 = vmatpush1.msra.mxu0 %v368
        %2975 = vmatprep.subr.mxu0 0.0
        %2976 = vmatpush1.msra.mxu0 %v369
        %2977 = vmatprep.subr.mxu0 0.0
        %2978 = vmatpush1.msra.mxu0 %v370
        %2979 = vmatprep.subr.mxu0 0.0
        %2980 = vmatpush1.msra.mxu0 %v371
        %2981 = vmatprep.subr.mxu0 0.0
        %2982 = vmatpush1.msra.mxu0 %v372
        %2983 = vmatprep.subr.mxu0 0.0
        %2984 = vmatpush1.msra.mxu0 %v373
        %2985 = vmatprep.subr.mxu0 0.0
        %2986 = vmatpush1.msra.mxu0 %v374
        %2987 = vmatprep.subr.mxu0 0.0
        %2988 = vmatpush1.msra.mxu0 %v375
        %2989 = vmatprep.subr.mxu0 0.0
        %2990 = vmatpush1.msra.mxu0 %v376
        %2991 = vmatprep.subr.mxu0 0.0
        %2992 = vmatpush1.msra.mxu0 %v377
        %2993 = vmatprep.subr.mxu0 0.0
        %2994 = vmatpush1.msra.mxu0 %v378
        %2995 = vmatprep.subr.mxu0 0.0
        %2996 = vmatpush1.msra.mxu0 %v379
        %2997 = vmatprep.subr.mxu0 0.0
        %2998 = vmatpush1.msra.mxu0 %v380
        %2999 = vmatprep.subr.mxu0 0.0
        %3000 = vmatpush1.msra.mxu0 %v381
        %3001 = vmatprep.subr.mxu0 0.0
        %3002 = vmatpush1.msra.mxu0 %v382
        %3003 = vmatprep.subr.mxu0 0.0
        %3004 = vmatpush1.msra.mxu0 %v383
        %3005 = vmatprep.subr.mxu0 0.0
        %3006 = vmatpush1.msra.mxu0 %v384
        %3007 = vmatprep.subr.mxu0 0.0
        %3008 = vmatpush1.msra.mxu0 %v385
        %3009 = vmatprep.subr.mxu0 0.0
        %3010 = vmatpush1.msra.mxu0 %v386
        %3011 = vmatprep.subr.mxu0 0.0
        %3012 = vmatpush1.msra.mxu0 %v387
        %3013 = vmatprep.subr.mxu0 0.0
        %3014 = vmatpush1.msra.mxu0 %v388
        %3015 = vmatprep.subr.mxu0 0.0
        %3016 = vmatpush1.msra.mxu0 %v389
        %3017 = vmatprep.subr.mxu0 0.0
        %3018 = vmatpush1.msra.mxu0 %v390
        %3019 = vmatprep.subr.mxu0 0.0
        %3020 = vmatpush1.msra.mxu0 %v391
        %3021 = vmatprep.subr.mxu0 0.0
        %3022 = vmatpush1.msra.mxu0 %v392
        %3023 = vmatprep.subr.mxu0 0.0
        %3024 = vmatpush1.msra.mxu0 %v393
        %3025 = vmatprep.mubr.f32.mxu0 %v2886
        %3026 = vmatmul.mubr.f32.gmra.mrb[0].mxu0 %v2885
        %v3027 = vpop.f32.mrb[0].mxu0
        %v3028 = vadd.f32 %v2958, %v3027
        %v3029 = vpop.f32.mrb[0].mxu0
        %3030 = vdwg.mxu0
        %3031 = vmatprep.subr.mxu0 0.0
        %3032 = vmatpush1.msra.mxu0 %v394
        %3033 = vmatprep.subr.mxu0 0.0
        %3034 = vmatpush1.msra.mxu0 %v395
        %3035 = vmatprep.subr.mxu0 0.0
        %3036 = vmatpush1.msra.mxu0 %v396
        %3037 = vmatprep.subr.mxu0 0.0
        %3038 = vmatpush1.msra.mxu0 %v397
        %3039 = vmatprep.subr.mxu0 0.0
        %3040 = vmatpush1.msra.mxu0 %v398
        %3041 = vmatprep.subr.mxu0 0.0
        %3042 = vmatpush1.msra.mxu0 %v399
        %3043 = vmatprep.subr.mxu0 0.0
        %3044 = vmatpush1.msra.mxu0 %v400
        %3045 = vmatprep.subr.mxu0 0.0
        %3046 = vmatpush1.msra.mxu0 %v401
        %3047 = vmatprep.subr.mxu0 0.0
        %3048 = vmatpush1.msra.mxu0 %v402
        %3049 = vmatprep.subr.mxu0 0.0
        %3050 = vmatpush1.msra.mxu0 %v403
        %3051 = vmatprep.subr.mxu0 0.0
        %3052 = vmatpush1.msra.mxu0 %v404
        %3053 = vmatprep.subr.mxu0 0.0
        %3054 = vmatpush1.msra.mxu0 %v405
        %3055 = vmatprep.subr.mxu0 0.0
        %3056 = vmatpush1.msra.mxu0 %v406
        %3057 = vmatprep.subr.mxu0 0.0
        %3058 = vmatpush1.msra.mxu0 %v407
        %3059 = vmatprep.subr.mxu0 0.0
        %3060 = vmatpush1.msra.mxu0 %v408
        %3061 = vmatprep.subr.mxu0 0.0
        %3062 = vmatpush1.msra.mxu0 %v409
        %3063 = vmatprep.subr.mxu0 0.0
        %3064 = vmatpush1.msra.mxu0 %v410
        %3065 = vmatprep.subr.mxu0 0.0
        %3066 = vmatpush1.msra.mxu0 %v411
        %3067 = vmatprep.subr.mxu0 0.0
        %3068 = vmatpush1.msra.mxu0 %v412
        %3069 = vmatprep.subr.mxu0 0.0
        %3070 = vmatpush1.msra.mxu0 %v413
        %3071 = vmatprep.subr.mxu0 0.0
        %3072 = vmatpush1.msra.mxu0 %v414
        %3073 = vmatprep.subr.mxu0 0.0
        %3074 = vmatpush1.msra.mxu0 %v415
        %3075 = vmatprep.subr.mxu0 0.0
        %3076 = vmatpush1.msra.mxu0 %v416
        %3077 = vmatprep.subr.mxu0 0.0
        %3078 = vmatpush1.msra.mxu0 %v417
        %3079 = vmatprep.subr.mxu0 0.0
        %3080 = vmatpush1.msra.mxu0 %v418
        %3081 = vmatprep.subr.mxu0 0.0
        %3082 = vmatpush1.msra.mxu0 %v419
        %3083 = vmatprep.subr.mxu0 0.0
        %3084 = vmatpush1.msra.mxu0 %v420
        %3085 = vmatprep.subr.mxu0 0.0
        %3086 = vmatpush1.msra.mxu0 %v421
        %3087 = vmatprep.subr.mxu0 0.0
        %3088 = vmatpush1.msra.mxu0 %v422
        %3089 = vmatprep.subr.mxu0 0.0
        %3090 = vmatpush1.msra.mxu0 %v423
        %3091 = vmatprep.subr.mxu0 0.0
        %3092 = vmatpush1.msra.mxu0 %v424
        %3093 = vmatprep.subr.mxu0 0.0
        %3094 = vmatpush1.msra.mxu0 %v425
        %3095 = vmatprep.mubr.f32.mxu0 %v2888
        %3096 = vmatmul.mubr.f32.gmra.mrb[0].mxu0 %v2887
        %v3097 = vpop.f32.mrb[0].mxu0
        %v3098 = vadd.f32 %v3028, %v3097
        %v3099 = vpop.f32.mrb[0].mxu0
        %3100 = vdwg.mxu0
        %3101 = vmatprep.subr.mxu0 0.0
        %3102 = vmatpush1.msra.mxu0 %v426
        %3103 = vmatprep.subr.mxu0 0.0
        %3104 = vmatpush1.msra.mxu0 %v427
        %3105 = vmatprep.subr.mxu0 0.0
        %3106 = vmatpush1.msra.mxu0 %v428
        %3107 = vmatprep.subr.mxu0 0.0
        %3108 = vmatpush1.msra.mxu0 %v429
        %3109 = vmatprep.subr.mxu0 0.0
        %3110 = vmatpush1.msra.mxu0 %v430
        %3111 = vmatprep.subr.mxu0 0.0
        %3112 = vmatpush1.msra.mxu0 %v431
        %3113 = vmatprep.subr.mxu0 0.0
        %3114 = vmatpush1.msra.mxu0 %v432
        %3115 = vmatprep.subr.mxu0 0.0
        %3116 = vmatpush1.msra.mxu0 %v433
        %3117 = vmatprep.subr.mxu0 0.0
        %3118 = vmatpush1.msra.mxu0 %v434
        %3119 = vmatprep.subr.mxu0 0.0
        %3120 = vmatpush1.msra.mxu0 %v435
        %3121 = vmatprep.subr.mxu0 0.0
        %3122 = vmatpush1.msra.mxu0 %v436
        %3123 = vmatprep.subr.mxu0 0.0
        %3124 = vmatpush1.msra.mxu0 %v437
        %3125 = vmatprep.subr.mxu0 0.0
        %3126 = vmatpush1.msra.mxu0 %v438
        %3127 = vmatprep.subr.mxu0 0.0
        %3128 = vmatpush1.msra.mxu0 %v439
        %3129 = vmatprep.subr.mxu0 0.0
        %3130 = vmatpush1.msra.mxu0 %v440
        %3131 = vmatprep.subr.mxu0 0.0
        %3132 = vmatpush1.msra.mxu0 %v441
        %3133 = vmatprep.subr.mxu0 0.0
        %3134 = vmatpush1.msra.mxu0 %v442
        %3135 = vmatprep.subr.mxu0 0.0
        %3136 = vmatpush1.msra.mxu0 %v443
        %3137 = vmatprep.subr.mxu0 0.0
        %3138 = vmatpush1.msra.mxu0 %v444
        %3139 = vmatprep.subr.mxu0 0.0
        %3140 = vmatpush1.msra.mxu0 %v445
        %3141 = vmatprep.subr.mxu0 0.0
        %3142 = vmatpush1.msra.mxu0 %v446
        %3143 = vmatprep.subr.mxu0 0.0
        %3144 = vmatpush1.msra.mxu0 %v447
        %3145 = vmatprep.subr.mxu0 0.0
        %3146 = vmatpush1.msra.mxu0 %v448
        %3147 = vmatprep.subr.mxu0 0.0
        %3148 = vmatpush1.msra.mxu0 %v449
        %3149 = vmatprep.subr.mxu0 0.0
        %3150 = vmatpush1.msra.mxu0 %v450
        %3151 = vmatprep.subr.mxu0 0.0
        %3152 = vmatpush1.msra.mxu0 %v451
        %3153 = vmatprep.subr.mxu0 0.0
        %3154 = vmatpush1.msra.mxu0 %v452
        %3155 = vmatprep.subr.mxu0 0.0
        %3156 = vmatpush1.msra.mxu0 %v453
        %3157 = vmatprep.subr.mxu0 0.0
        %3158 = vmatpush1.msra.mxu0 %v454
        %3159 = vmatprep.subr.mxu0 0.0
        %3160 = vmatpush1.msra.mxu0 %v455
        %3161 = vmatprep.subr.mxu0 0.0
        %3162 = vmatpush1.msra.mxu0 %v456
        %3163 = vmatprep.subr.mxu0 0.0
        %3164 = vmatpush1.msra.mxu0 %v457
        %3165 = vmatprep.mubr.f32.mxu0 %v2890
        %3166 = vmatmul.mubr.f32.gmra.mrb[0].mxu0 %v2889
        %v3167 = vpop.f32.mrb[0].mxu0
        %v3168 = vadd.f32 %v3098, %v3167
        %v3169 = vpop.f32.mrb[0].mxu0
        %3170 = vdwg.mxu0
        %v3171 = vmul.f32 %v3168, 0.00390625
        %v3172 = vmul.f32 %v2882, %v2882
        %v3173 = vsub.f32 %v3171, %v3172
        %v3174 = vadd.f32 %v3173, 1e-05
        %v3175 = vrsqrt.pop %v3174
        %v3180 = vcombine.high %v458, %v458
        %v3181 = vcombine.high %v459, %v459
        %v3182 = vcombine.high %v460, %v460
        %v3183 = vcombine.high %v461, %v461
        %vm3184 = vcmask 31744
        %v3186 = vsel %vm3184, %v3175, 0
        %vm3188 = vcmask 1043456
        %v3189 = vsel %vm3188, %v458, 0
        %v3191 = vsel %vm3188, %v3180, 0
        %v3193 = vsel %vm3188, %v459, 0
        %v3195 = vsel %vm3188, %v3181, 0
        %v3197 = vsel %vm3188, %v460, 0
        %v3199 = vsel %vm3188, %v3182, 0
        %v3201 = vsel %vm3188, %v461, 0
        %v3203 = vsel %vm3188, %v3183, 0
        %3205 = vmatprep.subr.mxu0 %v3191
        %3206 = vmatpush1.msra.mxu0 %v3189
        %3207 = vmatprep.subr.mxu0 0.0
        %3208 = vmatpush1.msra.mxu0 0.0
        %3209 = vmatprep.subr.mxu0 0.0
        %3210 = vmatpush1.msra.mxu0 0.0
        %3211 = vmatprep.subr.mxu0 0.0
        %3212 = vmatpush1.msra.mxu0 0.0
        %3213 = vmatprep.subr.mxu0 0.0
        %3214 = vmatpush1.msra.mxu0 0.0
        %3215 = vmatprep.subr.mxu0 0.0
        %3216 = vmatpush1.msra.mxu0 0.0
        %3217 = vmatprep.subr.mxu0 0.0
        %3218 = vmatpush1.msra.mxu0 0.0
        %3219 = vmatprep.subr.mxu0 0.0
        %3220 = vmatpush1.msra.mxu0 0.0
        %3221 = vmatprep.subr.mxu0 0.0
        %3222 = vmatpush1.msra.mxu0 0.0
        %3223 = vmatprep.subr.mxu0 0.0
        %3224 = vmatpush1.msra.mxu0 0.0
        %3225 = vmatprep.subr.mxu0 0.0
        %3226 = vmatpush1.msra.mxu0 0.0
        %3227 = vmatprep.subr.mxu0 0.0
        %3228 = vmatpush1.msra.mxu0 0.0
        %3229 = vmatprep.subr.mxu0 0.0
        %3230 = vmatpush1.msra.mxu0 0.0
        %3231 = vmatprep.subr.mxu0 0.0
        %3232 = vmatpush1.msra.mxu0 0.0
        %3233 = vmatprep.subr.mxu0 0.0
        %3234 = vmatpush1.msra.mxu0 0.0
        %3235 = vmatprep.subr.mxu0 0.0
        %3236 = vmatpush1.msra.mxu0 0.0
        %3237 = vmatprep.subr.mxu0 0.0
        %3238 = vmatpush1.msra.mxu0 0.0
        %3239 = vmatprep.subr.mxu0 0.0
        %3240 = vmatpush1.msra.mxu0 0.0
        %3241 = vmatprep.subr.mxu0 0.0
        %3242 = vmatpush1.msra.mxu0 0.0
        %3243 = vmatprep.subr.mxu0 0.0
        %3244 = vmatpush1.msra.mxu0 0.0
        %3245 = vmatprep.subr.mxu0 0.0
        %3246 = vmatpush1.msra.mxu0 0.0
        %3247 = vmatprep.subr.mxu0 0.0
        %3248 = vmatpush1.msra.mxu0 0.0
        %3249 = vmatprep.subr.mxu0 0.0
        %3250 = vmatpush1.msra.mxu0 0.0
        %3251 = vmatprep.subr.mxu0 0.0
        %3252 = vmatpush1.msra.mxu0 0.0
        %3253 = vmatprep.subr.mxu0 0.0
        %3254 = vmatpush1.msra.mxu0 0.0
        %3255 = vmatprep.subr.mxu0 0.0
        %3256 = vmatpush1.msra.mxu0 0.0
        %3257 = vmatprep.subr.mxu0 0.0
        %3258 = vmatpush1.msra.mxu0 0.0
        %3259 = vmatprep.subr.mxu0 0.0
        %3260 = vmatpush1.msra.mxu0 0.0
        %3261 = vmatprep.subr.mxu0 0.0
        %3262 = vmatpush1.msra.mxu0 0.0
        %3263 = vmatprep.subr.mxu0 0.0
        %3264 = vmatpush1.msra.mxu0 0.0
        %3265 = vmatprep.subr.mxu0 0.0
        %3266 = vmatpush1.msra.mxu0 0.0
        %3267 = vmatprep.subr.mxu0 0.0
        %3268 = vmatpush1.msra.mxu0 0.0
        %3269 = vmatprep.mubr.f32.mxu0 0.0
        %3270 = vmatmul.mubr.f32.gmra.mrb[0].mxu0 %v3186
        %v3271 = vpop.f32.mrb[0].mxu0
        %v3272 = vadd.f32 0.0, %v3271
        %v3273 = vpop.f32.mrb[0].mxu0
        %v3274 = vadd.f32 0.0, %v3273
        %3275 = vdwg.mxu0
        %3276 = vmatprep.subr.mxu0 %v3195
        %3277 = vmatpush1.msra.mxu0 %v3193
        %3278 = vmatprep.subr.mxu0 0.0
        %3279 = vmatpush1.msra.mxu0 0.0
        %3280 = vmatprep.subr.mxu0 0.0
        %3281 = vmatpush1.msra.mxu0 0.0
        %3282 = vmatprep.subr.mxu0 0.0
        %3283 = vmatpush1.msra.mxu0 0.0
        %3284 = vmatprep.subr.mxu0 0.0
        %3285 = vmatpush1.msra.mxu0 0.0
        %3286 = vmatprep.subr.mxu0 0.0
        %3287 = vmatpush1.msra.mxu0 0.0
        %3288 = vmatprep.subr.mxu0 0.0
        %3289 = vmatpush1.msra.mxu0 0.0
        %3290 = vmatprep.subr.mxu0 0.0
        %3291 = vmatpush1.msra.mxu0 0.0
        %3292 = vmatprep.subr.mxu0 0.0
        %3293 = vmatpush1.msra.mxu0 0.0
        %3294 = vmatprep.subr.mxu0 0.0
        %3295 = vmatpush1.msra.mxu0 0.0
        %3296 = vmatprep.subr.mxu0 0.0
        %3297 = vmatpush1.msra.mxu0 0.0
        %3298 = vmatprep.subr.mxu0 0.0
        %3299 = vmatpush1.msra.mxu0 0.0
        %3300 = vmatprep.subr.mxu0 0.0
        %3301 = vmatpush1.msra.mxu0 0.0
        %3302 = vmatprep.subr.mxu0 0.0
        %3303 = vmatpush1.msra.mxu0 0.0
        %3304 = vmatprep.subr.mxu0 0.0
        %3305 = vmatpush1.msra.mxu0 0.0
        %3306 = vmatprep.subr.mxu0 0.0
        %3307 = vmatpush1.msra.mxu0 0.0
        %3308 = vmatprep.subr.mxu0 0.0
        %3309 = vmatpush1.msra.mxu0 0.0
        %3310 = vmatprep.subr.mxu0 0.0
        %3311 = vmatpush1.msra.mxu0 0.0
        %3312 = vmatprep.subr.mxu0 0.0
        %3313 = vmatpush1.msra.mxu0 0.0
        %3314 = vmatprep.subr.mxu0 0.0
        %3315 = vmatpush1.msra.mxu0 0.0
        %3316 = vmatprep.subr.mxu0 0.0
        %3317 = vmatpush1.msra.mxu0 0.0
        %3318 = vmatprep.subr.mxu0 0.0
        %3319 = vmatpush1.msra.mxu0 0.0
        %3320 = vmatprep.subr.mxu0 0.0
        %3321 = vmatpush1.msra.mxu0 0.0
        %3322 = vmatprep.subr.mxu0 0.0
        %3323 = vmatpush1.msra.mxu0 0.0
        %3324 = vmatprep.subr.mxu0 0.0
        %3325 = vmatpush1.msra.mxu0 0.0
        %3326 = vmatprep.subr.mxu0 0.0
        %3327 = vmatpush1.msra.mxu0 0.0
        %3328 = vmatprep.subr.mxu0 0.0
        %3329 = vmatpush1.msra.mxu0 0.0
        %3330 = vmatprep.subr.mxu0 0.0
        %3331 = vmatpush1.msra.mxu0 0.0
        %3332 = vmatprep.subr.mxu0 0.0
        %3333 = vmatpush1.msra.mxu0 0.0
        %3334 = vmatprep.subr.mxu0 0.0
        %3335 = vmatpush1.msra.mxu0 0.0
        %3336 = vmatprep.subr.mxu0 0.0
        %3337 = vmatpush1.msra.mxu0 0.0
        %3338 = vmatprep.subr.mxu0 0.0
        %3339 = vmatpush1.msra.mxu0 0.0
        %3340 = vmatprep.mubr.f32.mxu0 0.0
        %3341 = vmatmul.mubr.f32.gmra.mrb[0].mxu0 %v3186
        %v3342 = vpop.f32.mrb[0].mxu0
        %v3343 = vadd.f32 0.0, %v3342
        %v3344 = vpop.f32.mrb[0].mxu0
        %v3345 = vadd.f32 0.0, %v3344
        %3346 = vdwg.mxu0
        %3347 = vmatprep.subr.mxu0 %v3199
        %3348 = vmatpush1.msra.mxu0 %v3197
        %3349 = vmatprep.subr.mxu0 0.0
        %3350 = vmatpush1.msra.mxu0 0.0
        %3351 = vmatprep.subr.mxu0 0.0
        %3352 = vmatpush1.msra.mxu0 0.0
        %3353 = vmatprep.subr.mxu0 0.0
        %3354 = vmatpush1.msra.mxu0 0.0
        %3355 = vmatprep.subr.mxu0 0.0
        %3356 = vmatpush1.msra.mxu0 0.0
        %3357 = vmatprep.subr.mxu0 0.0
        %3358 = vmatpush1.msra.mxu0 0.0
        %3359 = vmatprep.subr.mxu0 0.0
        %3360 = vmatpush1.msra.mxu0 0.0
        %3361 = vmatprep.subr.mxu0 0.0
        %3362 = vmatpush1.msra.mxu0 0.0
        %3363 = vmatprep.subr.mxu0 0.0
        %3364 = vmatpush1.msra.mxu0 0.0
        %3365 = vmatprep.subr.mxu0 0.0
        %3366 = vmatpush1.msra.mxu0 0.0
        %3367 = vmatprep.subr.mxu0 0.0
        %3368 = vmatpush1.msra.mxu0 0.0
        %3369 = vmatprep.subr.mxu0 0.0
        %3370 = vmatpush1.msra.mxu0 0.0
        %3371 = vmatprep.subr.mxu0 0.0
        %3372 = vmatpush1.msra.mxu0 0.0
        %3373 = vmatprep.subr.mxu0 0.0
        %3374 = vmatpush1.msra.mxu0 0.0
        %3375 = vmatprep.subr.mxu0 0.0
        %3376 = vmatpush1.msra.mxu0 0.0
        %3377 = vmatprep.subr.mxu0 0.0
        %3378 = vmatpush1.msra.mxu0 0.0
        %3379 = vmatprep.subr.mxu0 0.0
        %3380 = vmatpush1.msra.mxu0 0.0
        %3381 = vmatprep.subr.mxu0 0.0
        %3382 = vmatpush1.msra.mxu0 0.0
        %3383 = vmatprep.subr.mxu0 0.0
        %3384 = vmatpush1.msra.mxu0 0.0
        %3385 = vmatprep.subr.mxu0 0.0
        %3386 = vmatpush1.msra.mxu0 0.0
        %3387 = vmatprep.subr.mxu0 0.0
        %3388 = vmatpush1.msra.mxu0 0.0
        %3389 = vmatprep.subr.mxu0 0.0
        %3390 = vmatpush1.msra.mxu0 0.0
        %3391 = vmatprep.subr.mxu0 0.0
        %3392 = vmatpush1.msra.mxu0 0.0
        %3393 = vmatprep.subr.mxu0 0.0
        %3394 = vmatpush1.msra.mxu0 0.0
        %3395 = vmatprep.subr.mxu0 0.0
        %3396 = vmatpush1.msra.mxu0 0.0
        %3397 = vmatprep.subr.mxu0 0.0
        %3398 = vmatpush1.msra.mxu0 0.0
        %3399 = vmatprep.subr.mxu0 0.0
        %3400 = vmatpush1.msra.mxu0 0.0
        %3401 = vmatprep.subr.mxu0 0.0
        %3402 = vmatpush1.msra.mxu0 0.0
        %3403 = vmatprep.subr.mxu0 0.0
        %3404 = vmatpush1.msra.mxu0 0.0
        %3405 = vmatprep.subr.mxu0 0.0
        %3406 = vmatpush1.msra.mxu0 0.0
        %3407 = vmatprep.subr.mxu0 0.0
        %3408 = vmatpush1.msra.mxu0 0.0
        %3409 = vmatprep.subr.mxu0 0.0
        %3410 = vmatpush1.msra.mxu0 0.0
        %3411 = vmatprep.mubr.f32.mxu0 0.0
        %3412 = vmatmul.mubr.f32.gmra.mrb[0].mxu0 %v3186
        %v3413 = vpop.f32.mrb[0].mxu0
        %v3414 = vadd.f32 0.0, %v3413
        %v3415 = vpop.f32.mrb[0].mxu0
        %v3416 = vadd.f32 0.0, %v3415
        %3417 = vdwg.mxu0
        %3418 = vmatprep.subr.mxu0 %v3203
        %3419 = vmatpush1.msra.mxu0 %v3201
        %3420 = vmatprep.subr.mxu0 0.0
        %3421 = vmatpush1.msra.mxu0 0.0
        %3422 = vmatprep.subr.mxu0 0.0
        %3423 = vmatpush1.msra.mxu0 0.0
        %3424 = vmatprep.subr.mxu0 0.0
        %3425 = vmatpush1.msra.mxu0 0.0
        %3426 = vmatprep.subr.mxu0 0.0
        %3427 = vmatpush1.msra.mxu0 0.0
        %3428 = vmatprep.subr.mxu0 0.0
        %3429 = vmatpush1.msra.mxu0 0.0
        %3430 = vmatprep.subr.mxu0 0.0
        %3431 = vmatpush1.msra.mxu0 0.0
        %3432 = vmatprep.subr.mxu0 0.0
        %3433 = vmatpush1.msra.mxu0 0.0
        %3434 = vmatprep.subr.mxu0 0.0
        %3435 = vmatpush1.msra.mxu0 0.0
        %3436 = vmatprep.subr.mxu0 0.0
        %3437 = vmatpush1.msra.mxu0 0.0
        %3438 = vmatprep.subr.mxu0 0.0
        %3439 = vmatpush1.msra.mxu0 0.0
        %3440 = vmatprep.subr.mxu0 0.0
        %3441 = vmatpush1.msra.mxu0 0.0
        %3442 = vmatprep.subr.mxu0 0.0
        %3443 = vmatpush1.msra.mxu0 0.0
        %3444 = vmatprep.subr.mxu0 0.0
        %3445 = vmatpush1.msra.mxu0 0.0
        %3446 = vmatprep.subr.mxu0 0.0
        %3447 = vmatpush1.msra.mxu0 0.0
        %3448 = vmatprep.subr.mxu0 0.0
        %3449 = vmatpush1.msra.mxu0 0.0
        %3450 = vmatprep.subr.mxu0 0.0
        %3451 = vmatpush1.msra.mxu0 0.0
        %3452 = vmatprep.subr.mxu0 0.0
        %3453 = vmatpush1.msra.mxu0 0.0
        %3454 = vmatprep.subr.mxu0 0.0
        %3455 = vmatpush1.msra.mxu0 0.0
        %3456 = vmatprep.subr.mxu0 0.0
        %3457 = vmatpush1.msra.mxu0 0.0
        %3458 = vmatprep.subr.mxu0 0.0
        %3459 = vmatpush1.msra.mxu0 0.0
        %3460 = vmatprep.subr.mxu0 0.0
        %3461 = vmatpush1.msra.mxu0 0.0
        %3462 = vmatprep.subr.mxu0 0.0
        %3463 = vmatpush1.msra.mxu0 0.0
        %3464 = vmatprep.subr.mxu0 0.0
        %3465 = vmatpush1.msra.mxu0 0.0
        %3466 = vmatprep.subr.mxu0 0.0
        %3467 = vmatpush1.msra.mxu0 0.0
        %3468 = vmatprep.subr.mxu0 0.0
        %3469 = vmatpush1.msra.mxu0 0.0
        %3470 = vmatprep.subr.mxu0 0.0
        %3471 = vmatpush1.msra.mxu0 0.0
        %3472 = vmatprep.subr.mxu0 0.0
        %3473 = vmatpush1.msra.mxu0 0.0
        %3474 = vmatprep.subr.mxu0 0.0
        %3475 = vmatpush1.msra.mxu0 0.0
        %3476 = vmatprep.subr.mxu0 0.0
        %3477 = vmatpush1.msra.mxu0 0.0
        %3478 = vmatprep.subr.mxu0 0.0
        %3479 = vmatpush1.msra.mxu0 0.0
        %3480 = vmatprep.subr.mxu0 0.0
        %3481 = vmatpush1.msra.mxu0 0.0
        %3482 = vmatprep.mubr.f32.mxu0 0.0
        %3483 = vmatmul.mubr.f32.gmra.mrb[0].mxu0 %v3186
        %v3484 = vpop.f32.mrb[0].mxu0
        %v3485 = vadd.f32 0.0, %v3484
        %v3486 = vpop.f32.mrb[0].mxu0
        %v3487 = vadd.f32 0.0, %v3486
        %3488 = vdwg.mxu0
        %v3490 = vsel %vm3184, %v2882, 0
        %3492 = vmatprep.subr.mxu0 %v3191
        %3493 = vmatpush1.msra.mxu0 %v3189
        %3494 = vmatprep.subr.mxu0 0.0
        %3495 = vmatpush1.msra.mxu0 0.0
        %3496 = vmatprep.subr.mxu0 0.0
        %3497 = vmatpush1.msra.mxu0 0.0
        %3498 = vmatprep.subr.mxu0 0.0
        %3499 = vmatpush1.msra.mxu0 0.0
        %3500 = vmatprep.subr.mxu0 0.0
        %3501 = vmatpush1.msra.mxu0 0.0
        %3502 = vmatprep.subr.mxu0 0.0
        %3503 = vmatpush1.msra.mxu0 0.0
        %3504 = vmatprep.subr.mxu0 0.0
        %3505 = vmatpush1.msra.mxu0 0.0
        %3506 = vmatprep.subr.mxu0 0.0
        %3507 = vmatpush1.msra.mxu0 0.0
        %3508 = vmatprep.subr.mxu0 0.0
        %3509 = vmatpush1.msra.mxu0 0.0
        %3510 = vmatprep.subr.mxu0 0.0
        %3511 = vmatpush1.msra.mxu0 0.0
        %3512 = vmatprep.subr.mxu0 0.0
        %3513 = vmatpush1.msra.mxu0 0.0
        %3514 = vmatprep.subr.mxu0 0.0
        %3515 = vmatpush1.msra.mxu0 0.0
        %3516 = vmatprep.subr.mxu0 0.0
        %3517 = vmatpush1.msra.mxu0 0.0
        %3518 = vmatprep.subr.mxu0 0.0
        %3519 = vmatpush1.msra.mxu0 0.0
        %3520 = vmatprep.subr.mxu0 0.0
        %3521 = vmatpush1.msra.mxu0 0.0
        %3522 = vmatprep.subr.mxu0 0.0
        %3523 = vmatpush1.msra.mxu0 0.0
        %3524 = vmatprep.subr.mxu0 0.0
        %3525 = vmatpush1.msra.mxu0 0.0
        %3526 = vmatprep.subr.mxu0 0.0
        %3527 = vmatpush1.msra.mxu0 0.0
        %3528 = vmatprep.subr.mxu0 0.0
        %3529 = vmatpush1.msra.mxu0 0.0
        %3530 = vmatprep.subr.mxu0 0.0
        %3531 = vmatpush1.msra.mxu0 0.0
        %3532 = vmatprep.subr.mxu0 0.0
        %3533 = vmatpush1.msra.mxu0 0.0
        %3534 = vmatprep.subr.mxu0 0.0
        %3535 = vmatpush1.msra.mxu0 0.0
        %3536 = vmatprep.subr.mxu0 0.0
        %3537 = vmatpush1.msra.mxu0 0.0
        %3538 = vmatprep.subr.mxu0 0.0
        %3539 = vmatpush1.msra.mxu0 0.0
        %3540 = vmatprep.subr.mxu0 0.0
        %3541 = vmatpush1.msra.mxu0 0.0
        %3542 = vmatprep.subr.mxu0 0.0
        %3543 = vmatpush1.msra.mxu0 0.0
        %3544 = vmatprep.subr.mxu0 0.0
        %3545 = vmatpush1.msra.mxu0 0.0
        %3546 = vmatprep.subr.mxu0 0.0
        %3547 = vmatpush1.msra.mxu0 0.0
        %3548 = vmatprep.subr.mxu0 0.0
        %3549 = vmatpush1.msra.mxu0 0.0
        %3550 = vmatprep.subr.mxu0 0.0
        %3551 = vmatpush1.msra.mxu0 0.0
        %3552 = vmatprep.subr.mxu0 0.0
        %3553 = vmatpush1.msra.mxu0 0.0
        %3554 = vmatprep.subr.mxu0 0.0
        %3555 = vmatpush1.msra.mxu0 0.0
        %3556 = vmatprep.mubr.f32.mxu0 0.0
        %3557 = vmatmul.mubr.f32.gmra.mrb[0].mxu0 %v3490
        %v3558 = vpop.f32.mrb[0].mxu0
        %v3559 = vadd.f32 0.0, %v3558
        %v3560 = vpop.f32.mrb[0].mxu0
        %v3561 = vadd.f32 0.0, %v3560
        %3562 = vdwg.mxu0
        %3563 = vmatprep.subr.mxu0 %v3195
        %3564 = vmatpush1.msra.mxu0 %v3193
        %3565 = vmatprep.subr.mxu0 0.0
        %3566 = vmatpush1.msra.mxu0 0.0
        %3567 = vmatprep.subr.mxu0 0.0
        %3568 = vmatpush1.msra.mxu0 0.0
        %3569 = vmatprep.subr.mxu0 0.0
        %3570 = vmatpush1.msra.mxu0 0.0
        %3571 = vmatprep.subr.mxu0 0.0
        %3572 = vmatpush1.msra.mxu0 0.0
        %3573 = vmatprep.subr.mxu0 0.0
        %3574 = vmatpush1.msra.mxu0 0.0
        %3575 = vmatprep.subr.mxu0 0.0
        %3576 = vmatpush1.msra.mxu0 0.0
        %3577 = vmatprep.subr.mxu0 0.0
        %3578 = vmatpush1.msra.mxu0 0.0
        %3579 = vmatprep.subr.mxu0 0.0
        %3580 = vmatpush1.msra.mxu0 0.0
        %3581 = vmatprep.subr.mxu0 0.0
        %3582 = vmatpush1.msra.mxu0 0.0
        %3583 = vmatprep.subr.mxu0 0.0
        %3584 = vmatpush1.msra.mxu0 0.0
        %3585 = vmatprep.subr.mxu0 0.0
        %3586 = vmatpush1.msra.mxu0 0.0
        %3587 = vmatprep.subr.mxu0 0.0
        %3588 = vmatpush1.msra.mxu0 0.0
        %3589 = vmatprep.subr.mxu0 0.0
        %3590 = vmatpush1.msra.mxu0 0.0
        %3591 = vmatprep.subr.mxu0 0.0
        %3592 = vmatpush1.msra.mxu0 0.0
        %3593 = vmatprep.subr.mxu0 0.0
        %3594 = vmatpush1.msra.mxu0 0.0
        %3595 = vmatprep.subr.mxu0 0.0
        %3596 = vmatpush1.msra.mxu0 0.0
        %3597 = vmatprep.subr.mxu0 0.0
        %3598 = vmatpush1.msra.mxu0 0.0
        %3599 = vmatprep.subr.mxu0 0.0
        %3600 = vmatpush1.msra.mxu0 0.0
        %3601 = vmatprep.subr.mxu0 0.0
        %3602 = vmatpush1.msra.mxu0 0.0
        %3603 = vmatprep.subr.mxu0 0.0
        %3604 = vmatpush1.msra.mxu0 0.0
        %3605 = vmatprep.subr.mxu0 0.0
        %3606 = vmatpush1.msra.mxu0 0.0
        %3607 = vmatprep.subr.mxu0 0.0
        %3608 = vmatpush1.msra.mxu0 0.0
        %3609 = vmatprep.subr.mxu0 0.0
        %3610 = vmatpush1.msra.mxu0 0.0
        %3611 = vmatprep.subr.mxu0 0.0
        %3612 = vmatpush1.msra.mxu0 0.0
        %3613 = vmatprep.subr.mxu0 0.0
        %3614 = vmatpush1.msra.mxu0 0.0
        %3615 = vmatprep.subr.mxu0 0.0
        %3616 = vmatpush1.msra.mxu0 0.0
        %3617 = vmatprep.subr.mxu0 0.0
        %3618 = vmatpush1.msra.mxu0 0.0
        %3619 = vmatprep.subr.mxu0 0.0
        %3620 = vmatpush1.msra.mxu0 0.0
        %3621 = vmatprep.subr.mxu0 0.0
        %3622 = vmatpush1.msra.mxu0 0.0
        %3623 = vmatprep.subr.mxu0 0.0
        %3624 = vmatpush1.msra.mxu0 0.0
        %3625 = vmatprep.subr.mxu0 0.0
        %3626 = vmatpush1.msra.mxu0 0.0
        %3627 = vmatprep.mubr.f32.mxu0 0.0
        %3628 = vmatmul.mubr.f32.gmra.mrb[0].mxu0 %v3490
        %v3629 = vpop.f32.mrb[0].mxu0
        %v3630 = vadd.f32 0.0, %v3629
        %v3631 = vpop.f32.mrb[0].mxu0
        %v3632 = vadd.f32 0.0, %v3631
        %3633 = vdwg.mxu0
        %3634 = vmatprep.subr.mxu0 %v3199
        %3635 = vmatpush1.msra.mxu0 %v3197
        %3636 = vmatprep.subr.mxu0 0.0
        %3637 = vmatpush1.msra.mxu0 0.0
        %3638 = vmatprep.subr.mxu0 0.0
        %3639 = vmatpush1.msra.mxu0 0.0
        %3640 = vmatprep.subr.mxu0 0.0
        %3641 = vmatpush1.msra.mxu0 0.0
        %3642 = vmatprep.subr.mxu0 0.0
        %3643 = vmatpush1.msra.mxu0 0.0
        %3644 = vmatprep.subr.mxu0 0.0
        %3645 = vmatpush1.msra.mxu0 0.0
        %3646 = vmatprep.subr.mxu0 0.0
        %3647 = vmatpush1.msra.mxu0 0.0
        %3648 = vmatprep.subr.mxu0 0.0
        %3649 = vmatpush1.msra.mxu0 0.0
        %3650 = vmatprep.subr.mxu0 0.0
        %3651 = vmatpush1.msra.mxu0 0.0
        %3652 = vmatprep.subr.mxu0 0.0
        %3653 = vmatpush1.msra.mxu0 0.0
        %3654 = vmatprep.subr.mxu0 0.0
        %3655 = vmatpush1.msra.mxu0 0.0
        %3656 = vmatprep.subr.mxu0 0.0
        %3657 = vmatpush1.msra.mxu0 0.0
        %3658 = vmatprep.subr.mxu0 0.0
        %3659 = vmatpush1.msra.mxu0 0.0
        %3660 = vmatprep.subr.mxu0 0.0
        %3661 = vmatpush1.msra.mxu0 0.0
        %3662 = vmatprep.subr.mxu0 0.0
        %3663 = vmatpush1.msra.mxu0 0.0
        %3664 = vmatprep.subr.mxu0 0.0
        %3665 = vmatpush1.msra.mxu0 0.0
        %3666 = vmatprep.subr.mxu0 0.0
        %3667 = vmatpush1.msra.mxu0 0.0
        %3668 = vmatprep.subr.mxu0 0.0
        %3669 = vmatpush1.msra.mxu0 0.0
        %3670 = vmatprep.subr.mxu0 0.0
        %3671 = vmatpush1.msra.mxu0 0.0
        %3672 = vmatprep.subr.mxu0 0.0
        %3673 = vmatpush1.msra.mxu0 0.0
        %3674 = vmatprep.subr.mxu0 0.0
        %3675 = vmatpush1.msra.mxu0 0.0
        %3676 = vmatprep.subr.mxu0 0.0
        %3677 = vmatpush1.msra.mxu0 0.0
        %3678 = vmatprep.subr.mxu0 0.0
        %3679 = vmatpush1.msra.mxu0 0.0
        %3680 = vmatprep.subr.mxu0 0.0
        %3681 = vmatpush1.msra.mxu0 0.0
        %3682 = vmatprep.subr.mxu0 0.0
        %3683 = vmatpush1.msra.mxu0 0.0
        %3684 = vmatprep.subr.mxu0 0.0
        %3685 = vmatpush1.msra.mxu0 0.0
        %3686 = vmatprep.subr.mxu0 0.0
        %3687 = vmatpush1.msra.mxu0 0.0
        %3688 = vmatprep.subr.mxu0 0.0
        %3689 = vmatpush1.msra.mxu0 0.0
        %3690 = vmatprep.subr.mxu0 0.0
        %3691 = vmatpush1.msra.mxu0 0.0
        %3692 = vmatprep.subr.mxu0 0.0
        %3693 = vmatpush1.msra.mxu0 0.0
        %3694 = vmatprep.subr.mxu0 0.0
        %3695 = vmatpush1.msra.mxu0 0.0
        %3696 = vmatprep.subr.mxu0 0.0
        %3697 = vmatpush1.msra.mxu0 0.0
        %3698 = vmatprep.mubr.f32.mxu0 0.0
        %3699 = vmatmul.mubr.f32.gmra.mrb[0].mxu0 %v3490
        %v3700 = vpop.f32.mrb[0].mxu0
        %v3701 = vadd.f32 0.0, %v3700
        %v3702 = vpop.f32.mrb[0].mxu0
        %v3703 = vadd.f32 0.0, %v3702
        %3704 = vdwg.mxu0
        %3705 = vmatprep.subr.mxu0 %v3203
        %3706 = vmatpush1.msra.mxu0 %v3201
        %3707 = vmatprep.subr.mxu0 0.0
        %3708 = vmatpush1.msra.mxu0 0.0
        %3709 = vmatprep.subr.mxu0 0.0
        %3710 = vmatpush1.msra.mxu0 0.0
        %3711 = vmatprep.subr.mxu0 0.0
        %3712 = vmatpush1.msra.mxu0 0.0
        %3713 = vmatprep.subr.mxu0 0.0
        %3714 = vmatpush1.msra.mxu0 0.0
        %3715 = vmatprep.subr.mxu0 0.0
        %3716 = vmatpush1.msra.mxu0 0.0
        %3717 = vmatprep.subr.mxu0 0.0
        %3718 = vmatpush1.msra.mxu0 0.0
        %3719 = vmatprep.subr.mxu0 0.0
        %3720 = vmatpush1.msra.mxu0 0.0
        %3721 = vmatprep.subr.mxu0 0.0
        %3722 = vmatpush1.msra.mxu0 0.0
        %3723 = vmatprep.subr.mxu0 0.0
        %3724 = vmatpush1.msra.mxu0 0.0
        %3725 = vmatprep.subr.mxu0 0.0
        %3726 = vmatpush1.msra.mxu0 0.0
        %3727 = vmatprep.subr.mxu0 0.0
        %3728 = vmatpush1.msra.mxu0 0.0
        %3729 = vmatprep.subr.mxu0 0.0
        %3730 = vmatpush1.msra.mxu0 0.0
        %3731 = vmatprep.subr.mxu0 0.0
        %3732 = vmatpush1.msra.mxu0 0.0
        %3733 = vmatprep.subr.mxu0 0.0
        %3734 = vmatpush1.msra.mxu0 0.0
        %3735 = vmatprep.subr.mxu0 0.0
        %3736 = vmatpush1.msra.mxu0 0.0
        %3737 = vmatprep.subr.mxu0 0.0
        %3738 = vmatpush1.msra.mxu0 0.0
        %3739 = vmatprep.subr.mxu0 0.0
        %3740 = vmatpush1.msra.mxu0 0.0
        %3741 = vmatprep.subr.mxu0 0.0
        %3742 = vmatpush1.msra.mxu0 0.0
        %3743 = vmatprep.subr.mxu0 0.0
        %3744 = vmatpush1.msra.mxu0 0.0
        %3745 = vmatprep.subr.mxu0 0.0
        %3746 = vmatpush1.msra.mxu0 0.0
        %3747 = vmatprep.subr.mxu0 0.0
        %3748 = vmatpush1.msra.mxu0 0.0
        %3749 = vmatprep.subr.mxu0 0.0
        %3750 = vmatpush1.msra.mxu0 0.0
        %3751 = vmatprep.subr.mxu0 0.0
        %3752 = vmatpush1.msra.mxu0 0.0
        %3753 = vmatprep.subr.mxu0 0.0
        %3754 = vmatpush1.msra.mxu0 0.0
        %3755 = vmatprep.subr.mxu0 0.0
        %3756 = vmatpush1.msra.mxu0 0.0
        %3757 = vmatprep.subr.mxu0 0.0
        %3758 = vmatpush1.msra.mxu0 0.0
        %3759 = vmatprep.subr.mxu0 0.0
        %3760 = vmatpush1.msra.mxu0 0.0
        %3761 = vmatprep.subr.mxu0 0.0
        %3762 = vmatpush1.msra.mxu0 0.0
        %3763 = vmatprep.subr.mxu0 0.0
        %3764 = vmatpush1.msra.mxu0 0.0
        %3765 = vmatprep.subr.mxu0 0.0
        %3766 = vmatpush1.msra.mxu0 0.0
        %3767 = vmatprep.subr.mxu0 0.0
        %3768 = vmatpush1.msra.mxu0 0.0
        %3769 = vmatprep.mubr.f32.mxu0 0.0
        %3770 = vmatmul.mubr.f32.gmra.mrb[0].mxu0 %v3490
        %v3771 = vpop.f32.mrb[0].mxu0
        %v3772 = vadd.f32 0.0, %v3771
        %v3773 = vpop.f32.mrb[0].mxu0
        %v3774 = vadd.f32 0.0, %v3773
        %3775 = vdwg.mxu0
        %v3776 = vlaneseq
        %v3777 = vshrl.u32 %v3776, 7
        %v3778 = vsub.s32 1, %v3777
        %v3779 = vrot.slane %v322, %v3778
        %v3780 = vlaneseq
        %v3781 = vshrl.u32 %v3780, 7
        %v3782 = vsub.s32 1, %v3781
        %v3783 = vrot.slane %v323, %v3782
        %v3784 = vlaneseq
        %v3785 = vshrl.u32 %v3784, 7
        %v3786 = vsub.s32 1, %v3785
        %v3787 = vrot.slane %v324, %v3786
        %v3788 = vlaneseq
        %v3789 = vshrl.u32 %v3788, 7
        %v3790 = vsub.s32 1, %v3789
        %v3791 = vrot.slane %v325, %v3790
        %v3792 = vlaneseq
        %v3793 = vshrl.u32 %v3792, 7
        %v3794 = vsub.s32 1, %v3793
        %v3795 = vrot.slane %v326, %v3794
        %v3796 = vlaneseq
        %v3797 = vshrl.u32 %v3796, 7
        %v3798 = vsub.s32 1, %v3797
        %v3799 = vrot.slane %v327, %v3798
        %v3800 = vlaneseq
        %v3801 = vshrl.u32 %v3800, 7
        %v3802 = vsub.s32 1, %v3801
        %v3803 = vrot.slane %v328, %v3802
        %v3804 = vlaneseq
        %v3805 = vshrl.u32 %v3804, 7
        %v3806 = vsub.s32 1, %v3805
        %v3807 = vrot.slane %v329, %v3806
        %v3808 = vmul.f32 %v3272, %v3779
        %v3809 = vmul.f32 %v3274, %v3783
        %v3810 = vmul.f32 %v3343, %v3787
        %v3811 = vmul.f32 %v3345, %v3791
        %v3812 = vmul.f32 %v3414, %v3795
        %v3813 = vmul.f32 %v3416, %v3799
        %v3814 = vmul.f32 %v3485, %v3803
        %v3815 = vmul.f32 %v3487, %v3807
        %v3816 = vsub.f32 %v1746, %v3559
        %v3817 = vsub.f32 %v1748, %v3561
        %v3818 = vsub.f32 %v2030, %v3630
        %v3819 = vsub.f32 %v2032, %v3632
        %v3820 = vsub.f32 %v2314, %v3701
        %v3821 = vsub.f32 %v2316, %v3703
        %v3822 = vsub.f32 %v2598, %v3772
        %v3823 = vsub.f32 %v2600, %v3774
        %v3824 = vmul.f32 %v3816, %v3808
        %v3825 = vmul.f32 %v3817, %v3809
        %v3826 = vmul.f32 %v3818, %v3810
        %v3827 = vmul.f32 %v3819, %v3811
        %v3828 = vmul.f32 %v3820, %v3812
        %v3829 = vmul.f32 %v3821, %v3813
        %v3830 = vmul.f32 %v3822, %v3814
        %v3831 = vmul.f32 %v3823, %v3815
        %v3832 = vlaneseq
        %v3833 = vshrl.u32 %v3832, 7
        %v3834 = vsub.s32 2, %v3833
        %v3835 = vrot.slane %v322, %v3834
        %v3836 = vlaneseq
        %v3837 = vshrl.u32 %v3836, 7
        %v3838 = vsub.s32 2, %v3837
        %v3839 = vrot.slane %v323, %v3838
        %v3840 = vlaneseq
        %v3841 = vshrl.u32 %v3840, 7
        %v3842 = vsub.s32 2, %v3841
        %v3843 = vrot.slane %v324, %v3842
        %v3844 = vlaneseq
        %v3845 = vshrl.u32 %v3844, 7
        %v3846 = vsub.s32 2, %v3845
        %v3847 = vrot.slane %v325, %v3846
        %v3848 = vlaneseq
        %v3849 = vshrl.u32 %v3848, 7
        %v3850 = vsub.s32 2, %v3849
        %v3851 = vrot.slane %v326, %v3850
        %v3852 = vlaneseq
        %v3853 = vshrl.u32 %v3852, 7
        %v3854 = vsub.s32 2, %v3853
        %v3855 = vrot.slane %v327, %v3854
        %v3856 = vlaneseq
        %v3857 = vshrl.u32 %v3856, 7
        %v3858 = vsub.s32 2, %v3857
        %v3859 = vrot.slane %v328, %v3858
        %v3860 = vlaneseq
        %v3861 = vshrl.u32 %v3860, 7
        %v3862 = vsub.s32 2, %v3861
        %v3863 = vrot.slane %v329, %v3862
        %v3864 = vadd.f32 %v3824, %v3835
        %v3865 = vadd.f32 %v3825, %v3839
        %v3866 = vadd.f32 %v3826, %v3843
        %v3867 = vadd.f32 %v3827, %v3847
        %v3868 = vadd.f32 %v3828, %v3851
        %v3869 = vadd.f32 %v3829, %v3855
        %v3870 = vadd.f32 %v3830, %v3859
        %v3871 = vadd.f32 %v3831, %v3863
        %v3872 = vmul.f32 %v3864, 0.5
        %v3873 = vmul.f32 %v3865, 0.5
        %v3874 = vmul.f32 %v3866, 0.5
        %v3875 = vmul.f32 %v3867, 0.5
        %v3876 = vmul.f32 %v3868, 0.5
        %v3877 = vmul.f32 %v3869, 0.5
        %v3878 = vmul.f32 %v3870, 0.5
        %v3879 = vmul.f32 %v3871, 0.5
        %v3880 = vtanh.pop %v3872
        %v3881 = vtanh.pop %v3873
        %v3882 = vtanh.pop %v3874
        %v3883 = vtanh.pop %v3875
        %v3884 = vtanh.pop %v3876
        %v3885 = vtanh.pop %v3877
        %v3886 = vtanh.pop %v3878
        %v3887 = vtanh.pop %v3879
        %v3888 = vadd.f32 %v3880, 1.0
        %v3889 = vadd.f32 %v3881, 1.0
        %v3890 = vadd.f32 %v3882, 1.0
        %v3891 = vadd.f32 %v3883, 1.0
        %v3892 = vadd.f32 %v3884, 1.0
        %v3893 = vadd.f32 %v3885, 1.0
        %v3894 = vadd.f32 %v3886, 1.0
        %v3895 = vadd.f32 %v3887, 1.0
        %v3896 = vmul.f32 %v3888, 0.5
        %v3897 = vmul.f32 %v3889, 0.5
        %v3898 = vmul.f32 %v3890, 0.5
        %v3899 = vmul.f32 %v3891, 0.5
        %v3900 = vmul.f32 %v3892, 0.5
        %v3901 = vmul.f32 %v3893, 0.5
        %v3902 = vmul.f32 %v3894, 0.5
        %v3903 = vmul.f32 %v3895, 0.5
        %v3904 = vmul.f32 %v3864, %v3896
        %v3905 = vmul.f32 %v3865, %v3897
        %v3906 = vmul.f32 %v3866, %v3898
        %v3907 = vmul.f32 %v3867, %v3899
        %v3908 = vmul.f32 %v3868, %v3900
        %v3909 = vmul.f32 %v3869, %v3901
        %v3910 = vmul.f32 %v3870, %v3902
        %v3911 = vmul.f32 %v3871, %v3903
        %v3912 = vld [vmem:[#allocation7] sm:$0xff]
        %v3913 = vld [vmem:[#allocation7 + $0x8] sm:$0xff]
        %v3914 = vld [vmem:[#allocation7 + $0x10] sm:$0xff]
        %v3915 = vld [vmem:[#allocation7 + $0x18] sm:$0xff]
        %v3916 = vld [vmem:[#allocation7 + $0x20] sm:$0xff]
        %v3917 = vld [vmem:[#allocation7 + $0x28] sm:$0xff]
        %v3918 = vld [vmem:[#allocation7 + $0x30] sm:$0xff]
        %v3919 = vld [vmem:[#allocation7 + $0x38] sm:$0xff]
        %v3920 = vld [vmem:[#allocation7 + $0x40] sm:$0xff]
        %v3921 = vld [vmem:[#allocation7 + $0x48] sm:$0xff]
        %v3922 = vld [vmem:[#allocation7 + $0x50] sm:$0xff]
        %v3923 = vld [vmem:[#allocation7 + $0x58] sm:$0xff]
        %v3924 = vld [vmem:[#allocation7 + $0x60] sm:$0xff]
        %v3925 = vld [vmem:[#allocation7 + $0x68] sm:$0xff]
        %v3926 = vld [vmem:[#allocation7 + $0x70] sm:$0xff]
        %v3927 = vld [vmem:[#allocation7 + $0x78] sm:$0xff]
        %v3928 = vld [vmem:[#allocation7 + $0x80] sm:$0xff]
        %v3929 = vld [vmem:[#allocation7 + $0x88] sm:$0xff]
        %v3930 = vld [vmem:[#allocation7 + $0x90] sm:$0xff]
        %v3931 = vld [vmem:[#allocation7 + $0x98] sm:$0xff]
        %v3932 = vld [vmem:[#allocation7 + $0xa0] sm:$0xff]
        %v3933 = vld [vmem:[#allocation7 + $0xa8] sm:$0xff]
        %v3934 = vld [vmem:[#allocation7 + $0xb0] sm:$0xff]
        %v3935 = vld [vmem:[#allocation7 + $0xb8] sm:$0xff]
        %v3936 = vld [vmem:[#allocation7 + $0xc0] sm:$0xff]
        %v3937 = vld [vmem:[#allocation7 + $0xc8] sm:$0xff]
        %v3938 = vld [vmem:[#allocation7 + $0xd0] sm:$0xff]
        %v3939 = vld [vmem:[#allocation7 + $0xd8] sm:$0xff]
        %v3940 = vld [vmem:[#allocation7 + $0xe0] sm:$0xff]
        %v3941 = vld [vmem:[#allocation7 + $0xe8] sm:$0xff]
        %v3942 = vld [vmem:[#allocation7 + $0xf0] sm:$0xff]
        %v3943 = vld [vmem:[#allocation7 + $0xf8] sm:$0xff]
        %v3944 = vld [vmem:[#allocation7 + $0x100] sm:$0xff]
        %v3945 = vld [vmem:[#allocation7 + $0x108] sm:$0xff]
        %v3946 = vld [vmem:[#allocation7 + $0x110] sm:$0xff]
        %v3947 = vld [vmem:[#allocation7 + $0x118] sm:$0xff]
        %v3948 = vld [vmem:[#allocation7 + $0x120] sm:$0xff]
        %v3949 = vld [vmem:[#allocation7 + $0x128] sm:$0xff]
        %v3950 = vld [vmem:[#allocation7 + $0x130] sm:$0xff]
        %v3951 = vld [vmem:[#allocation7 + $0x138] sm:$0xff]
        %v3952 = vld [vmem:[#allocation7 + $0x140] sm:$0xff]
        %v3953 = vld [vmem:[#allocation7 + $0x148] sm:$0xff]
        %v3954 = vld [vmem:[#allocation7 + $0x150] sm:$0xff]
        %v3955 = vld [vmem:[#allocation7 + $0x158] sm:$0xff]
        %v3956 = vld [vmem:[#allocation7 + $0x160] sm:$0xff]
        %v3957 = vld [vmem:[#allocation7 + $0x168] sm:$0xff]
        %v3958 = vld [vmem:[#allocation7 + $0x170] sm:$0xff]
        %v3959 = vld [vmem:[#allocation7 + $0x178] sm:$0xff]
        %v3960 = vld [vmem:[#allocation7 + $0x180] sm:$0xff]
        %v3961 = vld [vmem:[#allocation7 + $0x188] sm:$0xff]
        %v3962 = vld [vmem:[#allocation7 + $0x190] sm:$0xff]
        %v3963 = vld [vmem:[#allocation7 + $0x198] sm:$0xff]
        %v3964 = vld [vmem:[#allocation7 + $0x1a0] sm:$0xff]
        %v3965 = vld [vmem:[#allocation7 + $0x1a8] sm:$0xff]
        %v3966 = vld [vmem:[#allocation7 + $0x1b0] sm:$0xff]
        %v3967 = vld [vmem:[#allocation7 + $0x1b8] sm:$0xff]
        %v3968 = vld [vmem:[#allocation7 + $0x1c0] sm:$0xff]
        %v3969 = vld [vmem:[#allocation7 + $0x1c8] sm:$0xff]
        %v3970 = vld [vmem:[#allocation7 + $0x1d0] sm:$0xff]
        %v3971 = vld [vmem:[#allocation7 + $0x1d8] sm:$0xff]
        %v3972 = vld [vmem:[#allocation7 + $0x1e0] sm:$0xff]
        %v3973 = vld [vmem:[#allocation7 + $0x1e8] sm:$0xff]
        %v3974 = vld [vmem:[#allocation7 + $0x1f0] sm:$0xff]
        %v3975 = vld [vmem:[#allocation7 + $0x1f8] sm:$0xff]
        %v3976 = vld [vmem:[#allocation7 + $0x200] sm:$0xff]
        %v3977 = vld [vmem:[#allocation7 + $0x208] sm:$0xff]
        %v3978 = vld [vmem:[#allocation7 + $0x210] sm:$0xff]
        %v3979 = vld [vmem:[#allocation7 + $0x218] sm:$0xff]
        %v3980 = vld [vmem:[#allocation7 + $0x220] sm:$0xff]
        %v3981 = vld [vmem:[#allocation7 + $0x228] sm:$0xff]
        %v3982 = vld [vmem:[#allocation7 + $0x230] sm:$0xff]
        %v3983 = vld [vmem:[#allocation7 + $0x238] sm:$0xff]
        %v3984 = vld [vmem:[#allocation7 + $0x240] sm:$0xff]
        %v3985 = vld [vmem:[#allocation7 + $0x248] sm:$0xff]
        %v3986 = vld [vmem:[#allocation7 + $0x250] sm:$0xff]
        %v3987 = vld [vmem:[#allocation7 + $0x258] sm:$0xff]
        %v3988 = vld [vmem:[#allocation7 + $0x260] sm:$0xff]
        %v3989 = vld [vmem:[#allocation7 + $0x268] sm:$0xff]
        %v3990 = vld [vmem:[#allocation7 + $0x270] sm:$0xff]
        %v3991 = vld [vmem:[#allocation7 + $0x278] sm:$0xff]
        %v3992 = vld [vmem:[#allocation7 + $0x280] sm:$0xff]
        %v3993 = vld [vmem:[#allocation7 + $0x288] sm:$0xff]
        %v3994 = vld [vmem:[#allocation7 + $0x290] sm:$0xff]
        %v3995 = vld [vmem:[#allocation7 + $0x298] sm:$0xff]
        %v3996 = vld [vmem:[#allocation7 + $0x2a0] sm:$0xff]
        %v3997 = vld [vmem:[#allocation7 + $0x2a8] sm:$0xff]
        %v3998 = vld [vmem:[#allocation7 + $0x2b0] sm:$0xff]
        %v3999 = vld [vmem:[#allocation7 + $0x2b8] sm:$0xff]
        %v4000 = vld [vmem:[#allocation7 + $0x2c0] sm:$0xff]
        %v4001 = vld [vmem:[#allocation7 + $0x2c8] sm:$0xff]
        %v4002 = vld [vmem:[#allocation7 + $0x2d0] sm:$0xff]
        %v4003 = vld [vmem:[#allocation7 + $0x2d8] sm:$0xff]
        %v4004 = vld [vmem:[#allocation7 + $0x2e0] sm:$0xff]
        %v4005 = vld [vmem:[#allocation7 + $0x2e8] sm:$0xff]
        %v4006 = vld [vmem:[#allocation7 + $0x2f0] sm:$0xff]
        %v4007 = vld [vmem:[#allocation7 + $0x2f8] sm:$0xff]
        %v4008 = vld [vmem:[#allocation7 + $0x300] sm:$0xff]
        %v4009 = vld [vmem:[#allocation7 + $0x308] sm:$0xff]
        %v4010 = vld [vmem:[#allocation7 + $0x310] sm:$0xff]
        %v4011 = vld [vmem:[#allocation7 + $0x318] sm:$0xff]
        %v4012 = vld [vmem:[#allocation7 + $0x320] sm:$0xff]
        %v4013 = vld [vmem:[#allocation7 + $0x328] sm:$0xff]
        %v4014 = vld [vmem:[#allocation7 + $0x330] sm:$0xff]
        %v4015 = vld [vmem:[#allocation7 + $0x338] sm:$0xff]
        %v4016 = vld [vmem:[#allocation7 + $0x340] sm:$0xff]
        %v4017 = vld [vmem:[#allocation7 + $0x348] sm:$0xff]
        %v4018 = vld [vmem:[#allocation7 + $0x350] sm:$0xff]
        %v4019 = vld [vmem:[#allocation7 + $0x358] sm:$0xff]
        %v4020 = vld [vmem:[#allocation7 + $0x360] sm:$0xff]
        %v4021 = vld [vmem:[#allocation7 + $0x368] sm:$0xff]
        %v4022 = vld [vmem:[#allocation7 + $0x370] sm:$0xff]
        %v4023 = vld [vmem:[#allocation7 + $0x378] sm:$0xff]
        %v4024 = vld [vmem:[#allocation7 + $0x380] sm:$0xff]
        %v4025 = vld [vmem:[#allocation7 + $0x388] sm:$0xff]
        %v4026 = vld [vmem:[#allocation7 + $0x390] sm:$0xff]
        %v4027 = vld [vmem:[#allocation7 + $0x398] sm:$0xff]
        %v4028 = vld [vmem:[#allocation7 + $0x3a0] sm:$0xff]
        %v4029 = vld [vmem:[#allocation7 + $0x3a8] sm:$0xff]
        %v4030 = vld [vmem:[#allocation7 + $0x3b0] sm:$0xff]
        %v4031 = vld [vmem:[#allocation7 + $0x3b8] sm:$0xff]
        %v4032 = vld [vmem:[#allocation7 + $0x3c0] sm:$0xff]
        %v4033 = vld [vmem:[#allocation7 + $0x3c8] sm:$0xff]
        %v4034 = vld [vmem:[#allocation7 + $0x3d0] sm:$0xff]
        %v4035 = vld [vmem:[#allocation7 + $0x3d8] sm:$0xff]
        %v4036 = vld [vmem:[#allocation7 + $0x3e0] sm:$0xff]
        %v4037 = vld [vmem:[#allocation7 + $0x3e8] sm:$0xff]
        %v4038 = vld [vmem:[#allocation7 + $0x3f0] sm:$0xff]
        %v4039 = vld [vmem:[#allocation7 + $0x3f8] sm:$0xff]
        %v4040 = vld [vmem:[#allocation7 + $0x400] sm:$0xff]
        %v4041 = vld [vmem:[#allocation7 + $0x408] sm:$0xff]
        %v4042 = vld [vmem:[#allocation7 + $0x410] sm:$0xff]
        %v4043 = vld [vmem:[#allocation7 + $0x418] sm:$0xff]
        %v4044 = vld [vmem:[#allocation7 + $0x420] sm:$0xff]
        %v4045 = vld [vmem:[#allocation7 + $0x428] sm:$0xff]
        %v4046 = vld [vmem:[#allocation7 + $0x430] sm:$0xff]
        %v4047 = vld [vmem:[#allocation7 + $0x438] sm:$0xff]
        %v4048 = vld [vmem:[#allocation7 + $0x440] sm:$0xff]
        %v4049 = vld [vmem:[#allocation7 + $0x448] sm:$0xff]
        %v4050 = vld [vmem:[#allocation7 + $0x450] sm:$0xff]
        %v4051 = vld [vmem:[#allocation7 + $0x458] sm:$0xff]
        %v4052 = vld [vmem:[#allocation7 + $0x460] sm:$0xff]
        %v4053 = vld [vmem:[#allocation7 + $0x468] sm:$0xff]
        %v4054 = vld [vmem:[#allocation7 + $0x470] sm:$0xff]
        %v4055 = vld [vmem:[#allocation7 + $0x478] sm:$0xff]
        %v4056 = vld [vmem:[#allocation7 + $0x480] sm:$0xff]
        %v4057 = vld [vmem:[#allocation7 + $0x488] sm:$0xff]
        %v4058 = vld [vmem:[#allocation7 + $0x490] sm:$0xff]
        %v4059 = vld [vmem:[#allocation7 + $0x498] sm:$0xff]
        %v4060 = vld [vmem:[#allocation7 + $0x4a0] sm:$0xff]
        %v4061 = vld [vmem:[#allocation7 + $0x4a8] sm:$0xff]
        %v4062 = vld [vmem:[#allocation7 + $0x4b0] sm:$0xff]
        %v4063 = vld [vmem:[#allocation7 + $0x4b8] sm:$0xff]
        %v4064 = vld [vmem:[#allocation7 + $0x4c0] sm:$0xff]
        %v4065 = vld [vmem:[#allocation7 + $0x4c8] sm:$0xff]
        %v4066 = vld [vmem:[#allocation7 + $0x4d0] sm:$0xff]
        %v4067 = vld [vmem:[#allocation7 + $0x4d8] sm:$0xff]
        %v4068 = vld [vmem:[#allocation7 + $0x4e0] sm:$0xff]
        %v4069 = vld [vmem:[#allocation7 + $0x4e8] sm:$0xff]
        %v4070 = vld [vmem:[#allocation7 + $0x4f0] sm:$0xff]
        %v4071 = vld [vmem:[#allocation7 + $0x4f8] sm:$0xff]
        %v4072 = vld [vmem:[#allocation7 + $0x500] sm:$0xff]
        %v4073 = vld [vmem:[#allocation7 + $0x508] sm:$0xff]
        %v4074 = vld [vmem:[#allocation7 + $0x510] sm:$0xff]
        %v4075 = vld [vmem:[#allocation7 + $0x518] sm:$0xff]
        %v4076 = vld [vmem:[#allocation7 + $0x520] sm:$0xff]
        %v4077 = vld [vmem:[#allocation7 + $0x528] sm:$0xff]
        %v4078 = vld [vmem:[#allocation7 + $0x530] sm:$0xff]
        %v4079 = vld [vmem:[#allocation7 + $0x538] sm:$0xff]
        %v4080 = vld [vmem:[#allocation7 + $0x540] sm:$0xff]
        %v4081 = vld [vmem:[#allocation7 + $0x548] sm:$0xff]
        %v4082 = vld [vmem:[#allocation7 + $0x550] sm:$0xff]
        %v4083 = vld [vmem:[#allocation7 + $0x558] sm:$0xff]
        %v4084 = vld [vmem:[#allocation7 + $0x560] sm:$0xff]
        %v4085 = vld [vmem:[#allocation7 + $0x568] sm:$0xff]
        %v4086 = vld [vmem:[#allocation7 + $0x570] sm:$0xff]
        %v4087 = vld [vmem:[#allocation7 + $0x578] sm:$0xff]
        %v4088 = vld [vmem:[#allocation7 + $0x580] sm:$0xff]
        %v4089 = vld [vmem:[#allocation7 + $0x588] sm:$0xff]
        %v4090 = vld [vmem:[#allocation7 + $0x590] sm:$0xff]
        %v4091 = vld [vmem:[#allocation7 + $0x598] sm:$0xff]
        %v4092 = vld [vmem:[#allocation7 + $0x5a0] sm:$0xff]
        %v4093 = vld [vmem:[#allocation7 + $0x5a8] sm:$0xff]
        %v4094 = vld [vmem:[#allocation7 + $0x5b0] sm:$0xff]
        %v4095 = vld [vmem:[#allocation7 + $0x5b8] sm:$0xff]
        %v4096 = vld [vmem:[#allocation7 + $0x5c0] sm:$0xff]
        %v4097 = vld [vmem:[#allocation7 + $0x5c8] sm:$0xff]
        %v4098 = vld [vmem:[#allocation7 + $0x5d0] sm:$0xff]
        %v4099 = vld [vmem:[#allocation7 + $0x5d8] sm:$0xff]
        %v4100 = vld [vmem:[#allocation7 + $0x5e0] sm:$0xff]
        %v4101 = vld [vmem:[#allocation7 + $0x5e8] sm:$0xff]
        %v4102 = vld [vmem:[#allocation7 + $0x5f0] sm:$0xff]
        %v4103 = vld [vmem:[#allocation7 + $0x5f8] sm:$0xff]
        %v4104 = vld [vmem:[#allocation7 + $0x600] sm:$0xff]
        %v4105 = vld [vmem:[#allocation7 + $0x608] sm:$0xff]
        %v4106 = vld [vmem:[#allocation7 + $0x610] sm:$0xff]
        %v4107 = vld [vmem:[#allocation7 + $0x618] sm:$0xff]
        %v4108 = vld [vmem:[#allocation7 + $0x620] sm:$0xff]
        %v4109 = vld [vmem:[#allocation7 + $0x628] sm:$0xff]
        %v4110 = vld [vmem:[#allocation7 + $0x630] sm:$0xff]
        %v4111 = vld [vmem:[#allocation7 + $0x638] sm:$0xff]
        %v4112 = vld [vmem:[#allocation7 + $0x640] sm:$0xff]
        %v4113 = vld [vmem:[#allocation7 + $0x648] sm:$0xff]
        %v4114 = vld [vmem:[#allocation7 + $0x650] sm:$0xff]
        %v4115 = vld [vmem:[#allocation7 + $0x658] sm:$0xff]
        %v4116 = vld [vmem:[#allocation7 + $0x660] sm:$0xff]
        %v4117 = vld [vmem:[#allocation7 + $0x668] sm:$0xff]
        %v4118 = vld [vmem:[#allocation7 + $0x670] sm:$0xff]
        %v4119 = vld [vmem:[#allocation7 + $0x678] sm:$0xff]
        %v4120 = vld [vmem:[#allocation7 + $0x680] sm:$0xff]
        %v4121 = vld [vmem:[#allocation7 + $0x688] sm:$0xff]
        %v4122 = vld [vmem:[#allocation7 + $0x690] sm:$0xff]
        %v4123 = vld [vmem:[#allocation7 + $0x698] sm:$0xff]
        %v4124 = vld [vmem:[#allocation7 + $0x6a0] sm:$0xff]
        %v4125 = vld [vmem:[#allocation7 + $0x6a8] sm:$0xff]
        %v4126 = vld [vmem:[#allocation7 + $0x6b0] sm:$0xff]
        %v4127 = vld [vmem:[#allocation7 + $0x6b8] sm:$0xff]
        %v4128 = vld [vmem:[#allocation7 + $0x6c0] sm:$0xff]
        %v4129 = vld [vmem:[#allocation7 + $0x6c8] sm:$0xff]
        %v4130 = vld [vmem:[#allocation7 + $0x6d0] sm:$0xff]
        %v4131 = vld [vmem:[#allocation7 + $0x6d8] sm:$0xff]
        %v4132 = vld [vmem:[#allocation7 + $0x6e0] sm:$0xff]
        %v4133 = vld [vmem:[#allocation7 + $0x6e8] sm:$0xff]
        %v4134 = vld [vmem:[#allocation7 + $0x6f0] sm:$0xff]
        %v4135 = vld [vmem:[#allocation7 + $0x6f8] sm:$0xff]
        %v4136 = vld [vmem:[#allocation7 + $0x700] sm:$0xff]
        %v4137 = vld [vmem:[#allocation7 + $0x708] sm:$0xff]
        %v4138 = vld [vmem:[#allocation7 + $0x710] sm:$0xff]
        %v4139 = vld [vmem:[#allocation7 + $0x718] sm:$0xff]
        %v4140 = vld [vmem:[#allocation7 + $0x720] sm:$0xff]
        %v4141 = vld [vmem:[#allocation7 + $0x728] sm:$0xff]
        %v4142 = vld [vmem:[#allocation7 + $0x730] sm:$0xff]
        %v4143 = vld [vmem:[#allocation7 + $0x738] sm:$0xff]
        %v4144 = vld [vmem:[#allocation7 + $0x740] sm:$0xff]
        %v4145 = vld [vmem:[#allocation7 + $0x748] sm:$0xff]
        %v4146 = vld [vmem:[#allocation7 + $0x750] sm:$0xff]
        %v4147 = vld [vmem:[#allocation7 + $0x758] sm:$0xff]
        %v4148 = vld [vmem:[#allocation7 + $0x760] sm:$0xff]
        %v4149 = vld [vmem:[#allocation7 + $0x768] sm:$0xff]
        %v4150 = vld [vmem:[#allocation7 + $0x770] sm:$0xff]
        %v4151 = vld [vmem:[#allocation7 + $0x778] sm:$0xff]
        %v4152 = vld [vmem:[#allocation7 + $0x780] sm:$0xff]
        %v4153 = vld [vmem:[#allocation7 + $0x788] sm:$0xff]
        %v4154 = vld [vmem:[#allocation7 + $0x790] sm:$0xff]
        %v4155 = vld [vmem:[#allocation7 + $0x798] sm:$0xff]
        %v4156 = vld [vmem:[#allocation7 + $0x7a0] sm:$0xff]
        %v4157 = vld [vmem:[#allocation7 + $0x7a8] sm:$0xff]
        %v4158 = vld [vmem:[#allocation7 + $0x7b0] sm:$0xff]
        %v4159 = vld [vmem:[#allocation7 + $0x7b8] sm:$0xff]
        %v4160 = vld [vmem:[#allocation7 + $0x7c0] sm:$0xff]
        %v4161 = vld [vmem:[#allocation7 + $0x7c8] sm:$0xff]
        %v4162 = vld [vmem:[#allocation7 + $0x7d0] sm:$0xff]
        %v4163 = vld [vmem:[#allocation7 + $0x7d8] sm:$0xff]
        %v4164 = vld [vmem:[#allocation7 + $0x7e0] sm:$0xff]
        %v4165 = vld [vmem:[#allocation7 + $0x7e8] sm:$0xff]
        %v4166 = vld [vmem:[#allocation7 + $0x7f0] sm:$0xff]
        %v4167 = vld [vmem:[#allocation7 + $0x7f8] sm:$0xff]
        %v4168 = vld [vmem:[#allocation7 + $0x800] sm:$0xff]
        %v4169 = vld [vmem:[#allocation7 + $0x808] sm:$0xff]
        %v4170 = vld [vmem:[#allocation7 + $0x810] sm:$0xff]
        %v4171 = vld [vmem:[#allocation7 + $0x818] sm:$0xff]
        %v4172 = vld [vmem:[#allocation7 + $0x820] sm:$0xff]
        %v4173 = vld [vmem:[#allocation7 + $0x828] sm:$0xff]
        %v4174 = vld [vmem:[#allocation7 + $0x830] sm:$0xff]
        %v4175 = vld [vmem:[#allocation7 + $0x838] sm:$0xff]
        %v4176 = vld [vmem:[#allocation7 + $0x840] sm:$0xff]
        %v4177 = vld [vmem:[#allocation7 + $0x848] sm:$0xff]
        %v4178 = vld [vmem:[#allocation7 + $0x850] sm:$0xff]
        %v4179 = vld [vmem:[#allocation7 + $0x858] sm:$0xff]
        %v4180 = vld [vmem:[#allocation7 + $0x860] sm:$0xff]
        %v4181 = vld [vmem:[#allocation7 + $0x868] sm:$0xff]
        %v4182 = vld [vmem:[#allocation7 + $0x870] sm:$0xff]
        %v4183 = vld [vmem:[#allocation7 + $0x878] sm:$0xff]
        %v4184 = vld [vmem:[#allocation7 + $0x880] sm:$0xff]
        %v4185 = vld [vmem:[#allocation7 + $0x888] sm:$0xff]
        %v4186 = vld [vmem:[#allocation7 + $0x890] sm:$0xff]
        %v4187 = vld [vmem:[#allocation7 + $0x898] sm:$0xff]
        %v4188 = vld [vmem:[#allocation7 + $0x8a0] sm:$0xff]
        %v4189 = vld [vmem:[#allocation7 + $0x8a8] sm:$0xff]
        %v4190 = vld [vmem:[#allocation7 + $0x8b0] sm:$0xff]
        %v4191 = vld [vmem:[#allocation7 + $0x8b8] sm:$0xff]
        %v4192 = vld [vmem:[#allocation7 + $0x8c0] sm:$0xff]
        %v4193 = vld [vmem:[#allocation7 + $0x8c8] sm:$0xff]
        %v4194 = vld [vmem:[#allocation7 + $0x8d0] sm:$0xff]
        %v4195 = vld [vmem:[#allocation7 + $0x8d8] sm:$0xff]
        %v4196 = vld [vmem:[#allocation7 + $0x8e0] sm:$0xff]
        %v4197 = vld [vmem:[#allocation7 + $0x8e8] sm:$0xff]
        %v4198 = vld [vmem:[#allocation7 + $0x8f0] sm:$0xff]
        %v4199 = vld [vmem:[#allocation7 + $0x8f8] sm:$0xff]
        %v4200 = vld [vmem:[#allocation7 + $0x900] sm:$0xff]
        %v4201 = vld [vmem:[#allocation7 + $0x908] sm:$0xff]
        %v4202 = vld [vmem:[#allocation7 + $0x910] sm:$0xff]
        %v4203 = vld [vmem:[#allocation7 + $0x918] sm:$0xff]
        %v4204 = vld [vmem:[#allocation7 + $0x920] sm:$0xff]
        %v4205 = vld [vmem:[#allocation7 + $0x928] sm:$0xff]
        %v4206 = vld [vmem:[#allocation7 + $0x930] sm:$0xff]
        %v4207 = vld [vmem:[#allocation7 + $0x938] sm:$0xff]
        %v4208 = vld [vmem:[#allocation7 + $0x940] sm:$0xff]
        %v4209 = vld [vmem:[#allocation7 + $0x948] sm:$0xff]
        %v4210 = vld [vmem:[#allocation7 + $0x950] sm:$0xff]
        %v4211 = vld [vmem:[#allocation7 + $0x958] sm:$0xff]
        %v4212 = vld [vmem:[#allocation7 + $0x960] sm:$0xff]
        %v4213 = vld [vmem:[#allocation7 + $0x968] sm:$0xff]
        %v4214 = vld [vmem:[#allocation7 + $0x970] sm:$0xff]
        %v4215 = vld [vmem:[#allocation7 + $0x978] sm:$0xff]
        %v4216 = vld [vmem:[#allocation7 + $0x980] sm:$0xff]
        %v4217 = vld [vmem:[#allocation7 + $0x988] sm:$0xff]
        %v4218 = vld [vmem:[#allocation7 + $0x990] sm:$0xff]
        %v4219 = vld [vmem:[#allocation7 + $0x998] sm:$0xff]
        %v4220 = vld [vmem:[#allocation7 + $0x9a0] sm:$0xff]
        %v4221 = vld [vmem:[#allocation7 + $0x9a8] sm:$0xff]
        %v4222 = vld [vmem:[#allocation7 + $0x9b0] sm:$0xff]
        %v4223 = vld [vmem:[#allocation7 + $0x9b8] sm:$0xff]
        %v4224 = vld [vmem:[#allocation7 + $0x9c0] sm:$0xff]
        %v4225 = vld [vmem:[#allocation7 + $0x9c8] sm:$0xff]
        %v4226 = vld [vmem:[#allocation7 + $0x9d0] sm:$0xff]
        %v4227 = vld [vmem:[#allocation7 + $0x9d8] sm:$0xff]
        %v4228 = vld [vmem:[#allocation7 + $0x9e0] sm:$0xff]
        %v4229 = vld [vmem:[#allocation7 + $0x9e8] sm:$0xff]
        %v4230 = vld [vmem:[#allocation7 + $0x9f0] sm:$0xff]
        %v4231 = vld [vmem:[#allocation7 + $0x9f8] sm:$0xff]
        %v4232 = vld [vmem:[#allocation7 + $0xa00] sm:$0xff]
        %v4233 = vld [vmem:[#allocation7 + $0xa08] sm:$0xff]
        %v4234 = vld [vmem:[#allocation7 + $0xa10] sm:$0xff]
        %v4235 = vld [vmem:[#allocation7 + $0xa18] sm:$0xff]
        %v4236 = vld [vmem:[#allocation7 + $0xa20] sm:$0xff]
        %v4237 = vld [vmem:[#allocation7 + $0xa28] sm:$0xff]
        %v4238 = vld [vmem:[#allocation7 + $0xa30] sm:$0xff]
        %v4239 = vld [vmem:[#allocation7 + $0xa38] sm:$0xff]
        %v4240 = vld [vmem:[#allocation7 + $0xa40] sm:$0xff]
        %v4241 = vld [vmem:[#allocation7 + $0xa48] sm:$0xff]
        %v4242 = vld [vmem:[#allocation7 + $0xa50] sm:$0xff]
        %v4243 = vld [vmem:[#allocation7 + $0xa58] sm:$0xff]
        %v4244 = vld [vmem:[#allocation7 + $0xa60] sm:$0xff]
        %v4245 = vld [vmem:[#allocation7 + $0xa68] sm:$0xff]
        %v4246 = vld [vmem:[#allocation7 + $0xa70] sm:$0xff]
        %v4247 = vld [vmem:[#allocation7 + $0xa78] sm:$0xff]
        %v4248 = vld [vmem:[#allocation7 + $0xa80] sm:$0xff]
        %v4249 = vld [vmem:[#allocation7 + $0xa88] sm:$0xff]
        %v4250 = vld [vmem:[#allocation7 + $0xa90] sm:$0xff]
        %v4251 = vld [vmem:[#allocation7 + $0xa98] sm:$0xff]
        %v4252 = vld [vmem:[#allocation7 + $0xaa0] sm:$0xff]
        %v4253 = vld [vmem:[#allocation7 + $0xaa8] sm:$0xff]
        %v4254 = vld [vmem:[#allocation7 + $0xab0] sm:$0xff]
        %v4255 = vld [vmem:[#allocation7 + $0xab8] sm:$0xff]
        %v4256 = vld [vmem:[#allocation7 + $0xac0] sm:$0xff]
        %v4257 = vld [vmem:[#allocation7 + $0xac8] sm:$0xff]
        %v4258 = vld [vmem:[#allocation7 + $0xad0] sm:$0xff]
        %v4259 = vld [vmem:[#allocation7 + $0xad8] sm:$0xff]
        %v4260 = vld [vmem:[#allocation7 + $0xae0] sm:$0xff]
        %v4261 = vld [vmem:[#allocation7 + $0xae8] sm:$0xff]
        %v4262 = vld [vmem:[#allocation7 + $0xaf0] sm:$0xff]
        %v4263 = vld [vmem:[#allocation7 + $0xaf8] sm:$0xff]
        %v4264 = vld [vmem:[#allocation7 + $0xb00] sm:$0xff]
        %v4265 = vld [vmem:[#allocation7 + $0xb08] sm:$0xff]
        %v4266 = vld [vmem:[#allocation7 + $0xb10] sm:$0xff]
        %v4267 = vld [vmem:[#allocation7 + $0xb18] sm:$0xff]
        %v4268 = vld [vmem:[#allocation7 + $0xb20] sm:$0xff]
        %v4269 = vld [vmem:[#allocation7 + $0xb28] sm:$0xff]
        %v4270 = vld [vmem:[#allocation7 + $0xb30] sm:$0xff]
        %v4271 = vld [vmem:[#allocation7 + $0xb38] sm:$0xff]
        %v4272 = vld [vmem:[#allocation7 + $0xb40] sm:$0xff]
        %v4273 = vld [vmem:[#allocation7 + $0xb48] sm:$0xff]
        %v4274 = vld [vmem:[#allocation7 + $0xb50] sm:$0xff]
        %v4275 = vld [vmem:[#allocation7 + $0xb58] sm:$0xff]
        %v4276 = vld [vmem:[#allocation7 + $0xb60] sm:$0xff]
        %v4277 = vld [vmem:[#allocation7 + $0xb68] sm:$0xff]
        %v4278 = vld [vmem:[#allocation7 + $0xb70] sm:$0xff]
        %v4279 = vld [vmem:[#allocation7 + $0xb78] sm:$0xff]
        %v4280 = vld [vmem:[#allocation7 + $0xb80] sm:$0xff]
        %v4281 = vld [vmem:[#allocation7 + $0xb88] sm:$0xff]
        %v4282 = vld [vmem:[#allocation7 + $0xb90] sm:$0xff]
        %v4283 = vld [vmem:[#allocation7 + $0xb98] sm:$0xff]
        %v4284 = vld [vmem:[#allocation7 + $0xba0] sm:$0xff]
        %v4285 = vld [vmem:[#allocation7 + $0xba8] sm:$0xff]
        %v4286 = vld [vmem:[#allocation7 + $0xbb0] sm:$0xff]
        %v4287 = vld [vmem:[#allocation7 + $0xbb8] sm:$0xff]
        %v4288 = vld [vmem:[#allocation7 + $0xbc0] sm:$0xff]
        %v4289 = vld [vmem:[#allocation7 + $0xbc8] sm:$0xff]
        %v4290 = vld [vmem:[#allocation7 + $0xbd0] sm:$0xff]
        %v4291 = vld [vmem:[#allocation7 + $0xbd8] sm:$0xff]
        %v4292 = vld [vmem:[#allocation7 + $0xbe0] sm:$0xff]
        %v4293 = vld [vmem:[#allocation7 + $0xbe8] sm:$0xff]
        %v4294 = vld [vmem:[#allocation7 + $0xbf0] sm:$0xff]
        %v4295 = vld [vmem:[#allocation7 + $0xbf8] sm:$0xff]
        %v4296 = vld [vmem:[#allocation7 + $0xc00] sm:$0xff]
        %v4297 = vld [vmem:[#allocation7 + $0xc08] sm:$0xff]
        %v4298 = vld [vmem:[#allocation7 + $0xc10] sm:$0xff]
        %v4299 = vld [vmem:[#allocation7 + $0xc18] sm:$0xff]
        %v4300 = vld [vmem:[#allocation7 + $0xc20] sm:$0xff]
        %v4301 = vld [vmem:[#allocation7 + $0xc28] sm:$0xff]
        %v4302 = vld [vmem:[#allocation7 + $0xc30] sm:$0xff]
        %v4303 = vld [vmem:[#allocation7 + $0xc38] sm:$0xff]
        %v4304 = vld [vmem:[#allocation7 + $0xc40] sm:$0xff]
        %v4305 = vld [vmem:[#allocation7 + $0xc48] sm:$0xff]
        %v4306 = vld [vmem:[#allocation7 + $0xc50] sm:$0xff]
        %v4307 = vld [vmem:[#allocation7 + $0xc58] sm:$0xff]
        %v4308 = vld [vmem:[#allocation7 + $0xc60] sm:$0xff]
        %v4309 = vld [vmem:[#allocation7 + $0xc68] sm:$0xff]
        %v4310 = vld [vmem:[#allocation7 + $0xc70] sm:$0xff]
        %v4311 = vld [vmem:[#allocation7 + $0xc78] sm:$0xff]
        %v4312 = vld [vmem:[#allocation7 + $0xc80] sm:$0xff]
        %v4313 = vld [vmem:[#allocation7 + $0xc88] sm:$0xff]
        %v4314 = vld [vmem:[#allocation7 + $0xc90] sm:$0xff]
        %v4315 = vld [vmem:[#allocation7 + $0xc98] sm:$0xff]
        %v4316 = vld [vmem:[#allocation7 + $0xca0] sm:$0xff]
        %v4317 = vld [vmem:[#allocation7 + $0xca8] sm:$0xff]
        %v4318 = vld [vmem:[#allocation7 + $0xcb0] sm:$0xff]
        %v4319 = vld [vmem:[#allocation7 + $0xcb8] sm:$0xff]
        %v4320 = vld [vmem:[#allocation7 + $0xcc0] sm:$0xff]
        %v4321 = vld [vmem:[#allocation7 + $0xcc8] sm:$0xff]
        %v4322 = vld [vmem:[#allocation7 + $0xcd0] sm:$0xff]
        %v4323 = vld [vmem:[#allocation7 + $0xcd8] sm:$0xff]
        %v4324 = vld [vmem:[#allocation7 + $0xce0] sm:$0xff]
        %v4325 = vld [vmem:[#allocation7 + $0xce8] sm:$0xff]
        %v4326 = vld [vmem:[#allocation7 + $0xcf0] sm:$0xff]
        %v4327 = vld [vmem:[#allocation7 + $0xcf8] sm:$0xff]
        %v4328 = vld [vmem:[#allocation7 + $0xd00] sm:$0xff]
        %v4329 = vld [vmem:[#allocation7 + $0xd08] sm:$0xff]
        %v4330 = vld [vmem:[#allocation7 + $0xd10] sm:$0xff]
        %v4331 = vld [vmem:[#allocation7 + $0xd18] sm:$0xff]
        %v4332 = vld [vmem:[#allocation7 + $0xd20] sm:$0xff]
        %v4333 = vld [vmem:[#allocation7 + $0xd28] sm:$0xff]
        %v4334 = vld [vmem:[#allocation7 + $0xd30] sm:$0xff]
        %v4335 = vld [vmem:[#allocation7 + $0xd38] sm:$0xff]
        %v4336 = vld [vmem:[#allocation7 + $0xd40] sm:$0xff]
        %v4337 = vld [vmem:[#allocation7 + $0xd48] sm:$0xff]
        %v4338 = vld [vmem:[#allocation7 + $0xd50] sm:$0xff]
        %v4339 = vld [vmem:[#allocation7 + $0xd58] sm:$0xff]
        %v4340 = vld [vmem:[#allocation7 + $0xd60] sm:$0xff]
        %v4341 = vld [vmem:[#allocation7 + $0xd68] sm:$0xff]
        %v4342 = vld [vmem:[#allocation7 + $0xd70] sm:$0xff]
        %v4343 = vld [vmem:[#allocation7 + $0xd78] sm:$0xff]
        %v4344 = vld [vmem:[#allocation7 + $0xd80] sm:$0xff]
        %v4345 = vld [vmem:[#allocation7 + $0xd88] sm:$0xff]
        %v4346 = vld [vmem:[#allocation7 + $0xd90] sm:$0xff]
        %v4347 = vld [vmem:[#allocation7 + $0xd98] sm:$0xff]
        %v4348 = vld [vmem:[#allocation7 + $0xda0] sm:$0xff]
        %v4349 = vld [vmem:[#allocation7 + $0xda8] sm:$0xff]
        %v4350 = vld [vmem:[#allocation7 + $0xdb0] sm:$0xff]
        %v4351 = vld [vmem:[#allocation7 + $0xdb8] sm:$0xff]
        %v4352 = vld [vmem:[#allocation7 + $0xdc0] sm:$0xff]
        %v4353 = vld [vmem:[#allocation7 + $0xdc8] sm:$0xff]
        %v4354 = vld [vmem:[#allocation7 + $0xdd0] sm:$0xff]
        %v4355 = vld [vmem:[#allocation7 + $0xdd8] sm:$0xff]
        %v4356 = vld [vmem:[#allocation7 + $0xde0] sm:$0xff]
        %v4357 = vld [vmem:[#allocation7 + $0xde8] sm:$0xff]
        %v4358 = vld [vmem:[#allocation7 + $0xdf0] sm:$0xff]
        %v4359 = vld [vmem:[#allocation7 + $0xdf8] sm:$0xff]
        %v4360 = vld [vmem:[#allocation7 + $0xe00] sm:$0xff]
        %v4361 = vld [vmem:[#allocation7 + $0xe08] sm:$0xff]
        %v4362 = vld [vmem:[#allocation7 + $0xe10] sm:$0xff]
        %v4363 = vld [vmem:[#allocation7 + $0xe18] sm:$0xff]
        %v4364 = vld [vmem:[#allocation7 + $0xe20] sm:$0xff]
        %v4365 = vld [vmem:[#allocation7 + $0xe28] sm:$0xff]
        %v4366 = vld [vmem:[#allocation7 + $0xe30] sm:$0xff]
        %v4367 = vld [vmem:[#allocation7 + $0xe38] sm:$0xff]
        %v4368 = vld [vmem:[#allocation7 + $0xe40] sm:$0xff]
        %v4369 = vld [vmem:[#allocation7 + $0xe48] sm:$0xff]
        %v4370 = vld [vmem:[#allocation7 + $0xe50] sm:$0xff]
        %v4371 = vld [vmem:[#allocation7 + $0xe58] sm:$0xff]
        %v4372 = vld [vmem:[#allocation7 + $0xe60] sm:$0xff]
        %v4373 = vld [vmem:[#allocation7 + $0xe68] sm:$0xff]
        %v4374 = vld [vmem:[#allocation7 + $0xe70] sm:$0xff]
        %v4375 = vld [vmem:[#allocation7 + $0xe78] sm:$0xff]
        %v4376 = vld [vmem:[#allocation7 + $0xe80] sm:$0xff]
        %v4377 = vld [vmem:[#allocation7 + $0xe88] sm:$0xff]
        %v4378 = vld [vmem:[#allocation7 + $0xe90] sm:$0xff]
        %v4379 = vld [vmem:[#allocation7 + $0xe98] sm:$0xff]
        %v4380 = vld [vmem:[#allocation7 + $0xea0] sm:$0xff]
        %v4381 = vld [vmem:[#allocation7 + $0xea8] sm:$0xff]
        %v4382 = vld [vmem:[#allocation7 + $0xeb0] sm:$0xff]
        %v4383 = vld [vmem:[#allocation7 + $0xeb8] sm:$0xff]
        %v4384 = vld [vmem:[#allocation7 + $0xec0] sm:$0xff]
        %v4385 = vld [vmem:[#allocation7 + $0xec8] sm:$0xff]
        %v4386 = vld [vmem:[#allocation7 + $0xed0] sm:$0xff]
        %v4387 = vld [vmem:[#allocation7 + $0xed8] sm:$0xff]
        %v4388 = vld [vmem:[#allocation7 + $0xee0] sm:$0xff]
        %v4389 = vld [vmem:[#allocation7 + $0xee8] sm:$0xff]
        %v4390 = vld [vmem:[#allocation7 + $0xef0] sm:$0xff]
        %v4391 = vld [vmem:[#allocation7 + $0xef8] sm:$0xff]
        %v4392 = vld [vmem:[#allocation7 + $0xf00] sm:$0xff]
        %v4393 = vld [vmem:[#allocation7 + $0xf08] sm:$0xff]
        %v4394 = vld [vmem:[#allocation7 + $0xf10] sm:$0xff]
        %v4395 = vld [vmem:[#allocation7 + $0xf18] sm:$0xff]
        %v4396 = vld [vmem:[#allocation7 + $0xf20] sm:$0xff]
        %v4397 = vld [vmem:[#allocation7 + $0xf28] sm:$0xff]
        %v4398 = vld [vmem:[#allocation7 + $0xf30] sm:$0xff]
        %v4399 = vld [vmem:[#allocation7 + $0xf38] sm:$0xff]
        %v4400 = vld [vmem:[#allocation7 + $0xf40] sm:$0xff]
        %v4401 = vld [vmem:[#allocation7 + $0xf48] sm:$0xff]
        %v4402 = vld [vmem:[#allocation7 + $0xf50] sm:$0xff]
        %v4403 = vld [vmem:[#allocation7 + $0xf58] sm:$0xff]
        %v4404 = vld [vmem:[#allocation7 + $0xf60] sm:$0xff]
        %v4405 = vld [vmem:[#allocation7 + $0xf68] sm:$0xff]
        %v4406 = vld [vmem:[#allocation7 + $0xf70] sm:$0xff]
        %v4407 = vld [vmem:[#allocation7 + $0xf78] sm:$0xff]
        %v4408 = vld [vmem:[#allocation7 + $0xf80] sm:$0xff]
        %v4409 = vld [vmem:[#allocation7 + $0xf88] sm:$0xff]
        %v4410 = vld [vmem:[#allocation7 + $0xf90] sm:$0xff]
        %v4411 = vld [vmem:[#allocation7 + $0xf98] sm:$0xff]
        %v4412 = vld [vmem:[#allocation7 + $0xfa0] sm:$0xff]
        %v4413 = vld [vmem:[#allocation7 + $0xfa8] sm:$0xff]
        %v4414 = vld [vmem:[#allocation7 + $0xfb0] sm:$0xff]
        %v4415 = vld [vmem:[#allocation7 + $0xfb8] sm:$0xff]
        %v4416 = vld [vmem:[#allocation7 + $0xfc0] sm:$0xff]
        %v4417 = vld [vmem:[#allocation7 + $0xfc8] sm:$0xff]
        %v4418 = vld [vmem:[#allocation7 + $0xfd0] sm:$0xff]
        %v4419 = vld [vmem:[#allocation7 + $0xfd8] sm:$0xff]
        %v4420 = vld [vmem:[#allocation7 + $0xfe0] sm:$0xff]
        %v4421 = vld [vmem:[#allocation7 + $0xfe8] sm:$0xff]
        %v4422 = vld [vmem:[#allocation7 + $0xff0] sm:$0xff]
        %v4423 = vld [vmem:[#allocation7 + $0xff8] sm:$0xff]
        %v4424 = vld [vmem:[#allocation7 + $0x1000] sm:$0xff]
        %v4425 = vld [vmem:[#allocation7 + $0x1008] sm:$0xff]
        %v4426 = vld [vmem:[#allocation7 + $0x1010] sm:$0xff]
        %v4427 = vld [vmem:[#allocation7 + $0x1018] sm:$0xff]
        %v4428 = vld [vmem:[#allocation7 + $0x1020] sm:$0xff]
        %v4429 = vld [vmem:[#allocation7 + $0x1028] sm:$0xff]
        %v4430 = vld [vmem:[#allocation7 + $0x1030] sm:$0xff]
        %v4431 = vld [vmem:[#allocation7 + $0x1038] sm:$0xff]
        %v4432 = vld [vmem:[#allocation7 + $0x1040] sm:$0xff]
        %v4433 = vld [vmem:[#allocation7 + $0x1048] sm:$0xff]
        %v4434 = vld [vmem:[#allocation7 + $0x1050] sm:$0xff]
        %v4435 = vld [vmem:[#allocation7 + $0x1058] sm:$0xff]
        %v4436 = vld [vmem:[#allocation7 + $0x1060] sm:$0xff]
        %v4437 = vld [vmem:[#allocation7 + $0x1068] sm:$0xff]
        %v4438 = vld [vmem:[#allocation7 + $0x1070] sm:$0xff]
        %v4439 = vld [vmem:[#allocation7 + $0x1078] sm:$0xff]
        %v4440 = vld [vmem:[#allocation7 + $0x1080] sm:$0xff]
        %v4441 = vld [vmem:[#allocation7 + $0x1088] sm:$0xff]
        %v4442 = vld [vmem:[#allocation7 + $0x1090] sm:$0xff]
        %v4443 = vld [vmem:[#allocation7 + $0x1098] sm:$0xff]
        %v4444 = vld [vmem:[#allocation7 + $0x10a0] sm:$0xff]
        %v4445 = vld [vmem:[#allocation7 + $0x10a8] sm:$0xff]
        %v4446 = vld [vmem:[#allocation7 + $0x10b0] sm:$0xff]
        %v4447 = vld [vmem:[#allocation7 + $0x10b8] sm:$0xff]
        %v4448 = vld [vmem:[#allocation7 + $0x10c0] sm:$0xff]
        %v4449 = vld [vmem:[#allocation7 + $0x10c8] sm:$0xff]
        %v4450 = vld [vmem:[#allocation7 + $0x10d0] sm:$0xff]
        %v4451 = vld [vmem:[#allocation7 + $0x10d8] sm:$0xff]
        %v4452 = vld [vmem:[#allocation7 + $0x10e0] sm:$0xff]
        %v4453 = vld [vmem:[#allocation7 + $0x10e8] sm:$0xff]
        %v4454 = vld [vmem:[#allocation7 + $0x10f0] sm:$0xff]
        %v4455 = vld [vmem:[#allocation7 + $0x10f8] sm:$0xff]
        %v4456 = vld [vmem:[#allocation7 + $0x1100] sm:$0xff]
        %v4457 = vld [vmem:[#allocation7 + $0x1108] sm:$0xff]
        %v4458 = vld [vmem:[#allocation7 + $0x1110] sm:$0xff]
        %v4459 = vld [vmem:[#allocation7 + $0x1118] sm:$0xff]
        %v4460 = vld [vmem:[#allocation7 + $0x1120] sm:$0xff]
        %v4461 = vld [vmem:[#allocation7 + $0x1128] sm:$0xff]
        %v4462 = vld [vmem:[#allocation7 + $0x1130] sm:$0xff]
        %v4463 = vld [vmem:[#allocation7 + $0x1138] sm:$0xff]
        %v4464 = vld [vmem:[#allocation7 + $0x1140] sm:$0xff]
        %v4465 = vld [vmem:[#allocation7 + $0x1148] sm:$0xff]
        %v4466 = vld [vmem:[#allocation7 + $0x1150] sm:$0xff]
        %v4467 = vld [vmem:[#allocation7 + $0x1158] sm:$0xff]
        %v4468 = vld [vmem:[#allocation7 + $0x1160] sm:$0xff]
        %v4469 = vld [vmem:[#allocation7 + $0x1168] sm:$0xff]
        %v4470 = vld [vmem:[#allocation7 + $0x1170] sm:$0xff]
        %v4471 = vld [vmem:[#allocation7 + $0x1178] sm:$0xff]
        %v4472 = vld [vmem:[#allocation7 + $0x1180] sm:$0xff]
        %v4473 = vld [vmem:[#allocation7 + $0x1188] sm:$0xff]
        %v4474 = vld [vmem:[#allocation7 + $0x1190] sm:$0xff]
        %v4475 = vld [vmem:[#allocation7 + $0x1198] sm:$0xff]
        %v4476 = vld [vmem:[#allocation7 + $0x11a0] sm:$0xff]
        %v4477 = vld [vmem:[#allocation7 + $0x11a8] sm:$0xff]
        %v4478 = vld [vmem:[#allocation7 + $0x11b0] sm:$0xff]
        %v4479 = vld [vmem:[#allocation7 + $0x11b8] sm:$0xff]
        %v4480 = vld [vmem:[#allocation7 + $0x11c0] sm:$0xff]
        %v4481 = vld [vmem:[#allocation7 + $0x11c8] sm:$0xff]
        %v4482 = vld [vmem:[#allocation7 + $0x11d0] sm:$0xff]
        %v4483 = vld [vmem:[#allocation7 + $0x11d8] sm:$0xff]
        %v4484 = vld [vmem:[#allocation7 + $0x11e0] sm:$0xff]
        %v4485 = vld [vmem:[#allocation7 + $0x11e8] sm:$0xff]
        %v4486 = vld [vmem:[#allocation7 + $0x11f0] sm:$0xff]
        %v4487 = vld [vmem:[#allocation7 + $0x11f8] sm:$0xff]
        %v4488 = vld [vmem:[#allocation7 + $0x1200] sm:$0xff]
        %v4489 = vld [vmem:[#allocation7 + $0x1208] sm:$0xff]
        %v4490 = vld [vmem:[#allocation7 + $0x1210] sm:$0xff]
        %v4491 = vld [vmem:[#allocation7 + $0x1218] sm:$0xff]
        %v4492 = vld [vmem:[#allocation7 + $0x1220] sm:$0xff]
        %v4493 = vld [vmem:[#allocation7 + $0x1228] sm:$0xff]
        %v4494 = vld [vmem:[#allocation7 + $0x1230] sm:$0xff]
        %v4495 = vld [vmem:[#allocation7 + $0x1238] sm:$0xff]
        %v4496 = vld [vmem:[#allocation7 + $0x1240] sm:$0xff]
        %v4497 = vld [vmem:[#allocation7 + $0x1248] sm:$0xff]
        %v4498 = vld [vmem:[#allocation7 + $0x1250] sm:$0xff]
        %v4499 = vld [vmem:[#allocation7 + $0x1258] sm:$0xff]
        %v4500 = vld [vmem:[#allocation7 + $0x1260] sm:$0xff]
        %v4501 = vld [vmem:[#allocation7 + $0x1268] sm:$0xff]
        %v4502 = vld [vmem:[#allocation7 + $0x1270] sm:$0xff]
        %v4503 = vld [vmem:[#allocation7 + $0x1278] sm:$0xff]
        %v4504 = vld [vmem:[#allocation7 + $0x1280] sm:$0xff]
        %v4505 = vld [vmem:[#allocation7 + $0x1288] sm:$0xff]
        %v4506 = vld [vmem:[#allocation7 + $0x1290] sm:$0xff]
        %v4507 = vld [vmem:[#allocation7 + $0x1298] sm:$0xff]
        %v4508 = vld [vmem:[#allocation7 + $0x12a0] sm:$0xff]
        %v4509 = vld [vmem:[#allocation7 + $0x12a8] sm:$0xff]
        %v4510 = vld [vmem:[#allocation7 + $0x12b0] sm:$0xff]
        %v4511 = vld [vmem:[#allocation7 + $0x12b8] sm:$0xff]
        %v4512 = vld [vmem:[#allocation7 + $0x12c0] sm:$0xff]
        %v4513 = vld [vmem:[#allocation7 + $0x12c8] sm:$0xff]
        %v4514 = vld [vmem:[#allocation7 + $0x12d0] sm:$0xff]
        %v4515 = vld [vmem:[#allocation7 + $0x12d8] sm:$0xff]
        %v4516 = vld [vmem:[#allocation7 + $0x12e0] sm:$0xff]
        %v4517 = vld [vmem:[#allocation7 + $0x12e8] sm:$0xff]
        %v4518 = vld [vmem:[#allocation7 + $0x12f0] sm:$0xff]
        %v4519 = vld [vmem:[#allocation7 + $0x12f8] sm:$0xff]
        %v4520 = vld [vmem:[#allocation7 + $0x1300] sm:$0xff]
        %v4521 = vld [vmem:[#allocation7 + $0x1308] sm:$0xff]
        %v4522 = vld [vmem:[#allocation7 + $0x1310] sm:$0xff]
        %v4523 = vld [vmem:[#allocation7 + $0x1318] sm:$0xff]
        %v4524 = vld [vmem:[#allocation7 + $0x1320] sm:$0xff]
        %v4525 = vld [vmem:[#allocation7 + $0x1328] sm:$0xff]
        %v4526 = vld [vmem:[#allocation7 + $0x1330] sm:$0xff]
        %v4527 = vld [vmem:[#allocation7 + $0x1338] sm:$0xff]
        %v4528 = vld [vmem:[#allocation7 + $0x1340] sm:$0xff]
        %v4529 = vld [vmem:[#allocation7 + $0x1348] sm:$0xff]
        %v4530 = vld [vmem:[#allocation7 + $0x1350] sm:$0xff]
        %v4531 = vld [vmem:[#allocation7 + $0x1358] sm:$0xff]
        %v4532 = vld [vmem:[#allocation7 + $0x1360] sm:$0xff]
        %v4533 = vld [vmem:[#allocation7 + $0x1368] sm:$0xff]
        %v4534 = vld [vmem:[#allocation7 + $0x1370] sm:$0xff]
        %v4535 = vld [vmem:[#allocation7 + $0x1378] sm:$0xff]
        %v4536 = vld [vmem:[#allocation7 + $0x1380] sm:$0xff]
        %v4537 = vld [vmem:[#allocation7 + $0x1388] sm:$0xff]
        %v4538 = vld [vmem:[#allocation7 + $0x1390] sm:$0xff]
        %v4539 = vld [vmem:[#allocation7 + $0x1398] sm:$0xff]
        %v4540 = vld [vmem:[#allocation7 + $0x13a0] sm:$0xff]
        %v4541 = vld [vmem:[#allocation7 + $0x13a8] sm:$0xff]
        %v4542 = vld [vmem:[#allocation7 + $0x13b0] sm:$0xff]
        %v4543 = vld [vmem:[#allocation7 + $0x13b8] sm:$0xff]
        %v4544 = vld [vmem:[#allocation7 + $0x13c0] sm:$0xff]
        %v4545 = vld [vmem:[#allocation7 + $0x13c8] sm:$0xff]
        %v4546 = vld [vmem:[#allocation7 + $0x13d0] sm:$0xff]
        %v4547 = vld [vmem:[#allocation7 + $0x13d8] sm:$0xff]
        %v4548 = vld [vmem:[#allocation7 + $0x13e0] sm:$0xff]
        %v4549 = vld [vmem:[#allocation7 + $0x13e8] sm:$0xff]
        %v4550 = vld [vmem:[#allocation7 + $0x13f0] sm:$0xff]
        %v4551 = vld [vmem:[#allocation7 + $0x13f8] sm:$0xff]
        %v4552 = vld [vmem:[#allocation7 + $0x1400] sm:$0xff]
        %v4553 = vld [vmem:[#allocation7 + $0x1408] sm:$0xff]
        %v4554 = vld [vmem:[#allocation7 + $0x1410] sm:$0xff]
        %v4555 = vld [vmem:[#allocation7 + $0x1418] sm:$0xff]
        %v4556 = vld [vmem:[#allocation7 + $0x1420] sm:$0xff]
        %v4557 = vld [vmem:[#allocation7 + $0x1428] sm:$0xff]
        %v4558 = vld [vmem:[#allocation7 + $0x1430] sm:$0xff]
        %v4559 = vld [vmem:[#allocation7 + $0x1438] sm:$0xff]
        %v4560 = vld [vmem:[#allocation7 + $0x1440] sm:$0xff]
        %v4561 = vld [vmem:[#allocation7 + $0x1448] sm:$0xff]
        %v4562 = vld [vmem:[#allocation7 + $0x1450] sm:$0xff]
        %v4563 = vld [vmem:[#allocation7 + $0x1458] sm:$0xff]
        %v4564 = vld [vmem:[#allocation7 + $0x1460] sm:$0xff]
        %v4565 = vld [vmem:[#allocation7 + $0x1468] sm:$0xff]
        %v4566 = vld [vmem:[#allocation7 + $0x1470] sm:$0xff]
        %v4567 = vld [vmem:[#allocation7 + $0x1478] sm:$0xff]
        %v4568 = vld [vmem:[#allocation7 + $0x1480] sm:$0xff]
        %v4569 = vld [vmem:[#allocation7 + $0x1488] sm:$0xff]
        %v4570 = vld [vmem:[#allocation7 + $0x1490] sm:$0xff]
        %v4571 = vld [vmem:[#allocation7 + $0x1498] sm:$0xff]
        %v4572 = vld [vmem:[#allocation7 + $0x14a0] sm:$0xff]
        %v4573 = vld [vmem:[#allocation7 + $0x14a8] sm:$0xff]
        %v4574 = vld [vmem:[#allocation7 + $0x14b0] sm:$0xff]
        %v4575 = vld [vmem:[#allocation7 + $0x14b8] sm:$0xff]
        %v4576 = vld [vmem:[#allocation7 + $0x14c0] sm:$0xff]
        %v4577 = vld [vmem:[#allocation7 + $0x14c8] sm:$0xff]
        %v4578 = vld [vmem:[#allocation7 + $0x14d0] sm:$0xff]
        %v4579 = vld [vmem:[#allocation7 + $0x14d8] sm:$0xff]
        %v4580 = vld [vmem:[#allocation7 + $0x14e0] sm:$0xff]
        %v4581 = vld [vmem:[#allocation7 + $0x14e8] sm:$0xff]
        %v4582 = vld [vmem:[#allocation7 + $0x14f0] sm:$0xff]
        %v4583 = vld [vmem:[#allocation7 + $0x14f8] sm:$0xff]
        %v4584 = vld [vmem:[#allocation7 + $0x1500] sm:$0xff]
        %v4585 = vld [vmem:[#allocation7 + $0x1508] sm:$0xff]
        %v4586 = vld [vmem:[#allocation7 + $0x1510] sm:$0xff]
        %v4587 = vld [vmem:[#allocation7 + $0x1518] sm:$0xff]
        %v4588 = vld [vmem:[#allocation7 + $0x1520] sm:$0xff]
        %v4589 = vld [vmem:[#allocation7 + $0x1528] sm:$0xff]
        %v4590 = vld [vmem:[#allocation7 + $0x1530] sm:$0xff]
        %v4591 = vld [vmem:[#allocation7 + $0x1538] sm:$0xff]
        %v4592 = vld [vmem:[#allocation7 + $0x1540] sm:$0xff]
        %v4593 = vld [vmem:[#allocation7 + $0x1548] sm:$0xff]
        %v4594 = vld [vmem:[#allocation7 + $0x1550] sm:$0xff]
        %v4595 = vld [vmem:[#allocation7 + $0x1558] sm:$0xff]
        %v4596 = vld [vmem:[#allocation7 + $0x1560] sm:$0xff]
        %v4597 = vld [vmem:[#allocation7 + $0x1568] sm:$0xff]
        %v4598 = vld [vmem:[#allocation7 + $0x1570] sm:$0xff]
        %v4599 = vld [vmem:[#allocation7 + $0x1578] sm:$0xff]
        %v4600 = vld [vmem:[#allocation7 + $0x1580] sm:$0xff]
        %v4601 = vld [vmem:[#allocation7 + $0x1588] sm:$0xff]
        %v4602 = vld [vmem:[#allocation7 + $0x1590] sm:$0xff]
        %v4603 = vld [vmem:[#allocation7 + $0x1598] sm:$0xff]
        %v4604 = vld [vmem:[#allocation7 + $0x15a0] sm:$0xff]
        %v4605 = vld [vmem:[#allocation7 + $0x15a8] sm:$0xff]
        %v4606 = vld [vmem:[#allocation7 + $0x15b0] sm:$0xff]
        %v4607 = vld [vmem:[#allocation7 + $0x15b8] sm:$0xff]
        %v4608 = vld [vmem:[#allocation7 + $0x15c0] sm:$0xff]
        %v4609 = vld [vmem:[#allocation7 + $0x15c8] sm:$0xff]
        %v4610 = vld [vmem:[#allocation7 + $0x15d0] sm:$0xff]
        %v4611 = vld [vmem:[#allocation7 + $0x15d8] sm:$0xff]
        %v4612 = vld [vmem:[#allocation7 + $0x15e0] sm:$0xff]
        %v4613 = vld [vmem:[#allocation7 + $0x15e8] sm:$0xff]
        %v4614 = vld [vmem:[#allocation7 + $0x15f0] sm:$0xff]
        %v4615 = vld [vmem:[#allocation7 + $0x15f8] sm:$0xff]
        %v4616 = vld [vmem:[#allocation7 + $0x1600] sm:$0xff]
        %v4617 = vld [vmem:[#allocation7 + $0x1608] sm:$0xff]
        %v4618 = vld [vmem:[#allocation7 + $0x1610] sm:$0xff]
        %v4619 = vld [vmem:[#allocation7 + $0x1618] sm:$0xff]
        %v4620 = vld [vmem:[#allocation7 + $0x1620] sm:$0xff]
        %v4621 = vld [vmem:[#allocation7 + $0x1628] sm:$0xff]
        %v4622 = vld [vmem:[#allocation7 + $0x1630] sm:$0xff]
        %v4623 = vld [vmem:[#allocation7 + $0x1638] sm:$0xff]
        %v4624 = vld [vmem:[#allocation7 + $0x1640] sm:$0xff]
        %v4625 = vld [vmem:[#allocation7 + $0x1648] sm:$0xff]
        %v4626 = vld [vmem:[#allocation7 + $0x1650] sm:$0xff]
        %v4627 = vld [vmem:[#allocation7 + $0x1658] sm:$0xff]
        %v4628 = vld [vmem:[#allocation7 + $0x1660] sm:$0xff]
        %v4629 = vld [vmem:[#allocation7 + $0x1668] sm:$0xff]
        %v4630 = vld [vmem:[#allocation7 + $0x1670] sm:$0xff]
        %v4631 = vld [vmem:[#allocation7 + $0x1678] sm:$0xff]
        %v4632 = vld [vmem:[#allocation7 + $0x1680] sm:$0xff]
        %v4633 = vld [vmem:[#allocation7 + $0x1688] sm:$0xff]
        %v4634 = vld [vmem:[#allocation7 + $0x1690] sm:$0xff]
        %v4635 = vld [vmem:[#allocation7 + $0x1698] sm:$0xff]
        %v4636 = vld [vmem:[#allocation7 + $0x16a0] sm:$0xff]
        %v4637 = vld [vmem:[#allocation7 + $0x16a8] sm:$0xff]
        %v4638 = vld [vmem:[#allocation7 + $0x16b0] sm:$0xff]
        %v4639 = vld [vmem:[#allocation7 + $0x16b8] sm:$0xff]
        %v4640 = vld [vmem:[#allocation7 + $0x16c0] sm:$0xff]
        %v4641 = vld [vmem:[#allocation7 + $0x16c8] sm:$0xff]
        %v4642 = vld [vmem:[#allocation7 + $0x16d0] sm:$0xff]
        %v4643 = vld [vmem:[#allocation7 + $0x16d8] sm:$0xff]
        %v4644 = vld [vmem:[#allocation7 + $0x16e0] sm:$0xff]
        %v4645 = vld [vmem:[#allocation7 + $0x16e8] sm:$0xff]
        %v4646 = vld [vmem:[#allocation7 + $0x16f0] sm:$0xff]
        %v4647 = vld [vmem:[#allocation7 + $0x16f8] sm:$0xff]
        %v4648 = vld [vmem:[#allocation7 + $0x1700] sm:$0xff]
        %v4649 = vld [vmem:[#allocation7 + $0x1708] sm:$0xff]
        %v4650 = vld [vmem:[#allocation7 + $0x1710] sm:$0xff]
        %v4651 = vld [vmem:[#allocation7 + $0x1718] sm:$0xff]
        %v4652 = vld [vmem:[#allocation7 + $0x1720] sm:$0xff]
        %v4653 = vld [vmem:[#allocation7 + $0x1728] sm:$0xff]
        %v4654 = vld [vmem:[#allocation7 + $0x1730] sm:$0xff]
        %v4655 = vld [vmem:[#allocation7 + $0x1738] sm:$0xff]
        %v4656 = vld [vmem:[#allocation7 + $0x1740] sm:$0xff]
        %v4657 = vld [vmem:[#allocation7 + $0x1748] sm:$0xff]
        %v4658 = vld [vmem:[#allocation7 + $0x1750] sm:$0xff]
        %v4659 = vld [vmem:[#allocation7 + $0x1758] sm:$0xff]
        %v4660 = vld [vmem:[#allocation7 + $0x1760] sm:$0xff]
        %v4661 = vld [vmem:[#allocation7 + $0x1768] sm:$0xff]
        %v4662 = vld [vmem:[#allocation7 + $0x1770] sm:$0xff]
        %v4663 = vld [vmem:[#allocation7 + $0x1778] sm:$0xff]
        %v4664 = vld [vmem:[#allocation7 + $0x1780] sm:$0xff]
        %v4665 = vld [vmem:[#allocation7 + $0x1788] sm:$0xff]
        %v4666 = vld [vmem:[#allocation7 + $0x1790] sm:$0xff]
        %v4667 = vld [vmem:[#allocation7 + $0x1798] sm:$0xff]
        %v4668 = vld [vmem:[#allocation7 + $0x17a0] sm:$0xff]
        %v4669 = vld [vmem:[#allocation7 + $0x17a8] sm:$0xff]
        %v4670 = vld [vmem:[#allocation7 + $0x17b0] sm:$0xff]
        %v4671 = vld [vmem:[#allocation7 + $0x17b8] sm:$0xff]
        %v4672 = vld [vmem:[#allocation7 + $0x17c0] sm:$0xff]
        %v4673 = vld [vmem:[#allocation7 + $0x17c8] sm:$0xff]
        %v4674 = vld [vmem:[#allocation7 + $0x17d0] sm:$0xff]
        %v4675 = vld [vmem:[#allocation7 + $0x17d8] sm:$0xff]
        %v4676 = vld [vmem:[#allocation7 + $0x17e0] sm:$0xff]
        %v4677 = vld [vmem:[#allocation7 + $0x17e8] sm:$0xff]
        %v4678 = vld [vmem:[#allocation7 + $0x17f0] sm:$0xff]
        %v4679 = vld [vmem:[#allocation7 + $0x17f8] sm:$0xff]
        %v4680 = vld [vmem:[#allocation7 + $0x1800] sm:$0xff]
        %v4681 = vld [vmem:[#allocation7 + $0x1808] sm:$0xff]
        %v4682 = vld [vmem:[#allocation7 + $0x1810] sm:$0xff]
        %v4683 = vld [vmem:[#allocation7 + $0x1818] sm:$0xff]
        %v4684 = vld [vmem:[#allocation7 + $0x1820] sm:$0xff]
        %v4685 = vld [vmem:[#allocation7 + $0x1828] sm:$0xff]
        %v4686 = vld [vmem:[#allocation7 + $0x1830] sm:$0xff]
        %v4687 = vld [vmem:[#allocation7 + $0x1838] sm:$0xff]
        %v4688 = vld [vmem:[#allocation7 + $0x1840] sm:$0xff]
        %v4689 = vld [vmem:[#allocation7 + $0x1848] sm:$0xff]
        %v4690 = vld [vmem:[#allocation7 + $0x1850] sm:$0xff]
        %v4691 = vld [vmem:[#allocation7 + $0x1858] sm:$0xff]
        %v4692 = vld [vmem:[#allocation7 + $0x1860] sm:$0xff]
        %v4693 = vld [vmem:[#allocation7 + $0x1868] sm:$0xff]
        %v4694 = vld [vmem:[#allocation7 + $0x1870] sm:$0xff]
        %v4695 = vld [vmem:[#allocation7 + $0x1878] sm:$0xff]
        %v4696 = vld [vmem:[#allocation7 + $0x1880] sm:$0xff]
        %v4697 = vld [vmem:[#allocation7 + $0x1888] sm:$0xff]
        %v4698 = vld [vmem:[#allocation7 + $0x1890] sm:$0xff]
        %v4699 = vld [vmem:[#allocation7 + $0x1898] sm:$0xff]
        %v4700 = vld [vmem:[#allocation7 + $0x18a0] sm:$0xff]
        %v4701 = vld [vmem:[#allocation7 + $0x18a8] sm:$0xff]
        %v4702 = vld [vmem:[#allocation7 + $0x18b0] sm:$0xff]
        %v4703 = vld [vmem:[#allocation7 + $0x18b8] sm:$0xff]
        %v4704 = vld [vmem:[#allocation7 + $0x18c0] sm:$0xff]
        %v4705 = vld [vmem:[#allocation7 + $0x18c8] sm:$0xff]
        %v4706 = vld [vmem:[#allocation7 + $0x18d0] sm:$0xff]
        %v4707 = vld [vmem:[#allocation7 + $0x18d8] sm:$0xff]
        %v4708 = vld [vmem:[#allocation7 + $0x18e0] sm:$0xff]
        %v4709 = vld [vmem:[#allocation7 + $0x18e8] sm:$0xff]
        %v4710 = vld [vmem:[#allocation7 + $0x18f0] sm:$0xff]
        %v4711 = vld [vmem:[#allocation7 + $0x18f8] sm:$0xff]
        %v4712 = vld [vmem:[#allocation7 + $0x1900] sm:$0xff]
        %v4713 = vld [vmem:[#allocation7 + $0x1908] sm:$0xff]
        %v4714 = vld [vmem:[#allocation7 + $0x1910] sm:$0xff]
        %v4715 = vld [vmem:[#allocation7 + $0x1918] sm:$0xff]
        %v4716 = vld [vmem:[#allocation7 + $0x1920] sm:$0xff]
        %v4717 = vld [vmem:[#allocation7 + $0x1928] sm:$0xff]
        %v4718 = vld [vmem:[#allocation7 + $0x1930] sm:$0xff]
        %v4719 = vld [vmem:[#allocation7 + $0x1938] sm:$0xff]
        %v4720 = vld [vmem:[#allocation7 + $0x1940] sm:$0xff]
        %v4721 = vld [vmem:[#allocation7 + $0x1948] sm:$0xff]
        %v4722 = vld [vmem:[#allocation7 + $0x1950] sm:$0xff]
        %v4723 = vld [vmem:[#allocation7 + $0x1958] sm:$0xff]
        %v4724 = vld [vmem:[#allocation7 + $0x1960] sm:$0xff]
        %v4725 = vld [vmem:[#allocation7 + $0x1968] sm:$0xff]
        %v4726 = vld [vmem:[#allocation7 + $0x1970] sm:$0xff]
        %v4727 = vld [vmem:[#allocation7 + $0x1978] sm:$0xff]
        %v4728 = vld [vmem:[#allocation7 + $0x1980] sm:$0xff]
        %v4729 = vld [vmem:[#allocation7 + $0x1988] sm:$0xff]
        %v4730 = vld [vmem:[#allocation7 + $0x1990] sm:$0xff]
        %v4731 = vld [vmem:[#allocation7 + $0x1998] sm:$0xff]
        %v4732 = vld [vmem:[#allocation7 + $0x19a0] sm:$0xff]
        %v4733 = vld [vmem:[#allocation7 + $0x19a8] sm:$0xff]
        %v4734 = vld [vmem:[#allocation7 + $0x19b0] sm:$0xff]
        %v4735 = vld [vmem:[#allocation7 + $0x19b8] sm:$0xff]
        %v4736 = vld [vmem:[#allocation7 + $0x19c0] sm:$0xff]
        %v4737 = vld [vmem:[#allocation7 + $0x19c8] sm:$0xff]
        %v4738 = vld [vmem:[#allocation7 + $0x19d0] sm:$0xff]
        %v4739 = vld [vmem:[#allocation7 + $0x19d8] sm:$0xff]
        %v4740 = vld [vmem:[#allocation7 + $0x19e0] sm:$0xff]
        %v4741 = vld [vmem:[#allocation7 + $0x19e8] sm:$0xff]
        %v4742 = vld [vmem:[#allocation7 + $0x19f0] sm:$0xff]
        %v4743 = vld [vmem:[#allocation7 + $0x19f8] sm:$0xff]
        %v4744 = vld [vmem:[#allocation7 + $0x1a00] sm:$0xff]
        %v4745 = vld [vmem:[#allocation7 + $0x1a08] sm:$0xff]
        %v4746 = vld [vmem:[#allocation7 + $0x1a10] sm:$0xff]
        %v4747 = vld [vmem:[#allocation7 + $0x1a18] sm:$0xff]
        %v4748 = vld [vmem:[#allocation7 + $0x1a20] sm:$0xff]
        %v4749 = vld [vmem:[#allocation7 + $0x1a28] sm:$0xff]
        %v4750 = vld [vmem:[#allocation7 + $0x1a30] sm:$0xff]
        %v4751 = vld [vmem:[#allocation7 + $0x1a38] sm:$0xff]
        %v4752 = vld [vmem:[#allocation7 + $0x1a40] sm:$0xff]
        %v4753 = vld [vmem:[#allocation7 + $0x1a48] sm:$0xff]
        %v4754 = vld [vmem:[#allocation7 + $0x1a50] sm:$0xff]
        %v4755 = vld [vmem:[#allocation7 + $0x1a58] sm:$0xff]
        %v4756 = vld [vmem:[#allocation7 + $0x1a60] sm:$0xff]
        %v4757 = vld [vmem:[#allocation7 + $0x1a68] sm:$0xff]
        %v4758 = vld [vmem:[#allocation7 + $0x1a70] sm:$0xff]
        %v4759 = vld [vmem:[#allocation7 + $0x1a78] sm:$0xff]
        %v4760 = vld [vmem:[#allocation7 + $0x1a80] sm:$0xff]
        %v4761 = vld [vmem:[#allocation7 + $0x1a88] sm:$0xff]
        %v4762 = vld [vmem:[#allocation7 + $0x1a90] sm:$0xff]
        %v4763 = vld [vmem:[#allocation7 + $0x1a98] sm:$0xff]
        %v4764 = vld [vmem:[#allocation7 + $0x1aa0] sm:$0xff]
        %v4765 = vld [vmem:[#allocation7 + $0x1aa8] sm:$0xff]
        %v4766 = vld [vmem:[#allocation7 + $0x1ab0] sm:$0xff]
        %v4767 = vld [vmem:[#allocation7 + $0x1ab8] sm:$0xff]
        %v4768 = vld [vmem:[#allocation7 + $0x1ac0] sm:$0xff]
        %v4769 = vld [vmem:[#allocation7 + $0x1ac8] sm:$0xff]
        %v4770 = vld [vmem:[#allocation7 + $0x1ad0] sm:$0xff]
        %v4771 = vld [vmem:[#allocation7 + $0x1ad8] sm:$0xff]
        %v4772 = vld [vmem:[#allocation7 + $0x1ae0] sm:$0xff]
        %v4773 = vld [vmem:[#allocation7 + $0x1ae8] sm:$0xff]
        %v4774 = vld [vmem:[#allocation7 + $0x1af0] sm:$0xff]
        %v4775 = vld [vmem:[#allocation7 + $0x1af8] sm:$0xff]
        %v4776 = vld [vmem:[#allocation7 + $0x1b00] sm:$0xff]
        %v4777 = vld [vmem:[#allocation7 + $0x1b08] sm:$0xff]
        %v4778 = vld [vmem:[#allocation7 + $0x1b10] sm:$0xff]
        %v4779 = vld [vmem:[#allocation7 + $0x1b18] sm:$0xff]
        %v4780 = vld [vmem:[#allocation7 + $0x1b20] sm:$0xff]
        %v4781 = vld [vmem:[#allocation7 + $0x1b28] sm:$0xff]
        %v4782 = vld [vmem:[#allocation7 + $0x1b30] sm:$0xff]
        %v4783 = vld [vmem:[#allocation7 + $0x1b38] sm:$0xff]
        %v4784 = vld [vmem:[#allocation7 + $0x1b40] sm:$0xff]
        %v4785 = vld [vmem:[#allocation7 + $0x1b48] sm:$0xff]
        %v4786 = vld [vmem:[#allocation7 + $0x1b50] sm:$0xff]
        %v4787 = vld [vmem:[#allocation7 + $0x1b58] sm:$0xff]
        %v4788 = vld [vmem:[#allocation7 + $0x1b60] sm:$0xff]
        %v4789 = vld [vmem:[#allocation7 + $0x1b68] sm:$0xff]
        %v4790 = vld [vmem:[#allocation7 + $0x1b70] sm:$0xff]
        %v4791 = vld [vmem:[#allocation7 + $0x1b78] sm:$0xff]
        %v4792 = vld [vmem:[#allocation7 + $0x1b80] sm:$0xff]
        %v4793 = vld [vmem:[#allocation7 + $0x1b88] sm:$0xff]
        %v4794 = vld [vmem:[#allocation7 + $0x1b90] sm:$0xff]
        %v4795 = vld [vmem:[#allocation7 + $0x1b98] sm:$0xff]
        %v4796 = vld [vmem:[#allocation7 + $0x1ba0] sm:$0xff]
        %v4797 = vld [vmem:[#allocation7 + $0x1ba8] sm:$0xff]
        %v4798 = vld [vmem:[#allocation7 + $0x1bb0] sm:$0xff]
        %v4799 = vld [vmem:[#allocation7 + $0x1bb8] sm:$0xff]
        %v4800 = vld [vmem:[#allocation7 + $0x1bc0] sm:$0xff]
        %v4801 = vld [vmem:[#allocation7 + $0x1bc8] sm:$0xff]
        %v4802 = vld [vmem:[#allocation7 + $0x1bd0] sm:$0xff]
        %v4803 = vld [vmem:[#allocation7 + $0x1bd8] sm:$0xff]
        %v4804 = vld [vmem:[#allocation7 + $0x1be0] sm:$0xff]
        %v4805 = vld [vmem:[#allocation7 + $0x1be8] sm:$0xff]
        %v4806 = vld [vmem:[#allocation7 + $0x1bf0] sm:$0xff]
        %v4807 = vld [vmem:[#allocation7 + $0x1bf8] sm:$0xff]
        %v4808 = vld [vmem:[#allocation7 + $0x1c00] sm:$0xff]
        %v4809 = vld [vmem:[#allocation7 + $0x1c08] sm:$0xff]
        %v4810 = vld [vmem:[#allocation7 + $0x1c10] sm:$0xff]
        %v4811 = vld [vmem:[#allocation7 + $0x1c18] sm:$0xff]
        %v4812 = vld [vmem:[#allocation7 + $0x1c20] sm:$0xff]
        %v4813 = vld [vmem:[#allocation7 + $0x1c28] sm:$0xff]
        %v4814 = vld [vmem:[#allocation7 + $0x1c30] sm:$0xff]
        %v4815 = vld [vmem:[#allocation7 + $0x1c38] sm:$0xff]
        %v4816 = vld [vmem:[#allocation7 + $0x1c40] sm:$0xff]
        %v4817 = vld [vmem:[#allocation7 + $0x1c48] sm:$0xff]
        %v4818 = vld [vmem:[#allocation7 + $0x1c50] sm:$0xff]
        %v4819 = vld [vmem:[#allocation7 + $0x1c58] sm:$0xff]
        %v4820 = vld [vmem:[#allocation7 + $0x1c60] sm:$0xff]
        %v4821 = vld [vmem:[#allocation7 + $0x1c68] sm:$0xff]
        %v4822 = vld [vmem:[#allocation7 + $0x1c70] sm:$0xff]
        %v4823 = vld [vmem:[#allocation7 + $0x1c78] sm:$0xff]
        %v4824 = vld [vmem:[#allocation7 + $0x1c80] sm:$0xff]
        %v4825 = vld [vmem:[#allocation7 + $0x1c88] sm:$0xff]
        %v4826 = vld [vmem:[#allocation7 + $0x1c90] sm:$0xff]
        %v4827 = vld [vmem:[#allocation7 + $0x1c98] sm:$0xff]
        %v4828 = vld [vmem:[#allocation7 + $0x1ca0] sm:$0xff]
        %v4829 = vld [vmem:[#allocation7 + $0x1ca8] sm:$0xff]
        %v4830 = vld [vmem:[#allocation7 + $0x1cb0] sm:$0xff]
        %v4831 = vld [vmem:[#allocation7 + $0x1cb8] sm:$0xff]
        %v4832 = vld [vmem:[#allocation7 + $0x1cc0] sm:$0xff]
        %v4833 = vld [vmem:[#allocation7 + $0x1cc8] sm:$0xff]
        %v4834 = vld [vmem:[#allocation7 + $0x1cd0] sm:$0xff]
        %v4835 = vld [vmem:[#allocation7 + $0x1cd8] sm:$0xff]
        %v4836 = vld [vmem:[#allocation7 + $0x1ce0] sm:$0xff]
        %v4837 = vld [vmem:[#allocation7 + $0x1ce8] sm:$0xff]
        %v4838 = vld [vmem:[#allocation7 + $0x1cf0] sm:$0xff]
        %v4839 = vld [vmem:[#allocation7 + $0x1cf8] sm:$0xff]
        %v4840 = vld [vmem:[#allocation7 + $0x1d00] sm:$0xff]
        %v4841 = vld [vmem:[#allocation7 + $0x1d08] sm:$0xff]
        %v4842 = vld [vmem:[#allocation7 + $0x1d10] sm:$0xff]
        %v4843 = vld [vmem:[#allocation7 + $0x1d18] sm:$0xff]
        %v4844 = vld [vmem:[#allocation7 + $0x1d20] sm:$0xff]
        %v4845 = vld [vmem:[#allocation7 + $0x1d28] sm:$0xff]
        %v4846 = vld [vmem:[#allocation7 + $0x1d30] sm:$0xff]
        %v4847 = vld [vmem:[#allocation7 + $0x1d38] sm:$0xff]
        %v4848 = vld [vmem:[#allocation7 + $0x1d40] sm:$0xff]
        %v4849 = vld [vmem:[#allocation7 + $0x1d48] sm:$0xff]
        %v4850 = vld [vmem:[#allocation7 + $0x1d50] sm:$0xff]
        %v4851 = vld [vmem:[#allocation7 + $0x1d58] sm:$0xff]
        %v4852 = vld [vmem:[#allocation7 + $0x1d60] sm:$0xff]
        %v4853 = vld [vmem:[#allocation7 + $0x1d68] sm:$0xff]
        %v4854 = vld [vmem:[#allocation7 + $0x1d70] sm:$0xff]
        %v4855 = vld [vmem:[#allocation7 + $0x1d78] sm:$0xff]
        %v4856 = vld [vmem:[#allocation7 + $0x1d80] sm:$0xff]
        %v4857 = vld [vmem:[#allocation7 + $0x1d88] sm:$0xff]
        %v4858 = vld [vmem:[#allocation7 + $0x1d90] sm:$0xff]
        %v4859 = vld [vmem:[#allocation7 + $0x1d98] sm:$0xff]
        %v4860 = vld [vmem:[#allocation7 + $0x1da0] sm:$0xff]
        %v4861 = vld [vmem:[#allocation7 + $0x1da8] sm:$0xff]
        %v4862 = vld [vmem:[#allocation7 + $0x1db0] sm:$0xff]
        %v4863 = vld [vmem:[#allocation7 + $0x1db8] sm:$0xff]
        %v4864 = vld [vmem:[#allocation7 + $0x1dc0] sm:$0xff]
        %v4865 = vld [vmem:[#allocation7 + $0x1dc8] sm:$0xff]
        %v4866 = vld [vmem:[#allocation7 + $0x1dd0] sm:$0xff]
        %v4867 = vld [vmem:[#allocation7 + $0x1dd8] sm:$0xff]
        %v4868 = vld [vmem:[#allocation7 + $0x1de0] sm:$0xff]
        %v4869 = vld [vmem:[#allocation7 + $0x1de8] sm:$0xff]
        %v4870 = vld [vmem:[#allocation7 + $0x1df0] sm:$0xff]
        %v4871 = vld [vmem:[#allocation7 + $0x1df8] sm:$0xff]
        %v4872 = vld [vmem:[#allocation7 + $0x1e00] sm:$0xff]
        %v4873 = vld [vmem:[#allocation7 + $0x1e08] sm:$0xff]
        %v4874 = vld [vmem:[#allocation7 + $0x1e10] sm:$0xff]
        %v4875 = vld [vmem:[#allocation7 + $0x1e18] sm:$0xff]
        %v4876 = vld [vmem:[#allocation7 + $0x1e20] sm:$0xff]
        %v4877 = vld [vmem:[#allocation7 + $0x1e28] sm:$0xff]
        %v4878 = vld [vmem:[#allocation7 + $0x1e30] sm:$0xff]
        %v4879 = vld [vmem:[#allocation7 + $0x1e38] sm:$0xff]
        %v4880 = vld [vmem:[#allocation7 + $0x1e40] sm:$0xff]
        %v4881 = vld [vmem:[#allocation7 + $0x1e48] sm:$0xff]
        %v4882 = vld [vmem:[#allocation7 + $0x1e50] sm:$0xff]
        %v4883 = vld [vmem:[#allocation7 + $0x1e58] sm:$0xff]
        %v4884 = vld [vmem:[#allocation7 + $0x1e60] sm:$0xff]
        %v4885 = vld [vmem:[#allocation7 + $0x1e68] sm:$0xff]
        %v4886 = vld [vmem:[#allocation7 + $0x1e70] sm:$0xff]
        %v4887 = vld [vmem:[#allocation7 + $0x1e78] sm:$0xff]
        %v4888 = vld [vmem:[#allocation7 + $0x1e80] sm:$0xff]
        %v4889 = vld [vmem:[#allocation7 + $0x1e88] sm:$0xff]
        %v4890 = vld [vmem:[#allocation7 + $0x1e90] sm:$0xff]
        %v4891 = vld [vmem:[#allocation7 + $0x1e98] sm:$0xff]
        %v4892 = vld [vmem:[#allocation7 + $0x1ea0] sm:$0xff]
        %v4893 = vld [vmem:[#allocation7 + $0x1ea8] sm:$0xff]
        %v4894 = vld [vmem:[#allocation7 + $0x1eb0] sm:$0xff]
        %v4895 = vld [vmem:[#allocation7 + $0x1eb8] sm:$0xff]
        %v4896 = vld [vmem:[#allocation7 + $0x1ec0] sm:$0xff]
        %v4897 = vld [vmem:[#allocation7 + $0x1ec8] sm:$0xff]
        %v4898 = vld [vmem:[#allocation7 + $0x1ed0] sm:$0xff]
        %v4899 = vld [vmem:[#allocation7 + $0x1ed8] sm:$0xff]
        %v4900 = vld [vmem:[#allocation7 + $0x1ee0] sm:$0xff]
        %v4901 = vld [vmem:[#allocation7 + $0x1ee8] sm:$0xff]
        %v4902 = vld [vmem:[#allocation7 + $0x1ef0] sm:$0xff]
        %v4903 = vld [vmem:[#allocation7 + $0x1ef8] sm:$0xff]
        %v4904 = vld [vmem:[#allocation7 + $0x1f00] sm:$0xff]
        %v4905 = vld [vmem:[#allocation7 + $0x1f08] sm:$0xff]
        %v4906 = vld [vmem:[#allocation7 + $0x1f10] sm:$0xff]
        %v4907 = vld [vmem:[#allocation7 + $0x1f18] sm:$0xff]
        %v4908 = vld [vmem:[#allocation7 + $0x1f20] sm:$0xff]
        %v4909 = vld [vmem:[#allocation7 + $0x1f28] sm:$0xff]
        %v4910 = vld [vmem:[#allocation7 + $0x1f30] sm:$0xff]
        %v4911 = vld [vmem:[#allocation7 + $0x1f38] sm:$0xff]
        %v4912 = vld [vmem:[#allocation7 + $0x1f40] sm:$0xff]
        %v4913 = vld [vmem:[#allocation7 + $0x1f48] sm:$0xff]
        %v4914 = vld [vmem:[#allocation7 + $0x1f50] sm:$0xff]
        %v4915 = vld [vmem:[#allocation7 + $0x1f58] sm:$0xff]
        %v4916 = vld [vmem:[#allocation7 + $0x1f60] sm:$0xff]
        %v4917 = vld [vmem:[#allocation7 + $0x1f68] sm:$0xff]
        %v4918 = vld [vmem:[#allocation7 + $0x1f70] sm:$0xff]
        %v4919 = vld [vmem:[#allocation7 + $0x1f78] sm:$0xff]
        %v4920 = vld [vmem:[#allocation7 + $0x1f80] sm:$0xff]
        %v4921 = vld [vmem:[#allocation7 + $0x1f88] sm:$0xff]
        %v4922 = vld [vmem:[#allocation7 + $0x1f90] sm:$0xff]
        %v4923 = vld [vmem:[#allocation7 + $0x1f98] sm:$0xff]
        %v4924 = vld [vmem:[#allocation7 + $0x1fa0] sm:$0xff]
        %v4925 = vld [vmem:[#allocation7 + $0x1fa8] sm:$0xff]
        %v4926 = vld [vmem:[#allocation7 + $0x1fb0] sm:$0xff]
        %v4927 = vld [vmem:[#allocation7 + $0x1fb8] sm:$0xff]
        %v4928 = vld [vmem:[#allocation7 + $0x1fc0] sm:$0xff]
        %v4929 = vld [vmem:[#allocation7 + $0x1fc8] sm:$0xff]
        %v4930 = vld [vmem:[#allocation7 + $0x1fd0] sm:$0xff]
        %v4931 = vld [vmem:[#allocation7 + $0x1fd8] sm:$0xff]
        %v4932 = vld [vmem:[#allocation7 + $0x1fe0] sm:$0xff]
        %v4933 = vld [vmem:[#allocation7 + $0x1fe8] sm:$0xff]
        %v4934 = vld [vmem:[#allocation7 + $0x1ff0] sm:$0xff]
        %v4935 = vld [vmem:[#allocation7 + $0x1ff8] sm:$0xff]
        %v4936 = vlaneseq
        %v4937 = vshrl.u32 %v4936, 7
        %v4938 = vsub.s32 3, %v4937
        %v4939 = vrot.slane %v322, %v4938
        %v4940 = vlaneseq
        %v4941 = vshrl.u32 %v4940, 7
        %v4942 = vsub.s32 3, %v4941
        %v4943 = vrot.slane %v323, %v4942
        %v4944 = vlaneseq
        %v4945 = vshrl.u32 %v4944, 7
        %v4946 = vsub.s32 3, %v4945
        %v4947 = vrot.slane %v324, %v4946
        %v4948 = vlaneseq
        %v4949 = vshrl.u32 %v4948, 7
        %v4950 = vsub.s32 3, %v4949
        %v4951 = vrot.slane %v325, %v4950
        %v4952 = vlaneseq
        %v4953 = vshrl.u32 %v4952, 7
        %v4954 = vsub.s32 3, %v4953
        %v4955 = vrot.slane %v326, %v4954
        %v4956 = vlaneseq
        %v4957 = vshrl.u32 %v4956, 7
        %v4958 = vsub.s32 3, %v4957
        %v4959 = vrot.slane %v327, %v4958
        %v4960 = vlaneseq
        %v4961 = vshrl.u32 %v4960, 7
        %v4962 = vsub.s32 3, %v4961
        %v4963 = vrot.slane %v328, %v4962
        %v4964 = vlaneseq
        %v4965 = vshrl.u32 %v4964, 7
        %v4966 = vsub.s32 3, %v4965
        %v4967 = vrot.slane %v329, %v4966
        %4968 = vmatprep.subr.mxu0 %v3913
        %4969 = vmatpush1.msra.mxu0 %v3912
        %4970 = vmatprep.subr.mxu0 %v3921
        %4971 = vmatpush1.msra.mxu0 %v3920
        %4972 = vmatprep.subr.mxu0 %v3929
        %4973 = vmatpush1.msra.mxu0 %v3928
        %4974 = vmatprep.subr.mxu0 %v3937
        %4975 = vmatpush1.msra.mxu0 %v3936
        %4976 = vmatprep.subr.mxu0 %v3945
        %4977 = vmatpush1.msra.mxu0 %v3944
        %4978 = vmatprep.subr.mxu0 %v3953
        %4979 = vmatpush1.msra.mxu0 %v3952
        %4980 = vmatprep.subr.mxu0 %v3961
        %4981 = vmatpush1.msra.mxu0 %v3960
        %4982 = vmatprep.subr.mxu0 %v3969
        %4983 = vmatpush1.msra.mxu0 %v3968
        %4984 = vmatprep.subr.mxu0 %v3977
        %4985 = vmatpush1.msra.mxu0 %v3976
        %4986 = vmatprep.subr.mxu0 %v3985
        %4987 = vmatpush1.msra.mxu0 %v3984
        %4988 = vmatprep.subr.mxu0 %v3993
        %4989 = vmatpush1.msra.mxu0 %v3992
        %4990 = vmatprep.subr.mxu0 %v4001
        %4991 = vmatpush1.msra.mxu0 %v4000
        %4992 = vmatprep.subr.mxu0 %v4009
        %4993 = vmatpush1.msra.mxu0 %v4008
        %4994 = vmatprep.subr.mxu0 %v4017
        %4995 = vmatpush1.msra.mxu0 %v4016
        %4996 = vmatprep.subr.mxu0 %v4025
        %4997 = vmatpush1.msra.mxu0 %v4024
        %4998 = vmatprep.subr.mxu0 %v4033
        %4999 = vmatpush1.msra.mxu0 %v4032
        %5000 = vmatprep.subr.mxu0 %v4041
        %5001 = vmatpush1.msra.mxu0 %v4040
        %5002 = vmatprep.subr.mxu0 %v4049
        %5003 = vmatpush1.msra.mxu0 %v4048
        %5004 = vmatprep.subr.mxu0 %v4057
        %5005 = vmatpush1.msra.mxu0 %v4056
        %5006 = vmatprep.subr.mxu0 %v4065
        %5007 = vmatpush1.msra.mxu0 %v4064
        %5008 = vmatprep.subr.mxu0 %v4073
        %5009 = vmatpush1.msra.mxu0 %v4072
        %5010 = vmatprep.subr.mxu0 %v4081
        %5011 = vmatpush1.msra.mxu0 %v4080
        %5012 = vmatprep.subr.mxu0 %v4089
        %5013 = vmatpush1.msra.mxu0 %v4088
        %5014 = vmatprep.subr.mxu0 %v4097
        %5015 = vmatpush1.msra.mxu0 %v4096
        %5016 = vmatprep.subr.mxu0 %v4105
        %5017 = vmatpush1.msra.mxu0 %v4104
        %5018 = vmatprep.subr.mxu0 %v4113
        %5019 = vmatpush1.msra.mxu0 %v4112
        %5020 = vmatprep.subr.mxu0 %v4121
        %5021 = vmatpush1.msra.mxu0 %v4120
        %5022 = vmatprep.subr.mxu0 %v4129
        %5023 = vmatpush1.msra.mxu0 %v4128
        %5024 = vmatprep.subr.mxu0 %v4137
        %5025 = vmatpush1.msra.mxu0 %v4136
        %5026 = vmatprep.subr.mxu0 %v4145
        %5027 = vmatpush1.msra.mxu0 %v4144
        %5028 = vmatprep.subr.mxu0 %v4153
        %5029 = vmatpush1.msra.mxu0 %v4152
        %5030 = vmatprep.subr.mxu0 %v4161
        %5031 = vmatpush1.msra.mxu0 %v4160
        %5032 = vmatprep.mubr.f32.mxu0 %v3905
        %5033 = vmatmul.mubr.f32.gmra.mrb[0].mxu0 %v3904
        %v5034 = vpop.f32.mrb[0].mxu0
        %v5035 = vadd.f32 %v4939, %v5034
        %v5036 = vpop.f32.mrb[0].mxu0
        %v5037 = vadd.f32 %v4943, %v5036
        %5038 = vdwg.mxu0
        %5039 = vmatprep.subr.mxu0 %v4169
        %5040 = vmatpush1.msra.mxu0 %v4168
        %5041 = vmatprep.subr.mxu0 %v4177
        %5042 = vmatpush1.msra.mxu0 %v4176
        %5043 = vmatprep.subr.mxu0 %v4185
        %5044 = vmatpush1.msra.mxu0 %v4184
        %5045 = vmatprep.subr.mxu0 %v4193
        %5046 = vmatpush1.msra.mxu0 %v4192
        %5047 = vmatprep.subr.mxu0 %v4201
        %5048 = vmatpush1.msra.mxu0 %v4200
        %5049 = vmatprep.subr.mxu0 %v4209
        %5050 = vmatpush1.msra.mxu0 %v4208
        %5051 = vmatprep.subr.mxu0 %v4217
        %5052 = vmatpush1.msra.mxu0 %v4216
        %5053 = vmatprep.subr.mxu0 %v4225
        %5054 = vmatpush1.msra.mxu0 %v4224
        %5055 = vmatprep.subr.mxu0 %v4233
        %5056 = vmatpush1.msra.mxu0 %v4232
        %5057 = vmatprep.subr.mxu0 %v4241
        %5058 = vmatpush1.msra.mxu0 %v4240
        %5059 = vmatprep.subr.mxu0 %v4249
        %5060 = vmatpush1.msra.mxu0 %v4248
        %5061 = vmatprep.subr.mxu0 %v4257
        %5062 = vmatpush1.msra.mxu0 %v4256
        %5063 = vmatprep.subr.mxu0 %v4265
        %5064 = vmatpush1.msra.mxu0 %v4264
        %5065 = vmatprep.subr.mxu0 %v4273
        %5066 = vmatpush1.msra.mxu0 %v4272
        %5067 = vmatprep.subr.mxu0 %v4281
        %5068 = vmatpush1.msra.mxu0 %v4280
        %5069 = vmatprep.subr.mxu0 %v4289
        %5070 = vmatpush1.msra.mxu0 %v4288
        %5071 = vmatprep.subr.mxu0 %v4297
        %5072 = vmatpush1.msra.mxu0 %v4296
        %5073 = vmatprep.subr.mxu0 %v4305
        %5074 = vmatpush1.msra.mxu0 %v4304
        %5075 = vmatprep.subr.mxu0 %v4313
        %5076 = vmatpush1.msra.mxu0 %v4312
        %5077 = vmatprep.subr.mxu0 %v4321
        %5078 = vmatpush1.msra.mxu0 %v4320
        %5079 = vmatprep.subr.mxu0 %v4329
        %5080 = vmatpush1.msra.mxu0 %v4328
        %5081 = vmatprep.subr.mxu0 %v4337
        %5082 = vmatpush1.msra.mxu0 %v4336
        %5083 = vmatprep.subr.mxu0 %v4345
        %5084 = vmatpush1.msra.mxu0 %v4344
        %5085 = vmatprep.subr.mxu0 %v4353
        %5086 = vmatpush1.msra.mxu0 %v4352
        %5087 = vmatprep.subr.mxu0 %v4361
        %5088 = vmatpush1.msra.mxu0 %v4360
        %5089 = vmatprep.subr.mxu0 %v4369
        %5090 = vmatpush1.msra.mxu0 %v4368
        %5091 = vmatprep.subr.mxu0 %v4377
        %5092 = vmatpush1.msra.mxu0 %v4376
        %5093 = vmatprep.subr.mxu0 %v4385
        %5094 = vmatpush1.msra.mxu0 %v4384
        %5095 = vmatprep.subr.mxu0 %v4393
        %5096 = vmatpush1.msra.mxu0 %v4392
        %5097 = vmatprep.subr.mxu0 %v4401
        %5098 = vmatpush1.msra.mxu0 %v4400
        %5099 = vmatprep.subr.mxu0 %v4409
        %5100 = vmatpush1.msra.mxu0 %v4408
        %5101 = vmatprep.subr.mxu0 %v4417
        %5102 = vmatpush1.msra.mxu0 %v4416
        %5103 = vmatprep.mubr.f32.mxu0 %v3907
        %5104 = vmatmul.mubr.f32.gmra.mrb[0].mxu0 %v3906
        %v5105 = vpop.f32.mrb[0].mxu0
        %v5106 = vadd.f32 %v5035, %v5105
        %v5107 = vpop.f32.mrb[0].mxu0
        %v5108 = vadd.f32 %v5037, %v5107
        %5109 = vdwg.mxu0
        %5110 = vmatprep.subr.mxu0 %v4425
        %5111 = vmatpush1.msra.mxu0 %v4424
        %5112 = vmatprep.subr.mxu0 %v4433
        %5113 = vmatpush1.msra.mxu0 %v4432
        %5114 = vmatprep.subr.mxu0 %v4441
        %5115 = vmatpush1.msra.mxu0 %v4440
        %5116 = vmatprep.subr.mxu0 %v4449
        %5117 = vmatpush1.msra.mxu0 %v4448
        %5118 = vmatprep.subr.mxu0 %v4457
        %5119 = vmatpush1.msra.mxu0 %v4456
        %5120 = vmatprep.subr.mxu0 %v4465
        %5121 = vmatpush1.msra.mxu0 %v4464
        %5122 = vmatprep.subr.mxu0 %v4473
        %5123 = vmatpush1.msra.mxu0 %v4472
        %5124 = vmatprep.subr.mxu0 %v4481
        %5125 = vmatpush1.msra.mxu0 %v4480
        %5126 = vmatprep.subr.mxu0 %v4489
        %5127 = vmatpush1.msra.mxu0 %v4488
        %5128 = vmatprep.subr.mxu0 %v4497
        %5129 = vmatpush1.msra.mxu0 %v4496
        %5130 = vmatprep.subr.mxu0 %v4505
        %5131 = vmatpush1.msra.mxu0 %v4504
        %5132 = vmatprep.subr.mxu0 %v4513
        %5133 = vmatpush1.msra.mxu0 %v4512
        %5134 = vmatprep.subr.mxu0 %v4521
        %5135 = vmatpush1.msra.mxu0 %v4520
        %5136 = vmatprep.subr.mxu0 %v4529
        %5137 = vmatpush1.msra.mxu0 %v4528
        %5138 = vmatprep.subr.mxu0 %v4537
        %5139 = vmatpush1.msra.mxu0 %v4536
        %5140 = vmatprep.subr.mxu0 %v4545
        %5141 = vmatpush1.msra.mxu0 %v4544
        %5142 = vmatprep.subr.mxu0 %v4553
        %5143 = vmatpush1.msra.mxu0 %v4552
        %5144 = vmatprep.subr.mxu0 %v4561
        %5145 = vmatpush1.msra.mxu0 %v4560
        %5146 = vmatprep.subr.mxu0 %v4569
        %5147 = vmatpush1.msra.mxu0 %v4568
        %5148 = vmatprep.subr.mxu0 %v4577
        %5149 = vmatpush1.msra.mxu0 %v4576
        %5150 = vmatprep.subr.mxu0 %v4585
        %5151 = vmatpush1.msra.mxu0 %v4584
        %5152 = vmatprep.subr.mxu0 %v4593
        %5153 = vmatpush1.msra.mxu0 %v4592
        %5154 = vmatprep.subr.mxu0 %v4601
        %5155 = vmatpush1.msra.mxu0 %v4600
        %5156 = vmatprep.subr.mxu0 %v4609
        %5157 = vmatpush1.msra.mxu0 %v4608
        %5158 = vmatprep.subr.mxu0 %v4617
        %5159 = vmatpush1.msra.mxu0 %v4616
        %5160 = vmatprep.subr.mxu0 %v4625
        %5161 = vmatpush1.msra.mxu0 %v4624
        %5162 = vmatprep.subr.mxu0 %v4633
        %5163 = vmatpush1.msra.mxu0 %v4632
        %5164 = vmatprep.subr.mxu0 %v4641
        %5165 = vmatpush1.msra.mxu0 %v4640
        %5166 = vmatprep.subr.mxu0 %v4649
        %5167 = vmatpush1.msra.mxu0 %v4648
        %5168 = vmatprep.subr.mxu0 %v4657
        %5169 = vmatpush1.msra.mxu0 %v4656
        %5170 = vmatprep.subr.mxu0 %v4665
        %5171 = vmatpush1.msra.mxu0 %v4664
        %5172 = vmatprep.subr.mxu0 %v4673
        %5173 = vmatpush1.msra.mxu0 %v4672
        %5174 = vmatprep.mubr.f32.mxu0 %v3909
        %5175 = vmatmul.mubr.f32.gmra.mrb[0].mxu0 %v3908
        %v5176 = vpop.f32.mrb[0].mxu0
        %v5177 = vadd.f32 %v5106, %v5176
        %v5178 = vpop.f32.mrb[0].mxu0
        %v5179 = vadd.f32 %v5108, %v5178
        %5180 = vdwg.mxu0
        %5181 = vmatprep.subr.mxu0 %v4681
        %5182 = vmatpush1.msra.mxu0 %v4680
        %5183 = vmatprep.subr.mxu0 %v4689
        %5184 = vmatpush1.msra.mxu0 %v4688
        %5185 = vmatprep.subr.mxu0 %v4697
        %5186 = vmatpush1.msra.mxu0 %v4696
        %5187 = vmatprep.subr.mxu0 %v4705
        %5188 = vmatpush1.msra.mxu0 %v4704
        %5189 = vmatprep.subr.mxu0 %v4713
        %5190 = vmatpush1.msra.mxu0 %v4712
        %5191 = vmatprep.subr.mxu0 %v4721
        %5192 = vmatpush1.msra.mxu0 %v4720
        %5193 = vmatprep.subr.mxu0 %v4729
        %5194 = vmatpush1.msra.mxu0 %v4728
        %5195 = vmatprep.subr.mxu0 %v4737
        %5196 = vmatpush1.msra.mxu0 %v4736
        %5197 = vmatprep.subr.mxu0 %v4745
        %5198 = vmatpush1.msra.mxu0 %v4744
        %5199 = vmatprep.subr.mxu0 %v4753
        %5200 = vmatpush1.msra.mxu0 %v4752
        %5201 = vmatprep.subr.mxu0 %v4761
        %5202 = vmatpush1.msra.mxu0 %v4760
        %5203 = vmatprep.subr.mxu0 %v4769
        %5204 = vmatpush1.msra.mxu0 %v4768
        %5205 = vmatprep.subr.mxu0 %v4777
        %5206 = vmatpush1.msra.mxu0 %v4776
        %5207 = vmatprep.subr.mxu0 %v4785
        %5208 = vmatpush1.msra.mxu0 %v4784
        %5209 = vmatprep.subr.mxu0 %v4793
        %5210 = vmatpush1.msra.mxu0 %v4792
        %5211 = vmatprep.subr.mxu0 %v4801
        %5212 = vmatpush1.msra.mxu0 %v4800
        %5213 = vmatprep.subr.mxu0 %v4809
        %5214 = vmatpush1.msra.mxu0 %v4808
        %5215 = vmatprep.subr.mxu0 %v4817
        %5216 = vmatpush1.msra.mxu0 %v4816
        %5217 = vmatprep.subr.mxu0 %v4825
        %5218 = vmatpush1.msra.mxu0 %v4824
        %5219 = vmatprep.subr.mxu0 %v4833
        %5220 = vmatpush1.msra.mxu0 %v4832
        %5221 = vmatprep.subr.mxu0 %v4841
        %5222 = vmatpush1.msra.mxu0 %v4840
        %5223 = vmatprep.subr.mxu0 %v4849
        %5224 = vmatpush1.msra.mxu0 %v4848
        %5225 = vmatprep.subr.mxu0 %v4857
        %5226 = vmatpush1.msra.mxu0 %v4856
        %5227 = vmatprep.subr.mxu0 %v4865
        %5228 = vmatpush1.msra.mxu0 %v4864
        %5229 = vmatprep.subr.mxu0 %v4873
        %5230 = vmatpush1.msra.mxu0 %v4872
        %5231 = vmatprep.subr.mxu0 %v4881
        %5232 = vmatpush1.msra.mxu0 %v4880
        %5233 = vmatprep.subr.mxu0 %v4889
        %5234 = vmatpush1.msra.mxu0 %v4888
        %5235 = vmatprep.subr.mxu0 %v4897
        %5236 = vmatpush1.msra.mxu0 %v4896
        %5237 = vmatprep.subr.mxu0 %v4905
        %5238 = vmatpush1.msra.mxu0 %v4904
        %5239 = vmatprep.subr.mxu0 %v4913
        %5240 = vmatpush1.msra.mxu0 %v4912
        %5241 = vmatprep.subr.mxu0 %v4921
        %5242 = vmatpush1.msra.mxu0 %v4920
        %5243 = vmatprep.subr.mxu0 %v4929
        %5244 = vmatpush1.msra.mxu0 %v4928
        %5245 = vmatprep.mubr.f32.mxu0 %v3911
        %5246 = vmatmul.mubr.f32.gmra.mrb[0].mxu0 %v3910
        %v5247 = vpop.f32.mrb[0].mxu0
        %v5248 = vadd.f32 %v5177, %v5247
        %v5249 = vpop.f32.mrb[0].mxu0
        %v5250 = vadd.f32 %v5179, %v5249
        %5251 = vdwg.mxu0
        %5252 = vmatprep.subr.mxu0 %v3915
        %5253 = vmatpush1.msra.mxu0 %v3914
        %5254 = vmatprep.subr.mxu0 %v3923
        %5255 = vmatpush1.msra.mxu0 %v3922
        %5256 = vmatprep.subr.mxu0 %v3931
        %5257 = vmatpush1.msra.mxu0 %v3930
        %5258 = vmatprep.subr.mxu0 %v3939
        %5259 = vmatpush1.msra.mxu0 %v3938
        %5260 = vmatprep.subr.mxu0 %v3947
        %5261 = vmatpush1.msra.mxu0 %v3946
        %5262 = vmatprep.subr.mxu0 %v3955
        %5263 = vmatpush1.msra.mxu0 %v3954
        %5264 = vmatprep.subr.mxu0 %v3963
        %5265 = vmatpush1.msra.mxu0 %v3962
        %5266 = vmatprep.subr.mxu0 %v3971
        %5267 = vmatpush1.msra.mxu0 %v3970
        %5268 = vmatprep.subr.mxu0 %v3979
        %5269 = vmatpush1.msra.mxu0 %v3978
        %5270 = vmatprep.subr.mxu0 %v3987
        %5271 = vmatpush1.msra.mxu0 %v3986
        %5272 = vmatprep.subr.mxu0 %v3995
        %5273 = vmatpush1.msra.mxu0 %v3994
        %5274 = vmatprep.subr.mxu0 %v4003
        %5275 = vmatpush1.msra.mxu0 %v4002
        %5276 = vmatprep.subr.mxu0 %v4011
        %5277 = vmatpush1.msra.mxu0 %v4010
        %5278 = vmatprep.subr.mxu0 %v4019
        %5279 = vmatpush1.msra.mxu0 %v4018
        %5280 = vmatprep.subr.mxu0 %v4027
        %5281 = vmatpush1.msra.mxu0 %v4026
        %5282 = vmatprep.subr.mxu0 %v4035
        %5283 = vmatpush1.msra.mxu0 %v4034
        %5284 = vmatprep.subr.mxu0 %v4043
        %5285 = vmatpush1.msra.mxu0 %v4042
        %5286 = vmatprep.subr.mxu0 %v4051
        %5287 = vmatpush1.msra.mxu0 %v4050
        %5288 = vmatprep.subr.mxu0 %v4059
        %5289 = vmatpush1.msra.mxu0 %v4058
        %5290 = vmatprep.subr.mxu0 %v4067
        %5291 = vmatpush1.msra.mxu0 %v4066
        %5292 = vmatprep.subr.mxu0 %v4075
        %5293 = vmatpush1.msra.mxu0 %v4074
        %5294 = vmatprep.subr.mxu0 %v4083
        %5295 = vmatpush1.msra.mxu0 %v4082
        %5296 = vmatprep.subr.mxu0 %v4091
        %5297 = vmatpush1.msra.mxu0 %v4090
        %5298 = vmatprep.subr.mxu0 %v4099
        %5299 = vmatpush1.msra.mxu0 %v4098
        %5300 = vmatprep.subr.mxu0 %v4107
        %5301 = vmatpush1.msra.mxu0 %v4106
        %5302 = vmatprep.subr.mxu0 %v4115
        %5303 = vmatpush1.msra.mxu0 %v4114
        %5304 = vmatprep.subr.mxu0 %v4123
        %5305 = vmatpush1.msra.mxu0 %v4122
        %5306 = vmatprep.subr.mxu0 %v4131
        %5307 = vmatpush1.msra.mxu0 %v4130
        %5308 = vmatprep.subr.mxu0 %v4139
        %5309 = vmatpush1.msra.mxu0 %v4138
        %5310 = vmatprep.subr.mxu0 %v4147
        %5311 = vmatpush1.msra.mxu0 %v4146
        %5312 = vmatprep.subr.mxu0 %v4155
        %5313 = vmatpush1.msra.mxu0 %v4154
        %5314 = vmatprep.subr.mxu0 %v4163
        %5315 = vmatpush1.msra.mxu0 %v4162
        %5316 = vmatprep.mubr.f32.mxu0 %v3905
        %5317 = vmatmul.mubr.f32.gmra.mrb[0].mxu0 %v3904
        %v5318 = vpop.f32.mrb[0].mxu0
        %v5319 = vadd.f32 %v4947, %v5318
        %v5320 = vpop.f32.mrb[0].mxu0
        %v5321 = vadd.f32 %v4951, %v5320
        %5322 = vdwg.mxu0
        %5323 = vmatprep.subr.mxu0 %v4171
        %5324 = vmatpush1.msra.mxu0 %v4170
        %5325 = vmatprep.subr.mxu0 %v4179
        %5326 = vmatpush1.msra.mxu0 %v4178
        %5327 = vmatprep.subr.mxu0 %v4187
        %5328 = vmatpush1.msra.mxu0 %v4186
        %5329 = vmatprep.subr.mxu0 %v4195
        %5330 = vmatpush1.msra.mxu0 %v4194
        %5331 = vmatprep.subr.mxu0 %v4203
        %5332 = vmatpush1.msra.mxu0 %v4202
        %5333 = vmatprep.subr.mxu0 %v4211
        %5334 = vmatpush1.msra.mxu0 %v4210
        %5335 = vmatprep.subr.mxu0 %v4219
        %5336 = vmatpush1.msra.mxu0 %v4218
        %5337 = vmatprep.subr.mxu0 %v4227
        %5338 = vmatpush1.msra.mxu0 %v4226
        %5339 = vmatprep.subr.mxu0 %v4235
        %5340 = vmatpush1.msra.mxu0 %v4234
        %5341 = vmatprep.subr.mxu0 %v4243
        %5342 = vmatpush1.msra.mxu0 %v4242
        %5343 = vmatprep.subr.mxu0 %v4251
        %5344 = vmatpush1.msra.mxu0 %v4250
        %5345 = vmatprep.subr.mxu0 %v4259
        %5346 = vmatpush1.msra.mxu0 %v4258
        %5347 = vmatprep.subr.mxu0 %v4267
        %5348 = vmatpush1.msra.mxu0 %v4266
        %5349 = vmatprep.subr.mxu0 %v4275
        %5350 = vmatpush1.msra.mxu0 %v4274
        %5351 = vmatprep.subr.mxu0 %v4283
        %5352 = vmatpush1.msra.mxu0 %v4282
        %5353 = vmatprep.subr.mxu0 %v4291
        %5354 = vmatpush1.msra.mxu0 %v4290
        %5355 = vmatprep.subr.mxu0 %v4299
        %5356 = vmatpush1.msra.mxu0 %v4298
        %5357 = vmatprep.subr.mxu0 %v4307
        %5358 = vmatpush1.msra.mxu0 %v4306
        %5359 = vmatprep.subr.mxu0 %v4315
        %5360 = vmatpush1.msra.mxu0 %v4314
        %5361 = vmatprep.subr.mxu0 %v4323
        %5362 = vmatpush1.msra.mxu0 %v4322
        %5363 = vmatprep.subr.mxu0 %v4331
        %5364 = vmatpush1.msra.mxu0 %v4330
        %5365 = vmatprep.subr.mxu0 %v4339
        %5366 = vmatpush1.msra.mxu0 %v4338
        %5367 = vmatprep.subr.mxu0 %v4347
        %5368 = vmatpush1.msra.mxu0 %v4346
        %5369 = vmatprep.subr.mxu0 %v4355
        %5370 = vmatpush1.msra.mxu0 %v4354
        %5371 = vmatprep.subr.mxu0 %v4363
        %5372 = vmatpush1.msra.mxu0 %v4362
        %5373 = vmatprep.subr.mxu0 %v4371
        %5374 = vmatpush1.msra.mxu0 %v4370
        %5375 = vmatprep.subr.mxu0 %v4379
        %5376 = vmatpush1.msra.mxu0 %v4378
        %5377 = vmatprep.subr.mxu0 %v4387
        %5378 = vmatpush1.msra.mxu0 %v4386
        %5379 = vmatprep.subr.mxu0 %v4395
        %5380 = vmatpush1.msra.mxu0 %v4394
        %5381 = vmatprep.subr.mxu0 %v4403
        %5382 = vmatpush1.msra.mxu0 %v4402
        %5383 = vmatprep.subr.mxu0 %v4411
        %5384 = vmatpush1.msra.mxu0 %v4410
        %5385 = vmatprep.subr.mxu0 %v4419
        %5386 = vmatpush1.msra.mxu0 %v4418
        %5387 = vmatprep.mubr.f32.mxu0 %v3907
        %5388 = vmatmul.mubr.f32.gmra.mrb[0].mxu0 %v3906
        %v5389 = vpop.f32.mrb[0].mxu0
        %v5390 = vadd.f32 %v5319, %v5389
        %v5391 = vpop.f32.mrb[0].mxu0
        %v5392 = vadd.f32 %v5321, %v5391
        %5393 = vdwg.mxu0
        %5394 = vmatprep.subr.mxu0 %v4427
        %5395 = vmatpush1.msra.mxu0 %v4426
        %5396 = vmatprep.subr.mxu0 %v4435
        %5397 = vmatpush1.msra.mxu0 %v4434
        %5398 = vmatprep.subr.mxu0 %v4443
        %5399 = vmatpush1.msra.mxu0 %v4442
        %5400 = vmatprep.subr.mxu0 %v4451
        %5401 = vmatpush1.msra.mxu0 %v4450
        %5402 = vmatprep.subr.mxu0 %v4459
        %5403 = vmatpush1.msra.mxu0 %v4458
        %5404 = vmatprep.subr.mxu0 %v4467
        %5405 = vmatpush1.msra.mxu0 %v4466
        %5406 = vmatprep.subr.mxu0 %v4475
        %5407 = vmatpush1.msra.mxu0 %v4474
        %5408 = vmatprep.subr.mxu0 %v4483
        %5409 = vmatpush1.msra.mxu0 %v4482
        %5410 = vmatprep.subr.mxu0 %v4491
        %5411 = vmatpush1.msra.mxu0 %v4490
        %5412 = vmatprep.subr.mxu0 %v4499
        %5413 = vmatpush1.msra.mxu0 %v4498
        %5414 = vmatprep.subr.mxu0 %v4507
        %5415 = vmatpush1.msra.mxu0 %v4506
        %5416 = vmatprep.subr.mxu0 %v4515
        %5417 = vmatpush1.msra.mxu0 %v4514
        %5418 = vmatprep.subr.mxu0 %v4523
        %5419 = vmatpush1.msra.mxu0 %v4522
        %5420 = vmatprep.subr.mxu0 %v4531
        %5421 = vmatpush1.msra.mxu0 %v4530
        %5422 = vmatprep.subr.mxu0 %v4539
        %5423 = vmatpush1.msra.mxu0 %v4538
        %5424 = vmatprep.subr.mxu0 %v4547
        %5425 = vmatpush1.msra.mxu0 %v4546
        %5426 = vmatprep.subr.mxu0 %v4555
        %5427 = vmatpush1.msra.mxu0 %v4554
        %5428 = vmatprep.subr.mxu0 %v4563
        %5429 = vmatpush1.msra.mxu0 %v4562
        %5430 = vmatprep.subr.mxu0 %v4571
        %5431 = vmatpush1.msra.mxu0 %v4570
        %5432 = vmatprep.subr.mxu0 %v4579
        %5433 = vmatpush1.msra.mxu0 %v4578
        %5434 = vmatprep.subr.mxu0 %v4587
        %5435 = vmatpush1.msra.mxu0 %v4586
        %5436 = vmatprep.subr.mxu0 %v4595
        %5437 = vmatpush1.msra.mxu0 %v4594
        %5438 = vmatprep.subr.mxu0 %v4603
        %5439 = vmatpush1.msra.mxu0 %v4602
        %5440 = vmatprep.subr.mxu0 %v4611
        %5441 = vmatpush1.msra.mxu0 %v4610
        %5442 = vmatprep.subr.mxu0 %v4619
        %5443 = vmatpush1.msra.mxu0 %v4618
        %5444 = vmatprep.subr.mxu0 %v4627
        %5445 = vmatpush1.msra.mxu0 %v4626
        %5446 = vmatprep.subr.mxu0 %v4635
        %5447 = vmatpush1.msra.mxu0 %v4634
        %5448 = vmatprep.subr.mxu0 %v4643
        %5449 = vmatpush1.msra.mxu0 %v4642
        %5450 = vmatprep.subr.mxu0 %v4651
        %5451 = vmatpush1.msra.mxu0 %v4650
        %5452 = vmatprep.subr.mxu0 %v4659
        %5453 = vmatpush1.msra.mxu0 %v4658
        %5454 = vmatprep.subr.mxu0 %v4667
        %5455 = vmatpush1.msra.mxu0 %v4666
        %5456 = vmatprep.subr.mxu0 %v4675
        %5457 = vmatpush1.msra.mxu0 %v4674
        %5458 = vmatprep.mubr.f32.mxu0 %v3909
        %5459 = vmatmul.mubr.f32.gmra.mrb[0].mxu0 %v3908
        %v5460 = vpop.f32.mrb[0].mxu0
        %v5461 = vadd.f32 %v5390, %v5460
        %v5462 = vpop.f32.mrb[0].mxu0
        %v5463 = vadd.f32 %v5392, %v5462
        %5464 = vdwg.mxu0
        %5465 = vmatprep.subr.mxu0 %v4683
        %5466 = vmatpush1.msra.mxu0 %v4682
        %5467 = vmatprep.subr.mxu0 %v4691
        %5468 = vmatpush1.msra.mxu0 %v4690
        %5469 = vmatprep.subr.mxu0 %v4699
        %5470 = vmatpush1.msra.mxu0 %v4698
        %5471 = vmatprep.subr.mxu0 %v4707
        %5472 = vmatpush1.msra.mxu0 %v4706
        %5473 = vmatprep.subr.mxu0 %v4715
        %5474 = vmatpush1.msra.mxu0 %v4714
        %5475 = vmatprep.subr.mxu0 %v4723
        %5476 = vmatpush1.msra.mxu0 %v4722
        %5477 = vmatprep.subr.mxu0 %v4731
        %5478 = vmatpush1.msra.mxu0 %v4730
        %5479 = vmatprep.subr.mxu0 %v4739
        %5480 = vmatpush1.msra.mxu0 %v4738
        %5481 = vmatprep.subr.mxu0 %v4747
        %5482 = vmatpush1.msra.mxu0 %v4746
        %5483 = vmatprep.subr.mxu0 %v4755
        %5484 = vmatpush1.msra.mxu0 %v4754
        %5485 = vmatprep.subr.mxu0 %v4763
        %5486 = vmatpush1.msra.mxu0 %v4762
        %5487 = vmatprep.subr.mxu0 %v4771
        %5488 = vmatpush1.msra.mxu0 %v4770
        %5489 = vmatprep.subr.mxu0 %v4779
        %5490 = vmatpush1.msra.mxu0 %v4778
        %5491 = vmatprep.subr.mxu0 %v4787
        %5492 = vmatpush1.msra.mxu0 %v4786
        %5493 = vmatprep.subr.mxu0 %v4795
        %5494 = vmatpush1.msra.mxu0 %v4794
        %5495 = vmatprep.subr.mxu0 %v4803
        %5496 = vmatpush1.msra.mxu0 %v4802
        %5497 = vmatprep.subr.mxu0 %v4811
        %5498 = vmatpush1.msra.mxu0 %v4810
        %5499 = vmatprep.subr.mxu0 %v4819
        %5500 = vmatpush1.msra.mxu0 %v4818
        %5501 = vmatprep.subr.mxu0 %v4827
        %5502 = vmatpush1.msra.mxu0 %v4826
        %5503 = vmatprep.subr.mxu0 %v4835
        %5504 = vmatpush1.msra.mxu0 %v4834
        %5505 = vmatprep.subr.mxu0 %v4843
        %5506 = vmatpush1.msra.mxu0 %v4842
        %5507 = vmatprep.subr.mxu0 %v4851
        %5508 = vmatpush1.msra.mxu0 %v4850
        %5509 = vmatprep.subr.mxu0 %v4859
        %5510 = vmatpush1.msra.mxu0 %v4858
        %5511 = vmatprep.subr.mxu0 %v4867
        %5512 = vmatpush1.msra.mxu0 %v4866
        %5513 = vmatprep.subr.mxu0 %v4875
        %5514 = vmatpush1.msra.mxu0 %v4874
        %5515 = vmatprep.subr.mxu0 %v4883
        %5516 = vmatpush1.msra.mxu0 %v4882
        %5517 = vmatprep.subr.mxu0 %v4891
        %5518 = vmatpush1.msra.mxu0 %v4890
        %5519 = vmatprep.subr.mxu0 %v4899
        %5520 = vmatpush1.msra.mxu0 %v4898
        %5521 = vmatprep.subr.mxu0 %v4907
        %5522 = vmatpush1.msra.mxu0 %v4906
        %5523 = vmatprep.subr.mxu0 %v4915
        %5524 = vmatpush1.msra.mxu0 %v4914
        %5525 = vmatprep.subr.mxu0 %v4923
        %5526 = vmatpush1.msra.mxu0 %v4922
        %5527 = vmatprep.subr.mxu0 %v4931
        %5528 = vmatpush1.msra.mxu0 %v4930
        %5529 = vmatprep.mubr.f32.mxu0 %v3911
        %5530 = vmatmul.mubr.f32.gmra.mrb[0].mxu0 %v3910
        %v5531 = vpop.f32.mrb[0].mxu0
        %v5532 = vadd.f32 %v5461, %v5531
        %v5533 = vpop.f32.mrb[0].mxu0
        %v5534 = vadd.f32 %v5463, %v5533
        %5535 = vdwg.mxu0
        %5536 = vmatprep.subr.mxu0 %v3917
        %5537 = vmatpush1.msra.mxu0 %v3916
        %5538 = vmatprep.subr.mxu0 %v3925
        %5539 = vmatpush1.msra.mxu0 %v3924
        %5540 = vmatprep.subr.mxu0 %v3933
        %5541 = vmatpush1.msra.mxu0 %v3932
        %5542 = vmatprep.subr.mxu0 %v3941
        %5543 = vmatpush1.msra.mxu0 %v3940
        %5544 = vmatprep.subr.mxu0 %v3949
        %5545 = vmatpush1.msra.mxu0 %v3948
        %5546 = vmatprep.subr.mxu0 %v3957
        %5547 = vmatpush1.msra.mxu0 %v3956
        %5548 = vmatprep.subr.mxu0 %v3965
        %5549 = vmatpush1.msra.mxu0 %v3964
        %5550 = vmatprep.subr.mxu0 %v3973
        %5551 = vmatpush1.msra.mxu0 %v3972
        %5552 = vmatprep.subr.mxu0 %v3981
        %5553 = vmatpush1.msra.mxu0 %v3980
        %5554 = vmatprep.subr.mxu0 %v3989
        %5555 = vmatpush1.msra.mxu0 %v3988
        %5556 = vmatprep.subr.mxu0 %v3997
        %5557 = vmatpush1.msra.mxu0 %v3996
        %5558 = vmatprep.subr.mxu0 %v4005
        %5559 = vmatpush1.msra.mxu0 %v4004
        %5560 = vmatprep.subr.mxu0 %v4013
        %5561 = vmatpush1.msra.mxu0 %v4012
        %5562 = vmatprep.subr.mxu0 %v4021
        %5563 = vmatpush1.msra.mxu0 %v4020
        %5564 = vmatprep.subr.mxu0 %v4029
        %5565 = vmatpush1.msra.mxu0 %v4028
        %5566 = vmatprep.subr.mxu0 %v4037
        %5567 = vmatpush1.msra.mxu0 %v4036
        %5568 = vmatprep.subr.mxu0 %v4045
        %5569 = vmatpush1.msra.mxu0 %v4044
        %5570 = vmatprep.subr.mxu0 %v4053
        %5571 = vmatpush1.msra.mxu0 %v4052
        %5572 = vmatprep.subr.mxu0 %v4061
        %5573 = vmatpush1.msra.mxu0 %v4060
        %5574 = vmatprep.subr.mxu0 %v4069
        %5575 = vmatpush1.msra.mxu0 %v4068
        %5576 = vmatprep.subr.mxu0 %v4077
        %5577 = vmatpush1.msra.mxu0 %v4076
        %5578 = vmatprep.subr.mxu0 %v4085
        %5579 = vmatpush1.msra.mxu0 %v4084
        %5580 = vmatprep.subr.mxu0 %v4093
        %5581 = vmatpush1.msra.mxu0 %v4092
        %5582 = vmatprep.subr.mxu0 %v4101
        %5583 = vmatpush1.msra.mxu0 %v4100
        %5584 = vmatprep.subr.mxu0 %v4109
        %5585 = vmatpush1.msra.mxu0 %v4108
        %5586 = vmatprep.subr.mxu0 %v4117
        %5587 = vmatpush1.msra.mxu0 %v4116
        %5588 = vmatprep.subr.mxu0 %v4125
        %5589 = vmatpush1.msra.mxu0 %v4124
        %5590 = vmatprep.subr.mxu0 %v4133
        %5591 = vmatpush1.msra.mxu0 %v4132
        %5592 = vmatprep.subr.mxu0 %v4141
        %5593 = vmatpush1.msra.mxu0 %v4140
        %5594 = vmatprep.subr.mxu0 %v4149
        %5595 = vmatpush1.msra.mxu0 %v4148
        %5596 = vmatprep.subr.mxu0 %v4157
        %5597 = vmatpush1.msra.mxu0 %v4156
        %5598 = vmatprep.subr.mxu0 %v4165
        %5599 = vmatpush1.msra.mxu0 %v4164
        %5600 = vmatprep.mubr.f32.mxu0 %v3905
        %5601 = vmatmul.mubr.f32.gmra.mrb[0].mxu0 %v3904
        %v5602 = vpop.f32.mrb[0].mxu0
        %v5603 = vadd.f32 %v4955, %v5602
        %v5604 = vpop.f32.mrb[0].mxu0
        %v5605 = vadd.f32 %v4959, %v5604
        %5606 = vdwg.mxu0
        %5607 = vmatprep.subr.mxu0 %v4173
        %5608 = vmatpush1.msra.mxu0 %v4172
        %5609 = vmatprep.subr.mxu0 %v4181
        %5610 = vmatpush1.msra.mxu0 %v4180
        %5611 = vmatprep.subr.mxu0 %v4189
        %5612 = vmatpush1.msra.mxu0 %v4188
        %5613 = vmatprep.subr.mxu0 %v4197
        %5614 = vmatpush1.msra.mxu0 %v4196
        %5615 = vmatprep.subr.mxu0 %v4205
        %5616 = vmatpush1.msra.mxu0 %v4204
        %5617 = vmatprep.subr.mxu0 %v4213
        %5618 = vmatpush1.msra.mxu0 %v4212
        %5619 = vmatprep.subr.mxu0 %v4221
        %5620 = vmatpush1.msra.mxu0 %v4220
        %5621 = vmatprep.subr.mxu0 %v4229
        %5622 = vmatpush1.msra.mxu0 %v4228
        %5623 = vmatprep.subr.mxu0 %v4237
        %5624 = vmatpush1.msra.mxu0 %v4236
        %5625 = vmatprep.subr.mxu0 %v4245
        %5626 = vmatpush1.msra.mxu0 %v4244
        %5627 = vmatprep.subr.mxu0 %v4253
        %5628 = vmatpush1.msra.mxu0 %v4252
        %5629 = vmatprep.subr.mxu0 %v4261
        %5630 = vmatpush1.msra.mxu0 %v4260
        %5631 = vmatprep.subr.mxu0 %v4269
        %5632 = vmatpush1.msra.mxu0 %v4268
        %5633 = vmatprep.subr.mxu0 %v4277
        %5634 = vmatpush1.msra.mxu0 %v4276
        %5635 = vmatprep.subr.mxu0 %v4285
        %5636 = vmatpush1.msra.mxu0 %v4284
        %5637 = vmatprep.subr.mxu0 %v4293
        %5638 = vmatpush1.msra.mxu0 %v4292
        %5639 = vmatprep.subr.mxu0 %v4301
        %5640 = vmatpush1.msra.mxu0 %v4300
        %5641 = vmatprep.subr.mxu0 %v4309
        %5642 = vmatpush1.msra.mxu0 %v4308
        %5643 = vmatprep.subr.mxu0 %v4317
        %5644 = vmatpush1.msra.mxu0 %v4316
        %5645 = vmatprep.subr.mxu0 %v4325
        %5646 = vmatpush1.msra.mxu0 %v4324
        %5647 = vmatprep.subr.mxu0 %v4333
        %5648 = vmatpush1.msra.mxu0 %v4332
        %5649 = vmatprep.subr.mxu0 %v4341
        %5650 = vmatpush1.msra.mxu0 %v4340
        %5651 = vmatprep.subr.mxu0 %v4349
        %5652 = vmatpush1.msra.mxu0 %v4348
        %5653 = vmatprep.subr.mxu0 %v4357
        %5654 = vmatpush1.msra.mxu0 %v4356
        %5655 = vmatprep.subr.mxu0 %v4365
        %5656 = vmatpush1.msra.mxu0 %v4364
        %5657 = vmatprep.subr.mxu0 %v4373
        %5658 = vmatpush1.msra.mxu0 %v4372
        %5659 = vmatprep.subr.mxu0 %v4381
        %5660 = vmatpush1.msra.mxu0 %v4380
        %5661 = vmatprep.subr.mxu0 %v4389
        %5662 = vmatpush1.msra.mxu0 %v4388
        %5663 = vmatprep.subr.mxu0 %v4397
        %5664 = vmatpush1.msra.mxu0 %v4396
        %5665 = vmatprep.subr.mxu0 %v4405
        %5666 = vmatpush1.msra.mxu0 %v4404
        %5667 = vmatprep.subr.mxu0 %v4413
        %5668 = vmatpush1.msra.mxu0 %v4412
        %5669 = vmatprep.subr.mxu0 %v4421
        %5670 = vmatpush1.msra.mxu0 %v4420
        %5671 = vmatprep.mubr.f32.mxu0 %v3907
        %5672 = vmatmul.mubr.f32.gmra.mrb[0].mxu0 %v3906
        %v5673 = vpop.f32.mrb[0].mxu0
        %v5674 = vadd.f32 %v5603, %v5673
        %v5675 = vpop.f32.mrb[0].mxu0
        %v5676 = vadd.f32 %v5605, %v5675
        %5677 = vdwg.mxu0
        %5678 = vmatprep.subr.mxu0 %v4429
        %5679 = vmatpush1.msra.mxu0 %v4428
        %5680 = vmatprep.subr.mxu0 %v4437
        %5681 = vmatpush1.msra.mxu0 %v4436
        %5682 = vmatprep.subr.mxu0 %v4445
        %5683 = vmatpush1.msra.mxu0 %v4444
        %5684 = vmatprep.subr.mxu0 %v4453
        %5685 = vmatpush1.msra.mxu0 %v4452
        %5686 = vmatprep.subr.mxu0 %v4461
        %5687 = vmatpush1.msra.mxu0 %v4460
        %5688 = vmatprep.subr.mxu0 %v4469
        %5689 = vmatpush1.msra.mxu0 %v4468
        %5690 = vmatprep.subr.mxu0 %v4477
        %5691 = vmatpush1.msra.mxu0 %v4476
        %5692 = vmatprep.subr.mxu0 %v4485
        %5693 = vmatpush1.msra.mxu0 %v4484
        %5694 = vmatprep.subr.mxu0 %v4493
        %5695 = vmatpush1.msra.mxu0 %v4492
        %5696 = vmatprep.subr.mxu0 %v4501
        %5697 = vmatpush1.msra.mxu0 %v4500
        %5698 = vmatprep.subr.mxu0 %v4509
        %5699 = vmatpush1.msra.mxu0 %v4508
        %5700 = vmatprep.subr.mxu0 %v4517
        %5701 = vmatpush1.msra.mxu0 %v4516
        %5702 = vmatprep.subr.mxu0 %v4525
        %5703 = vmatpush1.msra.mxu0 %v4524
        %5704 = vmatprep.subr.mxu0 %v4533
        %5705 = vmatpush1.msra.mxu0 %v4532
        %5706 = vmatprep.subr.mxu0 %v4541
        %5707 = vmatpush1.msra.mxu0 %v4540
        %5708 = vmatprep.subr.mxu0 %v4549
        %5709 = vmatpush1.msra.mxu0 %v4548
        %5710 = vmatprep.subr.mxu0 %v4557
        %5711 = vmatpush1.msra.mxu0 %v4556
        %5712 = vmatprep.subr.mxu0 %v4565
        %5713 = vmatpush1.msra.mxu0 %v4564
        %5714 = vmatprep.subr.mxu0 %v4573
        %5715 = vmatpush1.msra.mxu0 %v4572
        %5716 = vmatprep.subr.mxu0 %v4581
        %5717 = vmatpush1.msra.mxu0 %v4580
        %5718 = vmatprep.subr.mxu0 %v4589
        %5719 = vmatpush1.msra.mxu0 %v4588
        %5720 = vmatprep.subr.mxu0 %v4597
        %5721 = vmatpush1.msra.mxu0 %v4596
        %5722 = vmatprep.subr.mxu0 %v4605
        %5723 = vmatpush1.msra.mxu0 %v4604
        %5724 = vmatprep.subr.mxu0 %v4613
        %5725 = vmatpush1.msra.mxu0 %v4612
        %5726 = vmatprep.subr.mxu0 %v4621
        %5727 = vmatpush1.msra.mxu0 %v4620
        %5728 = vmatprep.subr.mxu0 %v4629
        %5729 = vmatpush1.msra.mxu0 %v4628
        %5730 = vmatprep.subr.mxu0 %v4637
        %5731 = vmatpush1.msra.mxu0 %v4636
        %5732 = vmatprep.subr.mxu0 %v4645
        %5733 = vmatpush1.msra.mxu0 %v4644
        %5734 = vmatprep.subr.mxu0 %v4653
        %5735 = vmatpush1.msra.mxu0 %v4652
        %5736 = vmatprep.subr.mxu0 %v4661
        %5737 = vmatpush1.msra.mxu0 %v4660
        %5738 = vmatprep.subr.mxu0 %v4669
        %5739 = vmatpush1.msra.mxu0 %v4668
        %5740 = vmatprep.subr.mxu0 %v4677
        %5741 = vmatpush1.msra.mxu0 %v4676
        %5742 = vmatprep.mubr.f32.mxu0 %v3909
        %5743 = vmatmul.mubr.f32.gmra.mrb[0].mxu0 %v3908
        %v5744 = vpop.f32.mrb[0].mxu0
        %v5745 = vadd.f32 %v5674, %v5744
        %v5746 = vpop.f32.mrb[0].mxu0
        %v5747 = vadd.f32 %v5676, %v5746
        %5748 = vdwg.mxu0
        %5749 = vmatprep.subr.mxu0 %v4685
        %5750 = vmatpush1.msra.mxu0 %v4684
        %5751 = vmatprep.subr.mxu0 %v4693
        %5752 = vmatpush1.msra.mxu0 %v4692
        %5753 = vmatprep.subr.mxu0 %v4701
        %5754 = vmatpush1.msra.mxu0 %v4700
        %5755 = vmatprep.subr.mxu0 %v4709
        %5756 = vmatpush1.msra.mxu0 %v4708
        %5757 = vmatprep.subr.mxu0 %v4717
        %5758 = vmatpush1.msra.mxu0 %v4716
        %5759 = vmatprep.subr.mxu0 %v4725
        %5760 = vmatpush1.msra.mxu0 %v4724
        %5761 = vmatprep.subr.mxu0 %v4733
        %5762 = vmatpush1.msra.mxu0 %v4732
        %5763 = vmatprep.subr.mxu0 %v4741
        %5764 = vmatpush1.msra.mxu0 %v4740
        %5765 = vmatprep.subr.mxu0 %v4749
        %5766 = vmatpush1.msra.mxu0 %v4748
        %5767 = vmatprep.subr.mxu0 %v4757
        %5768 = vmatpush1.msra.mxu0 %v4756
        %5769 = vmatprep.subr.mxu0 %v4765
        %5770 = vmatpush1.msra.mxu0 %v4764
        %5771 = vmatprep.subr.mxu0 %v4773
        %5772 = vmatpush1.msra.mxu0 %v4772
        %5773 = vmatprep.subr.mxu0 %v4781
        %5774 = vmatpush1.msra.mxu0 %v4780
        %5775 = vmatprep.subr.mxu0 %v4789
        %5776 = vmatpush1.msra.mxu0 %v4788
        %5777 = vmatprep.subr.mxu0 %v4797
        %5778 = vmatpush1.msra.mxu0 %v4796
        %5779 = vmatprep.subr.mxu0 %v4805
        %5780 = vmatpush1.msra.mxu0 %v4804
        %5781 = vmatprep.subr.mxu0 %v4813
        %5782 = vmatpush1.msra.mxu0 %v4812
        %5783 = vmatprep.subr.mxu0 %v4821
        %5784 = vmatpush1.msra.mxu0 %v4820
        %5785 = vmatprep.subr.mxu0 %v4829
        %5786 = vmatpush1.msra.mxu0 %v4828
        %5787 = vmatprep.subr.mxu0 %v4837
        %5788 = vmatpush1.msra.mxu0 %v4836
        %5789 = vmatprep.subr.mxu0 %v4845
        %5790 = vmatpush1.msra.mxu0 %v4844
        %5791 = vmatprep.subr.mxu0 %v4853
        %5792 = vmatpush1.msra.mxu0 %v4852
        %5793 = vmatprep.subr.mxu0 %v4861
        %5794 = vmatpush1.msra.mxu0 %v4860
        %5795 = vmatprep.subr.mxu0 %v4869
        %5796 = vmatpush1.msra.mxu0 %v4868
        %5797 = vmatprep.subr.mxu0 %v4877
        %5798 = vmatpush1.msra.mxu0 %v4876
        %5799 = vmatprep.subr.mxu0 %v4885
        %5800 = vmatpush1.msra.mxu0 %v4884
        %5801 = vmatprep.subr.mxu0 %v4893
        %5802 = vmatpush1.msra.mxu0 %v4892
        %5803 = vmatprep.subr.mxu0 %v4901
        %5804 = vmatpush1.msra.mxu0 %v4900
        %5805 = vmatprep.subr.mxu0 %v4909
        %5806 = vmatpush1.msra.mxu0 %v4908
        %5807 = vmatprep.subr.mxu0 %v4917
        %5808 = vmatpush1.msra.mxu0 %v4916
        %5809 = vmatprep.subr.mxu0 %v4925
        %5810 = vmatpush1.msra.mxu0 %v4924
        %5811 = vmatprep.subr.mxu0 %v4933
        %5812 = vmatpush1.msra.mxu0 %v4932
        %5813 = vmatprep.mubr.f32.mxu0 %v3911
        %5814 = vmatmul.mubr.f32.gmra.mrb[0].mxu0 %v3910
        %v5815 = vpop.f32.mrb[0].mxu0
        %v5816 = vadd.f32 %v5745, %v5815
        %v5817 = vpop.f32.mrb[0].mxu0
        %v5818 = vadd.f32 %v5747, %v5817
        %5819 = vdwg.mxu0
        %5820 = vmatprep.subr.mxu0 %v3919
        %5821 = vmatpush1.msra.mxu0 %v3918
        %5822 = vmatprep.subr.mxu0 %v3927
        %5823 = vmatpush1.msra.mxu0 %v3926
        %5824 = vmatprep.subr.mxu0 %v3935
        %5825 = vmatpush1.msra.mxu0 %v3934
        %5826 = vmatprep.subr.mxu0 %v3943
        %5827 = vmatpush1.msra.mxu0 %v3942
        %5828 = vmatprep.subr.mxu0 %v3951
        %5829 = vmatpush1.msra.mxu0 %v3950
        %5830 = vmatprep.subr.mxu0 %v3959
        %5831 = vmatpush1.msra.mxu0 %v3958
        %5832 = vmatprep.subr.mxu0 %v3967
        %5833 = vmatpush1.msra.mxu0 %v3966
        %5834 = vmatprep.subr.mxu0 %v3975
        %5835 = vmatpush1.msra.mxu0 %v3974
        %5836 = vmatprep.subr.mxu0 %v3983
        %5837 = vmatpush1.msra.mxu0 %v3982
        %5838 = vmatprep.subr.mxu0 %v3991
        %5839 = vmatpush1.msra.mxu0 %v3990
        %5840 = vmatprep.subr.mxu0 %v3999
        %5841 = vmatpush1.msra.mxu0 %v3998
        %5842 = vmatprep.subr.mxu0 %v4007
        %5843 = vmatpush1.msra.mxu0 %v4006
        %5844 = vmatprep.subr.mxu0 %v4015
        %5845 = vmatpush1.msra.mxu0 %v4014
        %5846 = vmatprep.subr.mxu0 %v4023
        %5847 = vmatpush1.msra.mxu0 %v4022
        %5848 = vmatprep.subr.mxu0 %v4031
        %5849 = vmatpush1.msra.mxu0 %v4030
        %5850 = vmatprep.subr.mxu0 %v4039
        %5851 = vmatpush1.msra.mxu0 %v4038
        %5852 = vmatprep.subr.mxu0 %v4047
        %5853 = vmatpush1.msra.mxu0 %v4046
        %5854 = vmatprep.subr.mxu0 %v4055
        %5855 = vmatpush1.msra.mxu0 %v4054
        %5856 = vmatprep.subr.mxu0 %v4063
        %5857 = vmatpush1.msra.mxu0 %v4062
        %5858 = vmatprep.subr.mxu0 %v4071
        %5859 = vmatpush1.msra.mxu0 %v4070
        %5860 = vmatprep.subr.mxu0 %v4079
        %5861 = vmatpush1.msra.mxu0 %v4078
        %5862 = vmatprep.subr.mxu0 %v4087
        %5863 = vmatpush1.msra.mxu0 %v4086
        %5864 = vmatprep.subr.mxu0 %v4095
        %5865 = vmatpush1.msra.mxu0 %v4094
        %5866 = vmatprep.subr.mxu0 %v4103
        %5867 = vmatpush1.msra.mxu0 %v4102
        %5868 = vmatprep.subr.mxu0 %v4111
        %5869 = vmatpush1.msra.mxu0 %v4110
        %5870 = vmatprep.subr.mxu0 %v4119
        %5871 = vmatpush1.msra.mxu0 %v4118
        %5872 = vmatprep.subr.mxu0 %v4127
        %5873 = vmatpush1.msra.mxu0 %v4126
        %5874 = vmatprep.subr.mxu0 %v4135
        %5875 = vmatpush1.msra.mxu0 %v4134
        %5876 = vmatprep.subr.mxu0 %v4143
        %5877 = vmatpush1.msra.mxu0 %v4142
        %5878 = vmatprep.subr.mxu0 %v4151
        %5879 = vmatpush1.msra.mxu0 %v4150
        %5880 = vmatprep.subr.mxu0 %v4159
        %5881 = vmatpush1.msra.mxu0 %v4158
        %5882 = vmatprep.subr.mxu0 %v4167
        %5883 = vmatpush1.msra.mxu0 %v4166
        %5884 = vmatprep.mubr.f32.mxu0 %v3905
        %5885 = vmatmul.mubr.f32.gmra.mrb[0].mxu0 %v3904
        %v5886 = vpop.f32.mrb[0].mxu0
        %v5887 = vadd.f32 %v4963, %v5886
        %v5888 = vpop.f32.mrb[0].mxu0
        %v5889 = vadd.f32 %v4967, %v5888
        %5890 = vdwg.mxu0
        %5891 = vmatprep.subr.mxu0 %v4175
        %5892 = vmatpush1.msra.mxu0 %v4174
        %5893 = vmatprep.subr.mxu0 %v4183
        %5894 = vmatpush1.msra.mxu0 %v4182
        %5895 = vmatprep.subr.mxu0 %v4191
        %5896 = vmatpush1.msra.mxu0 %v4190
        %5897 = vmatprep.subr.mxu0 %v4199
        %5898 = vmatpush1.msra.mxu0 %v4198
        %5899 = vmatprep.subr.mxu0 %v4207
        %5900 = vmatpush1.msra.mxu0 %v4206
        %5901 = vmatprep.subr.mxu0 %v4215
        %5902 = vmatpush1.msra.mxu0 %v4214
        %5903 = vmatprep.subr.mxu0 %v4223
        %5904 = vmatpush1.msra.mxu0 %v4222
        %5905 = vmatprep.subr.mxu0 %v4231
        %5906 = vmatpush1.msra.mxu0 %v4230
        %5907 = vmatprep.subr.mxu0 %v4239
        %5908 = vmatpush1.msra.mxu0 %v4238
        %5909 = vmatprep.subr.mxu0 %v4247
        %5910 = vmatpush1.msra.mxu0 %v4246
        %5911 = vmatprep.subr.mxu0 %v4255
        %5912 = vmatpush1.msra.mxu0 %v4254
        %5913 = vmatprep.subr.mxu0 %v4263
        %5914 = vmatpush1.msra.mxu0 %v4262
        %5915 = vmatprep.subr.mxu0 %v4271
        %5916 = vmatpush1.msra.mxu0 %v4270
        %5917 = vmatprep.subr.mxu0 %v4279
        %5918 = vmatpush1.msra.mxu0 %v4278
        %5919 = vmatprep.subr.mxu0 %v4287
        %5920 = vmatpush1.msra.mxu0 %v4286
        %5921 = vmatprep.subr.mxu0 %v4295
        %5922 = vmatpush1.msra.mxu0 %v4294
        %5923 = vmatprep.subr.mxu0 %v4303
        %5924 = vmatpush1.msra.mxu0 %v4302
        %5925 = vmatprep.subr.mxu0 %v4311
        %5926 = vmatpush1.msra.mxu0 %v4310
        %5927 = vmatprep.subr.mxu0 %v4319
        %5928 = vmatpush1.msra.mxu0 %v4318
        %5929 = vmatprep.subr.mxu0 %v4327
        %5930 = vmatpush1.msra.mxu0 %v4326
        %5931 = vmatprep.subr.mxu0 %v4335
        %5932 = vmatpush1.msra.mxu0 %v4334
        %5933 = vmatprep.subr.mxu0 %v4343
        %5934 = vmatpush1.msra.mxu0 %v4342
        %5935 = vmatprep.subr.mxu0 %v4351
        %5936 = vmatpush1.msra.mxu0 %v4350
        %5937 = vmatprep.subr.mxu0 %v4359
        %5938 = vmatpush1.msra.mxu0 %v4358
        %5939 = vmatprep.subr.mxu0 %v4367
        %5940 = vmatpush1.msra.mxu0 %v4366
        %5941 = vmatprep.subr.mxu0 %v4375
        %5942 = vmatpush1.msra.mxu0 %v4374
        %5943 = vmatprep.subr.mxu0 %v4383
        %5944 = vmatpush1.msra.mxu0 %v4382
        %5945 = vmatprep.subr.mxu0 %v4391
        %5946 = vmatpush1.msra.mxu0 %v4390
        %5947 = vmatprep.subr.mxu0 %v4399
        %5948 = vmatpush1.msra.mxu0 %v4398
        %5949 = vmatprep.subr.mxu0 %v4407
        %5950 = vmatpush1.msra.mxu0 %v4406
        %5951 = vmatprep.subr.mxu0 %v4415
        %5952 = vmatpush1.msra.mxu0 %v4414
        %5953 = vmatprep.subr.mxu0 %v4423
        %5954 = vmatpush1.msra.mxu0 %v4422
        %5955 = vmatprep.mubr.f32.mxu0 %v3907
        %5956 = vmatmul.mubr.f32.gmra.mrb[0].mxu0 %v3906
        %v5957 = vpop.f32.mrb[0].mxu0
        %v5958 = vadd.f32 %v5887, %v5957
        %v5959 = vpop.f32.mrb[0].mxu0
        %v5960 = vadd.f32 %v5889, %v5959
        %5961 = vdwg.mxu0
        %5962 = vmatprep.subr.mxu0 %v4431
        %5963 = vmatpush1.msra.mxu0 %v4430
        %5964 = vmatprep.subr.mxu0 %v4439
        %5965 = vmatpush1.msra.mxu0 %v4438
        %5966 = vmatprep.subr.mxu0 %v4447
        %5967 = vmatpush1.msra.mxu0 %v4446
        %5968 = vmatprep.subr.mxu0 %v4455
        %5969 = vmatpush1.msra.mxu0 %v4454
        %5970 = vmatprep.subr.mxu0 %v4463
        %5971 = vmatpush1.msra.mxu0 %v4462
        %5972 = vmatprep.subr.mxu0 %v4471
        %5973 = vmatpush1.msra.mxu0 %v4470
        %5974 = vmatprep.subr.mxu0 %v4479
        %5975 = vmatpush1.msra.mxu0 %v4478
        %5976 = vmatprep.subr.mxu0 %v4487
        %5977 = vmatpush1.msra.mxu0 %v4486
        %5978 = vmatprep.subr.mxu0 %v4495
        %5979 = vmatpush1.msra.mxu0 %v4494
        %5980 = vmatprep.subr.mxu0 %v4503
        %5981 = vmatpush1.msra.mxu0 %v4502
        %5982 = vmatprep.subr.mxu0 %v4511
        %5983 = vmatpush1.msra.mxu0 %v4510
        %5984 = vmatprep.subr.mxu0 %v4519
        %5985 = vmatpush1.msra.mxu0 %v4518
        %5986 = vmatprep.subr.mxu0 %v4527
        %5987 = vmatpush1.msra.mxu0 %v4526
        %5988 = vmatprep.subr.mxu0 %v4535
        %5989 = vmatpush1.msra.mxu0 %v4534
        %5990 = vmatprep.subr.mxu0 %v4543
        %5991 = vmatpush1.msra.mxu0 %v4542
        %5992 = vmatprep.subr.mxu0 %v4551
        %5993 = vmatpush1.msra.mxu0 %v4550
        %5994 = vmatprep.subr.mxu0 %v4559
        %5995 = vmatpush1.msra.mxu0 %v4558
        %5996 = vmatprep.subr.mxu0 %v4567
        %5997 = vmatpush1.msra.mxu0 %v4566
        %5998 = vmatprep.subr.mxu0 %v4575
        %5999 = vmatpush1.msra.mxu0 %v4574
        %6000 = vmatprep.subr.mxu0 %v4583
        %6001 = vmatpush1.msra.mxu0 %v4582
        %6002 = vmatprep.subr.mxu0 %v4591
        %6003 = vmatpush1.msra.mxu0 %v4590
        %6004 = vmatprep.subr.mxu0 %v4599
        %6005 = vmatpush1.msra.mxu0 %v4598
        %6006 = vmatprep.subr.mxu0 %v4607
        %6007 = vmatpush1.msra.mxu0 %v4606
        %6008 = vmatprep.subr.mxu0 %v4615
        %6009 = vmatpush1.msra.mxu0 %v4614
        %6010 = vmatprep.subr.mxu0 %v4623
        %6011 = vmatpush1.msra.mxu0 %v4622
        %6012 = vmatprep.subr.mxu0 %v4631
        %6013 = vmatpush1.msra.mxu0 %v4630
        %6014 = vmatprep.subr.mxu0 %v4639
        %6015 = vmatpush1.msra.mxu0 %v4638
        %6016 = vmatprep.subr.mxu0 %v4647
        %6017 = vmatpush1.msra.mxu0 %v4646
        %6018 = vmatprep.subr.mxu0 %v4655
        %6019 = vmatpush1.msra.mxu0 %v4654
        %6020 = vmatprep.subr.mxu0 %v4663
        %6021 = vmatpush1.msra.mxu0 %v4662
        %6022 = vmatprep.subr.mxu0 %v4671
        %6023 = vmatpush1.msra.mxu0 %v4670
        %6024 = vmatprep.subr.mxu0 %v4679
        %6025 = vmatpush1.msra.mxu0 %v4678
        %6026 = vmatprep.mubr.f32.mxu0 %v3909
        %6027 = vmatmul.mubr.f32.gmra.mrb[0].mxu0 %v3908
        %v6028 = vpop.f32.mrb[0].mxu0
        %v6029 = vadd.f32 %v5958, %v6028
        %v6030 = vpop.f32.mrb[0].mxu0
        %v6031 = vadd.f32 %v5960, %v6030
        %6032 = vdwg.mxu0
        %6033 = vmatprep.subr.mxu0 %v4687
        %6034 = vmatpush1.msra.mxu0 %v4686
        %6035 = vmatprep.subr.mxu0 %v4695
        %6036 = vmatpush1.msra.mxu0 %v4694
        %6037 = vmatprep.subr.mxu0 %v4703
        %6038 = vmatpush1.msra.mxu0 %v4702
        %6039 = vmatprep.subr.mxu0 %v4711
        %6040 = vmatpush1.msra.mxu0 %v4710
        %6041 = vmatprep.subr.mxu0 %v4719
        %6042 = vmatpush1.msra.mxu0 %v4718
        %6043 = vmatprep.subr.mxu0 %v4727
        %6044 = vmatpush1.msra.mxu0 %v4726
        %6045 = vmatprep.subr.mxu0 %v4735
        %6046 = vmatpush1.msra.mxu0 %v4734
        %6047 = vmatprep.subr.mxu0 %v4743
        %6048 = vmatpush1.msra.mxu0 %v4742
        %6049 = vmatprep.subr.mxu0 %v4751
        %6050 = vmatpush1.msra.mxu0 %v4750
        %6051 = vmatprep.subr.mxu0 %v4759
        %6052 = vmatpush1.msra.mxu0 %v4758
        %6053 = vmatprep.subr.mxu0 %v4767
        %6054 = vmatpush1.msra.mxu0 %v4766
        %6055 = vmatprep.subr.mxu0 %v4775
        %6056 = vmatpush1.msra.mxu0 %v4774
        %6057 = vmatprep.subr.mxu0 %v4783
        %6058 = vmatpush1.msra.mxu0 %v4782
        %6059 = vmatprep.subr.mxu0 %v4791
        %6060 = vmatpush1.msra.mxu0 %v4790
        %6061 = vmatprep.subr.mxu0 %v4799
        %6062 = vmatpush1.msra.mxu0 %v4798
        %6063 = vmatprep.subr.mxu0 %v4807
        %6064 = vmatpush1.msra.mxu0 %v4806
        %6065 = vmatprep.subr.mxu0 %v4815
        %6066 = vmatpush1.msra.mxu0 %v4814
        %6067 = vmatprep.subr.mxu0 %v4823
        %6068 = vmatpush1.msra.mxu0 %v4822
        %6069 = vmatprep.subr.mxu0 %v4831
        %6070 = vmatpush1.msra.mxu0 %v4830
        %6071 = vmatprep.subr.mxu0 %v4839
        %6072 = vmatpush1.msra.mxu0 %v4838
        %6073 = vmatprep.subr.mxu0 %v4847
        %6074 = vmatpush1.msra.mxu0 %v4846
        %6075 = vmatprep.subr.mxu0 %v4855
        %6076 = vmatpush1.msra.mxu0 %v4854
        %6077 = vmatprep.subr.mxu0 %v4863
        %6078 = vmatpush1.msra.mxu0 %v4862
        %6079 = vmatprep.subr.mxu0 %v4871
        %6080 = vmatpush1.msra.mxu0 %v4870
        %6081 = vmatprep.subr.mxu0 %v4879
        %6082 = vmatpush1.msra.mxu0 %v4878
        %6083 = vmatprep.subr.mxu0 %v4887
        %6084 = vmatpush1.msra.mxu0 %v4886
        %6085 = vmatprep.subr.mxu0 %v4895
        %6086 = vmatpush1.msra.mxu0 %v4894
        %6087 = vmatprep.subr.mxu0 %v4903
        %6088 = vmatpush1.msra.mxu0 %v4902
        %6089 = vmatprep.subr.mxu0 %v4911
        %6090 = vmatpush1.msra.mxu0 %v4910
        %6091 = vmatprep.subr.mxu0 %v4919
        %6092 = vmatpush1.msra.mxu0 %v4918
        %6093 = vmatprep.subr.mxu0 %v4927
        %6094 = vmatpush1.msra.mxu0 %v4926
        %6095 = vmatprep.subr.mxu0 %v4935
        %6096 = vmatpush1.msra.mxu0 %v4934
        %6097 = vmatprep.mubr.f32.mxu0 %v3911
        %6098 = vmatmul.mubr.f32.gmra.mrb[0].mxu0 %v3910
        %v6099 = vpop.f32.mrb[0].mxu0
        %v6100 = vadd.f32 %v6029, %v6099
        %v6101 = vpop.f32.mrb[0].mxu0
        %v6102 = vadd.f32 %v6031, %v6101
        %6103 = vdwg.mxu0
        %6104 = vmatprep.subr.mxu0 0.0
        %6105 = vmatpush1.msra.mxu0 %v330
        %6106 = vmatprep.subr.mxu0 0.0
        %6107 = vmatpush1.msra.mxu0 %v331
        %6108 = vmatprep.subr.mxu0 0.0
        %6109 = vmatpush1.msra.mxu0 %v332
        %6110 = vmatprep.subr.mxu0 0.0
        %6111 = vmatpush1.msra.mxu0 %v333
        %6112 = vmatprep.subr.mxu0 0.0
        %6113 = vmatpush1.msra.mxu0 %v334
        %6114 = vmatprep.subr.mxu0 0.0
        %6115 = vmatpush1.msra.mxu0 %v335
        %6116 = vmatprep.subr.mxu0 0.0
        %6117 = vmatpush1.msra.mxu0 %v336
        %6118 = vmatprep.subr.mxu0 0.0
        %6119 = vmatpush1.msra.mxu0 %v337
        %6120 = vmatprep.subr.mxu0 0.0
        %6121 = vmatpush1.msra.mxu0 %v338
        %6122 = vmatprep.subr.mxu0 0.0
        %6123 = vmatpush1.msra.mxu0 %v339
        %6124 = vmatprep.subr.mxu0 0.0
        %6125 = vmatpush1.msra.mxu0 %v340
        %6126 = vmatprep.subr.mxu0 0.0
        %6127 = vmatpush1.msra.mxu0 %v341
        %6128 = vmatprep.subr.mxu0 0.0
        %6129 = vmatpush1.msra.mxu0 %v342
        %6130 = vmatprep.subr.mxu0 0.0
        %6131 = vmatpush1.msra.mxu0 %v343
        %6132 = vmatprep.subr.mxu0 0.0
        %6133 = vmatpush1.msra.mxu0 %v344
        %6134 = vmatprep.subr.mxu0 0.0
        %6135 = vmatpush1.msra.mxu0 %v345
        %6136 = vmatprep.subr.mxu0 0.0
        %6137 = vmatpush1.msra.mxu0 %v346
        %6138 = vmatprep.subr.mxu0 0.0
        %6139 = vmatpush1.msra.mxu0 %v347
        %6140 = vmatprep.subr.mxu0 0.0
        %6141 = vmatpush1.msra.mxu0 %v348
        %6142 = vmatprep.subr.mxu0 0.0
        %6143 = vmatpush1.msra.mxu0 %v349
        %6144 = vmatprep.subr.mxu0 0.0
        %6145 = vmatpush1.msra.mxu0 %v350
        %6146 = vmatprep.subr.mxu0 0.0
        %6147 = vmatpush1.msra.mxu0 %v351
        %6148 = vmatprep.subr.mxu0 0.0
        %6149 = vmatpush1.msra.mxu0 %v352
        %6150 = vmatprep.subr.mxu0 0.0
        %6151 = vmatpush1.msra.mxu0 %v353
        %6152 = vmatprep.subr.mxu0 0.0
        %6153 = vmatpush1.msra.mxu0 %v354
        %6154 = vmatprep.subr.mxu0 0.0
        %6155 = vmatpush1.msra.mxu0 %v355
        %6156 = vmatprep.subr.mxu0 0.0
        %6157 = vmatpush1.msra.mxu0 %v356
        %6158 = vmatprep.subr.mxu0 0.0
        %6159 = vmatpush1.msra.mxu0 %v357
        %6160 = vmatprep.subr.mxu0 0.0
        %6161 = vmatpush1.msra.mxu0 %v358
        %6162 = vmatprep.subr.mxu0 0.0
        %6163 = vmatpush1.msra.mxu0 %v359
        %6164 = vmatprep.subr.mxu0 0.0
        %6165 = vmatpush1.msra.mxu0 %v360
        %6166 = vmatprep.subr.mxu0 0.0
        %6167 = vmatpush1.msra.mxu0 %v361
        %6168 = vmatprep.mubr.f32.mxu0 %v5250
        %6169 = vmatmul.mubr.f32.gmra.mrb[0].mxu0 %v5248
        %v6170 = vpop.f32.mrb[0].mxu0
        %v6171 = vadd.f32 0.0, %v6170
        %v6172 = vpop.f32.mrb[0].mxu0
        %6173 = vdwg.mxu0
        %6174 = vmatprep.subr.mxu0 0.0
        %6175 = vmatpush1.msra.mxu0 %v362
        %6176 = vmatprep.subr.mxu0 0.0
        %6177 = vmatpush1.msra.mxu0 %v363
        %6178 = vmatprep.subr.mxu0 0.0
        %6179 = vmatpush1.msra.mxu0 %v364
        %6180 = vmatprep.subr.mxu0 0.0
        %6181 = vmatpush1.msra.mxu0 %v365
        %6182 = vmatprep.subr.mxu0 0.0
        %6183 = vmatpush1.msra.mxu0 %v366
        %6184 = vmatprep.subr.mxu0 0.0
        %6185 = vmatpush1.msra.mxu0 %v367
        %6186 = vmatprep.subr.mxu0 0.0
        %6187 = vmatpush1.msra.mxu0 %v368
        %6188 = vmatprep.subr.mxu0 0.0
        %6189 = vmatpush1.msra.mxu0 %v369
        %6190 = vmatprep.subr.mxu0 0.0
        %6191 = vmatpush1.msra.mxu0 %v370
        %6192 = vmatprep.subr.mxu0 0.0
        %6193 = vmatpush1.msra.mxu0 %v371
        %6194 = vmatprep.subr.mxu0 0.0
        %6195 = vmatpush1.msra.mxu0 %v372
        %6196 = vmatprep.subr.mxu0 0.0
        %6197 = vmatpush1.msra.mxu0 %v373
        %6198 = vmatprep.subr.mxu0 0.0
        %6199 = vmatpush1.msra.mxu0 %v374
        %6200 = vmatprep.subr.mxu0 0.0
        %6201 = vmatpush1.msra.mxu0 %v375
        %6202 = vmatprep.subr.mxu0 0.0
        %6203 = vmatpush1.msra.mxu0 %v376
        %6204 = vmatprep.subr.mxu0 0.0
        %6205 = vmatpush1.msra.mxu0 %v377
        %6206 = vmatprep.subr.mxu0 0.0
        %6207 = vmatpush1.msra.mxu0 %v378
        %6208 = vmatprep.subr.mxu0 0.0
        %6209 = vmatpush1.msra.mxu0 %v379
        %6210 = vmatprep.subr.mxu0 0.0
        %6211 = vmatpush1.msra.mxu0 %v380
        %6212 = vmatprep.subr.mxu0 0.0
        %6213 = vmatpush1.msra.mxu0 %v381
        %6214 = vmatprep.subr.mxu0 0.0
        %6215 = vmatpush1.msra.mxu0 %v382
        %6216 = vmatprep.subr.mxu0 0.0
        %6217 = vmatpush1.msra.mxu0 %v383
        %6218 = vmatprep.subr.mxu0 0.0
        %6219 = vmatpush1.msra.mxu0 %v384
        %6220 = vmatprep.subr.mxu0 0.0
        %6221 = vmatpush1.msra.mxu0 %v385
        %6222 = vmatprep.subr.mxu0 0.0
        %6223 = vmatpush1.msra.mxu0 %v386
        %6224 = vmatprep.subr.mxu0 0.0
        %6225 = vmatpush1.msra.mxu0 %v387
        %6226 = vmatprep.subr.mxu0 0.0
        %6227 = vmatpush1.msra.mxu0 %v388
        %6228 = vmatprep.subr.mxu0 0.0
        %6229 = vmatpush1.msra.mxu0 %v389
        %6230 = vmatprep.subr.mxu0 0.0
        %6231 = vmatpush1.msra.mxu0 %v390
        %6232 = vmatprep.subr.mxu0 0.0
        %6233 = vmatpush1.msra.mxu0 %v391
        %6234 = vmatprep.subr.mxu0 0.0
        %6235 = vmatpush1.msra.mxu0 %v392
        %6236 = vmatprep.subr.mxu0 0.0
        %6237 = vmatpush1.msra.mxu0 %v393
        %6238 = vmatprep.mubr.f32.mxu0 %v5534
        %6239 = vmatmul.mubr.f32.gmra.mrb[0].mxu0 %v5532
        %v6240 = vpop.f32.mrb[0].mxu0
        %v6241 = vadd.f32 %v6171, %v6240
        %v6242 = vpop.f32.mrb[0].mxu0
        %6243 = vdwg.mxu0
        %6244 = vmatprep.subr.mxu0 0.0
        %6245 = vmatpush1.msra.mxu0 %v394
        %6246 = vmatprep.subr.mxu0 0.0
        %6247 = vmatpush1.msra.mxu0 %v395
        %6248 = vmatprep.subr.mxu0 0.0
        %6249 = vmatpush1.msra.mxu0 %v396
        %6250 = vmatprep.subr.mxu0 0.0
        %6251 = vmatpush1.msra.mxu0 %v397
        %6252 = vmatprep.subr.mxu0 0.0
        %6253 = vmatpush1.msra.mxu0 %v398
        %6254 = vmatprep.subr.mxu0 0.0
        %6255 = vmatpush1.msra.mxu0 %v399
        %6256 = vmatprep.subr.mxu0 0.0
        %6257 = vmatpush1.msra.mxu0 %v400
        %6258 = vmatprep.subr.mxu0 0.0
        %6259 = vmatpush1.msra.mxu0 %v401
        %6260 = vmatprep.subr.mxu0 0.0
        %6261 = vmatpush1.msra.mxu0 %v402
        %6262 = vmatprep.subr.mxu0 0.0
        %6263 = vmatpush1.msra.mxu0 %v403
        %6264 = vmatprep.subr.mxu0 0.0
        %6265 = vmatpush1.msra.mxu0 %v404
        %6266 = vmatprep.subr.mxu0 0.0
        %6267 = vmatpush1.msra.mxu0 %v405
        %6268 = vmatprep.subr.mxu0 0.0
        %6269 = vmatpush1.msra.mxu0 %v406
        %6270 = vmatprep.subr.mxu0 0.0
        %6271 = vmatpush1.msra.mxu0 %v407
        %6272 = vmatprep.subr.mxu0 0.0
        %6273 = vmatpush1.msra.mxu0 %v408
        %6274 = vmatprep.subr.mxu0 0.0
        %6275 = vmatpush1.msra.mxu0 %v409
        %6276 = vmatprep.subr.mxu0 0.0
        %6277 = vmatpush1.msra.mxu0 %v410
        %6278 = vmatprep.subr.mxu0 0.0
        %6279 = vmatpush1.msra.mxu0 %v411
        %6280 = vmatprep.subr.mxu0 0.0
        %6281 = vmatpush1.msra.mxu0 %v412
        %6282 = vmatprep.subr.mxu0 0.0
        %6283 = vmatpush1.msra.mxu0 %v413
        %6284 = vmatprep.subr.mxu0 0.0
        %6285 = vmatpush1.msra.mxu0 %v414
        %6286 = vmatprep.subr.mxu0 0.0
        %6287 = vmatpush1.msra.mxu0 %v415
        %6288 = vmatprep.subr.mxu0 0.0
        %6289 = vmatpush1.msra.mxu0 %v416
        %6290 = vmatprep.subr.mxu0 0.0
        %6291 = vmatpush1.msra.mxu0 %v417
        %6292 = vmatprep.subr.mxu0 0.0
        %6293 = vmatpush1.msra.mxu0 %v418
        %6294 = vmatprep.subr.mxu0 0.0
        %6295 = vmatpush1.msra.mxu0 %v419
        %6296 = vmatprep.subr.mxu0 0.0
        %6297 = vmatpush1.msra.mxu0 %v420
        %6298 = vmatprep.subr.mxu0 0.0
        %6299 = vmatpush1.msra.mxu0 %v421
        %6300 = vmatprep.subr.mxu0 0.0
        %6301 = vmatpush1.msra.mxu0 %v422
        %6302 = vmatprep.subr.mxu0 0.0
        %6303 = vmatpush1.msra.mxu0 %v423
        %6304 = vmatprep.subr.mxu0 0.0
        %6305 = vmatpush1.msra.mxu0 %v424
        %6306 = vmatprep.subr.mxu0 0.0
        %6307 = vmatpush1.msra.mxu0 %v425
        %6308 = vmatprep.mubr.f32.mxu0 %v5818
        %6309 = vmatmul.mubr.f32.gmra.mrb[0].mxu0 %v5816
        %v6310 = vpop.f32.mrb[0].mxu0
        %v6311 = vadd.f32 %v6241, %v6310
        %v6312 = vpop.f32.mrb[0].mxu0
        %6313 = vdwg.mxu0
        %6314 = vmatprep.subr.mxu0 0.0
        %6315 = vmatpush1.msra.mxu0 %v426
        %6316 = vmatprep.subr.mxu0 0.0
        %6317 = vmatpush1.msra.mxu0 %v427
        %6318 = vmatprep.subr.mxu0 0.0
        %6319 = vmatpush1.msra.mxu0 %v428
        %6320 = vmatprep.subr.mxu0 0.0
        %6321 = vmatpush1.msra.mxu0 %v429
        %6322 = vmatprep.subr.mxu0 0.0
        %6323 = vmatpush1.msra.mxu0 %v430
        %6324 = vmatprep.subr.mxu0 0.0
        %6325 = vmatpush1.msra.mxu0 %v431
        %6326 = vmatprep.subr.mxu0 0.0
        %6327 = vmatpush1.msra.mxu0 %v432
        %6328 = vmatprep.subr.mxu0 0.0
        %6329 = vmatpush1.msra.mxu0 %v433
        %6330 = vmatprep.subr.mxu0 0.0
        %6331 = vmatpush1.msra.mxu0 %v434
        %6332 = vmatprep.subr.mxu0 0.0
        %6333 = vmatpush1.msra.mxu0 %v435
        %6334 = vmatprep.subr.mxu0 0.0
        %6335 = vmatpush1.msra.mxu0 %v436
        %6336 = vmatprep.subr.mxu0 0.0
        %6337 = vmatpush1.msra.mxu0 %v437
        %6338 = vmatprep.subr.mxu0 0.0
        %6339 = vmatpush1.msra.mxu0 %v438
        %6340 = vmatprep.subr.mxu0 0.0
        %6341 = vmatpush1.msra.mxu0 %v439
        %6342 = vmatprep.subr.mxu0 0.0
        %6343 = vmatpush1.msra.mxu0 %v440
        %6344 = vmatprep.subr.mxu0 0.0
        %6345 = vmatpush1.msra.mxu0 %v441
        %6346 = vmatprep.subr.mxu0 0.0
        %6347 = vmatpush1.msra.mxu0 %v442
        %6348 = vmatprep.subr.mxu0 0.0
        %6349 = vmatpush1.msra.mxu0 %v443
        %6350 = vmatprep.subr.mxu0 0.0
        %6351 = vmatpush1.msra.mxu0 %v444
        %6352 = vmatprep.subr.mxu0 0.0
        %6353 = vmatpush1.msra.mxu0 %v445
        %6354 = vmatprep.subr.mxu0 0.0
        %6355 = vmatpush1.msra.mxu0 %v446
        %6356 = vmatprep.subr.mxu0 0.0
        %6357 = vmatpush1.msra.mxu0 %v447
        %6358 = vmatprep.subr.mxu0 0.0
        %6359 = vmatpush1.msra.mxu0 %v448
        %6360 = vmatprep.subr.mxu0 0.0
        %6361 = vmatpush1.msra.mxu0 %v449
        %6362 = vmatprep.subr.mxu0 0.0
        %6363 = vmatpush1.msra.mxu0 %v450
        %6364 = vmatprep.subr.mxu0 0.0
        %6365 = vmatpush1.msra.mxu0 %v451
        %6366 = vmatprep.subr.mxu0 0.0
        %6367 = vmatpush1.msra.mxu0 %v452
        %6368 = vmatprep.subr.mxu0 0.0
        %6369 = vmatpush1.msra.mxu0 %v453
        %6370 = vmatprep.subr.mxu0 0.0
        %6371 = vmatpush1.msra.mxu0 %v454
        %6372 = vmatprep.subr.mxu0 0.0
        %6373 = vmatpush1.msra.mxu0 %v455
        %6374 = vmatprep.subr.mxu0 0.0
        %6375 = vmatpush1.msra.mxu0 %v456
        %6376 = vmatprep.subr.mxu0 0.0
        %6377 = vmatpush1.msra.mxu0 %v457
        %6378 = vmatprep.mubr.f32.mxu0 %v6102
        %6379 = vmatmul.mubr.f32.gmra.mrb[0].mxu0 %v6100
        %v6380 = vpop.f32.mrb[0].mxu0
        %v6381 = vadd.f32 %v6311, %v6380
        %v6382 = vpop.f32.mrb[0].mxu0
        %6383 = vdwg.mxu0
        %v6384 = vmul.f32 %v6381, 0.00390625
        %v6385 = vmul.f32 %v5248, %v5248
        %v6386 = vmul.f32 %v5250, %v5250
        %v6387 = vmul.f32 %v5532, %v5532
        %v6388 = vmul.f32 %v5534, %v5534
        %v6389 = vmul.f32 %v5816, %v5816
        %v6390 = vmul.f32 %v5818, %v5818
        %v6391 = vmul.f32 %v6100, %v6100
        %v6392 = vmul.f32 %v6102, %v6102
        %6393 = vmatprep.subr.mxu0 0.0
        %6394 = vmatpush1.msra.mxu0 %v330
        %6395 = vmatprep.subr.mxu0 0.0
        %6396 = vmatpush1.msra.mxu0 %v331
        %6397 = vmatprep.subr.mxu0 0.0
        %6398 = vmatpush1.msra.mxu0 %v332
        %6399 = vmatprep.subr.mxu0 0.0
        %6400 = vmatpush1.msra.mxu0 %v333
        %6401 = vmatprep.subr.mxu0 0.0
        %6402 = vmatpush1.msra.mxu0 %v334
        %6403 = vmatprep.subr.mxu0 0.0
        %6404 = vmatpush1.msra.mxu0 %v335
        %6405 = vmatprep.subr.mxu0 0.0
        %6406 = vmatpush1.msra.mxu0 %v336
        %6407 = vmatprep.subr.mxu0 0.0
        %6408 = vmatpush1.msra.mxu0 %v337
        %6409 = vmatprep.subr.mxu0 0.0
        %6410 = vmatpush1.msra.mxu0 %v338
        %6411 = vmatprep.subr.mxu0 0.0
        %6412 = vmatpush1.msra.mxu0 %v339
        %6413 = vmatprep.subr.mxu0 0.0
        %6414 = vmatpush1.msra.mxu0 %v340
        %6415 = vmatprep.subr.mxu0 0.0
        %6416 = vmatpush1.msra.mxu0 %v341
        %6417 = vmatprep.subr.mxu0 0.0
        %6418 = vmatpush1.msra.mxu0 %v342
        %6419 = vmatprep.subr.mxu0 0.0
        %6420 = vmatpush1.msra.mxu0 %v343
        %6421 = vmatprep.subr.mxu0 0.0
        %6422 = vmatpush1.msra.mxu0 %v344
        %6423 = vmatprep.subr.mxu0 0.0
        %6424 = vmatpush1.msra.mxu0 %v345
        %6425 = vmatprep.subr.mxu0 0.0
        %6426 = vmatpush1.msra.mxu0 %v346
        %6427 = vmatprep.subr.mxu0 0.0
        %6428 = vmatpush1.msra.mxu0 %v347
        %6429 = vmatprep.subr.mxu0 0.0
        %6430 = vmatpush1.msra.mxu0 %v348
        %6431 = vmatprep.subr.mxu0 0.0
        %6432 = vmatpush1.msra.mxu0 %v349
        %6433 = vmatprep.subr.mxu0 0.0
        %6434 = vmatpush1.msra.mxu0 %v350
        %6435 = vmatprep.subr.mxu0 0.0
        %6436 = vmatpush1.msra.mxu0 %v351
        %6437 = vmatprep.subr.mxu0 0.0
        %6438 = vmatpush1.msra.mxu0 %v352
        %6439 = vmatprep.subr.mxu0 0.0
        %6440 = vmatpush1.msra.mxu0 %v353
        %6441 = vmatprep.subr.mxu0 0.0
        %6442 = vmatpush1.msra.mxu0 %v354
        %6443 = vmatprep.subr.mxu0 0.0
        %6444 = vmatpush1.msra.mxu0 %v355
        %6445 = vmatprep.subr.mxu0 0.0
        %6446 = vmatpush1.msra.mxu0 %v356
        %6447 = vmatprep.subr.mxu0 0.0
        %6448 = vmatpush1.msra.mxu0 %v357
        %6449 = vmatprep.subr.mxu0 0.0
        %6450 = vmatpush1.msra.mxu0 %v358
        %6451 = vmatprep.subr.mxu0 0.0
        %6452 = vmatpush1.msra.mxu0 %v359
        %6453 = vmatprep.subr.mxu0 0.0
        %6454 = vmatpush1.msra.mxu0 %v360
        %6455 = vmatprep.subr.mxu0 0.0
        %6456 = vmatpush1.msra.mxu0 %v361
        %6457 = vmatprep.mubr.f32.mxu0 %v6386
        %6458 = vmatmul.mubr.f32.gmra.mrb[0].mxu0 %v6385
        %v6459 = vpop.f32.mrb[0].mxu0
        %v6460 = vadd.f32 0.0, %v6459
        %v6461 = vpop.f32.mrb[0].mxu0
        %6462 = vdwg.mxu0
        %6463 = vmatprep.subr.mxu0 0.0
        %6464 = vmatpush1.msra.mxu0 %v362
        %6465 = vmatprep.subr.mxu0 0.0
        %6466 = vmatpush1.msra.mxu0 %v363
        %6467 = vmatprep.subr.mxu0 0.0
        %6468 = vmatpush1.msra.mxu0 %v364
        %6469 = vmatprep.subr.mxu0 0.0
        %6470 = vmatpush1.msra.mxu0 %v365
        %6471 = vmatprep.subr.mxu0 0.0
        %6472 = vmatpush1.msra.mxu0 %v366
        %6473 = vmatprep.subr.mxu0 0.0
        %6474 = vmatpush1.msra.mxu0 %v367
        %6475 = vmatprep.subr.mxu0 0.0
        %6476 = vmatpush1.msra.mxu0 %v368
        %6477 = vmatprep.subr.mxu0 0.0
        %6478 = vmatpush1.msra.mxu0 %v369
        %6479 = vmatprep.subr.mxu0 0.0
        %6480 = vmatpush1.msra.mxu0 %v370
        %6481 = vmatprep.subr.mxu0 0.0
        %6482 = vmatpush1.msra.mxu0 %v371
        %6483 = vmatprep.subr.mxu0 0.0
        %6484 = vmatpush1.msra.mxu0 %v372
        %6485 = vmatprep.subr.mxu0 0.0
        %6486 = vmatpush1.msra.mxu0 %v373
        %6487 = vmatprep.subr.mxu0 0.0
        %6488 = vmatpush1.msra.mxu0 %v374
        %6489 = vmatprep.subr.mxu0 0.0
        %6490 = vmatpush1.msra.mxu0 %v375
        %6491 = vmatprep.subr.mxu0 0.0
        %6492 = vmatpush1.msra.mxu0 %v376
        %6493 = vmatprep.subr.mxu0 0.0
        %6494 = vmatpush1.msra.mxu0 %v377
        %6495 = vmatprep.subr.mxu0 0.0
        %6496 = vmatpush1.msra.mxu0 %v378
        %6497 = vmatprep.subr.mxu0 0.0
        %6498 = vmatpush1.msra.mxu0 %v379
        %6499 = vmatprep.subr.mxu0 0.0
        %6500 = vmatpush1.msra.mxu0 %v380
        %6501 = vmatprep.subr.mxu0 0.0
        %6502 = vmatpush1.msra.mxu0 %v381
        %6503 = vmatprep.subr.mxu0 0.0
        %6504 = vmatpush1.msra.mxu0 %v382
        %6505 = vmatprep.subr.mxu0 0.0
        %6506 = vmatpush1.msra.mxu0 %v383
        %6507 = vmatprep.subr.mxu0 0.0
        %6508 = vmatpush1.msra.mxu0 %v384
        %6509 = vmatprep.subr.mxu0 0.0
        %6510 = vmatpush1.msra.mxu0 %v385
        %6511 = vmatprep.subr.mxu0 0.0
        %6512 = vmatpush1.msra.mxu0 %v386
        %6513 = vmatprep.subr.mxu0 0.0
        %6514 = vmatpush1.msra.mxu0 %v387
        %6515 = vmatprep.subr.mxu0 0.0
        %6516 = vmatpush1.msra.mxu0 %v388
        %6517 = vmatprep.subr.mxu0 0.0
        %6518 = vmatpush1.msra.mxu0 %v389
        %6519 = vmatprep.subr.mxu0 0.0
        %6520 = vmatpush1.msra.mxu0 %v390
        %6521 = vmatprep.subr.mxu0 0.0
        %6522 = vmatpush1.msra.mxu0 %v391
        %6523 = vmatprep.subr.mxu0 0.0
        %6524 = vmatpush1.msra.mxu0 %v392
        %6525 = vmatprep.subr.mxu0 0.0
        %6526 = vmatpush1.msra.mxu0 %v393
        %6527 = vmatprep.mubr.f32.mxu0 %v6388
        %6528 = vmatmul.mubr.f32.gmra.mrb[0].mxu0 %v6387
        %v6529 = vpop.f32.mrb[0].mxu0
        %v6530 = vadd.f32 %v6460, %v6529
        %v6531 = vpop.f32.mrb[0].mxu0
        %6532 = vdwg.mxu0
        %6533 = vmatprep.subr.mxu0 0.0
        %6534 = vmatpush1.msra.mxu0 %v394
        %6535 = vmatprep.subr.mxu0 0.0
        %6536 = vmatpush1.msra.mxu0 %v395
        %6537 = vmatprep.subr.mxu0 0.0
        %6538 = vmatpush1.msra.mxu0 %v396
        %6539 = vmatprep.subr.mxu0 0.0
        %6540 = vmatpush1.msra.mxu0 %v397
        %6541 = vmatprep.subr.mxu0 0.0
        %6542 = vmatpush1.msra.mxu0 %v398
        %6543 = vmatprep.subr.mxu0 0.0
        %6544 = vmatpush1.msra.mxu0 %v399
        %6545 = vmatprep.subr.mxu0 0.0
        %6546 = vmatpush1.msra.mxu0 %v400
        %6547 = vmatprep.subr.mxu0 0.0
        %6548 = vmatpush1.msra.mxu0 %v401
        %6549 = vmatprep.subr.mxu0 0.0
        %6550 = vmatpush1.msra.mxu0 %v402
        %6551 = vmatprep.subr.mxu0 0.0
        %6552 = vmatpush1.msra.mxu0 %v403
        %6553 = vmatprep.subr.mxu0 0.0
        %6554 = vmatpush1.msra.mxu0 %v404
        %6555 = vmatprep.subr.mxu0 0.0
        %6556 = vmatpush1.msra.mxu0 %v405
        %6557 = vmatprep.subr.mxu0 0.0
        %6558 = vmatpush1.msra.mxu0 %v406
        %6559 = vmatprep.subr.mxu0 0.0
        %6560 = vmatpush1.msra.mxu0 %v407
        %6561 = vmatprep.subr.mxu0 0.0
        %6562 = vmatpush1.msra.mxu0 %v408
        %6563 = vmatprep.subr.mxu0 0.0
        %6564 = vmatpush1.msra.mxu0 %v409
        %6565 = vmatprep.subr.mxu0 0.0
        %6566 = vmatpush1.msra.mxu0 %v410
        %6567 = vmatprep.subr.mxu0 0.0
        %6568 = vmatpush1.msra.mxu0 %v411
        %6569 = vmatprep.subr.mxu0 0.0
        %6570 = vmatpush1.msra.mxu0 %v412
        %6571 = vmatprep.subr.mxu0 0.0
        %6572 = vmatpush1.msra.mxu0 %v413
        %6573 = vmatprep.subr.mxu0 0.0
        %6574 = vmatpush1.msra.mxu0 %v414
        %6575 = vmatprep.subr.mxu0 0.0
        %6576 = vmatpush1.msra.mxu0 %v415
        %6577 = vmatprep.subr.mxu0 0.0
        %6578 = vmatpush1.msra.mxu0 %v416
        %6579 = vmatprep.subr.mxu0 0.0
        %6580 = vmatpush1.msra.mxu0 %v417
        %6581 = vmatprep.subr.mxu0 0.0
        %6582 = vmatpush1.msra.mxu0 %v418
        %6583 = vmatprep.subr.mxu0 0.0
        %6584 = vmatpush1.msra.mxu0 %v419
        %6585 = vmatprep.subr.mxu0 0.0
        %6586 = vmatpush1.msra.mxu0 %v420
        %6587 = vmatprep.subr.mxu0 0.0
        %6588 = vmatpush1.msra.mxu0 %v421
        %6589 = vmatprep.subr.mxu0 0.0
        %6590 = vmatpush1.msra.mxu0 %v422
        %6591 = vmatprep.subr.mxu0 0.0
        %6592 = vmatpush1.msra.mxu0 %v423
        %6593 = vmatprep.subr.mxu0 0.0
        %6594 = vmatpush1.msra.mxu0 %v424
        %6595 = vmatprep.subr.mxu0 0.0
        %6596 = vmatpush1.msra.mxu0 %v425
        %6597 = vmatprep.mubr.f32.mxu0 %v6390
        %6598 = vmatmul.mubr.f32.gmra.mrb[0].mxu0 %v6389
        %v6599 = vpop.f32.mrb[0].mxu0
        %v6600 = vadd.f32 %v6530, %v6599
        %v6601 = vpop.f32.mrb[0].mxu0
        %6602 = vdwg.mxu0
        %6603 = vmatprep.subr.mxu0 0.0
        %6604 = vmatpush1.msra.mxu0 %v426
        %6605 = vmatprep.subr.mxu0 0.0
        %6606 = vmatpush1.msra.mxu0 %v427
        %6607 = vmatprep.subr.mxu0 0.0
        %6608 = vmatpush1.msra.mxu0 %v428
        %6609 = vmatprep.subr.mxu0 0.0
        %6610 = vmatpush1.msra.mxu0 %v429
        %6611 = vmatprep.subr.mxu0 0.0
        %6612 = vmatpush1.msra.mxu0 %v430
        %6613 = vmatprep.subr.mxu0 0.0
        %6614 = vmatpush1.msra.mxu0 %v431
        %6615 = vmatprep.subr.mxu0 0.0
        %6616 = vmatpush1.msra.mxu0 %v432
        %6617 = vmatprep.subr.mxu0 0.0
        %6618 = vmatpush1.msra.mxu0 %v433
        %6619 = vmatprep.subr.mxu0 0.0
        %6620 = vmatpush1.msra.mxu0 %v434
        %6621 = vmatprep.subr.mxu0 0.0
        %6622 = vmatpush1.msra.mxu0 %v435
        %6623 = vmatprep.subr.mxu0 0.0
        %6624 = vmatpush1.msra.mxu0 %v436
        %6625 = vmatprep.subr.mxu0 0.0
        %6626 = vmatpush1.msra.mxu0 %v437
        %6627 = vmatprep.subr.mxu0 0.0
        %6628 = vmatpush1.msra.mxu0 %v438
        %6629 = vmatprep.subr.mxu0 0.0
        %6630 = vmatpush1.msra.mxu0 %v439
        %6631 = vmatprep.subr.mxu0 0.0
        %6632 = vmatpush1.msra.mxu0 %v440
        %6633 = vmatprep.subr.mxu0 0.0
        %6634 = vmatpush1.msra.mxu0 %v441
        %6635 = vmatprep.subr.mxu0 0.0
        %6636 = vmatpush1.msra.mxu0 %v442
        %6637 = vmatprep.subr.mxu0 0.0
        %6638 = vmatpush1.msra.mxu0 %v443
        %6639 = vmatprep.subr.mxu0 0.0
        %6640 = vmatpush1.msra.mxu0 %v444
        %6641 = vmatprep.subr.mxu0 0.0
        %6642 = vmatpush1.msra.mxu0 %v445
        %6643 = vmatprep.subr.mxu0 0.0
        %6644 = vmatpush1.msra.mxu0 %v446
        %6645 = vmatprep.subr.mxu0 0.0
        %6646 = vmatpush1.msra.mxu0 %v447
        %6647 = vmatprep.subr.mxu0 0.0
        %6648 = vmatpush1.msra.mxu0 %v448
        %6649 = vmatprep.subr.mxu0 0.0
        %6650 = vmatpush1.msra.mxu0 %v449
        %6651 = vmatprep.subr.mxu0 0.0
        %6652 = vmatpush1.msra.mxu0 %v450
        %6653 = vmatprep.subr.mxu0 0.0
        %6654 = vmatpush1.msra.mxu0 %v451
        %6655 = vmatprep.subr.mxu0 0.0
        %6656 = vmatpush1.msra.mxu0 %v452
        %6657 = vmatprep.subr.mxu0 0.0
        %6658 = vmatpush1.msra.mxu0 %v453
        %6659 = vmatprep.subr.mxu0 0.0
        %6660 = vmatpush1.msra.mxu0 %v454
        %6661 = vmatprep.subr.mxu0 0.0
        %6662 = vmatpush1.msra.mxu0 %v455
        %6663 = vmatprep.subr.mxu0 0.0
        %6664 = vmatpush1.msra.mxu0 %v456
        %6665 = vmatprep.subr.mxu0 0.0
        %6666 = vmatpush1.msra.mxu0 %v457
        %6667 = vmatprep.mubr.f32.mxu0 %v6392
        %6668 = vmatmul.mubr.f32.gmra.mrb[0].mxu0 %v6391
        %v6669 = vpop.f32.mrb[0].mxu0
        %v6670 = vadd.f32 %v6600, %v6669
        %v6671 = vpop.f32.mrb[0].mxu0
        %6672 = vdwg.mxu0
        %v6673 = vmul.f32 %v6670, 0.00390625
        %v6674 = vmul.f32 %v6384, %v6384
        %v6675 = vsub.f32 %v6673, %v6674
        %v6676 = vadd.f32 %v6675, 1e-05
        %v6677 = vrsqrt.pop %v6676
        %v6679 = vsel %vm3184, %v6677, 0
        %6681 = vmatprep.subr.mxu0 %v3191
        %6682 = vmatpush1.msra.mxu0 %v3189
        %6683 = vmatprep.subr.mxu0 0.0
        %6684 = vmatpush1.msra.mxu0 0.0
        %6685 = vmatprep.subr.mxu0 0.0
        %6686 = vmatpush1.msra.mxu0 0.0
        %6687 = vmatprep.subr.mxu0 0.0
        %6688 = vmatpush1.msra.mxu0 0.0
        %6689 = vmatprep.subr.mxu0 0.0
        %6690 = vmatpush1.msra.mxu0 0.0
        %6691 = vmatprep.subr.mxu0 0.0
        %6692 = vmatpush1.msra.mxu0 0.0
        %6693 = vmatprep.subr.mxu0 0.0
        %6694 = vmatpush1.msra.mxu0 0.0
        %6695 = vmatprep.subr.mxu0 0.0
        %6696 = vmatpush1.msra.mxu0 0.0
        %6697 = vmatprep.subr.mxu0 0.0
        %6698 = vmatpush1.msra.mxu0 0.0
        %6699 = vmatprep.subr.mxu0 0.0
        %6700 = vmatpush1.msra.mxu0 0.0
        %6701 = vmatprep.subr.mxu0 0.0
        %6702 = vmatpush1.msra.mxu0 0.0
        %6703 = vmatprep.subr.mxu0 0.0
        %6704 = vmatpush1.msra.mxu0 0.0
        %6705 = vmatprep.subr.mxu0 0.0
        %6706 = vmatpush1.msra.mxu0 0.0
        %6707 = vmatprep.subr.mxu0 0.0
        %6708 = vmatpush1.msra.mxu0 0.0
        %6709 = vmatprep.subr.mxu0 0.0
        %6710 = vmatpush1.msra.mxu0 0.0
        %6711 = vmatprep.subr.mxu0 0.0
        %6712 = vmatpush1.msra.mxu0 0.0
        %6713 = vmatprep.subr.mxu0 0.0
        %6714 = vmatpush1.msra.mxu0 0.0
        %6715 = vmatprep.subr.mxu0 0.0
        %6716 = vmatpush1.msra.mxu0 0.0
        %6717 = vmatprep.subr.mxu0 0.0
        %6718 = vmatpush1.msra.mxu0 0.0
        %6719 = vmatprep.subr.mxu0 0.0
        %6720 = vmatpush1.msra.mxu0 0.0
        %6721 = vmatprep.subr.mxu0 0.0
        %6722 = vmatpush1.msra.mxu0 0.0
        %6723 = vmatprep.subr.mxu0 0.0
        %6724 = vmatpush1.msra.mxu0 0.0
        %6725 = vmatprep.subr.mxu0 0.0
        %6726 = vmatpush1.msra.mxu0 0.0
        %6727 = vmatprep.subr.mxu0 0.0
        %6728 = vmatpush1.msra.mxu0 0.0
        %6729 = vmatprep.subr.mxu0 0.0
        %6730 = vmatpush1.msra.mxu0 0.0
        %6731 = vmatprep.subr.mxu0 0.0
        %6732 = vmatpush1.msra.mxu0 0.0
        %6733 = vmatprep.subr.mxu0 0.0
        %6734 = vmatpush1.msra.mxu0 0.0
        %6735 = vmatprep.subr.mxu0 0.0
        %6736 = vmatpush1.msra.mxu0 0.0
        %6737 = vmatprep.subr.mxu0 0.0
        %6738 = vmatpush1.msra.mxu0 0.0
        %6739 = vmatprep.subr.mxu0 0.0
        %6740 = vmatpush1.msra.mxu0 0.0
        %6741 = vmatprep.subr.mxu0 0.0
        %6742 = vmatpush1.msra.mxu0 0.0
        %6743 = vmatprep.subr.mxu0 0.0
        %6744 = vmatpush1.msra.mxu0 0.0
        %6745 = vmatprep.mubr.f32.mxu0 0.0
        %6746 = vmatmul.mubr.f32.gmra.mrb[0].mxu0 %v6679
        %v6747 = vpop.f32.mrb[0].mxu0
        %v6748 = vadd.f32 0.0, %v6747
        %v6749 = vpop.f32.mrb[0].mxu0
        %v6750 = vadd.f32 0.0, %v6749
        %6751 = vdwg.mxu0
        %6752 = vmatprep.subr.mxu0 %v3195
        %6753 = vmatpush1.msra.mxu0 %v3193
        %6754 = vmatprep.subr.mxu0 0.0
        %6755 = vmatpush1.msra.mxu0 0.0
        %6756 = vmatprep.subr.mxu0 0.0
        %6757 = vmatpush1.msra.mxu0 0.0
        %6758 = vmatprep.subr.mxu0 0.0
        %6759 = vmatpush1.msra.mxu0 0.0
        %6760 = vmatprep.subr.mxu0 0.0
        %6761 = vmatpush1.msra.mxu0 0.0
        %6762 = vmatprep.subr.mxu0 0.0
        %6763 = vmatpush1.msra.mxu0 0.0
        %6764 = vmatprep.subr.mxu0 0.0
        %6765 = vmatpush1.msra.mxu0 0.0
        %6766 = vmatprep.subr.mxu0 0.0
        %6767 = vmatpush1.msra.mxu0 0.0
        %6768 = vmatprep.subr.mxu0 0.0
        %6769 = vmatpush1.msra.mxu0 0.0
        %6770 = vmatprep.subr.mxu0 0.0
        %6771 = vmatpush1.msra.mxu0 0.0
        %6772 = vmatprep.subr.mxu0 0.0
        %6773 = vmatpush1.msra.mxu0 0.0
        %6774 = vmatprep.subr.mxu0 0.0
        %6775 = vmatpush1.msra.mxu0 0.0
        %6776 = vmatprep.subr.mxu0 0.0
        %6777 = vmatpush1.msra.mxu0 0.0
        %6778 = vmatprep.subr.mxu0 0.0
        %6779 = vmatpush1.msra.mxu0 0.0
        %6780 = vmatprep.subr.mxu0 0.0
        %6781 = vmatpush1.msra.mxu0 0.0
        %6782 = vmatprep.subr.mxu0 0.0
        %6783 = vmatpush1.msra.mxu0 0.0
        %6784 = vmatprep.subr.mxu0 0.0
        %6785 = vmatpush1.msra.mxu0 0.0
        %6786 = vmatprep.subr.mxu0 0.0
        %6787 = vmatpush1.msra.mxu0 0.0
        %6788 = vmatprep.subr.mxu0 0.0
        %6789 = vmatpush1.msra.mxu0 0.0
        %6790 = vmatprep.subr.mxu0 0.0
        %6791 = vmatpush1.msra.mxu0 0.0
        %6792 = vmatprep.subr.mxu0 0.0
        %6793 = vmatpush1.msra.mxu0 0.0
        %6794 = vmatprep.subr.mxu0 0.0
        %6795 = vmatpush1.msra.mxu0 0.0
        %6796 = vmatprep.subr.mxu0 0.0
        %6797 = vmatpush1.msra.mxu0 0.0
        %6798 = vmatprep.subr.mxu0 0.0
        %6799 = vmatpush1.msra.mxu0 0.0
        %6800 = vmatprep.subr.mxu0 0.0
        %6801 = vmatpush1.msra.mxu0 0.0
        %6802 = vmatprep.subr.mxu0 0.0
        %6803 = vmatpush1.msra.mxu0 0.0
        %6804 = vmatprep.subr.mxu0 0.0
        %6805 = vmatpush1.msra.mxu0 0.0
        %6806 = vmatprep.subr.mxu0 0.0
        %6807 = vmatpush1.msra.mxu0 0.0
        %6808 = vmatprep.subr.mxu0 0.0
        %6809 = vmatpush1.msra.mxu0 0.0
        %6810 = vmatprep.subr.mxu0 0.0
        %6811 = vmatpush1.msra.mxu0 0.0
        %6812 = vmatprep.subr.mxu0 0.0
        %6813 = vmatpush1.msra.mxu0 0.0
        %6814 = vmatprep.subr.mxu0 0.0
        %6815 = vmatpush1.msra.mxu0 0.0
        %6816 = vmatprep.mubr.f32.mxu0 0.0
        %6817 = vmatmul.mubr.f32.gmra.mrb[0].mxu0 %v6679
        %v6818 = vpop.f32.mrb[0].mxu0
        %v6819 = vadd.f32 0.0, %v6818
        %v6820 = vpop.f32.mrb[0].mxu0
        %v6821 = vadd.f32 0.0, %v6820
        %6822 = vdwg.mxu0
        %6823 = vmatprep.subr.mxu0 %v3199
        %6824 = vmatpush1.msra.mxu0 %v3197
        %6825 = vmatprep.subr.mxu0 0.0
        %6826 = vmatpush1.msra.mxu0 0.0
        %6827 = vmatprep.subr.mxu0 0.0
        %6828 = vmatpush1.msra.mxu0 0.0
        %6829 = vmatprep.subr.mxu0 0.0
        %6830 = vmatpush1.msra.mxu0 0.0
        %6831 = vmatprep.subr.mxu0 0.0
        %6832 = vmatpush1.msra.mxu0 0.0
        %6833 = vmatprep.subr.mxu0 0.0
        %6834 = vmatpush1.msra.mxu0 0.0
        %6835 = vmatprep.subr.mxu0 0.0
        %6836 = vmatpush1.msra.mxu0 0.0
        %6837 = vmatprep.subr.mxu0 0.0
        %6838 = vmatpush1.msra.mxu0 0.0
        %6839 = vmatprep.subr.mxu0 0.0
        %6840 = vmatpush1.msra.mxu0 0.0
        %6841 = vmatprep.subr.mxu0 0.0
        %6842 = vmatpush1.msra.mxu0 0.0
        %6843 = vmatprep.subr.mxu0 0.0
        %6844 = vmatpush1.msra.mxu0 0.0
        %6845 = vmatprep.subr.mxu0 0.0
        %6846 = vmatpush1.msra.mxu0 0.0
        %6847 = vmatprep.subr.mxu0 0.0
        %6848 = vmatpush1.msra.mxu0 0.0
        %6849 = vmatprep.subr.mxu0 0.0
        %6850 = vmatpush1.msra.mxu0 0.0
        %6851 = vmatprep.subr.mxu0 0.0
        %6852 = vmatpush1.msra.mxu0 0.0
        %6853 = vmatprep.subr.mxu0 0.0
        %6854 = vmatpush1.msra.mxu0 0.0
        %6855 = vmatprep.subr.mxu0 0.0
        %6856 = vmatpush1.msra.mxu0 0.0
        %6857 = vmatprep.subr.mxu0 0.0
        %6858 = vmatpush1.msra.mxu0 0.0
        %6859 = vmatprep.subr.mxu0 0.0
        %6860 = vmatpush1.msra.mxu0 0.0
        %6861 = vmatprep.subr.mxu0 0.0
        %6862 = vmatpush1.msra.mxu0 0.0
        %6863 = vmatprep.subr.mxu0 0.0
        %6864 = vmatpush1.msra.mxu0 0.0
        %6865 = vmatprep.subr.mxu0 0.0
        %6866 = vmatpush1.msra.mxu0 0.0
        %6867 = vmatprep.subr.mxu0 0.0
        %6868 = vmatpush1.msra.mxu0 0.0
        %6869 = vmatprep.subr.mxu0 0.0
        %6870 = vmatpush1.msra.mxu0 0.0
        %6871 = vmatprep.subr.mxu0 0.0
        %6872 = vmatpush1.msra.mxu0 0.0
        %6873 = vmatprep.subr.mxu0 0.0
        %6874 = vmatpush1.msra.mxu0 0.0
        %6875 = vmatprep.subr.mxu0 0.0
        %6876 = vmatpush1.msra.mxu0 0.0
        %6877 = vmatprep.subr.mxu0 0.0
        %6878 = vmatpush1.msra.mxu0 0.0
        %6879 = vmatprep.subr.mxu0 0.0
        %6880 = vmatpush1.msra.mxu0 0.0
        %6881 = vmatprep.subr.mxu0 0.0
        %6882 = vmatpush1.msra.mxu0 0.0
        %6883 = vmatprep.subr.mxu0 0.0
        %6884 = vmatpush1.msra.mxu0 0.0
        %6885 = vmatprep.subr.mxu0 0.0
        %6886 = vmatpush1.msra.mxu0 0.0
        %6887 = vmatprep.mubr.f32.mxu0 0.0
        %6888 = vmatmul.mubr.f32.gmra.mrb[0].mxu0 %v6679
        %v6889 = vpop.f32.mrb[0].mxu0
        %v6890 = vadd.f32 0.0, %v6889
        %v6891 = vpop.f32.mrb[0].mxu0
        %v6892 = vadd.f32 0.0, %v6891
        %6893 = vdwg.mxu0
        %6894 = vmatprep.subr.mxu0 %v3203
        %6895 = vmatpush1.msra.mxu0 %v3201
        %6896 = vmatprep.subr.mxu0 0.0
        %6897 = vmatpush1.msra.mxu0 0.0
        %6898 = vmatprep.subr.mxu0 0.0
        %6899 = vmatpush1.msra.mxu0 0.0
        %6900 = vmatprep.subr.mxu0 0.0
        %6901 = vmatpush1.msra.mxu0 0.0
        %6902 = vmatprep.subr.mxu0 0.0
        %6903 = vmatpush1.msra.mxu0 0.0
        %6904 = vmatprep.subr.mxu0 0.0
        %6905 = vmatpush1.msra.mxu0 0.0
        %6906 = vmatprep.subr.mxu0 0.0
        %6907 = vmatpush1.msra.mxu0 0.0
        %6908 = vmatprep.subr.mxu0 0.0
        %6909 = vmatpush1.msra.mxu0 0.0
        %6910 = vmatprep.subr.mxu0 0.0
        %6911 = vmatpush1.msra.mxu0 0.0
        %6912 = vmatprep.subr.mxu0 0.0
        %6913 = vmatpush1.msra.mxu0 0.0
        %6914 = vmatprep.subr.mxu0 0.0
        %6915 = vmatpush1.msra.mxu0 0.0
        %6916 = vmatprep.subr.mxu0 0.0
        %6917 = vmatpush1.msra.mxu0 0.0
        %6918 = vmatprep.subr.mxu0 0.0
        %6919 = vmatpush1.msra.mxu0 0.0
        %6920 = vmatprep.subr.mxu0 0.0
        %6921 = vmatpush1.msra.mxu0 0.0
        %6922 = vmatprep.subr.mxu0 0.0
        %6923 = vmatpush1.msra.mxu0 0.0
        %6924 = vmatprep.subr.mxu0 0.0
        %6925 = vmatpush1.msra.mxu0 0.0
        %6926 = vmatprep.subr.mxu0 0.0
        %6927 = vmatpush1.msra.mxu0 0.0
        %6928 = vmatprep.subr.mxu0 0.0
        %6929 = vmatpush1.msra.mxu0 0.0
        %6930 = vmatprep.subr.mxu0 0.0
        %6931 = vmatpush1.msra.mxu0 0.0
        %6932 = vmatprep.subr.mxu0 0.0
        %6933 = vmatpush1.msra.mxu0 0.0
        %6934 = vmatprep.subr.mxu0 0.0
        %6935 = vmatpush1.msra.mxu0 0.0
        %6936 = vmatprep.subr.mxu0 0.0
        %6937 = vmatpush1.msra.mxu0 0.0
        %6938 = vmatprep.subr.mxu0 0.0
        %6939 = vmatpush1.msra.mxu0 0.0
        %6940 = vmatprep.subr.mxu0 0.0
        %6941 = vmatpush1.msra.mxu0 0.0
        %6942 = vmatprep.subr.mxu0 0.0
        %6943 = vmatpush1.msra.mxu0 0.0
        %6944 = vmatprep.subr.mxu0 0.0
        %6945 = vmatpush1.msra.mxu0 0.0
        %6946 = vmatprep.subr.mxu0 0.0
        %6947 = vmatpush1.msra.mxu0 0.0
        %6948 = vmatprep.subr.mxu0 0.0
        %6949 = vmatpush1.msra.mxu0 0.0
        %6950 = vmatprep.subr.mxu0 0.0
        %6951 = vmatpush1.msra.mxu0 0.0
        %6952 = vmatprep.subr.mxu0 0.0
        %6953 = vmatpush1.msra.mxu0 0.0
        %6954 = vmatprep.subr.mxu0 0.0
        %6955 = vmatpush1.msra.mxu0 0.0
        %6956 = vmatprep.subr.mxu0 0.0
        %6957 = vmatpush1.msra.mxu0 0.0
        %6958 = vmatprep.mubr.f32.mxu0 0.0
        %6959 = vmatmul.mubr.f32.gmra.mrb[0].mxu0 %v6679
        %v6960 = vpop.f32.mrb[0].mxu0
        %v6961 = vadd.f32 0.0, %v6960
        %v6962 = vpop.f32.mrb[0].mxu0
        %v6963 = vadd.f32 0.0, %v6962
        %6964 = vdwg.mxu0
        %v6966 = vsel %vm3184, %v6384, 0
        %6968 = vmatprep.subr.mxu0 %v3191
        %6969 = vmatpush1.msra.mxu0 %v3189
        %6970 = vmatprep.subr.mxu0 0.0
        %6971 = vmatpush1.msra.mxu0 0.0
        %6972 = vmatprep.subr.mxu0 0.0
        %6973 = vmatpush1.msra.mxu0 0.0
        %6974 = vmatprep.subr.mxu0 0.0
        %6975 = vmatpush1.msra.mxu0 0.0
        %6976 = vmatprep.subr.mxu0 0.0
        %6977 = vmatpush1.msra.mxu0 0.0
        %6978 = vmatprep.subr.mxu0 0.0
        %6979 = vmatpush1.msra.mxu0 0.0
        %6980 = vmatprep.subr.mxu0 0.0
        %6981 = vmatpush1.msra.mxu0 0.0
        %6982 = vmatprep.subr.mxu0 0.0
        %6983 = vmatpush1.msra.mxu0 0.0
        %6984 = vmatprep.subr.mxu0 0.0
        %6985 = vmatpush1.msra.mxu0 0.0
        %6986 = vmatprep.subr.mxu0 0.0
        %6987 = vmatpush1.msra.mxu0 0.0
        %6988 = vmatprep.subr.mxu0 0.0
        %6989 = vmatpush1.msra.mxu0 0.0
        %6990 = vmatprep.subr.mxu0 0.0
        %6991 = vmatpush1.msra.mxu0 0.0
        %6992 = vmatprep.subr.mxu0 0.0
        %6993 = vmatpush1.msra.mxu0 0.0
        %6994 = vmatprep.subr.mxu0 0.0
        %6995 = vmatpush1.msra.mxu0 0.0
        %6996 = vmatprep.subr.mxu0 0.0
        %6997 = vmatpush1.msra.mxu0 0.0
        %6998 = vmatprep.subr.mxu0 0.0
        %6999 = vmatpush1.msra.mxu0 0.0
        %7000 = vmatprep.subr.mxu0 0.0
        %7001 = vmatpush1.msra.mxu0 0.0
        %7002 = vmatprep.subr.mxu0 0.0
        %7003 = vmatpush1.msra.mxu0 0.0
        %7004 = vmatprep.subr.mxu0 0.0
        %7005 = vmatpush1.msra.mxu0 0.0
        %7006 = vmatprep.subr.mxu0 0.0
        %7007 = vmatpush1.msra.mxu0 0.0
        %7008 = vmatprep.subr.mxu0 0.0
        %7009 = vmatpush1.msra.mxu0 0.0
        %7010 = vmatprep.subr.mxu0 0.0
        %7011 = vmatpush1.msra.mxu0 0.0
        %7012 = vmatprep.subr.mxu0 0.0
        %7013 = vmatpush1.msra.mxu0 0.0
        %7014 = vmatprep.subr.mxu0 0.0
        %7015 = vmatpush1.msra.mxu0 0.0
        %7016 = vmatprep.subr.mxu0 0.0
        %7017 = vmatpush1.msra.mxu0 0.0
        %7018 = vmatprep.subr.mxu0 0.0
        %7019 = vmatpush1.msra.mxu0 0.0
        %7020 = vmatprep.subr.mxu0 0.0
        %7021 = vmatpush1.msra.mxu0 0.0
        %7022 = vmatprep.subr.mxu0 0.0
        %7023 = vmatpush1.msra.mxu0 0.0
        %7024 = vmatprep.subr.mxu0 0.0
        %7025 = vmatpush1.msra.mxu0 0.0
        %7026 = vmatprep.subr.mxu0 0.0
        %7027 = vmatpush1.msra.mxu0 0.0
        %7028 = vmatprep.subr.mxu0 0.0
        %7029 = vmatpush1.msra.mxu0 0.0
        %7030 = vmatprep.subr.mxu0 0.0
        %7031 = vmatpush1.msra.mxu0 0.0
        %7032 = vmatprep.mubr.f32.mxu0 0.0
        %7033 = vmatmul.mubr.f32.gmra.mrb[0].mxu0 %v6966
        %v7034 = vpop.f32.mrb[0].mxu0
        %v7035 = vadd.f32 0.0, %v7034
        %v7036 = vpop.f32.mrb[0].mxu0
        %v7037 = vadd.f32 0.0, %v7036
        %7038 = vdwg.mxu0
        %7039 = vmatprep.subr.mxu0 %v3195
        %7040 = vmatpush1.msra.mxu0 %v3193
        %7041 = vmatprep.subr.mxu0 0.0
        %7042 = vmatpush1.msra.mxu0 0.0
        %7043 = vmatprep.subr.mxu0 0.0
        %7044 = vmatpush1.msra.mxu0 0.0
        %7045 = vmatprep.subr.mxu0 0.0
        %7046 = vmatpush1.msra.mxu0 0.0
        %7047 = vmatprep.subr.mxu0 0.0
        %7048 = vmatpush1.msra.mxu0 0.0
        %7049 = vmatprep.subr.mxu0 0.0
        %7050 = vmatpush1.msra.mxu0 0.0
        %7051 = vmatprep.subr.mxu0 0.0
        %7052 = vmatpush1.msra.mxu0 0.0
        %7053 = vmatprep.subr.mxu0 0.0
        %7054 = vmatpush1.msra.mxu0 0.0
        %7055 = vmatprep.subr.mxu0 0.0
        %7056 = vmatpush1.msra.mxu0 0.0
        %7057 = vmatprep.subr.mxu0 0.0
        %7058 = vmatpush1.msra.mxu0 0.0
        %7059 = vmatprep.subr.mxu0 0.0
        %7060 = vmatpush1.msra.mxu0 0.0
        %7061 = vmatprep.subr.mxu0 0.0
        %7062 = vmatpush1.msra.mxu0 0.0
        %7063 = vmatprep.subr.mxu0 0.0
        %7064 = vmatpush1.msra.mxu0 0.0
        %7065 = vmatprep.subr.mxu0 0.0
        %7066 = vmatpush1.msra.mxu0 0.0
        %7067 = vmatprep.subr.mxu0 0.0
        %7068 = vmatpush1.msra.mxu0 0.0
        %7069 = vmatprep.subr.mxu0 0.0
        %7070 = vmatpush1.msra.mxu0 0.0
        %7071 = vmatprep.subr.mxu0 0.0
        %7072 = vmatpush1.msra.mxu0 0.0
        %7073 = vmatprep.subr.mxu0 0.0
        %7074 = vmatpush1.msra.mxu0 0.0
        %7075 = vmatprep.subr.mxu0 0.0
        %7076 = vmatpush1.msra.mxu0 0.0
        %7077 = vmatprep.subr.mxu0 0.0
        %7078 = vmatpush1.msra.mxu0 0.0
        %7079 = vmatprep.subr.mxu0 0.0
        %7080 = vmatpush1.msra.mxu0 0.0
        %7081 = vmatprep.subr.mxu0 0.0
        %7082 = vmatpush1.msra.mxu0 0.0
        %7083 = vmatprep.subr.mxu0 0.0
        %7084 = vmatpush1.msra.mxu0 0.0
        %7085 = vmatprep.subr.mxu0 0.0
        %7086 = vmatpush1.msra.mxu0 0.0
        %7087 = vmatprep.subr.mxu0 0.0
        %7088 = vmatpush1.msra.mxu0 0.0
        %7089 = vmatprep.subr.mxu0 0.0
        %7090 = vmatpush1.msra.mxu0 0.0
        %7091 = vmatprep.subr.mxu0 0.0
        %7092 = vmatpush1.msra.mxu0 0.0
        %7093 = vmatprep.subr.mxu0 0.0
        %7094 = vmatpush1.msra.mxu0 0.0
        %7095 = vmatprep.subr.mxu0 0.0
        %7096 = vmatpush1.msra.mxu0 0.0
        %7097 = vmatprep.subr.mxu0 0.0
        %7098 = vmatpush1.msra.mxu0 0.0
        %7099 = vmatprep.subr.mxu0 0.0
        %7100 = vmatpush1.msra.mxu0 0.0
        %7101 = vmatprep.subr.mxu0 0.0
        %7102 = vmatpush1.msra.mxu0 0.0
        %7103 = vmatprep.mubr.f32.mxu0 0.0
        %7104 = vmatmul.mubr.f32.gmra.mrb[0].mxu0 %v6966
        %v7105 = vpop.f32.mrb[0].mxu0
        %v7106 = vadd.f32 0.0, %v7105
        %v7107 = vpop.f32.mrb[0].mxu0
        %v7108 = vadd.f32 0.0, %v7107
        %7109 = vdwg.mxu0
        %7110 = vmatprep.subr.mxu0 %v3199
        %7111 = vmatpush1.msra.mxu0 %v3197
        %7112 = vmatprep.subr.mxu0 0.0
        %7113 = vmatpush1.msra.mxu0 0.0
        %7114 = vmatprep.subr.mxu0 0.0
        %7115 = vmatpush1.msra.mxu0 0.0
        %7116 = vmatprep.subr.mxu0 0.0
        %7117 = vmatpush1.msra.mxu0 0.0
        %7118 = vmatprep.subr.mxu0 0.0
        %7119 = vmatpush1.msra.mxu0 0.0
        %7120 = vmatprep.subr.mxu0 0.0
        %7121 = vmatpush1.msra.mxu0 0.0
        %7122 = vmatprep.subr.mxu0 0.0
        %7123 = vmatpush1.msra.mxu0 0.0
        %7124 = vmatprep.subr.mxu0 0.0
        %7125 = vmatpush1.msra.mxu0 0.0
        %7126 = vmatprep.subr.mxu0 0.0
        %7127 = vmatpush1.msra.mxu0 0.0
        %7128 = vmatprep.subr.mxu0 0.0
        %7129 = vmatpush1.msra.mxu0 0.0
        %7130 = vmatprep.subr.mxu0 0.0
        %7131 = vmatpush1.msra.mxu0 0.0
        %7132 = vmatprep.subr.mxu0 0.0
        %7133 = vmatpush1.msra.mxu0 0.0
        %7134 = vmatprep.subr.mxu0 0.0
        %7135 = vmatpush1.msra.mxu0 0.0
        %7136 = vmatprep.subr.mxu0 0.0
        %7137 = vmatpush1.msra.mxu0 0.0
        %7138 = vmatprep.subr.mxu0 0.0
        %7139 = vmatpush1.msra.mxu0 0.0
        %7140 = vmatprep.subr.mxu0 0.0
        %7141 = vmatpush1.msra.mxu0 0.0
        %7142 = vmatprep.subr.mxu0 0.0
        %7143 = vmatpush1.msra.mxu0 0.0
        %7144 = vmatprep.subr.mxu0 0.0
        %7145 = vmatpush1.msra.mxu0 0.0
        %7146 = vmatprep.subr.mxu0 0.0
        %7147 = vmatpush1.msra.mxu0 0.0
        %7148 = vmatprep.subr.mxu0 0.0
        %7149 = vmatpush1.msra.mxu0 0.0
        %7150 = vmatprep.subr.mxu0 0.0
        %7151 = vmatpush1.msra.mxu0 0.0
        %7152 = vmatprep.subr.mxu0 0.0
        %7153 = vmatpush1.msra.mxu0 0.0
        %7154 = vmatprep.subr.mxu0 0.0
        %7155 = vmatpush1.msra.mxu0 0.0
        %7156 = vmatprep.subr.mxu0 0.0
        %7157 = vmatpush1.msra.mxu0 0.0
        %7158 = vmatprep.subr.mxu0 0.0
        %7159 = vmatpush1.msra.mxu0 0.0
        %7160 = vmatprep.subr.mxu0 0.0
        %7161 = vmatpush1.msra.mxu0 0.0
        %7162 = vmatprep.subr.mxu0 0.0
        %7163 = vmatpush1.msra.mxu0 0.0
        %7164 = vmatprep.subr.mxu0 0.0
        %7165 = vmatpush1.msra.mxu0 0.0
        %7166 = vmatprep.subr.mxu0 0.0
        %7167 = vmatpush1.msra.mxu0 0.0
        %7168 = vmatprep.subr.mxu0 0.0
        %7169 = vmatpush1.msra.mxu0 0.0
        %7170 = vmatprep.subr.mxu0 0.0
        %7171 = vmatpush1.msra.mxu0 0.0
        %7172 = vmatprep.subr.mxu0 0.0
        %7173 = vmatpush1.msra.mxu0 0.0
        %7174 = vmatprep.mubr.f32.mxu0 0.0
        %7175 = vmatmul.mubr.f32.gmra.mrb[0].mxu0 %v6966
        %v7176 = vpop.f32.mrb[0].mxu0
        %v7177 = vadd.f32 0.0, %v7176
        %v7178 = vpop.f32.mrb[0].mxu0
        %v7179 = vadd.f32 0.0, %v7178
        %7180 = vdwg.mxu0
        %7181 = vmatprep.subr.mxu0 %v3203
        %7182 = vmatpush1.msra.mxu0 %v3201
        %7183 = vmatprep.subr.mxu0 0.0
        %7184 = vmatpush1.msra.mxu0 0.0
        %7185 = vmatprep.subr.mxu0 0.0
        %7186 = vmatpush1.msra.mxu0 0.0
        %7187 = vmatprep.subr.mxu0 0.0
        %7188 = vmatpush1.msra.mxu0 0.0
        %7189 = vmatprep.subr.mxu0 0.0
        %7190 = vmatpush1.msra.mxu0 0.0
        %7191 = vmatprep.subr.mxu0 0.0
        %7192 = vmatpush1.msra.mxu0 0.0
        %7193 = vmatprep.subr.mxu0 0.0
        %7194 = vmatpush1.msra.mxu0 0.0
        %7195 = vmatprep.subr.mxu0 0.0
        %7196 = vmatpush1.msra.mxu0 0.0
        %7197 = vmatprep.subr.mxu0 0.0
        %7198 = vmatpush1.msra.mxu0 0.0
        %7199 = vmatprep.subr.mxu0 0.0
        %7200 = vmatpush1.msra.mxu0 0.0
        %7201 = vmatprep.subr.mxu0 0.0
        %7202 = vmatpush1.msra.mxu0 0.0
        %7203 = vmatprep.subr.mxu0 0.0
        %7204 = vmatpush1.msra.mxu0 0.0
        %7205 = vmatprep.subr.mxu0 0.0
        %7206 = vmatpush1.msra.mxu0 0.0
        %7207 = vmatprep.subr.mxu0 0.0
        %7208 = vmatpush1.msra.mxu0 0.0
        %7209 = vmatprep.subr.mxu0 0.0
        %7210 = vmatpush1.msra.mxu0 0.0
        %7211 = vmatprep.subr.mxu0 0.0
        %7212 = vmatpush1.msra.mxu0 0.0
        %7213 = vmatprep.subr.mxu0 0.0
        %7214 = vmatpush1.msra.mxu0 0.0
        %7215 = vmatprep.subr.mxu0 0.0
        %7216 = vmatpush1.msra.mxu0 0.0
        %7217 = vmatprep.subr.mxu0 0.0
        %7218 = vmatpush1.msra.mxu0 0.0
        %7219 = vmatprep.subr.mxu0 0.0
        %7220 = vmatpush1.msra.mxu0 0.0
        %7221 = vmatprep.subr.mxu0 0.0
        %7222 = vmatpush1.msra.mxu0 0.0
        %7223 = vmatprep.subr.mxu0 0.0
        %7224 = vmatpush1.msra.mxu0 0.0
        %7225 = vmatprep.subr.mxu0 0.0
        %7226 = vmatpush1.msra.mxu0 0.0
        %7227 = vmatprep.subr.mxu0 0.0
        %7228 = vmatpush1.msra.mxu0 0.0
        %7229 = vmatprep.subr.mxu0 0.0
        %7230 = vmatpush1.msra.mxu0 0.0
        %7231 = vmatprep.subr.mxu0 0.0
        %7232 = vmatpush1.msra.mxu0 0.0
        %7233 = vmatprep.subr.mxu0 0.0
        %7234 = vmatpush1.msra.mxu0 0.0
        %7235 = vmatprep.subr.mxu0 0.0
        %7236 = vmatpush1.msra.mxu0 0.0
        %7237 = vmatprep.subr.mxu0 0.0
        %7238 = vmatpush1.msra.mxu0 0.0
        %7239 = vmatprep.subr.mxu0 0.0
        %7240 = vmatpush1.msra.mxu0 0.0
        %7241 = vmatprep.subr.mxu0 0.0
        %7242 = vmatpush1.msra.mxu0 0.0
        %7243 = vmatprep.subr.mxu0 0.0
        %7244 = vmatpush1.msra.mxu0 0.0
        %7245 = vmatprep.mubr.f32.mxu0 0.0
        %7246 = vmatmul.mubr.f32.gmra.mrb[0].mxu0 %v6966
        %v7247 = vpop.f32.mrb[0].mxu0
        %v7248 = vadd.f32 0.0, %v7247
        %v7249 = vpop.f32.mrb[0].mxu0
        %v7250 = vadd.f32 0.0, %v7249
        %7251 = vdwg.mxu0
        %v7252 = vlaneseq
        %v7253 = vshrl.u32 %v7252, 7
        %v7254 = vsub.s32 4, %v7253
        %v7255 = vrot.slane %v322, %v7254
        %v7256 = vlaneseq
        %v7257 = vshrl.u32 %v7256, 7
        %v7258 = vsub.s32 4, %v7257
        %v7259 = vrot.slane %v323, %v7258
        %v7260 = vlaneseq
        %v7261 = vshrl.u32 %v7260, 7
        %v7262 = vsub.s32 4, %v7261
        %v7263 = vrot.slane %v324, %v7262
        %v7264 = vlaneseq
        %v7265 = vshrl.u32 %v7264, 7
        %v7266 = vsub.s32 4, %v7265
        %v7267 = vrot.slane %v325, %v7266
        %v7268 = vlaneseq
        %v7269 = vshrl.u32 %v7268, 7
        %v7270 = vsub.s32 4, %v7269
        %v7271 = vrot.slane %v326, %v7270
        %v7272 = vlaneseq
        %v7273 = vshrl.u32 %v7272, 7
        %v7274 = vsub.s32 4, %v7273
        %v7275 = vrot.slane %v327, %v7274
        %v7276 = vlaneseq
        %v7277 = vshrl.u32 %v7276, 7
        %v7278 = vsub.s32 4, %v7277
        %v7279 = vrot.slane %v328, %v7278
        %v7280 = vlaneseq
        %v7281 = vshrl.u32 %v7280, 7
        %v7282 = vsub.s32 4, %v7281
        %v7283 = vrot.slane %v329, %v7282
        %v7284 = vmul.f32 %v6748, %v7255
        %v7285 = vmul.f32 %v6750, %v7259
        %v7286 = vmul.f32 %v6819, %v7263
        %v7287 = vmul.f32 %v6821, %v7267
        %v7288 = vmul.f32 %v6890, %v7271
        %v7289 = vmul.f32 %v6892, %v7275
        %v7290 = vmul.f32 %v6961, %v7279
        %v7291 = vmul.f32 %v6963, %v7283
        %v7292 = vsub.f32 %v5248, %v7035
        %v7293 = vsub.f32 %v5250, %v7037
        %v7294 = vsub.f32 %v5532, %v7106
        %v7295 = vsub.f32 %v5534, %v7108
        %v7296 = vsub.f32 %v5816, %v7177
        %v7297 = vsub.f32 %v5818, %v7179
        %v7298 = vsub.f32 %v6100, %v7248
        %v7299 = vsub.f32 %v6102, %v7250
        %v7300 = vmul.f32 %v7292, %v7284
        %v7301 = vmul.f32 %v7293, %v7285
        %v7302 = vmul.f32 %v7294, %v7286
        %v7303 = vmul.f32 %v7295, %v7287
        %v7304 = vmul.f32 %v7296, %v7288
        %v7305 = vmul.f32 %v7297, %v7289
        %v7306 = vmul.f32 %v7298, %v7290
        %v7307 = vmul.f32 %v7299, %v7291
        %v7308 = vlaneseq
        %v7309 = vshrl.u32 %v7308, 7
        %v7310 = vsub.s32 5, %v7309
        %v7311 = vrot.slane %v322, %v7310
        %v7312 = vlaneseq
        %v7313 = vshrl.u32 %v7312, 7
        %v7314 = vsub.s32 5, %v7313
        %v7315 = vrot.slane %v323, %v7314
        %v7316 = vlaneseq
        %v7317 = vshrl.u32 %v7316, 7
        %v7318 = vsub.s32 5, %v7317
        %v7319 = vrot.slane %v324, %v7318
        %v7320 = vlaneseq
        %v7321 = vshrl.u32 %v7320, 7
        %v7322 = vsub.s32 5, %v7321
        %v7323 = vrot.slane %v325, %v7322
        %v7324 = vlaneseq
        %v7325 = vshrl.u32 %v7324, 7
        %v7326 = vsub.s32 5, %v7325
        %v7327 = vrot.slane %v326, %v7326
        %v7328 = vlaneseq
        %v7329 = vshrl.u32 %v7328, 7
        %v7330 = vsub.s32 5, %v7329
        %v7331 = vrot.slane %v327, %v7330
        %v7332 = vlaneseq
        %v7333 = vshrl.u32 %v7332, 7
        %v7334 = vsub.s32 5, %v7333
        %v7335 = vrot.slane %v328, %v7334
        %v7336 = vlaneseq
        %v7337 = vshrl.u32 %v7336, 7
        %v7338 = vsub.s32 5, %v7337
        %v7339 = vrot.slane %v329, %v7338
        %v7340 = vadd.f32 %v7300, %v7311
        %v7341 = vadd.f32 %v7301, %v7315
        %v7342 = vadd.f32 %v7302, %v7319
        %v7343 = vadd.f32 %v7303, %v7323
        %v7344 = vadd.f32 %v7304, %v7327
        %v7345 = vadd.f32 %v7305, %v7331
        %v7346 = vadd.f32 %v7306, %v7335
        %v7347 = vadd.f32 %v7307, %v7339
        %v7348 = vmul.f32 %v7340, 0.5
        %v7349 = vmul.f32 %v7341, 0.5
        %v7350 = vmul.f32 %v7342, 0.5
        %v7351 = vmul.f32 %v7343, 0.5
        %v7352 = vmul.f32 %v7344, 0.5
        %v7353 = vmul.f32 %v7345, 0.5
        %v7354 = vmul.f32 %v7346, 0.5
        %v7355 = vmul.f32 %v7347, 0.5
        %v7356 = vtanh.pop %v7348
        %v7357 = vtanh.pop %v7349
        %v7358 = vtanh.pop %v7350
        %v7359 = vtanh.pop %v7351
        %v7360 = vtanh.pop %v7352
        %v7361 = vtanh.pop %v7353
        %v7362 = vtanh.pop %v7354
        %v7363 = vtanh.pop %v7355
        %v7364 = vadd.f32 %v7356, 1.0
        %v7365 = vadd.f32 %v7357, 1.0
        %v7366 = vadd.f32 %v7358, 1.0
        %v7367 = vadd.f32 %v7359, 1.0
        %v7368 = vadd.f32 %v7360, 1.0
        %v7369 = vadd.f32 %v7361, 1.0
        %v7370 = vadd.f32 %v7362, 1.0
        %v7371 = vadd.f32 %v7363, 1.0
        %v7372 = vmul.f32 %v7364, 0.5
        %v7373 = vmul.f32 %v7365, 0.5
        %v7374 = vmul.f32 %v7366, 0.5
        %v7375 = vmul.f32 %v7367, 0.5
        %v7376 = vmul.f32 %v7368, 0.5
        %v7377 = vmul.f32 %v7369, 0.5
        %v7378 = vmul.f32 %v7370, 0.5
        %v7379 = vmul.f32 %v7371, 0.5
        %v7380 = vmul.f32 %v7340, %v7372
        %v7381 = vmul.f32 %v7341, %v7373
        %v7382 = vmul.f32 %v7342, %v7374
        %v7383 = vmul.f32 %v7343, %v7375
        %v7384 = vmul.f32 %v7344, %v7376
        %v7385 = vmul.f32 %v7345, %v7377
        %v7386 = vmul.f32 %v7346, %v7378
        %v7387 = vmul.f32 %v7347, %v7379
        %7388 = vst [vmem:[%s321] sm:$0xff] %v7380
        %7389 = vst [vmem:[%s321 + $0x8] sm:$0xff] %v7381
        %7390 = vst [vmem:[%s321 + $0x10] sm:$0xff] %v7382
        %7391 = vst [vmem:[%s321 + $0x18] sm:$0xff] %v7383
        %7392 = vst [vmem:[%s321 + $0x20] sm:$0xff] %v7384
        %7393 = vst [vmem:[%s321 + $0x28] sm:$0xff] %v7385
        %7394 = vst [vmem:[%s321 + $0x30] sm:$0xff] %v7386
        %7395 = vst [vmem:[%s321 + $0x38] sm:$0xff] %v7387
        %s7396 = sand.u32 %s164, 1
        %s7397 = scalar_lea.sflag [#allocation4], %s7396
        %s7398 = sand.u32 %s164, 1
        %s7399 = smul.addr %s7398, 64
        %s7400 = scalar_lea.vmem [#allocation11], %s7399
        // Predicated region
        $region65: #{tpu_custom_call.1} parent=43 // pred_check
          %p7401 = pneg %p174
        $region66: #{tpu_custom_call.1} parent=43 // pred_check_branch
          %7403 = sbr.rel (%p7401) target = $region68
        $region67: #{tpu_custom_call.1} parent=43 // pred_region
          %s7405 = ssub.s32 1024, 1024
          %7406 = vsyncadd %s7397, %s7405
          %s7407 = smul.addr %s25, 8
          %s7408 = smul.addr %s7407, 128
          %s7409 = scalar_lea.hbm %s6, %s7408
          %s7411 = sshll.u32 %s7400, 4
          %s7412 = int_to_ptr.vmem [resolvable:$true] %s7411
          %7414 = dma.vmem_to_hbm [thread:$0]  %s7412, 1024, %s7409, %s7397
        $region68: #{tpu_custom_call.1} parent=43 // pred_fallthru
          _
      $region44: #{tpu_custom_call.1} parent=5 // pred_fallthru
        _
      %p7415 = scmp.le.s32.totalorder 2, %s20
      // Predicated region
      $region69: #{tpu_custom_call.1} parent=5 // pred_check
        %p7416 = pneg %p7415
      $region70: #{tpu_custom_call.1} parent=5 // pred_check_branch
        %7418 = sbr.rel (%p7416) target = $region72
      $region71: #{tpu_custom_call.1} parent=5 // pred_region
        %s7419 = ssub.s32 %s20, 2
        // Predicated region
        $region73: #{tpu_custom_call.1} parent=71 // pred_check
          %p7420 = pneg %p180
        $region74: #{tpu_custom_call.1} parent=71 // pred_check_branch
          %7422 = sbr.rel (%p7420) target = $region76
        $region75: #{tpu_custom_call.1} parent=71 // pred_region
          %s7423 = sand.u32 %s165, 1
          %s7424 = scalar_lea.sflag [#allocation4], %s7423
          %s7425 = sand.u32 %s165, 1
          %s7426 = smul.addr %s7425, 64
          %s7427 = scalar_lea.vmem [#allocation11], %s7426
          %7428 = dma.done %s7424, 1024
        $region76: #{tpu_custom_call.1} parent=71 // pred_fallthru
          _
      $region72: #{tpu_custom_call.1} parent=5 // pred_fallthru
        _
    $region6: #{tpu_custom_call.1} parent=1 // loop_footer
      %s24 = sadd.s32 1, %s20
    $region7: #{tpu_custom_call.1} parent=1 // loop_footer_branch
      %19 = sbr.rel target = $region3
    $region8: #{tpu_custom_call.1} parent=1 // loop_exit
      _
    %7429 = vsyncpa [#allocation3], 1
    %s7430 = scalar_lea.sflag [#allocation3], 1
    %7431 = vsyncpa %s7430, 1
    %7432 = vsyncpa [#allocation6], 1
    %7433 = vsyncpa [#allocation9], 1
    %7434 = vsyncpa [#allocation4], 1
    %s7435 = scalar_lea.sflag [#allocation4], 1
    %7436 = vsyncpa %s7435, 1

</llo_original>
